<compile_context>
chip_gen: v7x
topology: tpu7x:2x2x1
jax: 0.10.0
libtpu: 0.0.40
codegen_flags: <defaults>
</compile_context>

<pallas_src>
import functools
import numpy as np
import jax
import jax.numpy as jnp
from jax import lax
from jax.experimental import pallas as pl
from jax.experimental.pallas import tpu as pltpu

LANE = 128


# ----------------------------- Pallas kernels --------------------------------

def _accum_taps(x_refs, w_ref, *, stride, Ho, Wo):
    """Accumulate all 27 conv taps into a kernel-local f32 (M, tco) value."""
    M = Ho * Wo
    tco = w_ref.shape[-1]
    acc = jnp.zeros((M, tco), jnp.float32)
    for kd in range(3):
        xr = x_refs[kd]                                      # (s, Hq, s, Wq, Ci)
        for kh in range(3):
            ph, h0 = kh % stride, kh // stride
            for kw in range(3):
                pw, w0 = kw % stride, kw // stride
                win = xr[ph, h0:h0 + Ho, pw, w0:w0 + Wo, :]  # (Ho, Wo, Ci)
                patch = win.reshape(M, win.shape[-1])        # (M, Ci)
                acc = acc + jnp.dot(patch, w_ref[kd * 9 + kh * 3 + kw],
                                    preferred_element_type=jnp.float32)
    return acc


def _conv_bn_kernel(x0, x1, x2, w_ref, s_ref, t_ref, o_ref,
                    *, stride, Ho, Wo, relu):
    acc = _accum_taps((x0, x1, x2), w_ref, stride=stride, Ho=Ho, Wo=Wo)
    y = acc * s_ref[...] + t_ref[...]
    if relu:
        y = jnp.maximum(y, 0.0)
    o_ref[...] = y.astype(o_ref.dtype)


def _conv_bn_res_conv_kernel(x0, x1, x2, w_ref, s_ref, t_ref,
                             xs_ref, wr_ref, sr_ref, tr_ref, o_ref,
                             *, stride, Ho, Wo):
    acc = _accum_taps((x0, x1, x2), w_ref, stride=stride, Ho=Ho, Wo=Wo)
    y = acc * s_ref[...] + t_ref[...]
    # fused shortcut: residual = BN(1x1 conv(xs)).
    res = jnp.dot(xs_ref[...], wr_ref[...], preferred_element_type=jnp.float32)
    y = y + res * sr_ref[...] + tr_ref[...]
    o_ref[...] = jnp.maximum(y, 0.0).astype(o_ref.dtype)


def _conv_bn_res_id_kernel(x0, x1, x2, w_ref, s_ref, t_ref, xs_ref, o_ref,
                           *, stride, Ho, Wo):
    acc = _accum_taps((x0, x1, x2), w_ref, stride=stride, Ho=Ho, Wo=Wo)
    y = acc * s_ref[...] + t_ref[...]
    y = y + xs_ref[...].astype(jnp.float32)    # identity shortcut: plain VPU add
    o_ref[...] = jnp.maximum(y, 0.0).astype(o_ref.dtype)


# ------------------------------- wrappers -------------------------------------

def _round_up(x, m):
    return (x + m - 1) // m * m


def _pad_channels(x, c_to):
    c = x.shape[-1]
    if c == c_to:
        return x
    return jnp.pad(x, ((0, 0),) * (x.ndim - 1) + ((0, c_to - c),))


def _phase_split(xp, stride):
    """(N, Dp, Hp, Wp, C) zero-padded -> (N, Dp, s, Hq, s, Wq, C)."""
    N, Dp, Hp, Wp, C = xp.shape
    Hq = -(-Hp // stride)
    Wq = -(-Wp // stride)
    xp = jnp.pad(xp, ((0, 0), (0, 0),
                      (0, Hq * stride - Hp), (0, Wq * stride - Wp), (0, 0)))
    xp = xp.reshape(N, Dp, Hq, stride, Wq, stride, C)
    return xp.transpose(0, 1, 3, 2, 5, 4, 6)


def _prep_conv_weight(w, Ci, Co, dtype):
    """PyTorch (Cout, Cin, 3,3,3) -> (27, Ci, Co) zero-padded channels."""
    co, ci = w.shape[0], w.shape[1]
    w = jnp.transpose(w, (2, 3, 4, 1, 0))                    # (3,3,3,Cin,Cout)
    w = jnp.pad(w, ((0, 0),) * 3 + ((0, Ci - ci), (0, Co - co)))
    return w.reshape(27, Ci, Co).astype(dtype)


def _prep_pointwise_weight(w, Ci, Co, dtype):
    """PyTorch (Cout, Cin, 1,1,1) -> (Ci, Co)."""
    co, ci = w.shape[0], w.shape[1]
    w = jnp.transpose(w[:, :, 0, 0, 0], (1, 0))              # (Cin, Cout)
    w = jnp.pad(w, ((0, Ci - ci), (0, Co - co)))
    return w.astype(dtype)


def _prep_bn(gamma, beta, mean, var, bias, Co, eps=1e-5):
    scale = gamma / jnp.sqrt(var + eps)
    shift = beta + (bias - mean) * scale
    pad = (0, Co - scale.shape[0])
    return (jnp.pad(scale, pad).reshape(1, Co).astype(jnp.float32),
            jnp.pad(shift, pad).reshape(1, Co).astype(jnp.float32))


def conv3x3_bn(x, w_taps, scale, shift, stride, *, residual=None, relu=True,
               out_dtype=jnp.float32):
    """Fused 3x3x3 conv (pad=1, stride) + folded BN (+ fused shortcut) (+ ReLU).

    x:        (N, D, H, W, Ci)  channel-padded activations (bf16 or f32)
    w_taps:   (27, Ci, Co)      per-tap weight panels
    scale/shift: (1, Co) f32    folded BN affine
    residual: None
              | (xs, None, None, None)  identity shortcut, xs (N, Do, Ho*Wo, Co)
              | (xs, wr, sr, tr)        conv shortcut, xs (N, Do, Ho*Wo, Cr),
                                        wr (Cr, Co), sr/tr (1, Co)
    returns:  (N, Do, Ho, Wo, Co) out_dtype
    """
    N, D, H, W, Ci = x.shape
    Co = w_taps.shape[-1]
    Do = (D - 1) // stride + 1
    Ho = (H - 1) // stride + 1
    Wo = (W - 1) // stride + 1
    M = Ho * Wo

    xp = jnp.pad(x, ((0, 0), (1, 1), (1, 1), (1, 1), (0, 0)))
    xq = _phase_split(xp, stride)                 # (N, Dp, s, Hq, s, Wq, Ci)
    Hq, Wq = xq.shape[3], xq.shape[5]

    tco = 256 if Co % 256 == 0 else 128           # lane-dense output tile
    # Do innermost so the weight panel (index depends only on c) stays resident.
    grid = (N, Co // tco, Do)

    # Same phase-split array passed 3x: one operand per depth tap; the depth
    # block index is the element offset d*stride + kd (block size 1, squeezed).
    x_specs = [
        pl.BlockSpec((None, None, stride, Hq, stride, Wq, Ci),
                     lambda n, c, d, kd=kd: (n, d * stride + kd, 0, 0, 0, 0, 0))
        for kd in range(3)]
    w_spec = pl.BlockSpec((27, Ci, tco), lambda n, c, d: (0, 0, c))
    v_spec = pl.BlockSpec((1, tco), lambda n, c, d: (0, c))
    o_spec = pl.BlockSpec((None, None, M, tco), lambda n, c, d: (n, d, 0, c))

    # Per-step VMEM footprint is a few MiB -> default scoped VMEM limit is ample
    # on v5e/v6e (128 MiB parts) and v7x (64 MiB); no explicit override needed.
    cparams = pltpu.CompilerParams(
        dimension_semantics=("parallel", "parallel", "parallel"))

    if residual is None:
        kern = functools.partial(_conv_bn_kernel, stride=stride, Ho=Ho, Wo=Wo,
                                 relu=relu)
        in_specs = x_specs + [w_spec, v_spec, v_spec]
        args = (xq, xq, xq, w_taps, scale, shift)
    else:
        xs, wr, sr, tr = residual
        if wr is None:
            # identity shortcut: channel-tiled direct add.
            xs_spec = pl.BlockSpec((None, None, M, tco),
                                   lambda n, c, d: (n, d, 0, c))
            kern = functools.partial(_conv_bn_res_id_kernel, stride=stride,
                                     Ho=Ho, Wo=Wo)
            in_specs = x_specs + [w_spec, v_spec, v_spec, xs_spec]
            args = (xq, xq, xq, w_taps, scale, shift, xs)
        else:
            Cr = xs.shape[-1]
            xs_spec = pl.BlockSpec((None, None, M, Cr),
                                   lambda n, c, d: (n, d, 0, 0))
            wr_spec = pl.BlockSpec((Cr, tco), lambda n, c, d: (0, c))
            kern = functools.partial(_conv_bn_res_conv_kernel, stride=stride,
                                     Ho=Ho, Wo=Wo)
            in_specs = x_specs + [w_spec, v_spec, v_spec,
                                  xs_spec, wr_spec, v_spec, v_spec]
            args = (xq, xq, xq, w_taps, scale, shift, xs, wr, sr, tr)

    out = pl.pallas_call(
        kern,
        out_shape=jax.ShapeDtypeStruct((N, Do, M, Co), out_dtype),
        grid_spec=pltpu.PrefetchScalarGridSpec(
            num_scalar_prefetch=0, grid=grid,
            in_specs=in_specs, out_specs=o_spec),
        compiler_params=cparams,
    )(*args)
    return out.reshape(N, Do, Ho, Wo, Co)


def postres_forward(x, p, stride, compute_dtype=jnp.bfloat16):
    """x: (N, D, H, W, n_in) channels-last.  Returns (N, Do, Ho, Wo, n_out)."""
    N, D, H, W, n_in = x.shape
    n_out = p['w1'].shape[0]
    Ci = _round_up(n_in, LANE)
    Co = _round_up(n_out, LANE)

    xb = _pad_channels(x, Ci).astype(compute_dtype)

    # conv1 + bn1 + relu (output kept in compute dtype to halve conv2 traffic).
    w1 = _prep_conv_weight(p['w1'], Ci, Co, compute_dtype)
    s1, t1 = _prep_bn(p['g1'], p['b1'], p['m1'], p['v1'], p['cb1'], Co)
    y1 = conv3x3_bn(xb, w1, s1, t1, stride, relu=True, out_dtype=compute_dtype)
    Do, Ho, Wo = y1.shape[1:4]

    # shortcut operand (fused into the conv2 kernel epilogue).
    xs = xb[:, ::stride, ::stride, ::stride, :]          # (N, Do, Ho, Wo, Ci)
    xs = xs.reshape(N, Do, Ho * Wo, Ci)
    if stride != 1 or n_out != n_in:
        wr = _prep_pointwise_weight(p['wsc'], Ci, Co, compute_dtype)
        sr, tr = _prep_bn(p['gsc'], p['bsc'], p['msc'], p['vsc'], p['cbsc'], Co)
        residual = (xs, wr, sr, tr)
    else:
        residual = (xs, None, None, None)                # identity: direct add

    # conv2 + bn2 + residual add + relu.
    w2 = _prep_conv_weight(p['w2'], Co, Co, compute_dtype)
    s2, t2 = _prep_bn(p['g2'], p['b2'], p['m2'], p['v2'], p['cb2'], Co)
    y2 = conv3x3_bn(y1, w2, s2, t2, 1, residual=residual,
                    out_dtype=compute_dtype)
    # Only slice if output channels are actually padded (avoids a full extra
    # HBM pass when n_out is already a multiple of 128).
    return y2 if Co == n_out else y2[..., :n_out]


# --------------------------- pure-JAX reference --------------------------------

def _conv3d_ref(x, w, b, stride, padding):
    wt = jnp.transpose(w, (2, 3, 4, 1, 0))               # DHWIO
    y = lax.conv_general_dilated(
        x, wt, window_strides=(stride,) * 3, padding=padding,
        dimension_numbers=('NDHWC', 'DHWIO', 'NDHWC'))
    return y + b


def _bn_ref(x, gamma, beta, mean, var, eps=1e-5):
    return (x - mean) / jnp.sqrt(var + eps) * gamma + beta


def postres_ref(x, p, stride):
    residual = x
    n_in, n_out = x.shape[-1], p['w1'].shape[0]
    if stride != 1 or n_out != n_in:
        residual = _conv3d_ref(x, p['wsc'], p['cbsc'], stride, [(0, 0)] * 3)
        residual = _bn_ref(residual, p['gsc'], p['bsc'], p['msc'], p['vsc'])
    out = _conv3d_ref(x, p['w1'], p['cb1'], stride, [(1, 1)] * 3)
    out = jnp.maximum(_bn_ref(out, p['g1'], p['b1'], p['m1'], p['v1']), 0.0)
    out = _conv3d_ref(out, p['w2'], p['cb2'], 1, [(1, 1)] * 3)
    out = _bn_ref(out, p['g2'], p['b2'], p['m2'], p['v2'])
    return jnp.maximum(out + residual, 0.0)


# ---------------------------------- main ---------------------------------------

def init_params(key, n_in, n_out):
    ks = jax.random.split(key, 20)
    f32 = jnp.float32
    p = {}
    p['w1'] = jax.random.normal(ks[0], (n_out, n_in, 3, 3, 3), f32) * 0.1
    p['cb1'] = jax.random.normal(ks[1], (n_out,), f32) * 0.05
    p['g1'] = jax.random.uniform(ks[2], (n_out,), f32, 0.8, 1.2)
    p['b1'] = jax.random.normal(ks[3], (n_out,), f32) * 0.05
    p['m1'] = jax.random.normal(ks[4], (n_out,), f32) * 0.1
    p['v1'] = jax.random.uniform(ks[5], (n_out,), f32, 0.5, 1.5)
    p['w2'] = jax.random.normal(ks[6], (n_out, n_out, 3, 3, 3), f32) * 0.1
    p['cb2'] = jax.random.normal(ks[7], (n_out,), f32) * 0.05
    p['g2'] = jax.random.uniform(ks[8], (n_out,), f32, 0.8, 1.2)
    p['b2'] = jax.random.normal(ks[9], (n_out,), f32) * 0.05
    p['m2'] = jax.random.normal(ks[10], (n_out,), f32) * 0.1
    p['v2'] = jax.random.uniform(ks[11], (n_out,), f32, 0.5, 1.5)
    p['wsc'] = jax.random.normal(ks[12], (n_out, n_in, 1, 1, 1), f32) * 0.1
    p['cbsc'] = jax.random.normal(ks[13], (n_out,), f32) * 0.05
    p['gsc'] = jax.random.uniform(ks[14], (n_out,), f32, 0.8, 1.2)
    p['bsc'] = jax.random.normal(ks[15], (n_out,), f32) * 0.05
    p['msc'] = jax.random.normal(ks[16], (n_out,), f32) * 0.1
    p['vsc'] = jax.random.uniform(ks[17], (n_out,), f32, 0.5, 1.5)
    return p


if __name__ == "__main__":
    key = jax.random.PRNGKey(0)
    k1, k2, k3, k4 = jax.random.split(key, 4)

    # ---- config 1: stride-2 block with 1x1-conv shortcut --------------------
    n_in, n_out, stride = 4, 8, 2
    N, D, H, W = 2, 8, 8, 8          # NDHWC here == PyTorch NCDHW (2, 4, 8, 8, 8)
    x = jax.random.normal(k1, (N, D, H, W, n_in), jnp.float32)
    params = init_params(k2, n_in, n_out)
    ref = jax.block_until_ready(postres_ref(x, params, stride))

    # f32 compute path: tight numerical check.
    fwd_f32 = jax.jit(functools.partial(postres_forward, stride=stride,
                                        compute_dtype=jnp.float32))
    out_f32 = jax.block_until_ready(fwd_f32(x, params))
    np.testing.assert_allclose(np.asarray(out_f32), np.asarray(ref),
                               rtol=1e-3, atol=1e-3)

    # bf16 MXU-operand path (f32 accumulate, f32 BN epilogue, bf16 output):
    # looser check.
    fwd_bf16 = jax.jit(functools.partial(postres_forward, stride=stride,
                                         compute_dtype=jnp.bfloat16))
    out_bf16 = jax.block_until_ready(fwd_bf16(x, params))
    np.testing.assert_allclose(np.asarray(out_bf16.astype(jnp.float32)),
                               np.asarray(ref), rtol=1e-1, atol=1e-1)

    # ---- config 2: stride-1 identity-shortcut block --------------------------
    n_in2 = n_out2 = 8
    x2 = jax.random.normal(k3, (1, 6, 6, 6, n_in2), jnp.float32)
    params2 = init_params(k4, n_in2, n_out2)
    ref2 = jax.block_until_ready(postres_ref(x2, params2, 1))
    fwd2 = jax.jit(functools.partial(postres_forward, stride=1,
                                     compute_dtype=jnp.float32))
    out2 = jax.block_until_ready(fwd2(x2, params2))
    np.testing.assert_allclose(np.asarray(out2), np.asarray(ref2),
                               rtol=1e-3, atol=1e-3)

    print("KERNEL_OK")
</pallas_src>

<mosaic_0001>
module attributes {stable_mosaic.version = 11 : i64} {
  func.func @_conv_bn_kernel(%arg0: i32, %arg1: i32, %arg2: i32, %arg3: memref<1x1x2x5x2x5x128xf32, #tpu.memory_space<vmem>>, %arg4: memref<1x1x2x5x2x5x128xf32, #tpu.memory_space<vmem>>, %arg5: memref<1x1x2x5x2x5x128xf32, #tpu.memory_space<vmem>>, %arg6: memref<27x128x128xf32, #tpu.memory_space<vmem>>, %arg7: memref<1x128xf32, #tpu.memory_space<vmem>>, %arg8: memref<1x128xf32, #tpu.memory_space<vmem>>, %arg9: memref<1x1x16x128xf32, #tpu.memory_space<vmem>>) attributes {dimension_semantics = [#tpu.dimension_semantics<parallel>, #tpu.dimension_semantics<parallel>, #tpu.dimension_semantics<parallel>], iteration_bounds = array<i64: 2, 1, 4>, scalar_prefetch = 0 : i64, scratch_operands = 0 : i64, tpu.core_type = #tpu.core_type<tc>, window_params = [{transform_indices = @transform_0, window_bounds = array<i64: 1, 1, 2, 5, 2, 5, 128>}, {transform_indices = @transform_1, window_bounds = array<i64: 1, 1, 2, 5, 2, 5, 128>}, {transform_indices = @transform_2, window_bounds = array<i64: 1, 1, 2, 5, 2, 5, 128>}, {transform_indices = @transform_3, window_bounds = array<i64: 27, 128, 128>}, {transform_indices = @transform_4, window_bounds = array<i64: 1, 128>}, {transform_indices = @transform_5, window_bounds = array<i64: 1, 128>}, {transform_indices = @transform_6, window_bounds = array<i64: 1, 1, 16, 128>}]} {
    %cst = arith.constant 0.000000e+00 : f32
    %0 = vector.broadcast %cst : f32 to vector<16x128xf32>
    %c0 = arith.constant 0 : index
    %c0_0 = arith.constant 0 : index
    %c0_1 = arith.constant 0 : index
    %c0_2 = arith.constant 0 : index
    %c0_3 = arith.constant 0 : index
    %c0_4 = arith.constant 0 : index
    %c0_5 = arith.constant 0 : index
    %1 = vector.load %arg3[%c0, %c0_0, %c0_1, %c0_2, %c0_3, %c0_4, %c0_5] : memref<1x1x2x5x2x5x128xf32, #tpu.memory_space<vmem>>, vector<1x1x1x4x1x4x128xf32>
    %2 = vector.shape_cast %1 : vector<1x1x1x4x1x4x128xf32> to vector<4x4x128xf32>
    %3 = vector.shape_cast %2 : vector<4x4x128xf32> to vector<16x128xf32>
    %c0_6 = arith.constant 0 : index
    %c0_7 = arith.constant 0 : index
    %c0_8 = arith.constant 0 : index
    %4 = vector.load %arg6[%c0_6, %c0_7, %c0_8] : memref<27x128x128xf32, #tpu.memory_space<vmem>>, vector<1x128x128xf32>
    %5 = vector.shape_cast %4 : vector<1x128x128xf32> to vector<128x128xf32>
    %cst_9 = arith.constant dense<0.000000e+00> : vector<16x128xf32>
    %6 = tpu.matmul %3, %5, %cst_9 {dimension_numbers = #tpu.dot_dimension_numbers<[1], [0], [0], [1], [0, 0, 1, 1], [], []>} : vector<16x128xf32>, vector<128x128xf32>, vector<16x128xf32> -> vector<16x128xf32>
    %7 = arith.addf %0, %6 : vector<16x128xf32>
    %c0_10 = arith.constant 0 : index
    %c0_11 = arith.constant 0 : index
    %c0_12 = arith.constant 0 : index
    %c0_13 = arith.constant 0 : index
    %c1 = arith.constant 1 : index
    %c0_14 = arith.constant 0 : index
    %c0_15 = arith.constant 0 : index
    %8 = vector.load %arg3[%c0_10, %c0_11, %c0_12, %c0_13, %c1, %c0_14, %c0_15] : memref<1x1x2x5x2x5x128xf32, #tpu.memory_space<vmem>>, vector<1x1x1x4x1x4x128xf32>
    %9 = vector.shape_cast %8 : vector<1x1x1x4x1x4x128xf32> to vector<4x4x128xf32>
    %10 = vector.shape_cast %9 : vector<4x4x128xf32> to vector<16x128xf32>
    %c1_16 = arith.constant 1 : index
    %c0_17 = arith.constant 0 : index
    %c0_18 = arith.constant 0 : index
    %11 = vector.load %arg6[%c1_16, %c0_17, %c0_18] : memref<27x128x128xf32, #tpu.memory_space<vmem>>, vector<1x128x128xf32>
    %12 = vector.shape_cast %11 : vector<1x128x128xf32> to vector<128x128xf32>
    %cst_19 = arith.constant dense<0.000000e+00> : vector<16x128xf32>
    %13 = tpu.matmul %10, %12, %cst_19 {dimension_numbers = #tpu.dot_dimension_numbers<[1], [0], [0], [1], [0, 0, 1, 1], [], []>} : vector<16x128xf32>, vector<128x128xf32>, vector<16x128xf32> -> vector<16x128xf32>
    %14 = arith.addf %7, %13 : vector<16x128xf32>
    %c0_20 = arith.constant 0 : index
    %c0_21 = arith.constant 0 : index
    %c0_22 = arith.constant 0 : index
    %c0_23 = arith.constant 0 : index
    %c0_24 = arith.constant 0 : index
    %c1_25 = arith.constant 1 : index
    %c0_26 = arith.constant 0 : index
    %15 = vector.load %arg3[%c0_20, %c0_21, %c0_22, %c0_23, %c0_24, %c1_25, %c0_26] : memref<1x1x2x5x2x5x128xf32, #tpu.memory_space<vmem>>, vector<1x1x1x4x1x4x128xf32>
    %16 = vector.shape_cast %15 : vector<1x1x1x4x1x4x128xf32> to vector<4x4x128xf32>
    %17 = vector.shape_cast %16 : vector<4x4x128xf32> to vector<16x128xf32>
    %c2 = arith.constant 2 : index
    %c0_27 = arith.constant 0 : index
    %c0_28 = arith.constant 0 : index
    %18 = vector.load %arg6[%c2, %c0_27, %c0_28] : memref<27x128x128xf32, #tpu.memory_space<vmem>>, vector<1x128x128xf32>
    %19 = vector.shape_cast %18 : vector<1x128x128xf32> to vector<128x128xf32>
    %cst_29 = arith.constant dense<0.000000e+00> : vector<16x128xf32>
    %20 = tpu.matmul %17, %19, %cst_29 {dimension_numbers = #tpu.dot_dimension_numbers<[1], [0], [0], [1], [0, 0, 1, 1], [], []>} : vector<16x128xf32>, vector<128x128xf32>, vector<16x128xf32> -> vector<16x128xf32>
    %21 = arith.addf %14, %20 : vector<16x128xf32>
    %c0_30 = arith.constant 0 : index
    %c0_31 = arith.constant 0 : index
    %c1_32 = arith.constant 1 : index
    %c0_33 = arith.constant 0 : index
    %c0_34 = arith.constant 0 : index
    %c0_35 = arith.constant 0 : index
    %c0_36 = arith.constant 0 : index
    %22 = vector.load %arg3[%c0_30, %c0_31, %c1_32, %c0_33, %c0_34, %c0_35, %c0_36] : memref<1x1x2x5x2x5x128xf32, #tpu.memory_space<vmem>>, vector<1x1x1x4x1x4x128xf32>
    %23 = vector.shape_cast %22 : vector<1x1x1x4x1x4x128xf32> to vector<4x4x128xf32>
    %24 = vector.shape_cast %23 : vector<4x4x128xf32> to vector<16x128xf32>
    %c3 = arith.constant 3 : index
    %c0_37 = arith.constant 0 : index
    %c0_38 = arith.constant 0 : index
    %25 = vector.load %arg6[%c3, %c0_37, %c0_38] : memref<27x128x128xf32, #tpu.memory_space<vmem>>, vector<1x128x128xf32>
    %26 = vector.shape_cast %25 : vector<1x128x128xf32> to vector<128x128xf32>
    %cst_39 = arith.constant dense<0.000000e+00> : vector<16x128xf32>
    %27 = tpu.matmul %24, %26, %cst_39 {dimension_numbers = #tpu.dot_dimension_numbers<[1], [0], [0], [1], [0, 0, 1, 1], [], []>} : vector<16x128xf32>, vector<128x128xf32>, vector<16x128xf32> -> vector<16x128xf32>
    %28 = arith.addf %21, %27 : vector<16x128xf32>
    %c0_40 = arith.constant 0 : index
    %c0_41 = arith.constant 0 : index
    %c1_42 = arith.constant 1 : index
    %c0_43 = arith.constant 0 : index
    %c1_44 = arith.constant 1 : index
    %c0_45 = arith.constant 0 : index
    %c0_46 = arith.constant 0 : index
    %29 = vector.load %arg3[%c0_40, %c0_41, %c1_42, %c0_43, %c1_44, %c0_45, %c0_46] : memref<1x1x2x5x2x5x128xf32, #tpu.memory_space<vmem>>, vector<1x1x1x4x1x4x128xf32>
    %30 = vector.shape_cast %29 : vector<1x1x1x4x1x4x128xf32> to vector<4x4x128xf32>
    %31 = vector.shape_cast %30 : vector<4x4x128xf32> to vector<16x128xf32>
    %c4 = arith.constant 4 : index
    %c0_47 = arith.constant 0 : index
    %c0_48 = arith.constant 0 : index
    %32 = vector.load %arg6[%c4, %c0_47, %c0_48] : memref<27x128x128xf32, #tpu.memory_space<vmem>>, vector<1x128x128xf32>
    %33 = vector.shape_cast %32 : vector<1x128x128xf32> to vector<128x128xf32>
    %cst_49 = arith.constant dense<0.000000e+00> : vector<16x128xf32>
    %34 = tpu.matmul %31, %33, %cst_49 {dimension_numbers = #tpu.dot_dimension_numbers<[1], [0], [0], [1], [0, 0, 1, 1], [], []>} : vector<16x128xf32>, vector<128x128xf32>, vector<16x128xf32> -> vector<16x128xf32>
    %35 = arith.addf %28, %34 : vector<16x128xf32>
    %c0_50 = arith.constant 0 : index
    %c0_51 = arith.constant 0 : index
    %c1_52 = arith.constant 1 : index
    %c0_53 = arith.constant 0 : index
    %c0_54 = arith.constant 0 : index
    %c1_55 = arith.constant 1 : index
    %c0_56 = arith.constant 0 : index
    %36 = vector.load %arg3[%c0_50, %c0_51, %c1_52, %c0_53, %c0_54, %c1_55, %c0_56] : memref<1x1x2x5x2x5x128xf32, #tpu.memory_space<vmem>>, vector<1x1x1x4x1x4x128xf32>
    %37 = vector.shape_cast %36 : vector<1x1x1x4x1x4x128xf32> to vector<4x4x128xf32>
    %38 = vector.shape_cast %37 : vector<4x4x128xf32> to vector<16x128xf32>
    %c5 = arith.constant 5 : index
    %c0_57 = arith.constant 0 : index
    %c0_58 = arith.constant 0 : index
    %39 = vector.load %arg6[%c5, %c0_57, %c0_58] : memref<27x128x128xf32, #tpu.memory_space<vmem>>, vector<1x128x128xf32>
    %40 = vector.shape_cast %39 : vector<1x128x128xf32> to vector<128x128xf32>
    %cst_59 = arith.constant dense<0.000000e+00> : vector<16x128xf32>
    %41 = tpu.matmul %38, %40, %cst_59 {dimension_numbers = #tpu.dot_dimension_numbers<[1], [0], [0], [1], [0, 0, 1, 1], [], []>} : vector<16x128xf32>, vector<128x128xf32>, vector<16x128xf32> -> vector<16x128xf32>
    %42 = arith.addf %35, %41 : vector<16x128xf32>
    %c0_60 = arith.constant 0 : index
    %c0_61 = arith.constant 0 : index
    %c0_62 = arith.constant 0 : index
    %c1_63 = arith.constant 1 : index
    %c0_64 = arith.constant 0 : index
    %c0_65 = arith.constant 0 : index
    %c0_66 = arith.constant 0 : index
    %43 = vector.load %arg3[%c0_60, %c0_61, %c0_62, %c1_63, %c0_64, %c0_65, %c0_66] : memref<1x1x2x5x2x5x128xf32, #tpu.memory_space<vmem>>, vector<1x1x1x4x1x4x128xf32>
    %44 = vector.shape_cast %43 : vector<1x1x1x4x1x4x128xf32> to vector<4x4x128xf32>
    %45 = vector.shape_cast %44 : vector<4x4x128xf32> to vector<16x128xf32>
    %c6 = arith.constant 6 : index
    %c0_67 = arith.constant 0 : index
    %c0_68 = arith.constant 0 : index
    %46 = vector.load %arg6[%c6, %c0_67, %c0_68] : memref<27x128x128xf32, #tpu.memory_space<vmem>>, vector<1x128x128xf32>
    %47 = vector.shape_cast %46 : vector<1x128x128xf32> to vector<128x128xf32>
    %cst_69 = arith.constant dense<0.000000e+00> : vector<16x128xf32>
    %48 = tpu.matmul %45, %47, %cst_69 {dimension_numbers = #tpu.dot_dimension_numbers<[1], [0], [0], [1], [0, 0, 1, 1], [], []>} : vector<16x128xf32>, vector<128x128xf32>, vector<16x128xf32> -> vector<16x128xf32>
    %49 = arith.addf %42, %48 : vector<16x128xf32>
    %c0_70 = arith.constant 0 : index
    %c0_71 = arith.constant 0 : index
    %c0_72 = arith.constant 0 : index
    %c1_73 = arith.constant 1 : index
    %c1_74 = arith.constant 1 : index
    %c0_75 = arith.constant 0 : index
    %c0_76 = arith.constant 0 : index
    %50 = vector.load %arg3[%c0_70, %c0_71, %c0_72, %c1_73, %c1_74, %c0_75, %c0_76] : memref<1x1x2x5x2x5x128xf32, #tpu.memory_space<vmem>>, vector<1x1x1x4x1x4x128xf32>
    %51 = vector.shape_cast %50 : vector<1x1x1x4x1x4x128xf32> to vector<4x4x128xf32>
    %52 = vector.shape_cast %51 : vector<4x4x128xf32> to vector<16x128xf32>
    %c7 = arith.constant 7 : index
    %c0_77 = arith.constant 0 : index
    %c0_78 = arith.constant 0 : index
    %53 = vector.load %arg6[%c7, %c0_77, %c0_78] : memref<27x128x128xf32, #tpu.memory_space<vmem>>, vector<1x128x128xf32>
    %54 = vector.shape_cast %53 : vector<1x128x128xf32> to vector<128x128xf32>
    %cst_79 = arith.constant dense<0.000000e+00> : vector<16x128xf32>
    %55 = tpu.matmul %52, %54, %cst_79 {dimension_numbers = #tpu.dot_dimension_numbers<[1], [0], [0], [1], [0, 0, 1, 1], [], []>} : vector<16x128xf32>, vector<128x128xf32>, vector<16x128xf32> -> vector<16x128xf32>
    %56 = arith.addf %49, %55 : vector<16x128xf32>
    %c0_80 = arith.constant 0 : index
    %c0_81 = arith.constant 0 : index
    %c0_82 = arith.constant 0 : index
    %c1_83 = arith.constant 1 : index
    %c0_84 = arith.constant 0 : index
    %c1_85 = arith.constant 1 : index
    %c0_86 = arith.constant 0 : index
    %57 = vector.load %arg3[%c0_80, %c0_81, %c0_82, %c1_83, %c0_84, %c1_85, %c0_86] : memref<1x1x2x5x2x5x128xf32, #tpu.memory_space<vmem>>, vector<1x1x1x4x1x4x128xf32>
    %58 = vector.shape_cast %57 : vector<1x1x1x4x1x4x128xf32> to vector<4x4x128xf32>
    %59 = vector.shape_cast %58 : vector<4x4x128xf32> to vector<16x128xf32>
    %c8 = arith.constant 8 : index
    %c0_87 = arith.constant 0 : index
    %c0_88 = arith.constant 0 : index
    %60 = vector.load %arg6[%c8, %c0_87, %c0_88] : memref<27x128x128xf32, #tpu.memory_space<vmem>>, vector<1x128x128xf32>
    %61 = vector.shape_cast %60 : vector<1x128x128xf32> to vector<128x128xf32>
    %cst_89 = arith.constant dense<0.000000e+00> : vector<16x128xf32>
    %62 = tpu.matmul %59, %61, %cst_89 {dimension_numbers = #tpu.dot_dimension_numbers<[1], [0], [0], [1], [0, 0, 1, 1], [], []>} : vector<16x128xf32>, vector<128x128xf32>, vector<16x128xf32> -> vector<16x128xf32>
    %63 = arith.addf %56, %62 : vector<16x128xf32>
    %c0_90 = arith.constant 0 : index
    %c0_91 = arith.constant 0 : index
    %c0_92 = arith.constant 0 : index
    %c0_93 = arith.constant 0 : index
    %c0_94 = arith.constant 0 : index
    %c0_95 = arith.constant 0 : index
    %c0_96 = arith.constant 0 : index
    %64 = vector.load %arg4[%c0_90, %c0_91, %c0_92, %c0_93, %c0_94, %c0_95, %c0_96] : memref<1x1x2x5x2x5x128xf32, #tpu.memory_space<vmem>>, vector<1x1x1x4x1x4x128xf32>
    %65 = vector.shape_cast %64 : vector<1x1x1x4x1x4x128xf32> to vector<4x4x128xf32>
    %66 = vector.shape_cast %65 : vector<4x4x128xf32> to vector<16x128xf32>
    %c9 = arith.constant 9 : index
    %c0_97 = arith.constant 0 : index
    %c0_98 = arith.constant 0 : index
    %67 = vector.load %arg6[%c9, %c0_97, %c0_98] : memref<27x128x128xf32, #tpu.memory_space<vmem>>, vector<1x128x128xf32>
    %68 = vector.shape_cast %67 : vector<1x128x128xf32> to vector<128x128xf32>
    %cst_99 = arith.constant dense<0.000000e+00> : vector<16x128xf32>
    %69 = tpu.matmul %66, %68, %cst_99 {dimension_numbers = #tpu.dot_dimension_numbers<[1], [0], [0], [1], [0, 0, 1, 1], [], []>} : vector<16x128xf32>, vector<128x128xf32>, vector<16x128xf32> -> vector<16x128xf32>
    %70 = arith.addf %63, %69 : vector<16x128xf32>
    %c0_100 = arith.constant 0 : index
    %c0_101 = arith.constant 0 : index
    %c0_102 = arith.constant 0 : index
    %c0_103 = arith.constant 0 : index
    %c1_104 = arith.constant 1 : index
    %c0_105 = arith.constant 0 : index
    %c0_106 = arith.constant 0 : index
    %71 = vector.load %arg4[%c0_100, %c0_101, %c0_102, %c0_103, %c1_104, %c0_105, %c0_106] : memref<1x1x2x5x2x5x128xf32, #tpu.memory_space<vmem>>, vector<1x1x1x4x1x4x128xf32>
    %72 = vector.shape_cast %71 : vector<1x1x1x4x1x4x128xf32> to vector<4x4x128xf32>
    %73 = vector.shape_cast %72 : vector<4x4x128xf32> to vector<16x128xf32>
    %c10 = arith.constant 10 : index
    %c0_107 = arith.constant 0 : index
    %c0_108 = arith.constant 0 : index
    %74 = vector.load %arg6[%c10, %c0_107, %c0_108] : memref<27x128x128xf32, #tpu.memory_space<vmem>>, vector<1x128x128xf32>
    %75 = vector.shape_cast %74 : vector<1x128x128xf32> to vector<128x128xf32>
    %cst_109 = arith.constant dense<0.000000e+00> : vector<16x128xf32>
    %76 = tpu.matmul %73, %75, %cst_109 {dimension_numbers = #tpu.dot_dimension_numbers<[1], [0], [0], [1], [0, 0, 1, 1], [], []>} : vector<16x128xf32>, vector<128x128xf32>, vector<16x128xf32> -> vector<16x128xf32>
    %77 = arith.addf %70, %76 : vector<16x128xf32>
    %c0_110 = arith.constant 0 : index
    %c0_111 = arith.constant 0 : index
    %c0_112 = arith.constant 0 : index
    %c0_113 = arith.constant 0 : index
    %c0_114 = arith.constant 0 : index
    %c1_115 = arith.constant 1 : index
    %c0_116 = arith.constant 0 : index
    %78 = vector.load %arg4[%c0_110, %c0_111, %c0_112, %c0_113, %c0_114, %c1_115, %c0_116] : memref<1x1x2x5x2x5x128xf32, #tpu.memory_space<vmem>>, vector<1x1x1x4x1x4x128xf32>
    %79 = vector.shape_cast %78 : vector<1x1x1x4x1x4x128xf32> to vector<4x4x128xf32>
    %80 = vector.shape_cast %79 : vector<4x4x128xf32> to vector<16x128xf32>
    %c11 = arith.constant 11 : index
    %c0_117 = arith.constant 0 : index
    %c0_118 = arith.constant 0 : index
    %81 = vector.load %arg6[%c11, %c0_117, %c0_118] : memref<27x128x128xf32, #tpu.memory_space<vmem>>, vector<1x128x128xf32>
    %82 = vector.shape_cast %81 : vector<1x128x128xf32> to vector<128x128xf32>
    %cst_119 = arith.constant dense<0.000000e+00> : vector<16x128xf32>
    %83 = tpu.matmul %80, %82, %cst_119 {dimension_numbers = #tpu.dot_dimension_numbers<[1], [0], [0], [1], [0, 0, 1, 1], [], []>} : vector<16x128xf32>, vector<128x128xf32>, vector<16x128xf32> -> vector<16x128xf32>
    %84 = arith.addf %77, %83 : vector<16x128xf32>
    %c0_120 = arith.constant 0 : index
    %c0_121 = arith.constant 0 : index
    %c1_122 = arith.constant 1 : index
    %c0_123 = arith.constant 0 : index
    %c0_124 = arith.constant 0 : index
    %c0_125 = arith.constant 0 : index
    %c0_126 = arith.constant 0 : index
    %85 = vector.load %arg4[%c0_120, %c0_121, %c1_122, %c0_123, %c0_124, %c0_125, %c0_126] : memref<1x1x2x5x2x5x128xf32, #tpu.memory_space<vmem>>, vector<1x1x1x4x1x4x128xf32>
    %86 = vector.shape_cast %85 : vector<1x1x1x4x1x4x128xf32> to vector<4x4x128xf32>
    %87 = vector.shape_cast %86 : vector<4x4x128xf32> to vector<16x128xf32>
    %c12 = arith.constant 12 : index
    %c0_127 = arith.constant 0 : index
    %c0_128 = arith.constant 0 : index
    %88 = vector.load %arg6[%c12, %c0_127, %c0_128] : memref<27x128x128xf32, #tpu.memory_space<vmem>>, vector<1x128x128xf32>
    %89 = vector.shape_cast %88 : vector<1x128x128xf32> to vector<128x128xf32>
    %cst_129 = arith.constant dense<0.000000e+00> : vector<16x128xf32>
    %90 = tpu.matmul %87, %89, %cst_129 {dimension_numbers = #tpu.dot_dimension_numbers<[1], [0], [0], [1], [0, 0, 1, 1], [], []>} : vector<16x128xf32>, vector<128x128xf32>, vector<16x128xf32> -> vector<16x128xf32>
    %91 = arith.addf %84, %90 : vector<16x128xf32>
    %c0_130 = arith.constant 0 : index
    %c0_131 = arith.constant 0 : index
    %c1_132 = arith.constant 1 : index
    %c0_133 = arith.constant 0 : index
    %c1_134 = arith.constant 1 : index
    %c0_135 = arith.constant 0 : index
    %c0_136 = arith.constant 0 : index
    %92 = vector.load %arg4[%c0_130, %c0_131, %c1_132, %c0_133, %c1_134, %c0_135, %c0_136] : memref<1x1x2x5x2x5x128xf32, #tpu.memory_space<vmem>>, vector<1x1x1x4x1x4x128xf32>
    %93 = vector.shape_cast %92 : vector<1x1x1x4x1x4x128xf32> to vector<4x4x128xf32>
    %94 = vector.shape_cast %93 : vector<4x4x128xf32> to vector<16x128xf32>
    %c13 = arith.constant 13 : index
    %c0_137 = arith.constant 0 : index
    %c0_138 = arith.constant 0 : index
    %95 = vector.load %arg6[%c13, %c0_137, %c0_138] : memref<27x128x128xf32, #tpu.memory_space<vmem>>, vector<1x128x128xf32>
    %96 = vector.shape_cast %95 : vector<1x128x128xf32> to vector<128x128xf32>
    %cst_139 = arith.constant dense<0.000000e+00> : vector<16x128xf32>
    %97 = tpu.matmul %94, %96, %cst_139 {dimension_numbers = #tpu.dot_dimension_numbers<[1], [0], [0], [1], [0, 0, 1, 1], [], []>} : vector<16x128xf32>, vector<128x128xf32>, vector<16x128xf32> -> vector<16x128xf32>
    %98 = arith.addf %91, %97 : vector<16x128xf32>
    %c0_140 = arith.constant 0 : index
    %c0_141 = arith.constant 0 : index
    %c1_142 = arith.constant 1 : index
    %c0_143 = arith.constant 0 : index
    %c0_144 = arith.constant 0 : index
    %c1_145 = arith.constant 1 : index
    %c0_146 = arith.constant 0 : index
    %99 = vector.load %arg4[%c0_140, %c0_141, %c1_142, %c0_143, %c0_144, %c1_145, %c0_146] : memref<1x1x2x5x2x5x128xf32, #tpu.memory_space<vmem>>, vector<1x1x1x4x1x4x128xf32>
    %100 = vector.shape_cast %99 : vector<1x1x1x4x1x4x128xf32> to vector<4x4x128xf32>
    %101 = vector.shape_cast %100 : vector<4x4x128xf32> to vector<16x128xf32>
    %c14 = arith.constant 14 : index
    %c0_147 = arith.constant 0 : index
    %c0_148 = arith.constant 0 : index
    %102 = vector.load %arg6[%c14, %c0_147, %c0_148] : memref<27x128x128xf32, #tpu.memory_space<vmem>>, vector<1x128x128xf32>
    %103 = vector.shape_cast %102 : vector<1x128x128xf32> to vector<128x128xf32>
    %cst_149 = arith.constant dense<0.000000e+00> : vector<16x128xf32>
    %104 = tpu.matmul %101, %103, %cst_149 {dimension_numbers = #tpu.dot_dimension_numbers<[1], [0], [0], [1], [0, 0, 1, 1], [], []>} : vector<16x128xf32>, vector<128x128xf32>, vector<16x128xf32> -> vector<16x128xf32>
    %105 = arith.addf %98, %104 : vector<16x128xf32>
    %c0_150 = arith.constant 0 : index
    %c0_151 = arith.constant 0 : index
    %c0_152 = arith.constant 0 : index
    %c1_153 = arith.constant 1 : index
    %c0_154 = arith.constant 0 : index
    %c0_155 = arith.constant 0 : index
    %c0_156 = arith.constant 0 : index
    %106 = vector.load %arg4[%c0_150, %c0_151, %c0_152, %c1_153, %c0_154, %c0_155, %c0_156] : memref<1x1x2x5x2x5x128xf32, #tpu.memory_space<vmem>>, vector<1x1x1x4x1x4x128xf32>
    %107 = vector.shape_cast %106 : vector<1x1x1x4x1x4x128xf32> to vector<4x4x128xf32>
    %108 = vector.shape_cast %107 : vector<4x4x128xf32> to vector<16x128xf32>
    %c15 = arith.constant 15 : index
    %c0_157 = arith.constant 0 : index
    %c0_158 = arith.constant 0 : index
    %109 = vector.load %arg6[%c15, %c0_157, %c0_158] : memref<27x128x128xf32, #tpu.memory_space<vmem>>, vector<1x128x128xf32>
    %110 = vector.shape_cast %109 : vector<1x128x128xf32> to vector<128x128xf32>
    %cst_159 = arith.constant dense<0.000000e+00> : vector<16x128xf32>
    %111 = tpu.matmul %108, %110, %cst_159 {dimension_numbers = #tpu.dot_dimension_numbers<[1], [0], [0], [1], [0, 0, 1, 1], [], []>} : vector<16x128xf32>, vector<128x128xf32>, vector<16x128xf32> -> vector<16x128xf32>
    %112 = arith.addf %105, %111 : vector<16x128xf32>
    %c0_160 = arith.constant 0 : index
    %c0_161 = arith.constant 0 : index
    %c0_162 = arith.constant 0 : index
    %c1_163 = arith.constant 1 : index
    %c1_164 = arith.constant 1 : index
    %c0_165 = arith.constant 0 : index
    %c0_166 = arith.constant 0 : index
    %113 = vector.load %arg4[%c0_160, %c0_161, %c0_162, %c1_163, %c1_164, %c0_165, %c0_166] : memref<1x1x2x5x2x5x128xf32, #tpu.memory_space<vmem>>, vector<1x1x1x4x1x4x128xf32>
    %114 = vector.shape_cast %113 : vector<1x1x1x4x1x4x128xf32> to vector<4x4x128xf32>
    %115 = vector.shape_cast %114 : vector<4x4x128xf32> to vector<16x128xf32>
    %c16 = arith.constant 16 : index
    %c0_167 = arith.constant 0 : index
    %c0_168 = arith.constant 0 : index
    %116 = vector.load %arg6[%c16, %c0_167, %c0_168] : memref<27x128x128xf32, #tpu.memory_space<vmem>>, vector<1x128x128xf32>
    %117 = vector.shape_cast %116 : vector<1x128x128xf32> to vector<128x128xf32>
    %cst_169 = arith.constant dense<0.000000e+00> : vector<16x128xf32>
    %118 = tpu.matmul %115, %117, %cst_169 {dimension_numbers = #tpu.dot_dimension_numbers<[1], [0], [0], [1], [0, 0, 1, 1], [], []>} : vector<16x128xf32>, vector<128x128xf32>, vector<16x128xf32> -> vector<16x128xf32>
    %119 = arith.addf %112, %118 : vector<16x128xf32>
    %c0_170 = arith.constant 0 : index
    %c0_171 = arith.constant 0 : index
    %c0_172 = arith.constant 0 : index
    %c1_173 = arith.constant 1 : index
    %c0_174 = arith.constant 0 : index
    %c1_175 = arith.constant 1 : index
    %c0_176 = arith.constant 0 : index
    %120 = vector.load %arg4[%c0_170, %c0_171, %c0_172, %c1_173, %c0_174, %c1_175, %c0_176] : memref<1x1x2x5x2x5x128xf32, #tpu.memory_space<vmem>>, vector<1x1x1x4x1x4x128xf32>
    %121 = vector.shape_cast %120 : vector<1x1x1x4x1x4x128xf32> to vector<4x4x128xf32>
    %122 = vector.shape_cast %121 : vector<4x4x128xf32> to vector<16x128xf32>
    %c17 = arith.constant 17 : index
    %c0_177 = arith.constant 0 : index
    %c0_178 = arith.constant 0 : index
    %123 = vector.load %arg6[%c17, %c0_177, %c0_178] : memref<27x128x128xf32, #tpu.memory_space<vmem>>, vector<1x128x128xf32>
    %124 = vector.shape_cast %123 : vector<1x128x128xf32> to vector<128x128xf32>
    %cst_179 = arith.constant dense<0.000000e+00> : vector<16x128xf32>
    %125 = tpu.matmul %122, %124, %cst_179 {dimension_numbers = #tpu.dot_dimension_numbers<[1], [0], [0], [1], [0, 0, 1, 1], [], []>} : vector<16x128xf32>, vector<128x128xf32>, vector<16x128xf32> -> vector<16x128xf32>
    %126 = arith.addf %119, %125 : vector<16x128xf32>
    %c0_180 = arith.constant 0 : index
    %c0_181 = arith.constant 0 : index
    %c0_182 = arith.constant 0 : index
    %c0_183 = arith.constant 0 : index
    %c0_184 = arith.constant 0 : index
    %c0_185 = arith.constant 0 : index
    %c0_186 = arith.constant 0 : index
    %127 = vector.load %arg5[%c0_180, %c0_181, %c0_182, %c0_183, %c0_184, %c0_185, %c0_186] : memref<1x1x2x5x2x5x128xf32, #tpu.memory_space<vmem>>, vector<1x1x1x4x1x4x128xf32>
    %128 = vector.shape_cast %127 : vector<1x1x1x4x1x4x128xf32> to vector<4x4x128xf32>
    %129 = vector.shape_cast %128 : vector<4x4x128xf32> to vector<16x128xf32>
    %c18 = arith.constant 18 : index
    %c0_187 = arith.constant 0 : index
    %c0_188 = arith.constant 0 : index
    %130 = vector.load %arg6[%c18, %c0_187, %c0_188] : memref<27x128x128xf32, #tpu.memory_space<vmem>>, vector<1x128x128xf32>
    %131 = vector.shape_cast %130 : vector<1x128x128xf32> to vector<128x128xf32>
    %cst_189 = arith.constant dense<0.000000e+00> : vector<16x128xf32>
    %132 = tpu.matmul %129, %131, %cst_189 {dimension_numbers = #tpu.dot_dimension_numbers<[1], [0], [0], [1], [0, 0, 1, 1], [], []>} : vector<16x128xf32>, vector<128x128xf32>, vector<16x128xf32> -> vector<16x128xf32>
    %133 = arith.addf %126, %132 : vector<16x128xf32>
    %c0_190 = arith.constant 0 : index
    %c0_191 = arith.constant 0 : index
    %c0_192 = arith.constant 0 : index
    %c0_193 = arith.constant 0 : index
    %c1_194 = arith.constant 1 : index
    %c0_195 = arith.constant 0 : index
    %c0_196 = arith.constant 0 : index
    %134 = vector.load %arg5[%c0_190, %c0_191, %c0_192, %c0_193, %c1_194, %c0_195, %c0_196] : memref<1x1x2x5x2x5x128xf32, #tpu.memory_space<vmem>>, vector<1x1x1x4x1x4x128xf32>
    %135 = vector.shape_cast %134 : vector<1x1x1x4x1x4x128xf32> to vector<4x4x128xf32>
    %136 = vector.shape_cast %135 : vector<4x4x128xf32> to vector<16x128xf32>
    %c19 = arith.constant 19 : index
    %c0_197 = arith.constant 0 : index
    %c0_198 = arith.constant 0 : index
    %137 = vector.load %arg6[%c19, %c0_197, %c0_198] : memref<27x128x128xf32, #tpu.memory_space<vmem>>, vector<1x128x128xf32>
    %138 = vector.shape_cast %137 : vector<1x128x128xf32> to vector<128x128xf32>
    %cst_199 = arith.constant dense<0.000000e+00> : vector<16x128xf32>
    %139 = tpu.matmul %136, %138, %cst_199 {dimension_numbers = #tpu.dot_dimension_numbers<[1], [0], [0], [1], [0, 0, 1, 1], [], []>} : vector<16x128xf32>, vector<128x128xf32>, vector<16x128xf32> -> vector<16x128xf32>
    %140 = arith.addf %133, %139 : vector<16x128xf32>
    %c0_200 = arith.constant 0 : index
    %c0_201 = arith.constant 0 : index
    %c0_202 = arith.constant 0 : index
    %c0_203 = arith.constant 0 : index
    %c0_204 = arith.constant 0 : index
    %c1_205 = arith.constant 1 : index
    %c0_206 = arith.constant 0 : index
    %141 = vector.load %arg5[%c0_200, %c0_201, %c0_202, %c0_203, %c0_204, %c1_205, %c0_206] : memref<1x1x2x5x2x5x128xf32, #tpu.memory_space<vmem>>, vector<1x1x1x4x1x4x128xf32>
    %142 = vector.shape_cast %141 : vector<1x1x1x4x1x4x128xf32> to vector<4x4x128xf32>
    %143 = vector.shape_cast %142 : vector<4x4x128xf32> to vector<16x128xf32>
    %c20 = arith.constant 20 : index
    %c0_207 = arith.constant 0 : index
    %c0_208 = arith.constant 0 : index
    %144 = vector.load %arg6[%c20, %c0_207, %c0_208] : memref<27x128x128xf32, #tpu.memory_space<vmem>>, vector<1x128x128xf32>
    %145 = vector.shape_cast %144 : vector<1x128x128xf32> to vector<128x128xf32>
    %cst_209 = arith.constant dense<0.000000e+00> : vector<16x128xf32>
    %146 = tpu.matmul %143, %145, %cst_209 {dimension_numbers = #tpu.dot_dimension_numbers<[1], [0], [0], [1], [0, 0, 1, 1], [], []>} : vector<16x128xf32>, vector<128x128xf32>, vector<16x128xf32> -> vector<16x128xf32>
    %147 = arith.addf %140, %146 : vector<16x128xf32>
    %c0_210 = arith.constant 0 : index
    %c0_211 = arith.constant 0 : index
    %c1_212 = arith.constant 1 : index
    %c0_213 = arith.constant 0 : index
    %c0_214 = arith.constant 0 : index
    %c0_215 = arith.constant 0 : index
    %c0_216 = arith.constant 0 : index
    %148 = vector.load %arg5[%c0_210, %c0_211, %c1_212, %c0_213, %c0_214, %c0_215, %c0_216] : memref<1x1x2x5x2x5x128xf32, #tpu.memory_space<vmem>>, vector<1x1x1x4x1x4x128xf32>
    %149 = vector.shape_cast %148 : vector<1x1x1x4x1x4x128xf32> to vector<4x4x128xf32>
    %150 = vector.shape_cast %149 : vector<4x4x128xf32> to vector<16x128xf32>
    %c21 = arith.constant 21 : index
    %c0_217 = arith.constant 0 : index
    %c0_218 = arith.constant 0 : index
    %151 = vector.load %arg6[%c21, %c0_217, %c0_218] : memref<27x128x128xf32, #tpu.memory_space<vmem>>, vector<1x128x128xf32>
    %152 = vector.shape_cast %151 : vector<1x128x128xf32> to vector<128x128xf32>
    %cst_219 = arith.constant dense<0.000000e+00> : vector<16x128xf32>
    %153 = tpu.matmul %150, %152, %cst_219 {dimension_numbers = #tpu.dot_dimension_numbers<[1], [0], [0], [1], [0, 0, 1, 1], [], []>} : vector<16x128xf32>, vector<128x128xf32>, vector<16x128xf32> -> vector<16x128xf32>
    %154 = arith.addf %147, %153 : vector<16x128xf32>
    %c0_220 = arith.constant 0 : index
    %c0_221 = arith.constant 0 : index
    %c1_222 = arith.constant 1 : index
    %c0_223 = arith.constant 0 : index
    %c1_224 = arith.constant 1 : index
    %c0_225 = arith.constant 0 : index
    %c0_226 = arith.constant 0 : index
    %155 = vector.load %arg5[%c0_220, %c0_221, %c1_222, %c0_223, %c1_224, %c0_225, %c0_226] : memref<1x1x2x5x2x5x128xf32, #tpu.memory_space<vmem>>, vector<1x1x1x4x1x4x128xf32>
    %156 = vector.shape_cast %155 : vector<1x1x1x4x1x4x128xf32> to vector<4x4x128xf32>
    %157 = vector.shape_cast %156 : vector<4x4x128xf32> to vector<16x128xf32>
    %c22 = arith.constant 22 : index
    %c0_227 = arith.constant 0 : index
    %c0_228 = arith.constant 0 : index
    %158 = vector.load %arg6[%c22, %c0_227, %c0_228] : memref<27x128x128xf32, #tpu.memory_space<vmem>>, vector<1x128x128xf32>
    %159 = vector.shape_cast %158 : vector<1x128x128xf32> to vector<128x128xf32>
    %cst_229 = arith.constant dense<0.000000e+00> : vector<16x128xf32>
    %160 = tpu.matmul %157, %159, %cst_229 {dimension_numbers = #tpu.dot_dimension_numbers<[1], [0], [0], [1], [0, 0, 1, 1], [], []>} : vector<16x128xf32>, vector<128x128xf32>, vector<16x128xf32> -> vector<16x128xf32>
    %161 = arith.addf %154, %160 : vector<16x128xf32>
    %c0_230 = arith.constant 0 : index
    %c0_231 = arith.constant 0 : index
    %c1_232 = arith.constant 1 : index
    %c0_233 = arith.constant 0 : index
    %c0_234 = arith.constant 0 : index
    %c1_235 = arith.constant 1 : index
    %c0_236 = arith.constant 0 : index
    %162 = vector.load %arg5[%c0_230, %c0_231, %c1_232, %c0_233, %c0_234, %c1_235, %c0_236] : memref<1x1x2x5x2x5x128xf32, #tpu.memory_space<vmem>>, vector<1x1x1x4x1x4x128xf32>
    %163 = vector.shape_cast %162 : vector<1x1x1x4x1x4x128xf32> to vector<4x4x128xf32>
    %164 = vector.shape_cast %163 : vector<4x4x128xf32> to vector<16x128xf32>
    %c23 = arith.constant 23 : index
    %c0_237 = arith.constant 0 : index
    %c0_238 = arith.constant 0 : index
    %165 = vector.load %arg6[%c23, %c0_237, %c0_238] : memref<27x128x128xf32, #tpu.memory_space<vmem>>, vector<1x128x128xf32>
    %166 = vector.shape_cast %165 : vector<1x128x128xf32> to vector<128x128xf32>
    %cst_239 = arith.constant dense<0.000000e+00> : vector<16x128xf32>
    %167 = tpu.matmul %164, %166, %cst_239 {dimension_numbers = #tpu.dot_dimension_numbers<[1], [0], [0], [1], [0, 0, 1, 1], [], []>} : vector<16x128xf32>, vector<128x128xf32>, vector<16x128xf32> -> vector<16x128xf32>
    %168 = arith.addf %161, %167 : vector<16x128xf32>
    %c0_240 = arith.constant 0 : index
    %c0_241 = arith.constant 0 : index
    %c0_242 = arith.constant 0 : index
    %c1_243 = arith.constant 1 : index
    %c0_244 = arith.constant 0 : index
    %c0_245 = arith.constant 0 : index
    %c0_246 = arith.constant 0 : index
    %169 = vector.load %arg5[%c0_240, %c0_241, %c0_242, %c1_243, %c0_244, %c0_245, %c0_246] : memref<1x1x2x5x2x5x128xf32, #tpu.memory_space<vmem>>, vector<1x1x1x4x1x4x128xf32>
    %170 = vector.shape_cast %169 : vector<1x1x1x4x1x4x128xf32> to vector<4x4x128xf32>
    %171 = vector.shape_cast %170 : vector<4x4x128xf32> to vector<16x128xf32>
    %c24 = arith.constant 24 : index
    %c0_247 = arith.constant 0 : index
    %c0_248 = arith.constant 0 : index
    %172 = vector.load %arg6[%c24, %c0_247, %c0_248] : memref<27x128x128xf32, #tpu.memory_space<vmem>>, vector<1x128x128xf32>
    %173 = vector.shape_cast %172 : vector<1x128x128xf32> to vector<128x128xf32>
    %cst_249 = arith.constant dense<0.000000e+00> : vector<16x128xf32>
    %174 = tpu.matmul %171, %173, %cst_249 {dimension_numbers = #tpu.dot_dimension_numbers<[1], [0], [0], [1], [0, 0, 1, 1], [], []>} : vector<16x128xf32>, vector<128x128xf32>, vector<16x128xf32> -> vector<16x128xf32>
    %175 = arith.addf %168, %174 : vector<16x128xf32>
    %c0_250 = arith.constant 0 : index
    %c0_251 = arith.constant 0 : index
    %c0_252 = arith.constant 0 : index
    %c1_253 = arith.constant 1 : index
    %c1_254 = arith.constant 1 : index
    %c0_255 = arith.constant 0 : index
    %c0_256 = arith.constant 0 : index
    %176 = vector.load %arg5[%c0_250, %c0_251, %c0_252, %c1_253, %c1_254, %c0_255, %c0_256] : memref<1x1x2x5x2x5x128xf32, #tpu.memory_space<vmem>>, vector<1x1x1x4x1x4x128xf32>
    %177 = vector.shape_cast %176 : vector<1x1x1x4x1x4x128xf32> to vector<4x4x128xf32>
    %178 = vector.shape_cast %177 : vector<4x4x128xf32> to vector<16x128xf32>
    %c25 = arith.constant 25 : index
    %c0_257 = arith.constant 0 : index
    %c0_258 = arith.constant 0 : index
    %179 = vector.load %arg6[%c25, %c0_257, %c0_258] : memref<27x128x128xf32, #tpu.memory_space<vmem>>, vector<1x128x128xf32>
    %180 = vector.shape_cast %179 : vector<1x128x128xf32> to vector<128x128xf32>
    %cst_259 = arith.constant dense<0.000000e+00> : vector<16x128xf32>
    %181 = tpu.matmul %178, %180, %cst_259 {dimension_numbers = #tpu.dot_dimension_numbers<[1], [0], [0], [1], [0, 0, 1, 1], [], []>} : vector<16x128xf32>, vector<128x128xf32>, vector<16x128xf32> -> vector<16x128xf32>
    %182 = arith.addf %175, %181 : vector<16x128xf32>
    %c0_260 = arith.constant 0 : index
    %c0_261 = arith.constant 0 : index
    %c0_262 = arith.constant 0 : index
    %c1_263 = arith.constant 1 : index
    %c0_264 = arith.constant 0 : index
    %c1_265 = arith.constant 1 : index
    %c0_266 = arith.constant 0 : index
    %183 = vector.load %arg5[%c0_260, %c0_261, %c0_262, %c1_263, %c0_264, %c1_265, %c0_266] : memref<1x1x2x5x2x5x128xf32, #tpu.memory_space<vmem>>, vector<1x1x1x4x1x4x128xf32>
    %184 = vector.shape_cast %183 : vector<1x1x1x4x1x4x128xf32> to vector<4x4x128xf32>
    %185 = vector.shape_cast %184 : vector<4x4x128xf32> to vector<16x128xf32>
    %c26 = arith.constant 26 : index
    %c0_267 = arith.constant 0 : index
    %c0_268 = arith.constant 0 : index
    %186 = vector.load %arg6[%c26, %c0_267, %c0_268] : memref<27x128x128xf32, #tpu.memory_space<vmem>>, vector<1x128x128xf32>
    %187 = vector.shape_cast %186 : vector<1x128x128xf32> to vector<128x128xf32>
    %cst_269 = arith.constant dense<0.000000e+00> : vector<16x128xf32>
    %188 = tpu.matmul %185, %187, %cst_269 {dimension_numbers = #tpu.dot_dimension_numbers<[1], [0], [0], [1], [0, 0, 1, 1], [], []>} : vector<16x128xf32>, vector<128x128xf32>, vector<16x128xf32> -> vector<16x128xf32>
    %189 = arith.addf %182, %188 : vector<16x128xf32>
    %c0_270 = arith.constant 0 : index
    %c0_271 = arith.constant 0 : index
    %190 = vector.load %arg7[%c0_270, %c0_271] : memref<1x128xf32, #tpu.memory_space<vmem>>, vector<1x128xf32>
    %191 = vector.broadcast %190 : vector<1x128xf32> to vector<16x128xf32>
    %192 = arith.mulf %189, %191 : vector<16x128xf32>
    %c0_272 = arith.constant 0 : index
    %c0_273 = arith.constant 0 : index
    %193 = vector.load %arg8[%c0_272, %c0_273] : memref<1x128xf32, #tpu.memory_space<vmem>>, vector<1x128xf32>
    %194 = vector.broadcast %193 : vector<1x128xf32> to vector<16x128xf32>
    %195 = arith.addf %192, %194 : vector<16x128xf32>
    %cst_274 = arith.constant 0.000000e+00 : f32
    %196 = vector.broadcast %cst_274 : f32 to vector<16x128xf32>
    %197 = arith.maximumf %195, %196 : vector<16x128xf32>
    %c0_275 = arith.constant 0 : index
    %c0_276 = arith.constant 0 : index
    %c0_277 = arith.constant 0 : index
    %c0_278 = arith.constant 0 : index
    %198 = vector.load %arg9[%c0_275, %c0_276, %c0_277, %c0_278] : memref<1x1x16x128xf32, #tpu.memory_space<vmem>>, vector<1x1x16x128xf32>
    %199 = vector.shape_cast %198 : vector<1x1x16x128xf32> to vector<16x128xf32>
    %200 = vector.shape_cast %197 : vector<16x128xf32> to vector<1x1x16x128xf32>
    tpu.vector_store %arg9[%c0_275, %c0_276, %c0_277, %c0_278], %200 {strides = array<i32>} : memref<1x1x16x128xf32, #tpu.memory_space<vmem>>, vector<1x1x16x128xf32>,
    return
  }
  func.func @transform_0(%arg0: i32, %arg1: i32, %arg2: i32) -> (i32, i32, i32, i32, i32, i32, i32) {
    %c2_i32 = arith.constant 2 : i32
    %0 = arith.muli %arg2, %c2_i32 : i32
    %c0_i32 = arith.constant 0 : i32
    %1 = arith.addi %0, %c0_i32 : i32
    %c0_i32_0 = arith.constant 0 : i32
    %c0_i32_1 = arith.constant 0 : i32
    %c0_i32_2 = arith.constant 0 : i32
    %c0_i32_3 = arith.constant 0 : i32
    %c0_i32_4 = arith.constant 0 : i32
    %c0_i32_5 = arith.constant 0 : i32
    return %arg0, %1, %c0_i32_0, %c0_i32_1, %c0_i32_2, %c0_i32_3, %c0_i32_4 : i32, i32, i32, i32, i32, i32, i32
  }
  func.func @transform_1(%arg0: i32, %arg1: i32, %arg2: i32) -> (i32, i32, i32, i32, i32, i32, i32) {
    %c2_i32 = arith.constant 2 : i32
    %0 = arith.muli %arg2, %c2_i32 : i32
    %c1_i32 = arith.constant 1 : i32
    %1 = arith.addi %0, %c1_i32 : i32
    %c0_i32 = arith.constant 0 : i32
    %c0_i32_0 = arith.constant 0 : i32
    %c0_i32_1 = arith.constant 0 : i32
    %c0_i32_2 = arith.constant 0 : i32
    %c0_i32_3 = arith.constant 0 : i32
    %c0_i32_4 = arith.constant 0 : i32
    return %arg0, %1, %c0_i32, %c0_i32_0, %c0_i32_1, %c0_i32_2, %c0_i32_3 : i32, i32, i32, i32, i32, i32, i32
  }
  func.func @transform_2(%arg0: i32, %arg1: i32, %arg2: i32) -> (i32, i32, i32, i32, i32, i32, i32) {
    %c2_i32 = arith.constant 2 : i32
    %0 = arith.muli %arg2, %c2_i32 : i32
    %c2_i32_0 = arith.constant 2 : i32
    %1 = arith.addi %0, %c2_i32_0 : i32
    %c0_i32 = arith.constant 0 : i32
    %c0_i32_1 = arith.constant 0 : i32
    %c0_i32_2 = arith.constant 0 : i32
    %c0_i32_3 = arith.constant 0 : i32
    %c0_i32_4 = arith.constant 0 : i32
    %c0_i32_5 = arith.constant 0 : i32
    return %arg0, %1, %c0_i32, %c0_i32_1, %c0_i32_2, %c0_i32_3, %c0_i32_4 : i32, i32, i32, i32, i32, i32, i32
  }
  func.func @transform_3(%arg0: i32, %arg1: i32, %arg2: i32) -> (i32, i32, i32) {
    %c0_i32 = arith.constant 0 : i32
    %c0_i32_0 = arith.constant 0 : i32
    %c0_i32_1 = arith.constant 0 : i32
    return %c0_i32, %c0_i32_0, %arg1 : i32, i32, i32
  }
  func.func @transform_4(%arg0: i32, %arg1: i32, %arg2: i32) -> (i32, i32) {
    %c0_i32 = arith.constant 0 : i32
    %c0_i32_0 = arith.constant 0 : i32
    return %c0_i32, %arg1 : i32, i32
  }
  func.func @transform_5(%arg0: i32, %arg1: i32, %arg2: i32) -> (i32, i32) {
    %c0_i32 = arith.constant 0 : i32
    %c0_i32_0 = arith.constant 0 : i32
    return %c0_i32, %arg1 : i32, i32
  }
  func.func @transform_6(%arg0: i32, %arg1: i32, %arg2: i32) -> (i32, i32, i32, i32) {
    %c0_i32 = arith.constant 0 : i32
    %c0_i32_0 = arith.constant 0 : i32
    return %arg0, %arg2, %c0_i32, %arg1 : i32, i32, i32, i32
  }
}

module attributes {stable_mosaic.version = 11 : i64} {
  func.func @_conv_bn_res_conv_kernel(%arg0: i32, %arg1: i32, %arg2: i32, %arg3: memref<1x1x1x6x1x6x128xf32, #tpu.memory_space<vmem>>, %arg4: memref<1x1x1x6x1x6x128xf32, #tpu.memory_space<vmem>>, %arg5: memref<1x1x1x6x1x6x128xf32, #tpu.memory_space<vmem>>, %arg6: memref<27x128x128xf32, #tpu.memory_space<vmem>>, %arg7: memref<1x128xf32, #tpu.memory_space<vmem>>, %arg8: memref<1x128xf32, #tpu.memory_space<vmem>>, %arg9: memref<1x1x16x128xf32, #tpu.memory_space<vmem>>, %arg10: memref<128x128xf32, #tpu.memory_space<vmem>>, %arg11: memref<1x128xf32, #tpu.memory_space<vmem>>, %arg12: memref<1x128xf32, #tpu.memory_space<vmem>>, %arg13: memref<1x1x16x128xf32, #tpu.memory_space<vmem>>) attributes {dimension_semantics = [#tpu.dimension_semantics<parallel>, #tpu.dimension_semantics<parallel>, #tpu.dimension_semantics<parallel>], iteration_bounds = array<i64: 2, 1, 4>, scalar_prefetch = 0 : i64, scratch_operands = 0 : i64, tpu.core_type = #tpu.core_type<tc>, window_params = [{transform_indices = @transform_0, window_bounds = array<i64: 1, 1, 1, 6, 1, 6, 128>}, {transform_indices = @transform_1, window_bounds = array<i64: 1, 1, 1, 6, 1, 6, 128>}, {transform_indices = @transform_2, window_bounds = array<i64: 1, 1, 1, 6, 1, 6, 128>}, {transform_indices = @transform_3, window_bounds = array<i64: 27, 128, 128>}, {transform_indices = @transform_4, window_bounds = array<i64: 1, 128>}, {transform_indices = @transform_5, window_bounds = array<i64: 1, 128>}, {transform_indices = @transform_6, window_bounds = array<i64: 1, 1, 16, 128>}, {transform_indices = @transform_7, window_bounds = array<i64: 128, 128>}, {transform_indices = @transform_8, window_bounds = array<i64: 1, 128>}, {transform_indices = @transform_9, window_bounds = array<i64: 1, 128>}, {transform_indices = @transform_10, window_bounds = array<i64: 1, 1, 16, 128>}]} {
    %cst = arith.constant 0.000000e+00 : f32
    %0 = vector.broadcast %cst : f32 to vector<16x128xf32>
    %c0 = arith.constant 0 : index
    %c0_0 = arith.constant 0 : index
    %c0_1 = arith.constant 0 : index
    %c0_2 = arith.constant 0 : index
    %c0_3 = arith.constant 0 : index
    %c0_4 = arith.constant 0 : index
    %c0_5 = arith.constant 0 : index
    %1 = vector.load %arg3[%c0, %c0_0, %c0_1, %c0_2, %c0_3, %c0_4, %c0_5] : memref<1x1x1x6x1x6x128xf32, #tpu.memory_space<vmem>>, vector<1x1x1x4x1x4x128xf32>
    %2 = vector.shape_cast %1 : vector<1x1x1x4x1x4x128xf32> to vector<4x4x128xf32>
    %3 = vector.shape_cast %2 : vector<4x4x128xf32> to vector<16x128xf32>
    %c0_6 = arith.constant 0 : index
    %c0_7 = arith.constant 0 : index
    %c0_8 = arith.constant 0 : index
    %4 = vector.load %arg6[%c0_6, %c0_7, %c0_8] : memref<27x128x128xf32, #tpu.memory_space<vmem>>, vector<1x128x128xf32>
    %5 = vector.shape_cast %4 : vector<1x128x128xf32> to vector<128x128xf32>
    %cst_9 = arith.constant dense<0.000000e+00> : vector<16x128xf32>
    %6 = tpu.matmul %3, %5, %cst_9 {dimension_numbers = #tpu.dot_dimension_numbers<[1], [0], [0], [1], [0, 0, 1, 1], [], []>} : vector<16x128xf32>, vector<128x128xf32>, vector<16x128xf32> -> vector<16x128xf32>
    %7 = arith.addf %0, %6 : vector<16x128xf32>
    %c0_10 = arith.constant 0 : index
    %c0_11 = arith.constant 0 : index
    %c0_12 = arith.constant 0 : index
    %c0_13 = arith.constant 0 : index
    %c0_14 = arith.constant 0 : index
    %c1 = arith.constant 1 : index
    %c0_15 = arith.constant 0 : index
    %8 = vector.load %arg3[%c0_10, %c0_11, %c0_12, %c0_13, %c0_14, %c1, %c0_15] : memref<1x1x1x6x1x6x128xf32, #tpu.memory_space<vmem>>, vector<1x1x1x4x1x4x128xf32>
    %9 = vector.shape_cast %8 : vector<1x1x1x4x1x4x128xf32> to vector<4x4x128xf32>
    %10 = vector.shape_cast %9 : vector<4x4x128xf32> to vector<16x128xf32>
    %c1_16 = arith.constant 1 : index
    %c0_17 = arith.constant 0 : index
    %c0_18 = arith.constant 0 : index
    %11 = vector.load %arg6[%c1_16, %c0_17, %c0_18] : memref<27x128x128xf32, #tpu.memory_space<vmem>>, vector<1x128x128xf32>
    %12 = vector.shape_cast %11 : vector<1x128x128xf32> to vector<128x128xf32>
    %cst_19 = arith.constant dense<0.000000e+00> : vector<16x128xf32>
    %13 = tpu.matmul %10, %12, %cst_19 {dimension_numbers = #tpu.dot_dimension_numbers<[1], [0], [0], [1], [0, 0, 1, 1], [], []>} : vector<16x128xf32>, vector<128x128xf32>, vector<16x128xf32> -> vector<16x128xf32>
    %14 = arith.addf %7, %13 : vector<16x128xf32>
    %c0_20 = arith.constant 0 : index
    %c0_21 = arith.constant 0 : index
    %c0_22 = arith.constant 0 : index
    %c0_23 = arith.constant 0 : index
    %c0_24 = arith.constant 0 : index
    %c2 = arith.constant 2 : index
    %c0_25 = arith.constant 0 : index
    %15 = vector.load %arg3[%c0_20, %c0_21, %c0_22, %c0_23, %c0_24, %c2, %c0_25] : memref<1x1x1x6x1x6x128xf32, #tpu.memory_space<vmem>>, vector<1x1x1x4x1x4x128xf32>
    %16 = vector.shape_cast %15 : vector<1x1x1x4x1x4x128xf32> to vector<4x4x128xf32>
    %17 = vector.shape_cast %16 : vector<4x4x128xf32> to vector<16x128xf32>
    %c2_26 = arith.constant 2 : index
    %c0_27 = arith.constant 0 : index
    %c0_28 = arith.constant 0 : index
    %18 = vector.load %arg6[%c2_26, %c0_27, %c0_28] : memref<27x128x128xf32, #tpu.memory_space<vmem>>, vector<1x128x128xf32>
    %19 = vector.shape_cast %18 : vector<1x128x128xf32> to vector<128x128xf32>
    %cst_29 = arith.constant dense<0.000000e+00> : vector<16x128xf32>
    %20 = tpu.matmul %17, %19, %cst_29 {dimension_numbers = #tpu.dot_dimension_numbers<[1], [0], [0], [1], [0, 0, 1, 1], [], []>} : vector<16x128xf32>, vector<128x128xf32>, vector<16x128xf32> -> vector<16x128xf32>
    %21 = arith.addf %14, %20 : vector<16x128xf32>
    %c0_30 = arith.constant 0 : index
    %c0_31 = arith.constant 0 : index
    %c0_32 = arith.constant 0 : index
    %c1_33 = arith.constant 1 : index
    %c0_34 = arith.constant 0 : index
    %c0_35 = arith.constant 0 : index
    %c0_36 = arith.constant 0 : index
    %22 = vector.load %arg3[%c0_30, %c0_31, %c0_32, %c1_33, %c0_34, %c0_35, %c0_36] : memref<1x1x1x6x1x6x128xf32, #tpu.memory_space<vmem>>, vector<1x1x1x4x1x4x128xf32>
    %23 = vector.shape_cast %22 : vector<1x1x1x4x1x4x128xf32> to vector<4x4x128xf32>
    %24 = vector.shape_cast %23 : vector<4x4x128xf32> to vector<16x128xf32>
    %c3 = arith.constant 3 : index
    %c0_37 = arith.constant 0 : index
    %c0_38 = arith.constant 0 : index
    %25 = vector.load %arg6[%c3, %c0_37, %c0_38] : memref<27x128x128xf32, #tpu.memory_space<vmem>>, vector<1x128x128xf32>
    %26 = vector.shape_cast %25 : vector<1x128x128xf32> to vector<128x128xf32>
    %cst_39 = arith.constant dense<0.000000e+00> : vector<16x128xf32>
    %27 = tpu.matmul %24, %26, %cst_39 {dimension_numbers = #tpu.dot_dimension_numbers<[1], [0], [0], [1], [0, 0, 1, 1], [], []>} : vector<16x128xf32>, vector<128x128xf32>, vector<16x128xf32> -> vector<16x128xf32>
    %28 = arith.addf %21, %27 : vector<16x128xf32>
    %c0_40 = arith.constant 0 : index
    %c0_41 = arith.constant 0 : index
    %c0_42 = arith.constant 0 : index
    %c1_43 = arith.constant 1 : index
    %c0_44 = arith.constant 0 : index
    %c1_45 = arith.constant 1 : index
    %c0_46 = arith.constant 0 : index
    %29 = vector.load %arg3[%c0_40, %c0_41, %c0_42, %c1_43, %c0_44, %c1_45, %c0_46] : memref<1x1x1x6x1x6x128xf32, #tpu.memory_space<vmem>>, vector<1x1x1x4x1x4x128xf32>
    %30 = vector.shape_cast %29 : vector<1x1x1x4x1x4x128xf32> to vector<4x4x128xf32>
    %31 = vector.shape_cast %30 : vector<4x4x128xf32> to vector<16x128xf32>
    %c4 = arith.constant 4 : index
    %c0_47 = arith.constant 0 : index
    %c0_48 = arith.constant 0 : index
    %32 = vector.load %arg6[%c4, %c0_47, %c0_48] : memref<27x128x128xf32, #tpu.memory_space<vmem>>, vector<1x128x128xf32>
    %33 = vector.shape_cast %32 : vector<1x128x128xf32> to vector<128x128xf32>
    %cst_49 = arith.constant dense<0.000000e+00> : vector<16x128xf32>
    %34 = tpu.matmul %31, %33, %cst_49 {dimension_numbers = #tpu.dot_dimension_numbers<[1], [0], [0], [1], [0, 0, 1, 1], [], []>} : vector<16x128xf32>, vector<128x128xf32>, vector<16x128xf32> -> vector<16x128xf32>
    %35 = arith.addf %28, %34 : vector<16x128xf32>
    %c0_50 = arith.constant 0 : index
    %c0_51 = arith.constant 0 : index
    %c0_52 = arith.constant 0 : index
    %c1_53 = arith.constant 1 : index
    %c0_54 = arith.constant 0 : index
    %c2_55 = arith.constant 2 : index
    %c0_56 = arith.constant 0 : index
    %36 = vector.load %arg3[%c0_50, %c0_51, %c0_52, %c1_53, %c0_54, %c2_55, %c0_56] : memref<1x1x1x6x1x6x128xf32, #tpu.memory_space<vmem>>, vector<1x1x1x4x1x4x128xf32>
    %37 = vector.shape_cast %36 : vector<1x1x1x4x1x4x128xf32> to vector<4x4x128xf32>
    %38 = vector.shape_cast %37 : vector<4x4x128xf32> to vector<16x128xf32>
    %c5 = arith.constant 5 : index
    %c0_57 = arith.constant 0 : index
    %c0_58 = arith.constant 0 : index
    %39 = vector.load %arg6[%c5, %c0_57, %c0_58] : memref<27x128x128xf32, #tpu.memory_space<vmem>>, vector<1x128x128xf32>
    %40 = vector.shape_cast %39 : vector<1x128x128xf32> to vector<128x128xf32>
    %cst_59 = arith.constant dense<0.000000e+00> : vector<16x128xf32>
    %41 = tpu.matmul %38, %40, %cst_59 {dimension_numbers = #tpu.dot_dimension_numbers<[1], [0], [0], [1], [0, 0, 1, 1], [], []>} : vector<16x128xf32>, vector<128x128xf32>, vector<16x128xf32> -> vector<16x128xf32>
    %42 = arith.addf %35, %41 : vector<16x128xf32>
    %c0_60 = arith.constant 0 : index
    %c0_61 = arith.constant 0 : index
    %c0_62 = arith.constant 0 : index
    %c2_63 = arith.constant 2 : index
    %c0_64 = arith.constant 0 : index
    %c0_65 = arith.constant 0 : index
    %c0_66 = arith.constant 0 : index
    %43 = vector.load %arg3[%c0_60, %c0_61, %c0_62, %c2_63, %c0_64, %c0_65, %c0_66] : memref<1x1x1x6x1x6x128xf32, #tpu.memory_space<vmem>>, vector<1x1x1x4x1x4x128xf32>
    %44 = vector.shape_cast %43 : vector<1x1x1x4x1x4x128xf32> to vector<4x4x128xf32>
    %45 = vector.shape_cast %44 : vector<4x4x128xf32> to vector<16x128xf32>
    %c6 = arith.constant 6 : index
    %c0_67 = arith.constant 0 : index
    %c0_68 = arith.constant 0 : index
    %46 = vector.load %arg6[%c6, %c0_67, %c0_68] : memref<27x128x128xf32, #tpu.memory_space<vmem>>, vector<1x128x128xf32>
    %47 = vector.shape_cast %46 : vector<1x128x128xf32> to vector<128x128xf32>
    %cst_69 = arith.constant dense<0.000000e+00> : vector<16x128xf32>
    %48 = tpu.matmul %45, %47, %cst_69 {dimension_numbers = #tpu.dot_dimension_numbers<[1], [0], [0], [1], [0, 0, 1, 1], [], []>} : vector<16x128xf32>, vector<128x128xf32>, vector<16x128xf32> -> vector<16x128xf32>
    %49 = arith.addf %42, %48 : vector<16x128xf32>
    %c0_70 = arith.constant 0 : index
    %c0_71 = arith.constant 0 : index
    %c0_72 = arith.constant 0 : index
    %c2_73 = arith.constant 2 : index
    %c0_74 = arith.constant 0 : index
    %c1_75 = arith.constant 1 : index
    %c0_76 = arith.constant 0 : index
    %50 = vector.load %arg3[%c0_70, %c0_71, %c0_72, %c2_73, %c0_74, %c1_75, %c0_76] : memref<1x1x1x6x1x6x128xf32, #tpu.memory_space<vmem>>, vector<1x1x1x4x1x4x128xf32>
    %51 = vector.shape_cast %50 : vector<1x1x1x4x1x4x128xf32> to vector<4x4x128xf32>
    %52 = vector.shape_cast %51 : vector<4x4x128xf32> to vector<16x128xf32>
    %c7 = arith.constant 7 : index
    %c0_77 = arith.constant 0 : index
    %c0_78 = arith.constant 0 : index
    %53 = vector.load %arg6[%c7, %c0_77, %c0_78] : memref<27x128x128xf32, #tpu.memory_space<vmem>>, vector<1x128x128xf32>
    %54 = vector.shape_cast %53 : vector<1x128x128xf32> to vector<128x128xf32>
    %cst_79 = arith.constant dense<0.000000e+00> : vector<16x128xf32>
    %55 = tpu.matmul %52, %54, %cst_79 {dimension_numbers = #tpu.dot_dimension_numbers<[1], [0], [0], [1], [0, 0, 1, 1], [], []>} : vector<16x128xf32>, vector<128x128xf32>, vector<16x128xf32> -> vector<16x128xf32>
    %56 = arith.addf %49, %55 : vector<16x128xf32>
    %c0_80 = arith.constant 0 : index
    %c0_81 = arith.constant 0 : index
    %c0_82 = arith.constant 0 : index
    %c2_83 = arith.constant 2 : index
    %c0_84 = arith.constant 0 : index
    %c2_85 = arith.constant 2 : index
    %c0_86 = arith.constant 0 : index
    %57 = vector.load %arg3[%c0_80, %c0_81, %c0_82, %c2_83, %c0_84, %c2_85, %c0_86] : memref<1x1x1x6x1x6x128xf32, #tpu.memory_space<vmem>>, vector<1x1x1x4x1x4x128xf32>
    %58 = vector.shape_cast %57 : vector<1x1x1x4x1x4x128xf32> to vector<4x4x128xf32>
    %59 = vector.shape_cast %58 : vector<4x4x128xf32> to vector<16x128xf32>
    %c8 = arith.constant 8 : index
    %c0_87 = arith.constant 0 : index
    %c0_88 = arith.constant 0 : index
    %60 = vector.load %arg6[%c8, %c0_87, %c0_88] : memref<27x128x128xf32, #tpu.memory_space<vmem>>, vector<1x128x128xf32>
    %61 = vector.shape_cast %60 : vector<1x128x128xf32> to vector<128x128xf32>
    %cst_89 = arith.constant dense<0.000000e+00> : vector<16x128xf32>
    %62 = tpu.matmul %59, %61, %cst_89 {dimension_numbers = #tpu.dot_dimension_numbers<[1], [0], [0], [1], [0, 0, 1, 1], [], []>} : vector<16x128xf32>, vector<128x128xf32>, vector<16x128xf32> -> vector<16x128xf32>
    %63 = arith.addf %56, %62 : vector<16x128xf32>
    %c0_90 = arith.constant 0 : index
    %c0_91 = arith.constant 0 : index
    %c0_92 = arith.constant 0 : index
    %c0_93 = arith.constant 0 : index
    %c0_94 = arith.constant 0 : index
    %c0_95 = arith.constant 0 : index
    %c0_96 = arith.constant 0 : index
    %64 = vector.load %arg4[%c0_90, %c0_91, %c0_92, %c0_93, %c0_94, %c0_95, %c0_96] : memref<1x1x1x6x1x6x128xf32, #tpu.memory_space<vmem>>, vector<1x1x1x4x1x4x128xf32>
    %65 = vector.shape_cast %64 : vector<1x1x1x4x1x4x128xf32> to vector<4x4x128xf32>
    %66 = vector.shape_cast %65 : vector<4x4x128xf32> to vector<16x128xf32>
    %c9 = arith.constant 9 : index
    %c0_97 = arith.constant 0 : index
    %c0_98 = arith.constant 0 : index
    %67 = vector.load %arg6[%c9, %c0_97, %c0_98] : memref<27x128x128xf32, #tpu.memory_space<vmem>>, vector<1x128x128xf32>
    %68 = vector.shape_cast %67 : vector<1x128x128xf32> to vector<128x128xf32>
    %cst_99 = arith.constant dense<0.000000e+00> : vector<16x128xf32>
    %69 = tpu.matmul %66, %68, %cst_99 {dimension_numbers = #tpu.dot_dimension_numbers<[1], [0], [0], [1], [0, 0, 1, 1], [], []>} : vector<16x128xf32>, vector<128x128xf32>, vector<16x128xf32> -> vector<16x128xf32>
    %70 = arith.addf %63, %69 : vector<16x128xf32>
    %c0_100 = arith.constant 0 : index
    %c0_101 = arith.constant 0 : index
    %c0_102 = arith.constant 0 : index
    %c0_103 = arith.constant 0 : index
    %c0_104 = arith.constant 0 : index
    %c1_105 = arith.constant 1 : index
    %c0_106 = arith.constant 0 : index
    %71 = vector.load %arg4[%c0_100, %c0_101, %c0_102, %c0_103, %c0_104, %c1_105, %c0_106] : memref<1x1x1x6x1x6x128xf32, #tpu.memory_space<vmem>>, vector<1x1x1x4x1x4x128xf32>
    %72 = vector.shape_cast %71 : vector<1x1x1x4x1x4x128xf32> to vector<4x4x128xf32>
    %73 = vector.shape_cast %72 : vector<4x4x128xf32> to vector<16x128xf32>
    %c10 = arith.constant 10 : index
    %c0_107 = arith.constant 0 : index
    %c0_108 = arith.constant 0 : index
    %74 = vector.load %arg6[%c10, %c0_107, %c0_108] : memref<27x128x128xf32, #tpu.memory_space<vmem>>, vector<1x128x128xf32>
    %75 = vector.shape_cast %74 : vector<1x128x128xf32> to vector<128x128xf32>
    %cst_109 = arith.constant dense<0.000000e+00> : vector<16x128xf32>
    %76 = tpu.matmul %73, %75, %cst_109 {dimension_numbers = #tpu.dot_dimension_numbers<[1], [0], [0], [1], [0, 0, 1, 1], [], []>} : vector<16x128xf32>, vector<128x128xf32>, vector<16x128xf32> -> vector<16x128xf32>
    %77 = arith.addf %70, %76 : vector<16x128xf32>
    %c0_110 = arith.constant 0 : index
    %c0_111 = arith.constant 0 : index
    %c0_112 = arith.constant 0 : index
    %c0_113 = arith.constant 0 : index
    %c0_114 = arith.constant 0 : index
    %c2_115 = arith.constant 2 : index
    %c0_116 = arith.constant 0 : index
    %78 = vector.load %arg4[%c0_110, %c0_111, %c0_112, %c0_113, %c0_114, %c2_115, %c0_116] : memref<1x1x1x6x1x6x128xf32, #tpu.memory_space<vmem>>, vector<1x1x1x4x1x4x128xf32>
    %79 = vector.shape_cast %78 : vector<1x1x1x4x1x4x128xf32> to vector<4x4x128xf32>
    %80 = vector.shape_cast %79 : vector<4x4x128xf32> to vector<16x128xf32>
    %c11 = arith.constant 11 : index
    %c0_117 = arith.constant 0 : index
    %c0_118 = arith.constant 0 : index
    %81 = vector.load %arg6[%c11, %c0_117, %c0_118] : memref<27x128x128xf32, #tpu.memory_space<vmem>>, vector<1x128x128xf32>
    %82 = vector.shape_cast %81 : vector<1x128x128xf32> to vector<128x128xf32>
    %cst_119 = arith.constant dense<0.000000e+00> : vector<16x128xf32>
    %83 = tpu.matmul %80, %82, %cst_119 {dimension_numbers = #tpu.dot_dimension_numbers<[1], [0], [0], [1], [0, 0, 1, 1], [], []>} : vector<16x128xf32>, vector<128x128xf32>, vector<16x128xf32> -> vector<16x128xf32>
    %84 = arith.addf %77, %83 : vector<16x128xf32>
    %c0_120 = arith.constant 0 : index
    %c0_121 = arith.constant 0 : index
    %c0_122 = arith.constant 0 : index
    %c1_123 = arith.constant 1 : index
    %c0_124 = arith.constant 0 : index
    %c0_125 = arith.constant 0 : index
    %c0_126 = arith.constant 0 : index
    %85 = vector.load %arg4[%c0_120, %c0_121, %c0_122, %c1_123, %c0_124, %c0_125, %c0_126] : memref<1x1x1x6x1x6x128xf32, #tpu.memory_space<vmem>>, vector<1x1x1x4x1x4x128xf32>
    %86 = vector.shape_cast %85 : vector<1x1x1x4x1x4x128xf32> to vector<4x4x128xf32>
    %87 = vector.shape_cast %86 : vector<4x4x128xf32> to vector<16x128xf32>
    %c12 = arith.constant 12 : index
    %c0_127 = arith.constant 0 : index
    %c0_128 = arith.constant 0 : index
    %88 = vector.load %arg6[%c12, %c0_127, %c0_128] : memref<27x128x128xf32, #tpu.memory_space<vmem>>, vector<1x128x128xf32>
    %89 = vector.shape_cast %88 : vector<1x128x128xf32> to vector<128x128xf32>
    %cst_129 = arith.constant dense<0.000000e+00> : vector<16x128xf32>
    %90 = tpu.matmul %87, %89, %cst_129 {dimension_numbers = #tpu.dot_dimension_numbers<[1], [0], [0], [1], [0, 0, 1, 1], [], []>} : vector<16x128xf32>, vector<128x128xf32>, vector<16x128xf32> -> vector<16x128xf32>
    %91 = arith.addf %84, %90 : vector<16x128xf32>
    %c0_130 = arith.constant 0 : index
    %c0_131 = arith.constant 0 : index
    %c0_132 = arith.constant 0 : index
    %c1_133 = arith.constant 1 : index
    %c0_134 = arith.constant 0 : index
    %c1_135 = arith.constant 1 : index
    %c0_136 = arith.constant 0 : index
    %92 = vector.load %arg4[%c0_130, %c0_131, %c0_132, %c1_133, %c0_134, %c1_135, %c0_136] : memref<1x1x1x6x1x6x128xf32, #tpu.memory_space<vmem>>, vector<1x1x1x4x1x4x128xf32>
    %93 = vector.shape_cast %92 : vector<1x1x1x4x1x4x128xf32> to vector<4x4x128xf32>
    %94 = vector.shape_cast %93 : vector<4x4x128xf32> to vector<16x128xf32>
    %c13 = arith.constant 13 : index
    %c0_137 = arith.constant 0 : index
    %c0_138 = arith.constant 0 : index
    %95 = vector.load %arg6[%c13, %c0_137, %c0_138] : memref<27x128x128xf32, #tpu.memory_space<vmem>>, vector<1x128x128xf32>
    %96 = vector.shape_cast %95 : vector<1x128x128xf32> to vector<128x128xf32>
    %cst_139 = arith.constant dense<0.000000e+00> : vector<16x128xf32>
    %97 = tpu.matmul %94, %96, %cst_139 {dimension_numbers = #tpu.dot_dimension_numbers<[1], [0], [0], [1], [0, 0, 1, 1], [], []>} : vector<16x128xf32>, vector<128x128xf32>, vector<16x128xf32> -> vector<16x128xf32>
    %98 = arith.addf %91, %97 : vector<16x128xf32>
    %c0_140 = arith.constant 0 : index
    %c0_141 = arith.constant 0 : index
    %c0_142 = arith.constant 0 : index
    %c1_143 = arith.constant 1 : index
    %c0_144 = arith.constant 0 : index
    %c2_145 = arith.constant 2 : index
    %c0_146 = arith.constant 0 : index
    %99 = vector.load %arg4[%c0_140, %c0_141, %c0_142, %c1_143, %c0_144, %c2_145, %c0_146] : memref<1x1x1x6x1x6x128xf32, #tpu.memory_space<vmem>>, vector<1x1x1x4x1x4x128xf32>
    %100 = vector.shape_cast %99 : vector<1x1x1x4x1x4x128xf32> to vector<4x4x128xf32>
    %101 = vector.shape_cast %100 : vector<4x4x128xf32> to vector<16x128xf32>
    %c14 = arith.constant 14 : index
    %c0_147 = arith.constant 0 : index
    %c0_148 = arith.constant 0 : index
    %102 = vector.load %arg6[%c14, %c0_147, %c0_148] : memref<27x128x128xf32, #tpu.memory_space<vmem>>, vector<1x128x128xf32>
    %103 = vector.shape_cast %102 : vector<1x128x128xf32> to vector<128x128xf32>
    %cst_149 = arith.constant dense<0.000000e+00> : vector<16x128xf32>
    %104 = tpu.matmul %101, %103, %cst_149 {dimension_numbers = #tpu.dot_dimension_numbers<[1], [0], [0], [1], [0, 0, 1, 1], [], []>} : vector<16x128xf32>, vector<128x128xf32>, vector<16x128xf32> -> vector<16x128xf32>
    %105 = arith.addf %98, %104 : vector<16x128xf32>
    %c0_150 = arith.constant 0 : index
    %c0_151 = arith.constant 0 : index
    %c0_152 = arith.constant 0 : index
    %c2_153 = arith.constant 2 : index
    %c0_154 = arith.constant 0 : index
    %c0_155 = arith.constant 0 : index
    %c0_156 = arith.constant 0 : index
    %106 = vector.load %arg4[%c0_150, %c0_151, %c0_152, %c2_153, %c0_154, %c0_155, %c0_156] : memref<1x1x1x6x1x6x128xf32, #tpu.memory_space<vmem>>, vector<1x1x1x4x1x4x128xf32>
    %107 = vector.shape_cast %106 : vector<1x1x1x4x1x4x128xf32> to vector<4x4x128xf32>
    %108 = vector.shape_cast %107 : vector<4x4x128xf32> to vector<16x128xf32>
    %c15 = arith.constant 15 : index
    %c0_157 = arith.constant 0 : index
    %c0_158 = arith.constant 0 : index
    %109 = vector.load %arg6[%c15, %c0_157, %c0_158] : memref<27x128x128xf32, #tpu.memory_space<vmem>>, vector<1x128x128xf32>
    %110 = vector.shape_cast %109 : vector<1x128x128xf32> to vector<128x128xf32>
    %cst_159 = arith.constant dense<0.000000e+00> : vector<16x128xf32>
    %111 = tpu.matmul %108, %110, %cst_159 {dimension_numbers = #tpu.dot_dimension_numbers<[1], [0], [0], [1], [0, 0, 1, 1], [], []>} : vector<16x128xf32>, vector<128x128xf32>, vector<16x128xf32> -> vector<16x128xf32>
    %112 = arith.addf %105, %111 : vector<16x128xf32>
    %c0_160 = arith.constant 0 : index
    %c0_161 = arith.constant 0 : index
    %c0_162 = arith.constant 0 : index
    %c2_163 = arith.constant 2 : index
    %c0_164 = arith.constant 0 : index
    %c1_165 = arith.constant 1 : index
    %c0_166 = arith.constant 0 : index
    %113 = vector.load %arg4[%c0_160, %c0_161, %c0_162, %c2_163, %c0_164, %c1_165, %c0_166] : memref<1x1x1x6x1x6x128xf32, #tpu.memory_space<vmem>>, vector<1x1x1x4x1x4x128xf32>
    %114 = vector.shape_cast %113 : vector<1x1x1x4x1x4x128xf32> to vector<4x4x128xf32>
    %115 = vector.shape_cast %114 : vector<4x4x128xf32> to vector<16x128xf32>
    %c16 = arith.constant 16 : index
    %c0_167 = arith.constant 0 : index
    %c0_168 = arith.constant 0 : index
    %116 = vector.load %arg6[%c16, %c0_167, %c0_168] : memref<27x128x128xf32, #tpu.memory_space<vmem>>, vector<1x128x128xf32>
    %117 = vector.shape_cast %116 : vector<1x128x128xf32> to vector<128x128xf32>
    %cst_169 = arith.constant dense<0.000000e+00> : vector<16x128xf32>
    %118 = tpu.matmul %115, %117, %cst_169 {dimension_numbers = #tpu.dot_dimension_numbers<[1], [0], [0], [1], [0, 0, 1, 1], [], []>} : vector<16x128xf32>, vector<128x128xf32>, vector<16x128xf32> -> vector<16x128xf32>
    %119 = arith.addf %112, %118 : vector<16x128xf32>
    %c0_170 = arith.constant 0 : index
    %c0_171 = arith.constant 0 : index
    %c0_172 = arith.constant 0 : index
    %c2_173 = arith.constant 2 : index
    %c0_174 = arith.constant 0 : index
    %c2_175 = arith.constant 2 : index
    %c0_176 = arith.constant 0 : index
    %120 = vector.load %arg4[%c0_170, %c0_171, %c0_172, %c2_173, %c0_174, %c2_175, %c0_176] : memref<1x1x1x6x1x6x128xf32, #tpu.memory_space<vmem>>, vector<1x1x1x4x1x4x128xf32>
    %121 = vector.shape_cast %120 : vector<1x1x1x4x1x4x128xf32> to vector<4x4x128xf32>
    %122 = vector.shape_cast %121 : vector<4x4x128xf32> to vector<16x128xf32>
    %c17 = arith.constant 17 : index
    %c0_177 = arith.constant 0 : index
    %c0_178 = arith.constant 0 : index
    %123 = vector.load %arg6[%c17, %c0_177, %c0_178] : memref<27x128x128xf32, #tpu.memory_space<vmem>>, vector<1x128x128xf32>
    %124 = vector.shape_cast %123 : vector<1x128x128xf32> to vector<128x128xf32>
    %cst_179 = arith.constant dense<0.000000e+00> : vector<16x128xf32>
    %125 = tpu.matmul %122, %124, %cst_179 {dimension_numbers = #tpu.dot_dimension_numbers<[1], [0], [0], [1], [0, 0, 1, 1], [], []>} : vector<16x128xf32>, vector<128x128xf32>, vector<16x128xf32> -> vector<16x128xf32>
    %126 = arith.addf %119, %125 : vector<16x128xf32>
    %c0_180 = arith.constant 0 : index
    %c0_181 = arith.constant 0 : index
    %c0_182 = arith.constant 0 : index
    %c0_183 = arith.constant 0 : index
    %c0_184 = arith.constant 0 : index
    %c0_185 = arith.constant 0 : index
    %c0_186 = arith.constant 0 : index
    %127 = vector.load %arg5[%c0_180, %c0_181, %c0_182, %c0_183, %c0_184, %c0_185, %c0_186] : memref<1x1x1x6x1x6x128xf32, #tpu.memory_space<vmem>>, vector<1x1x1x4x1x4x128xf32>
    %128 = vector.shape_cast %127 : vector<1x1x1x4x1x4x128xf32> to vector<4x4x128xf32>
    %129 = vector.shape_cast %128 : vector<4x4x128xf32> to vector<16x128xf32>
    %c18 = arith.constant 18 : index
    %c0_187 = arith.constant 0 : index
    %c0_188 = arith.constant 0 : index
    %130 = vector.load %arg6[%c18, %c0_187, %c0_188] : memref<27x128x128xf32, #tpu.memory_space<vmem>>, vector<1x128x128xf32>
    %131 = vector.shape_cast %130 : vector<1x128x128xf32> to vector<128x128xf32>
    %cst_189 = arith.constant dense<0.000000e+00> : vector<16x128xf32>
    %132 = tpu.matmul %129, %131, %cst_189 {dimension_numbers = #tpu.dot_dimension_numbers<[1], [0], [0], [1], [0, 0, 1, 1], [], []>} : vector<16x128xf32>, vector<128x128xf32>, vector<16x128xf32> -> vector<16x128xf32>
    %133 = arith.addf %126, %132 : vector<16x128xf32>
    %c0_190 = arith.constant 0 : index
    %c0_191 = arith.constant 0 : index
    %c0_192 = arith.constant 0 : index
    %c0_193 = arith.constant 0 : index
    %c0_194 = arith.constant 0 : index
    %c1_195 = arith.constant 1 : index
    %c0_196 = arith.constant 0 : index
    %134 = vector.load %arg5[%c0_190, %c0_191, %c0_192, %c0_193, %c0_194, %c1_195, %c0_196] : memref<1x1x1x6x1x6x128xf32, #tpu.memory_space<vmem>>, vector<1x1x1x4x1x4x128xf32>
    %135 = vector.shape_cast %134 : vector<1x1x1x4x1x4x128xf32> to vector<4x4x128xf32>
    %136 = vector.shape_cast %135 : vector<4x4x128xf32> to vector<16x128xf32>
    %c19 = arith.constant 19 : index
    %c0_197 = arith.constant 0 : index
    %c0_198 = arith.constant 0 : index
    %137 = vector.load %arg6[%c19, %c0_197, %c0_198] : memref<27x128x128xf32, #tpu.memory_space<vmem>>, vector<1x128x128xf32>
    %138 = vector.shape_cast %137 : vector<1x128x128xf32> to vector<128x128xf32>
    %cst_199 = arith.constant dense<0.000000e+00> : vector<16x128xf32>
    %139 = tpu.matmul %136, %138, %cst_199 {dimension_numbers = #tpu.dot_dimension_numbers<[1], [0], [0], [1], [0, 0, 1, 1], [], []>} : vector<16x128xf32>, vector<128x128xf32>, vector<16x128xf32> -> vector<16x128xf32>
    %140 = arith.addf %133, %139 : vector<16x128xf32>
    %c0_200 = arith.constant 0 : index
    %c0_201 = arith.constant 0 : index
    %c0_202 = arith.constant 0 : index
    %c0_203 = arith.constant 0 : index
    %c0_204 = arith.constant 0 : index
    %c2_205 = arith.constant 2 : index
    %c0_206 = arith.constant 0 : index
    %141 = vector.load %arg5[%c0_200, %c0_201, %c0_202, %c0_203, %c0_204, %c2_205, %c0_206] : memref<1x1x1x6x1x6x128xf32, #tpu.memory_space<vmem>>, vector<1x1x1x4x1x4x128xf32>
    %142 = vector.shape_cast %141 : vector<1x1x1x4x1x4x128xf32> to vector<4x4x128xf32>
    %143 = vector.shape_cast %142 : vector<4x4x128xf32> to vector<16x128xf32>
    %c20 = arith.constant 20 : index
    %c0_207 = arith.constant 0 : index
    %c0_208 = arith.constant 0 : index
    %144 = vector.load %arg6[%c20, %c0_207, %c0_208] : memref<27x128x128xf32, #tpu.memory_space<vmem>>, vector<1x128x128xf32>
    %145 = vector.shape_cast %144 : vector<1x128x128xf32> to vector<128x128xf32>
    %cst_209 = arith.constant dense<0.000000e+00> : vector<16x128xf32>
    %146 = tpu.matmul %143, %145, %cst_209 {dimension_numbers = #tpu.dot_dimension_numbers<[1], [0], [0], [1], [0, 0, 1, 1], [], []>} : vector<16x128xf32>, vector<128x128xf32>, vector<16x128xf32> -> vector<16x128xf32>
    %147 = arith.addf %140, %146 : vector<16x128xf32>
    %c0_210 = arith.constant 0 : index
    %c0_211 = arith.constant 0 : index
    %c0_212 = arith.constant 0 : index
    %c1_213 = arith.constant 1 : index
    %c0_214 = arith.constant 0 : index
    %c0_215 = arith.constant 0 : index
    %c0_216 = arith.constant 0 : index
    %148 = vector.load %arg5[%c0_210, %c0_211, %c0_212, %c1_213, %c0_214, %c0_215, %c0_216] : memref<1x1x1x6x1x6x128xf32, #tpu.memory_space<vmem>>, vector<1x1x1x4x1x4x128xf32>
    %149 = vector.shape_cast %148 : vector<1x1x1x4x1x4x128xf32> to vector<4x4x128xf32>
    %150 = vector.shape_cast %149 : vector<4x4x128xf32> to vector<16x128xf32>
    %c21 = arith.constant 21 : index
    %c0_217 = arith.constant 0 : index
    %c0_218 = arith.constant 0 : index
    %151 = vector.load %arg6[%c21, %c0_217, %c0_218] : memref<27x128x128xf32, #tpu.memory_space<vmem>>, vector<1x128x128xf32>
    %152 = vector.shape_cast %151 : vector<1x128x128xf32> to vector<128x128xf32>
    %cst_219 = arith.constant dense<0.000000e+00> : vector<16x128xf32>
    %153 = tpu.matmul %150, %152, %cst_219 {dimension_numbers = #tpu.dot_dimension_numbers<[1], [0], [0], [1], [0, 0, 1, 1], [], []>} : vector<16x128xf32>, vector<128x128xf32>, vector<16x128xf32> -> vector<16x128xf32>
    %154 = arith.addf %147, %153 : vector<16x128xf32>
    %c0_220 = arith.constant 0 : index
    %c0_221 = arith.constant 0 : index
    %c0_222 = arith.constant 0 : index
    %c1_223 = arith.constant 1 : index
    %c0_224 = arith.constant 0 : index
    %c1_225 = arith.constant 1 : index
    %c0_226 = arith.constant 0 : index
    %155 = vector.load %arg5[%c0_220, %c0_221, %c0_222, %c1_223, %c0_224, %c1_225, %c0_226] : memref<1x1x1x6x1x6x128xf32, #tpu.memory_space<vmem>>, vector<1x1x1x4x1x4x128xf32>
    %156 = vector.shape_cast %155 : vector<1x1x1x4x1x4x128xf32> to vector<4x4x128xf32>
    %157 = vector.shape_cast %156 : vector<4x4x128xf32> to vector<16x128xf32>
    %c22 = arith.constant 22 : index
    %c0_227 = arith.constant 0 : index
    %c0_228 = arith.constant 0 : index
    %158 = vector.load %arg6[%c22, %c0_227, %c0_228] : memref<27x128x128xf32, #tpu.memory_space<vmem>>, vector<1x128x128xf32>
    %159 = vector.shape_cast %158 : vector<1x128x128xf32> to vector<128x128xf32>
    %cst_229 = arith.constant dense<0.000000e+00> : vector<16x128xf32>
    %160 = tpu.matmul %157, %159, %cst_229 {dimension_numbers = #tpu.dot_dimension_numbers<[1], [0], [0], [1], [0, 0, 1, 1], [], []>} : vector<16x128xf32>, vector<128x128xf32>, vector<16x128xf32> -> vector<16x128xf32>
    %161 = arith.addf %154, %160 : vector<16x128xf32>
    %c0_230 = arith.constant 0 : index
    %c0_231 = arith.constant 0 : index
    %c0_232 = arith.constant 0 : index
    %c1_233 = arith.constant 1 : index
    %c0_234 = arith.constant 0 : index
    %c2_235 = arith.constant 2 : index
    %c0_236 = arith.constant 0 : index
    %162 = vector.load %arg5[%c0_230, %c0_231, %c0_232, %c1_233, %c0_234, %c2_235, %c0_236] : memref<1x1x1x6x1x6x128xf32, #tpu.memory_space<vmem>>, vector<1x1x1x4x1x4x128xf32>
    %163 = vector.shape_cast %162 : vector<1x1x1x4x1x4x128xf32> to vector<4x4x128xf32>
    %164 = vector.shape_cast %163 : vector<4x4x128xf32> to vector<16x128xf32>
    %c23 = arith.constant 23 : index
    %c0_237 = arith.constant 0 : index
    %c0_238 = arith.constant 0 : index
    %165 = vector.load %arg6[%c23, %c0_237, %c0_238] : memref<27x128x128xf32, #tpu.memory_space<vmem>>, vector<1x128x128xf32>
    %166 = vector.shape_cast %165 : vector<1x128x128xf32> to vector<128x128xf32>
    %cst_239 = arith.constant dense<0.000000e+00> : vector<16x128xf32>
    %167 = tpu.matmul %164, %166, %cst_239 {dimension_numbers = #tpu.dot_dimension_numbers<[1], [0], [0], [1], [0, 0, 1, 1], [], []>} : vector<16x128xf32>, vector<128x128xf32>, vector<16x128xf32> -> vector<16x128xf32>
    %168 = arith.addf %161, %167 : vector<16x128xf32>
    %c0_240 = arith.constant 0 : index
    %c0_241 = arith.constant 0 : index
    %c0_242 = arith.constant 0 : index
    %c2_243 = arith.constant 2 : index
    %c0_244 = arith.constant 0 : index
    %c0_245 = arith.constant 0 : index
    %c0_246 = arith.constant 0 : index
    %169 = vector.load %arg5[%c0_240, %c0_241, %c0_242, %c2_243, %c0_244, %c0_245, %c0_246] : memref<1x1x1x6x1x6x128xf32, #tpu.memory_space<vmem>>, vector<1x1x1x4x1x4x128xf32>
    %170 = vector.shape_cast %169 : vector<1x1x1x4x1x4x128xf32> to vector<4x4x128xf32>
    %171 = vector.shape_cast %170 : vector<4x4x128xf32> to vector<16x128xf32>
    %c24 = arith.constant 24 : index
    %c0_247 = arith.constant 0 : index
    %c0_248 = arith.constant 0 : index
    %172 = vector.load %arg6[%c24, %c0_247, %c0_248] : memref<27x128x128xf32, #tpu.memory_space<vmem>>, vector<1x128x128xf32>
    %173 = vector.shape_cast %172 : vector<1x128x128xf32> to vector<128x128xf32>
    %cst_249 = arith.constant dense<0.000000e+00> : vector<16x128xf32>
    %174 = tpu.matmul %171, %173, %cst_249 {dimension_numbers = #tpu.dot_dimension_numbers<[1], [0], [0], [1], [0, 0, 1, 1], [], []>} : vector<16x128xf32>, vector<128x128xf32>, vector<16x128xf32> -> vector<16x128xf32>
    %175 = arith.addf %168, %174 : vector<16x128xf32>
    %c0_250 = arith.constant 0 : index
    %c0_251 = arith.constant 0 : index
    %c0_252 = arith.constant 0 : index
    %c2_253 = arith.constant 2 : index
    %c0_254 = arith.constant 0 : index
    %c1_255 = arith.constant 1 : index
    %c0_256 = arith.constant 0 : index
    %176 = vector.load %arg5[%c0_250, %c0_251, %c0_252, %c2_253, %c0_254, %c1_255, %c0_256] : memref<1x1x1x6x1x6x128xf32, #tpu.memory_space<vmem>>, vector<1x1x1x4x1x4x128xf32>
    %177 = vector.shape_cast %176 : vector<1x1x1x4x1x4x128xf32> to vector<4x4x128xf32>
    %178 = vector.shape_cast %177 : vector<4x4x128xf32> to vector<16x128xf32>
    %c25 = arith.constant 25 : index
    %c0_257 = arith.constant 0 : index
    %c0_258 = arith.constant 0 : index
    %179 = vector.load %arg6[%c25, %c0_257, %c0_258] : memref<27x128x128xf32, #tpu.memory_space<vmem>>, vector<1x128x128xf32>
    %180 = vector.shape_cast %179 : vector<1x128x128xf32> to vector<128x128xf32>
    %cst_259 = arith.constant dense<0.000000e+00> : vector<16x128xf32>
    %181 = tpu.matmul %178, %180, %cst_259 {dimension_numbers = #tpu.dot_dimension_numbers<[1], [0], [0], [1], [0, 0, 1, 1], [], []>} : vector<16x128xf32>, vector<128x128xf32>, vector<16x128xf32> -> vector<16x128xf32>
    %182 = arith.addf %175, %181 : vector<16x128xf32>
    %c0_260 = arith.constant 0 : index
    %c0_261 = arith.constant 0 : index
    %c0_262 = arith.constant 0 : index
    %c2_263 = arith.constant 2 : index
    %c0_264 = arith.constant 0 : index
    %c2_265 = arith.constant 2 : index
    %c0_266 = arith.constant 0 : index
    %183 = vector.load %arg5[%c0_260, %c0_261, %c0_262, %c2_263, %c0_264, %c2_265, %c0_266] : memref<1x1x1x6x1x6x128xf32, #tpu.memory_space<vmem>>, vector<1x1x1x4x1x4x128xf32>
    %184 = vector.shape_cast %183 : vector<1x1x1x4x1x4x128xf32> to vector<4x4x128xf32>
    %185 = vector.shape_cast %184 : vector<4x4x128xf32> to vector<16x128xf32>
    %c26 = arith.constant 26 : index
    %c0_267 = arith.constant 0 : index
    %c0_268 = arith.constant 0 : index
    %186 = vector.load %arg6[%c26, %c0_267, %c0_268] : memref<27x128x128xf32, #tpu.memory_space<vmem>>, vector<1x128x128xf32>
    %187 = vector.shape_cast %186 : vector<1x128x128xf32> to vector<128x128xf32>
    %cst_269 = arith.constant dense<0.000000e+00> : vector<16x128xf32>
    %188 = tpu.matmul %185, %187, %cst_269 {dimension_numbers = #tpu.dot_dimension_numbers<[1], [0], [0], [1], [0, 0, 1, 1], [], []>} : vector<16x128xf32>, vector<128x128xf32>, vector<16x128xf32> -> vector<16x128xf32>
    %189 = arith.addf %182, %188 : vector<16x128xf32>
    %c0_270 = arith.constant 0 : index
    %c0_271 = arith.constant 0 : index
    %190 = vector.load %arg7[%c0_270, %c0_271] : memref<1x128xf32, #tpu.memory_space<vmem>>, vector<1x128xf32>
    %191 = vector.broadcast %190 : vector<1x128xf32> to vector<16x128xf32>
    %192 = arith.mulf %189, %191 : vector<16x128xf32>
    %c0_272 = arith.constant 0 : index
    %c0_273 = arith.constant 0 : index
    %193 = vector.load %arg8[%c0_272, %c0_273] : memref<1x128xf32, #tpu.memory_space<vmem>>, vector<1x128xf32>
    %194 = vector.broadcast %193 : vector<1x128xf32> to vector<16x128xf32>
    %195 = arith.addf %192, %194 : vector<16x128xf32>
    %c0_274 = arith.constant 0 : index
    %c0_275 = arith.constant 0 : index
    %c0_276 = arith.constant 0 : index
    %c0_277 = arith.constant 0 : index
    %196 = vector.load %arg9[%c0_274, %c0_275, %c0_276, %c0_277] : memref<1x1x16x128xf32, #tpu.memory_space<vmem>>, vector<1x1x16x128xf32>
    %197 = vector.shape_cast %196 : vector<1x1x16x128xf32> to vector<16x128xf32>
    %c0_278 = arith.constant 0 : index
    %c0_279 = arith.constant 0 : index
    %198 = vector.load %arg10[%c0_278, %c0_279] : memref<128x128xf32, #tpu.memory_space<vmem>>, vector<128x128xf32>
    %cst_280 = arith.constant dense<0.000000e+00> : vector<16x128xf32>
    %199 = tpu.matmul %197, %198, %cst_280 {dimension_numbers = #tpu.dot_dimension_numbers<[1], [0], [0], [1], [0, 0, 1, 1], [], []>} : vector<16x128xf32>, vector<128x128xf32>, vector<16x128xf32> -> vector<16x128xf32>
    %c0_281 = arith.constant 0 : index
    %c0_282 = arith.constant 0 : index
    %200 = vector.load %arg11[%c0_281, %c0_282] : memref<1x128xf32, #tpu.memory_space<vmem>>, vector<1x128xf32>
    %201 = vector.broadcast %200 : vector<1x128xf32> to vector<16x128xf32>
    %202 = arith.mulf %199, %201 : vector<16x128xf32>
    %203 = arith.addf %195, %202 : vector<16x128xf32>
    %c0_283 = arith.constant 0 : index
    %c0_284 = arith.constant 0 : index
    %204 = vector.load %arg12[%c0_283, %c0_284] : memref<1x128xf32, #tpu.memory_space<vmem>>, vector<1x128xf32>
    %205 = vector.broadcast %204 : vector<1x128xf32> to vector<16x128xf32>
    %206 = arith.addf %203, %205 : vector<16x128xf32>
    %cst_285 = arith.constant 0.000000e+00 : f32
    %207 = vector.broadcast %cst_285 : f32 to vector<16x128xf32>
    %208 = arith.maximumf %206, %207 : vector<16x128xf32>
    %c0_286 = arith.constant 0 : index
    %c0_287 = arith.constant 0 : index
    %c0_288 = arith.constant 0 : index
    %c0_289 = arith.constant 0 : index
    %209 = vector.load %arg13[%c0_286, %c0_287, %c0_288, %c0_289] : memref<1x1x16x128xf32, #tpu.memory_space<vmem>>, vector<1x1x16x128xf32>
    %210 = vector.shape_cast %209 : vector<1x1x16x128xf32> to vector<16x128xf32>
    %211 = vector.shape_cast %208 : vector<16x128xf32> to vector<1x1x16x128xf32>
    tpu.vector_store %arg13[%c0_286, %c0_287, %c0_288, %c0_289], %211 {strides = array<i32>} : memref<1x1x16x128xf32, #tpu.memory_space<vmem>>, vector<1x1x16x128xf32>,
    return
  }
  func.func @transform_0(%arg0: i32, %arg1: i32, %arg2: i32) -> (i32, i32, i32, i32, i32, i32, i32) {
    %c1_i32 = arith.constant 1 : i32
    %0 = arith.muli %arg2, %c1_i32 : i32
    %c0_i32 = arith.constant 0 : i32
    %1 = arith.addi %0, %c0_i32 : i32
    %c0_i32_0 = arith.constant 0 : i32
    %c0_i32_1 = arith.constant 0 : i32
    %c0_i32_2 = arith.constant 0 : i32
    %c0_i32_3 = arith.constant 0 : i32
    %c0_i32_4 = arith.constant 0 : i32
    %c0_i32_5 = arith.constant 0 : i32
    return %arg0, %1, %c0_i32_0, %c0_i32_1, %c0_i32_2, %c0_i32_3, %c0_i32_4 : i32, i32, i32, i32, i32, i32, i32
  }
  func.func @transform_1(%arg0: i32, %arg1: i32, %arg2: i32) -> (i32, i32, i32, i32, i32, i32, i32) {
    %c1_i32 = arith.constant 1 : i32
    %0 = arith.muli %arg2, %c1_i32 : i32
    %c1_i32_0 = arith.constant 1 : i32
    %1 = arith.addi %0, %c1_i32_0 : i32
    %c0_i32 = arith.constant 0 : i32
    %c0_i32_1 = arith.constant 0 : i32
    %c0_i32_2 = arith.constant 0 : i32
    %c0_i32_3 = arith.constant 0 : i32
    %c0_i32_4 = arith.constant 0 : i32
    %c0_i32_5 = arith.constant 0 : i32
    return %arg0, %1, %c0_i32, %c0_i32_1, %c0_i32_2, %c0_i32_3, %c0_i32_4 : i32, i32, i32, i32, i32, i32, i32
  }
  func.func @transform_2(%arg0: i32, %arg1: i32, %arg2: i32) -> (i32, i32, i32, i32, i32, i32, i32) {
    %c1_i32 = arith.constant 1 : i32
    %0 = arith.muli %arg2, %c1_i32 : i32
    %c2_i32 = arith.constant 2 : i32
    %1 = arith.addi %0, %c2_i32 : i32
    %c0_i32 = arith.constant 0 : i32
    %c0_i32_0 = arith.constant 0 : i32
    %c0_i32_1 = arith.constant 0 : i32
    %c0_i32_2 = arith.constant 0 : i32
    %c0_i32_3 = arith.constant 0 : i32
    %c0_i32_4 = arith.constant 0 : i32
    return %arg0, %1, %c0_i32, %c0_i32_0, %c0_i32_1, %c0_i32_2, %c0_i32_3 : i32, i32, i32, i32, i32, i32, i32
  }
  func.func @transform_3(%arg0: i32, %arg1: i32, %arg2: i32) -> (i32, i32, i32) {
    %c0_i32 = arith.constant 0 : i32
    %c0_i32_0 = arith.constant 0 : i32
    %c0_i32_1 = arith.constant 0 : i32
    return %c0_i32, %c0_i32_0, %arg1 : i32, i32, i32
  }
  func.func @transform_4(%arg0: i32, %arg1: i32, %arg2: i32) -> (i32, i32) {
    %c0_i32 = arith.constant 0 : i32
    %c0_i32_0 = arith.constant 0 : i32
    return %c0_i32, %arg1 : i32, i32
  }
  func.func @transform_5(%arg0: i32, %arg1: i32, %arg2: i32) -> (i32, i32) {
    %c0_i32 = arith.constant 0 : i32
    %c0_i32_0 = arith.constant 0 : i32
    return %c0_i32, %arg1 : i32, i32
  }
  func.func @transform_6(%arg0: i32, %arg1: i32, %arg2: i32) -> (i32, i32, i32, i32) {
    %c0_i32 = arith.constant 0 : i32
    %c0_i32_0 = arith.constant 0 : i32
    %c0_i32_1 = arith.constant 0 : i32
    return %arg0, %arg2, %c0_i32, %c0_i32_0 : i32, i32, i32, i32
  }
  func.func @transform_7(%arg0: i32, %arg1: i32, %arg2: i32) -> (i32, i32) {
    %c0_i32 = arith.constant 0 : i32
    %c0_i32_0 = arith.constant 0 : i32
    return %c0_i32, %arg1 : i32, i32
  }
  func.func @transform_8(%arg0: i32, %arg1: i32, %arg2: i32) -> (i32, i32) {
    %c0_i32 = arith.constant 0 : i32
    %c0_i32_0 = arith.constant 0 : i32
    return %c0_i32, %arg1 : i32, i32
  }
  func.func @transform_9(%arg0: i32, %arg1: i32, %arg2: i32) -> (i32, i32) {
    %c0_i32 = arith.constant 0 : i32
    %c0_i32_0 = arith.constant 0 : i32
    return %c0_i32, %arg1 : i32, i32
  }
  func.func @transform_10(%arg0: i32, %arg1: i32, %arg2: i32) -> (i32, i32, i32, i32) {
    %c0_i32 = arith.constant 0 : i32
    %c0_i32_0 = arith.constant 0 : i32
    return %arg0, %arg2, %c0_i32, %arg1 : i32, i32, i32, i32
  }
}

</mosaic_0001>

<llo_original>
// kernel: postres_forward.2
$region0: #{postres_forward.2}
  #allocation0 [shape = 'u32[]', space=smem, size = 0x4, offset = 0x4, fixed_abs, tag = 'smem constant byte address 0x4 - core index']
  #allocation1 [shape = 'u32[144,128]{1,0:T(1,128)}', space=vmem, size = 0x12000, scoped, tag = 'internal scratch']
  %s0 = inlined_call_operand.vmem [shape: f32[2,10,2,5,2,5,128], index: 0, kind: input, shape index: {}, may-alias: {0,1,2}]
  %s1 = inlined_call_operand.vmem [shape: f32[2,10,2,5,2,5,128], index: 1, kind: input, shape index: {}, may-alias: {0,1,2}]
  %s2 = inlined_call_operand.vmem [shape: f32[2,10,2,5,2,5,128], index: 2, kind: input, shape index: {}, may-alias: {0,1,2}]
  %s3 = inlined_call_operand.vmem [shape: f32[27,128,128], index: 3, kind: input, shape index: {}]
  %s4 = inlined_call_operand.vmem [shape: f32[1,128], index: 4, kind: input, shape index: {}]
  %s5 = inlined_call_operand.vmem [shape: f32[1,128], index: 5, kind: input, shape index: {}]
  %s6 = inlined_call_operand.vmem [shape: f32[2,4,16,128], index: 6, kind: output, shape index: {}]
  %s7 = sld [smem:[#allocation0]]
  $region57: #{postres_forward.2} parent=0
    _
  %s9 = ssub.s32 1, %s7
  %s10 = scalar_select 0, %s9, %s7
  loop: start=0, step=1, limit=10
  $region2: #{postres_forward.2} parent=0 // loop_pre_header
    _
  $region3: #{postres_forward.2} parent=0 // loop_header
    %s12 = sphi 0, %s16
    %p13 = scmp.ge.s32.totalorder %s12, 10
    %s19 = sphi 0, %s38
    %s20 = sphi 0, %s34
    %s21 = sphi 0, %s30
    %s22 = sphi 0, %s19
    %s23 = sphi 0, %s20
    %s24 = sphi 0, %s21
    %s25 = sphi 0, %s22
    %s26 = sphi 0, %s23
    %s27 = sphi 0, %s24
    %s45 = sphi 0, %s47
    %s48 = sphi 0, %s45
    %s49 = sphi 0, %s48
    %s65 = sphi 0, %s49
    %s77 = sphi 0, %s79
    %s80 = sphi 0, %s77
    %s81 = sphi 0, %s80
    %s97 = sphi 0, %s81
    %s109 = sphi 0, %s111
    %s112 = sphi 0, %s109
    %s113 = sphi 0, %s112
    %s129 = sphi 0, %s113
    %s135 = sphi 0, %s137
    %s138 = sphi 0, %s135
    %s139 = sphi 0, %s138
    %s155 = sphi 0, %s139
    %s161 = sphi 0, %s163
    %s164 = sphi 0, %s161
    %s165 = sphi 0, %s164
    %s181 = sphi 0, %s165
    %s187 = sphi 0, %s189
    %s190 = sphi 0, %s187
    %s191 = sphi 0, %s190
    %s207 = sphi 0, %s191
    %s217 = sphi 0, %s219
    %s220 = sphi 0, %s217
    %s221 = sphi 0, %s220
    %s237 = sphi 0, %s221
  $region4: #{postres_forward.2} parent=0 // loop_header_branch
    %15 = sbr.rel (%p13) target = $region8
  $region5: #{postres_forward.2} parent=0 // loop_body
    %s17 = ssub.s32 %s12, 1
    %s18 = ssub.s32 %s12, 2
    %s28 = sadd.s32 1, %s21
    %p29 = scmp.ge.s32.totalorder %s28, 4
    %s30 = scalar_select %p29, 0, %s28
    %s31 = sadd.s32 1, %s20
    %s32 = scalar_select %p29, %s31, %s20
    %p33 = scmp.ge.s32.totalorder %s32, 1
    %s34 = scalar_select %p33, 0, %s32
    %s35 = sadd.s32 1, %s19
    %s36 = scalar_select %p33, %s35, %s19
    %p37 = scmp.ge.s32.totalorder %s36, 2
    %s38 = scalar_select %p37, 0, %s36
    %s39 = smul.u32 %s21, 2
    %s40 = smul.u32 %s30, 2
    %s41 = ssub.s32 %s19, %s38
    %s42 = ssub.s32 %s39, %s40
    %s43 = sor.u32 %s41, %s42
    %p44 = scmp.eq.s32.totalorder %s43, 0
    %s46 = sadd.s32 %s45, 1
    %s47 = scalar_select %p44, %s45, %s46
    %p50 = pneg %p44
    %p51 = scmp.eq.s32.totalorder %s12, 7
    %p52 = por %p50, %p51
    %p53 = scmp.ne.s32.totalorder %s45, %s48
    %p54 = scmp.eq.s32.totalorder %s12, 0
    %p55 = por %p53, %p54
    %p56 = scmp.ne.s32.totalorder %s45, %s48
    %p57 = scmp.eq.s32.totalorder %s17, 7
    %p58 = por %p56, %p57
    %p59 = scmp.ne.s32.totalorder %s48, %s49
    %p60 = scmp.eq.s32.totalorder %s17, 0
    %p61 = por %p59, %p60
    %p62 = scmp.ne.s32.totalorder %s48, %s49
    %p63 = scmp.eq.s32.totalorder %s18, 7
    %p64 = por %p62, %p63
    %p66 = scmp.ne.s32.totalorder %s49, %s65
    %p67 = scmp.eq.s32.totalorder %s18, 0
    %p68 = por %p66, %p67
    %s69 = smul.u32 %s21, 2
    %s70 = sadd.s32 %s69, 1
    %s71 = smul.u32 %s30, 2
    %s72 = sadd.s32 %s71, 1
    %s73 = ssub.s32 %s19, %s38
    %s74 = ssub.s32 %s70, %s72
    %s75 = sor.u32 %s73, %s74
    %p76 = scmp.eq.s32.totalorder %s75, 0
    %s78 = sadd.s32 %s77, 1
    %s79 = scalar_select %p76, %s77, %s78
    %p82 = pneg %p76
    %p83 = scmp.eq.s32.totalorder %s12, 7
    %p84 = por %p82, %p83
    %p85 = scmp.ne.s32.totalorder %s77, %s80
    %p86 = scmp.eq.s32.totalorder %s12, 0
    %p87 = por %p85, %p86
    %p88 = scmp.ne.s32.totalorder %s77, %s80
    %p89 = scmp.eq.s32.totalorder %s17, 7
    %p90 = por %p88, %p89
    %p91 = scmp.ne.s32.totalorder %s80, %s81
    %p92 = scmp.eq.s32.totalorder %s17, 0
    %p93 = por %p91, %p92
    %p94 = scmp.ne.s32.totalorder %s80, %s81
    %p95 = scmp.eq.s32.totalorder %s18, 7
    %p96 = por %p94, %p95
    %p98 = scmp.ne.s32.totalorder %s81, %s97
    %p99 = scmp.eq.s32.totalorder %s18, 0
    %p100 = por %p98, %p99
    %s101 = smul.u32 %s21, 2
    %s102 = sadd.s32 %s101, 2
    %s103 = smul.u32 %s30, 2
    %s104 = sadd.s32 %s103, 2
    %s105 = ssub.s32 %s19, %s38
    %s106 = ssub.s32 %s102, %s104
    %s107 = sor.u32 %s105, %s106
    %p108 = scmp.eq.s32.totalorder %s107, 0
    %s110 = sadd.s32 %s109, 1
    %s111 = scalar_select %p108, %s109, %s110
    %p114 = pneg %p108
    %p115 = scmp.eq.s32.totalorder %s12, 7
    %p116 = por %p114, %p115
    %p117 = scmp.ne.s32.totalorder %s109, %s112
    %p118 = scmp.eq.s32.totalorder %s12, 0
    %p119 = por %p117, %p118
    %p120 = scmp.ne.s32.totalorder %s109, %s112
    %p121 = scmp.eq.s32.totalorder %s17, 7
    %p122 = por %p120, %p121
    %p123 = scmp.ne.s32.totalorder %s112, %s113
    %p124 = scmp.eq.s32.totalorder %s17, 0
    %p125 = por %p123, %p124
    %p126 = scmp.ne.s32.totalorder %s112, %s113
    %p127 = scmp.eq.s32.totalorder %s18, 7
    %p128 = por %p126, %p127
    %p130 = scmp.ne.s32.totalorder %s113, %s129
    %p131 = scmp.eq.s32.totalorder %s18, 0
    %p132 = por %p130, %p131
    %s133 = ssub.s32 %s20, %s34
    %p134 = scmp.eq.s32.totalorder %s133, 0
    %s136 = sadd.s32 %s135, 1
    %s137 = scalar_select %p134, %s135, %s136
    %p140 = pneg %p134
    %p141 = scmp.eq.s32.totalorder %s12, 7
    %p142 = por %p140, %p141
    %p143 = scmp.ne.s32.totalorder %s135, %s138
    %p144 = scmp.eq.s32.totalorder %s12, 0
    %p145 = por %p143, %p144
    %p146 = scmp.ne.s32.totalorder %s135, %s138
    %p147 = scmp.eq.s32.totalorder %s17, 7
    %p148 = por %p146, %p147
    %p149 = scmp.ne.s32.totalorder %s138, %s139
    %p150 = scmp.eq.s32.totalorder %s17, 0
    %p151 = por %p149, %p150
    %p152 = scmp.ne.s32.totalorder %s138, %s139
    %p153 = scmp.eq.s32.totalorder %s18, 7
    %p154 = por %p152, %p153
    %p156 = scmp.ne.s32.totalorder %s139, %s155
    %p157 = scmp.eq.s32.totalorder %s18, 0
    %p158 = por %p156, %p157
    %s159 = ssub.s32 %s20, %s34
    %p160 = scmp.eq.s32.totalorder %s159, 0
    %s162 = sadd.s32 %s161, 1
    %s163 = scalar_select %p160, %s161, %s162
    %p166 = pneg %p160
    %p167 = scmp.eq.s32.totalorder %s12, 7
    %p168 = por %p166, %p167
    %p169 = scmp.ne.s32.totalorder %s161, %s164
    %p170 = scmp.eq.s32.totalorder %s12, 0
    %p171 = por %p169, %p170
    %p172 = scmp.ne.s32.totalorder %s161, %s164
    %p173 = scmp.eq.s32.totalorder %s17, 7
    %p174 = por %p172, %p173
    %p175 = scmp.ne.s32.totalorder %s164, %s165
    %p176 = scmp.eq.s32.totalorder %s17, 0
    %p177 = por %p175, %p176
    %p178 = scmp.ne.s32.totalorder %s164, %s165
    %p179 = scmp.eq.s32.totalorder %s18, 7
    %p180 = por %p178, %p179
    %p182 = scmp.ne.s32.totalorder %s165, %s181
    %p183 = scmp.eq.s32.totalorder %s18, 0
    %p184 = por %p182, %p183
    %s185 = ssub.s32 %s20, %s34
    %p186 = scmp.eq.s32.totalorder %s185, 0
    %s188 = sadd.s32 %s187, 1
    %s189 = scalar_select %p186, %s187, %s188
    %p192 = pneg %p186
    %p193 = scmp.eq.s32.totalorder %s12, 7
    %p194 = por %p192, %p193
    %p195 = scmp.ne.s32.totalorder %s187, %s190
    %p196 = scmp.eq.s32.totalorder %s12, 0
    %p197 = por %p195, %p196
    %p198 = scmp.ne.s32.totalorder %s187, %s190
    %p199 = scmp.eq.s32.totalorder %s17, 7
    %p200 = por %p198, %p199
    %p201 = scmp.ne.s32.totalorder %s190, %s191
    %p202 = scmp.eq.s32.totalorder %s17, 0
    %p203 = por %p201, %p202
    %p204 = scmp.ne.s32.totalorder %s190, %s191
    %p205 = scmp.eq.s32.totalorder %s18, 7
    %p206 = por %p204, %p205
    %p208 = scmp.ne.s32.totalorder %s191, %s207
    %p209 = scmp.eq.s32.totalorder %s18, 0
    %p210 = por %p208, %p209
    %s211 = ssub.s32 %s19, %s38
    %s212 = ssub.s32 %s21, %s30
    %s213 = sor.u32 %s211, %s212
    %s214 = ssub.s32 %s20, %s34
    %s215 = sor.u32 %s213, %s214
    %p216 = scmp.eq.s32.totalorder %s215, 0
    %s218 = sadd.s32 %s217, 1
    %s219 = scalar_select %p216, %s217, %s218
    %p222 = pneg %p216
    %p223 = scmp.eq.s32.totalorder %s12, 7
    %p224 = por %p222, %p223
    %p225 = scmp.ne.s32.totalorder %s217, %s220
    %p226 = scmp.eq.s32.totalorder %s12, 0
    %p227 = por %p225, %p226
    %p228 = scmp.ne.s32.totalorder %s217, %s220
    %p229 = scmp.eq.s32.totalorder %s17, 7
    %p230 = por %p228, %p229
    %p231 = scmp.ne.s32.totalorder %s220, %s221
    %p232 = scmp.eq.s32.totalorder %s17, 0
    %p233 = por %p231, %p232
    %p234 = scmp.ne.s32.totalorder %s220, %s221
    %p235 = scmp.eq.s32.totalorder %s18, 7
    %p236 = por %p234, %p235
    %p238 = scmp.ne.s32.totalorder %s221, %s237
    %p239 = scmp.eq.s32.totalorder %s18, 0
    %p240 = por %p238, %p239
    %p241 = scmp.le.s32.totalorder 1, %s12
    %p242 = scmp.lt.s32.totalorder %s12, 9
    %p243 = pnand %p241, %p242
    %p244 = pneg %p243
    // Predicated region
    $region9: #{postres_forward.2} parent=5 // pred_check
      _
    $region10: #{postres_forward.2} parent=5 // pred_check_branch
      %246 = sbr.rel (%p243) target = $region12
    $region11: #{postres_forward.2} parent=5 // pred_region
      %s247 = ssub.s32 %s12, 1
      // Predicated region
      $region13: #{postres_forward.2} parent=11 // pred_check
        %p248 = pneg %p151
      $region14: #{postres_forward.2} parent=11 // pred_check_branch
        %250 = sbr.rel (%p248) target = $region16
      $region15: #{postres_forward.2} parent=11 // pred_region
        %p251 = scmp.lt.s32.totalorder %s23, 0
        %s252 = scalar_select %p251, %s23, 0
        %s253 = smul.addr %s252, 8
        %s254 = scalar_lea.vmem %s3, %s253
      $region16: #{postres_forward.2} parent=11 // pred_fallthru
        _
      // Predicated region
      $region17: #{postres_forward.2} parent=11 // pred_check
        %p255 = pneg %p177
      $region18: #{postres_forward.2} parent=11 // pred_check_branch
        %257 = sbr.rel (%p255) target = $region20
      $region19: #{postres_forward.2} parent=11 // pred_region
        %p258 = scmp.lt.s32.totalorder %s23, 0
        %s259 = scalar_select %p258, %s23, 0
        %s260 = scalar_lea.vmem %s4, %s259
      $region20: #{postres_forward.2} parent=11 // pred_fallthru
        _
      // Predicated region
      $region21: #{postres_forward.2} parent=11 // pred_check
        %p261 = pneg %p203
      $region22: #{postres_forward.2} parent=11 // pred_check_branch
        %263 = sbr.rel (%p261) target = $region24
      $region23: #{postres_forward.2} parent=11 // pred_region
        %p264 = scmp.lt.s32.totalorder %s23, 0
        %s265 = scalar_select %p264, %s23, 0
        %s266 = scalar_lea.vmem %s5, %s265
      $region24: #{postres_forward.2} parent=11 // pred_fallthru
        _
    $region12: #{postres_forward.2} parent=5 // pred_fallthru
      _
    %p267 = scmp.lt.s32.totalorder %s12, 8
    // Predicated region
    $region25: #{postres_forward.2} parent=5 // pred_check
      %p268 = pneg %p267
    $region26: #{postres_forward.2} parent=5 // pred_check_branch
      %270 = sbr.rel (%p268) target = $region28
    $region27: #{postres_forward.2} parent=5 // pred_region
      // Predicated region
      $region29: #{postres_forward.2} parent=27 // pred_check
        %p271 = pneg %p55
      $region30: #{postres_forward.2} parent=27 // pred_check_branch
        %273 = sbr.rel (%p271) target = $region32
      $region31: #{postres_forward.2} parent=27 // pred_region
        %s274 = smul.u32 %s21, 2
        %p275 = scmp.lt.s32.totalorder %s19, 1
        %s276 = scalar_select %p275, %s19, 1
        %p277 = scmp.lt.s32.totalorder %s274, 9
        %s278 = scalar_select %p277, %s274, 9
        %s279 = smul.addr %s278, 20
        %s280 = smul.addr %s276, 200
        %s281 = sadd.s32 %s279, %s280
        %s282 = smul.addr %s281, 8
        %s283 = scalar_lea.vmem %s0, %s282
        %s284 = smul.u32 %s21, 2
      $region32: #{postres_forward.2} parent=27 // pred_fallthru
        _
      // Predicated region
      $region33: #{postres_forward.2} parent=27 // pred_check
        %p285 = pneg %p87
      $region34: #{postres_forward.2} parent=27 // pred_check_branch
        %287 = sbr.rel (%p285) target = $region36
      $region35: #{postres_forward.2} parent=27 // pred_region
        %s288 = smul.u32 %s21, 2
        %s289 = sadd.s32 %s288, 1
        %p290 = scmp.lt.s32.totalorder %s19, 1
        %s291 = scalar_select %p290, %s19, 1
        %p292 = scmp.lt.s32.totalorder %s289, 9
        %s293 = scalar_select %p292, %s289, 9
        %s294 = smul.addr %s293, 20
        %s295 = smul.addr %s291, 200
        %s296 = sadd.s32 %s294, %s295
        %s297 = smul.addr %s296, 8
        %s298 = scalar_lea.vmem %s1, %s297
        %s299 = smul.u32 %s21, 2
        %s300 = sadd.s32 %s299, 1
      $region36: #{postres_forward.2} parent=27 // pred_fallthru
        _
      // Predicated region
      $region37: #{postres_forward.2} parent=27 // pred_check
        %p301 = pneg %p119
      $region38: #{postres_forward.2} parent=27 // pred_check_branch
        %303 = sbr.rel (%p301) target = $region40
      $region39: #{postres_forward.2} parent=27 // pred_region
        %s304 = smul.u32 %s21, 2
        %s305 = sadd.s32 %s304, 2
        %p306 = scmp.lt.s32.totalorder %s19, 1
        %s307 = scalar_select %p306, %s19, 1
        %p308 = scmp.lt.s32.totalorder %s305, 9
        %s309 = scalar_select %p308, %s305, 9
        %s310 = smul.addr %s309, 20
        %s311 = smul.addr %s307, 200
        %s312 = sadd.s32 %s310, %s311
        %s313 = smul.addr %s312, 8
        %s314 = scalar_lea.vmem %s2, %s313
        %s315 = smul.u32 %s21, 2
        %s316 = sadd.s32 %s315, 2
      $region40: #{postres_forward.2} parent=27 // pred_fallthru
        _
    $region28: #{postres_forward.2} parent=5 // pred_fallthru
      _
    %p317 = scmp.le.s32.totalorder 1, %s12
    %p318 = scmp.lt.s32.totalorder %s12, 9
    %p319 = pnand %p317, %p318
    %p320 = pneg %p319
    // Predicated region
    $region41: #{postres_forward.2} parent=5 // pred_check
      _
    $region42: #{postres_forward.2} parent=5 // pred_check_branch
      %322 = sbr.rel (%p319) target = $region44
    $region43: #{postres_forward.2} parent=5 // pred_region
      %s323 = ssub.s32 %s12, 1
      %s324 = smul.u32 %s24, 2
      %p325 = scmp.lt.s32.totalorder %s22, 1
      %s326 = scalar_select %p325, %s22, 1
      %p327 = scmp.lt.s32.totalorder %s324, 9
      %s328 = scalar_select %p327, %s324, 9
      %s329 = smul.addr %s328, 20
      %s330 = smul.addr %s326, 200
      %s331 = sadd.s32 %s329, %s330
      %s332 = smul.addr %s331, 8
      %s333 = scalar_lea.vmem %s0, %s332
      %p334 = pneg %p61
      %p335 = pneg %p58
      %s336 = smul.u32 %s24, 2
      %s337 = sadd.s32 %s336, 1
      %p338 = scmp.lt.s32.totalorder %s22, 1
      %s339 = scalar_select %p338, %s22, 1
      %p340 = scmp.lt.s32.totalorder %s337, 9
      %s341 = scalar_select %p340, %s337, 9
      %s342 = smul.addr %s341, 20
      %s343 = smul.addr %s339, 200
      %s344 = sadd.s32 %s342, %s343
      %s345 = smul.addr %s344, 8
      %s346 = scalar_lea.vmem %s1, %s345
      %p347 = pneg %p93
      %p348 = pneg %p90
      %s349 = smul.u32 %s24, 2
      %s350 = sadd.s32 %s349, 2
      %p351 = scmp.lt.s32.totalorder %s22, 1
      %s352 = scalar_select %p351, %s22, 1
      %p353 = scmp.lt.s32.totalorder %s350, 9
      %s354 = scalar_select %p353, %s350, 9
      %s355 = smul.addr %s354, 20
      %s356 = smul.addr %s352, 200
      %s357 = sadd.s32 %s355, %s356
      %s358 = smul.addr %s357, 8
      %s359 = scalar_lea.vmem %s2, %s358
      %p360 = pneg %p125
      %p361 = pneg %p122
      %p362 = scmp.lt.s32.totalorder %s23, 0
      %s363 = scalar_select %p362, %s23, 0
      %s364 = smul.addr %s363, 8
      %s365 = scalar_lea.vmem %s3, %s364
      %p366 = pneg %p151
      %p367 = pneg %p148
      %p368 = scmp.lt.s32.totalorder %s23, 0
      %s369 = scalar_select %p368, %s23, 0
      %s370 = scalar_lea.vmem %s4, %s369
      %p371 = pneg %p177
      %p372 = pneg %p174
      %p373 = scmp.lt.s32.totalorder %s23, 0
      %s374 = scalar_select %p373, %s23, 0
      %s375 = scalar_lea.vmem %s5, %s374
      %p376 = pneg %p203
      %p377 = pneg %p200
      %p378 = pneg %p233
      %p379 = pneg %p230
      %p380 = scmp.lt.s32.totalorder %s22, 1
      %s381 = scalar_select %p380, %s22, 1
      %p382 = scmp.lt.s32.totalorder %s24, 3
      %s383 = scalar_select %p382, %s24, 3
      %p384 = scmp.lt.s32.totalorder %s23, 0
      %s385 = scalar_select %p384, %s23, 0
      %s386 = smul.addr %s383, 2
      %s387 = sadd.s32 %s385, %s386
      %s388 = smul.addr %s381, 8
      %s389 = sadd.s32 %s387, %s388
      %s390 = smul.addr %s389, 8
      %s391 = scalar_lea.vmem %s6, %s390
      %s392 = smul.u32 %s24, 2
      %p393 = scmp.lt.s32.totalorder %s22, 1
      %s394 = scalar_select %p393, %s22, 1
      %p395 = scmp.lt.s32.totalorder %s392, 9
      %s396 = scalar_select %p395, %s392, 9
      %s397 = smul.addr %s396, 20
      %s398 = smul.addr %s394, 200
      %s399 = sadd.s32 %s397, %s398
      %s400 = smul.addr %s399, 8
      %s401 = scalar_lea.vmem %s0, %s400
      %s402 = smul.u32 %s24, 2
      %s403 = smul.u32 %s24, 2
      %s404 = sadd.s32 %s403, 1
      %p405 = scmp.lt.s32.totalorder %s22, 1
      %s406 = scalar_select %p405, %s22, 1
      %p407 = scmp.lt.s32.totalorder %s404, 9
      %s408 = scalar_select %p407, %s404, 9
      %s409 = smul.addr %s408, 20
      %s410 = smul.addr %s406, 200
      %s411 = sadd.s32 %s409, %s410
      %s412 = smul.addr %s411, 8
      %s413 = scalar_lea.vmem %s1, %s412
      %s414 = smul.u32 %s24, 2
      %s415 = sadd.s32 %s414, 1
      %s416 = smul.u32 %s24, 2
      %s417 = sadd.s32 %s416, 2
      %p418 = scmp.lt.s32.totalorder %s22, 1
      %s419 = scalar_select %p418, %s22, 1
      %p420 = scmp.lt.s32.totalorder %s417, 9
      %s421 = scalar_select %p420, %s417, 9
      %s422 = smul.addr %s421, 20
      %s423 = smul.addr %s419, 200
      %s424 = sadd.s32 %s422, %s423
      %s425 = smul.addr %s424, 8
      %s426 = scalar_lea.vmem %s2, %s425
      %s427 = smul.u32 %s24, 2
      %s428 = sadd.s32 %s427, 2
      %p429 = scmp.lt.s32.totalorder %s23, 0
      %s430 = scalar_select %p429, %s23, 0
      %s431 = smul.addr %s430, 8
      %s432 = scalar_lea.vmem %s3, %s431
      %p433 = scmp.lt.s32.totalorder %s23, 0
      %s434 = scalar_select %p433, %s23, 0
      %s435 = scalar_lea.vmem %s4, %s434
      %p436 = scmp.lt.s32.totalorder %s23, 0
      %s437 = scalar_select %p436, %s23, 0
      %s438 = scalar_lea.vmem %s5, %s437
      %p439 = scmp.lt.s32.totalorder %s22, 1
      %s440 = scalar_select %p439, %s22, 1
      %p441 = scmp.lt.s32.totalorder %s24, 3
      %s442 = scalar_select %p441, %s24, 3
      %p443 = scmp.lt.s32.totalorder %s23, 0
      %s444 = scalar_select %p443, %s23, 0
      %s445 = smul.addr %s442, 2
      %s446 = sadd.s32 %s444, %s445
      %s447 = smul.addr %s440, 8
      %s448 = sadd.s32 %s446, %s447
      %s449 = smul.addr %s448, 8
      %s450 = scalar_lea.vmem %s6, %s449
      %v451 = vld [vmem:[%s401] sm:$0xf]
      %v452 = vld [vmem:[%s401 + $0x10] sm:$0xf]
      %v453 = vld [vmem:[%s401 + $0x20] sm:$0xf]
      %v454 = vld [vmem:[%s401 + $0x30] sm:$0xf]
      %v455 = vld [vmem:[%s432] sm:$0xff]
      %v456 = vld [vmem:[%s432 + $0x8] sm:$0xff]
      %v457 = vld [vmem:[%s432 + $0x10] sm:$0xff]
      %v458 = vld [vmem:[%s432 + $0x18] sm:$0xff]
      %v459 = vld [vmem:[%s432 + $0x20] sm:$0xff]
      %v460 = vld [vmem:[%s432 + $0x28] sm:$0xff]
      %v461 = vld [vmem:[%s432 + $0x30] sm:$0xff]
      %v462 = vld [vmem:[%s432 + $0x38] sm:$0xff]
      %v463 = vld [vmem:[%s432 + $0x40] sm:$0xff]
      %v464 = vld [vmem:[%s432 + $0x48] sm:$0xff]
      %v465 = vld [vmem:[%s432 + $0x50] sm:$0xff]
      %v466 = vld [vmem:[%s432 + $0x58] sm:$0xff]
      %v467 = vld [vmem:[%s432 + $0x60] sm:$0xff]
      %v468 = vld [vmem:[%s432 + $0x68] sm:$0xff]
      %v469 = vld [vmem:[%s432 + $0x70] sm:$0xff]
      %v470 = vld [vmem:[%s432 + $0x78] sm:$0xff]
      %s471 = scalar_lea.vmem %s401, 8
      %v472 = vld [vmem:[%s471] sm:$0xf]
      %v473 = vld [vmem:[%s471 + $0x10] sm:$0xf]
      %v474 = vld [vmem:[%s471 + $0x20] sm:$0xf]
      %v475 = vld [vmem:[%s471 + $0x30] sm:$0xf]
      %s476 = scalar_lea.vmem %s432, 128
      %v477 = vld [vmem:[%s476] sm:$0xff]
      %v478 = vld [vmem:[%s476 + $0x8] sm:$0xff]
      %v479 = vld [vmem:[%s476 + $0x10] sm:$0xff]
      %v480 = vld [vmem:[%s476 + $0x18] sm:$0xff]
      %v481 = vld [vmem:[%s476 + $0x20] sm:$0xff]
      %v482 = vld [vmem:[%s476 + $0x28] sm:$0xff]
      %v483 = vld [vmem:[%s476 + $0x30] sm:$0xff]
      %v484 = vld [vmem:[%s476 + $0x38] sm:$0xff]
      %v485 = vld [vmem:[%s476 + $0x40] sm:$0xff]
      %v486 = vld [vmem:[%s476 + $0x48] sm:$0xff]
      %v487 = vld [vmem:[%s476 + $0x50] sm:$0xff]
      %v488 = vld [vmem:[%s476 + $0x58] sm:$0xff]
      %v489 = vld [vmem:[%s476 + $0x60] sm:$0xff]
      %v490 = vld [vmem:[%s476 + $0x68] sm:$0xff]
      %v491 = vld [vmem:[%s476 + $0x70] sm:$0xff]
      %v492 = vld [vmem:[%s476 + $0x78] sm:$0xff]
      %v497 = vcombine.low %v472, %v473
      %v498 = vcombine.low %v474, %v475
      %501 = vmatprep.subr.mxu0 0.0
      %502 = vmatpush1.msra.mxu0 %v477
      %503 = vmatprep.subr.mxu0 0.0
      %504 = vmatpush1.msra.mxu0 %v478
      %505 = vmatprep.subr.mxu0 0.0
      %506 = vmatpush1.msra.mxu0 %v479
      %507 = vmatprep.subr.mxu0 0.0
      %508 = vmatpush1.msra.mxu0 %v480
      %509 = vmatprep.subr.mxu0 0.0
      %510 = vmatpush1.msra.mxu0 %v481
      %511 = vmatprep.subr.mxu0 0.0
      %512 = vmatpush1.msra.mxu0 %v482
      %513 = vmatprep.subr.mxu0 0.0
      %514 = vmatpush1.msra.mxu0 %v483
      %515 = vmatprep.subr.mxu0 0.0
      %516 = vmatpush1.msra.mxu0 %v484
      %517 = vmatprep.subr.mxu0 0.0
      %518 = vmatpush1.msra.mxu0 %v485
      %519 = vmatprep.subr.mxu0 0.0
      %520 = vmatpush1.msra.mxu0 %v486
      %521 = vmatprep.subr.mxu0 0.0
      %522 = vmatpush1.msra.mxu0 %v487
      %523 = vmatprep.subr.mxu0 0.0
      %524 = vmatpush1.msra.mxu0 %v488
      %525 = vmatprep.subr.mxu0 0.0
      %526 = vmatpush1.msra.mxu0 %v489
      %527 = vmatprep.subr.mxu0 0.0
      %528 = vmatpush1.msra.mxu0 %v490
      %529 = vmatprep.subr.mxu0 0.0
      %530 = vmatpush1.msra.mxu0 %v491
      %531 = vmatprep.subr.mxu0 0.0
      %532 = vmatpush1.msra.mxu0 %v492
      %533 = vmatprep.subr.mxu0 0.0
      %534 = vmatpush1.msra.mxu0 0.0
      %535 = vmatprep.subr.mxu0 0.0
      %536 = vmatpush1.msra.mxu0 0.0
      %537 = vmatprep.subr.mxu0 0.0
      %538 = vmatpush1.msra.mxu0 0.0
      %539 = vmatprep.subr.mxu0 0.0
      %540 = vmatpush1.msra.mxu0 0.0
      %541 = vmatprep.subr.mxu0 0.0
      %542 = vmatpush1.msra.mxu0 0.0
      %543 = vmatprep.subr.mxu0 0.0
      %544 = vmatpush1.msra.mxu0 0.0
      %545 = vmatprep.subr.mxu0 0.0
      %546 = vmatpush1.msra.mxu0 0.0
      %547 = vmatprep.subr.mxu0 0.0
      %548 = vmatpush1.msra.mxu0 0.0
      %549 = vmatprep.subr.mxu0 0.0
      %550 = vmatpush1.msra.mxu0 0.0
      %551 = vmatprep.subr.mxu0 0.0
      %552 = vmatpush1.msra.mxu0 0.0
      %553 = vmatprep.subr.mxu0 0.0
      %554 = vmatpush1.msra.mxu0 0.0
      %555 = vmatprep.subr.mxu0 0.0
      %556 = vmatpush1.msra.mxu0 0.0
      %557 = vmatprep.subr.mxu0 0.0
      %558 = vmatpush1.msra.mxu0 0.0
      %559 = vmatprep.subr.mxu0 0.0
      %560 = vmatpush1.msra.mxu0 0.0
      %561 = vmatprep.subr.mxu0 0.0
      %562 = vmatpush1.msra.mxu0 0.0
      %563 = vmatprep.subr.mxu0 0.0
      %564 = vmatpush1.msra.mxu0 0.0
      %565 = vmatprep.mubr.f32.mxu0 0.0
      %566 = vmatmul.mubr.f32.gmra.mrb[0].mxu0 %v497
      %v567 = vpop.f32.mrb[0].mxu0
      %v568 = vadd.f32 0.0, %v567
      %v569 = vpop.f32.mrb[0].mxu0
      %570 = vmatprep.mubr.f32.mxu0 0.0
      %571 = vmatmul.mubr.f32.gmra.mrb[0].mxu0 %v498
      %v572 = vpop.f32.mrb[0].mxu0
      %v573 = vadd.f32 0.0, %v572
      %v574 = vpop.f32.mrb[0].mxu0
      %575 = vdwg.mxu0
      %v580 = vcombine.low %v451, %v452
      %v581 = vcombine.low %v453, %v454
      %584 = vmatprep.subr.mxu0 0.0
      %585 = vmatpush1.msra.mxu0 %v455
      %586 = vmatprep.subr.mxu0 0.0
      %587 = vmatpush1.msra.mxu0 %v456
      %588 = vmatprep.subr.mxu0 0.0
      %589 = vmatpush1.msra.mxu0 %v457
      %590 = vmatprep.subr.mxu0 0.0
      %591 = vmatpush1.msra.mxu0 %v458
      %592 = vmatprep.subr.mxu0 0.0
      %593 = vmatpush1.msra.mxu0 %v459
      %594 = vmatprep.subr.mxu0 0.0
      %595 = vmatpush1.msra.mxu0 %v460
      %596 = vmatprep.subr.mxu0 0.0
      %597 = vmatpush1.msra.mxu0 %v461
      %598 = vmatprep.subr.mxu0 0.0
      %599 = vmatpush1.msra.mxu0 %v462
      %600 = vmatprep.subr.mxu0 0.0
      %601 = vmatpush1.msra.mxu0 %v463
      %602 = vmatprep.subr.mxu0 0.0
      %603 = vmatpush1.msra.mxu0 %v464
      %604 = vmatprep.subr.mxu0 0.0
      %605 = vmatpush1.msra.mxu0 %v465
      %606 = vmatprep.subr.mxu0 0.0
      %607 = vmatpush1.msra.mxu0 %v466
      %608 = vmatprep.subr.mxu0 0.0
      %609 = vmatpush1.msra.mxu0 %v467
      %610 = vmatprep.subr.mxu0 0.0
      %611 = vmatpush1.msra.mxu0 %v468
      %612 = vmatprep.subr.mxu0 0.0
      %613 = vmatpush1.msra.mxu0 %v469
      %614 = vmatprep.subr.mxu0 0.0
      %615 = vmatpush1.msra.mxu0 %v470
      %616 = vmatprep.subr.mxu0 0.0
      %617 = vmatpush1.msra.mxu0 0.0
      %618 = vmatprep.subr.mxu0 0.0
      %619 = vmatpush1.msra.mxu0 0.0
      %620 = vmatprep.subr.mxu0 0.0
      %621 = vmatpush1.msra.mxu0 0.0
      %622 = vmatprep.subr.mxu0 0.0
      %623 = vmatpush1.msra.mxu0 0.0
      %624 = vmatprep.subr.mxu0 0.0
      %625 = vmatpush1.msra.mxu0 0.0
      %626 = vmatprep.subr.mxu0 0.0
      %627 = vmatpush1.msra.mxu0 0.0
      %628 = vmatprep.subr.mxu0 0.0
      %629 = vmatpush1.msra.mxu0 0.0
      %630 = vmatprep.subr.mxu0 0.0
      %631 = vmatpush1.msra.mxu0 0.0
      %632 = vmatprep.subr.mxu0 0.0
      %633 = vmatpush1.msra.mxu0 0.0
      %634 = vmatprep.subr.mxu0 0.0
      %635 = vmatpush1.msra.mxu0 0.0
      %636 = vmatprep.subr.mxu0 0.0
      %637 = vmatpush1.msra.mxu0 0.0
      %638 = vmatprep.subr.mxu0 0.0
      %639 = vmatpush1.msra.mxu0 0.0
      %640 = vmatprep.subr.mxu0 0.0
      %641 = vmatpush1.msra.mxu0 0.0
      %642 = vmatprep.subr.mxu0 0.0
      %643 = vmatpush1.msra.mxu0 0.0
      %644 = vmatprep.subr.mxu0 0.0
      %645 = vmatpush1.msra.mxu0 0.0
      %646 = vmatprep.subr.mxu0 0.0
      %647 = vmatpush1.msra.mxu0 0.0
      %648 = vmatprep.mubr.f32.mxu0 0.0
      %649 = vmatmul.mubr.f32.gmra.mrb[0].mxu0 %v580
      %v650 = vpop.f32.mrb[0].mxu0
      %v651 = vadd.f32 %v568, %v650
      %v652 = vpop.f32.mrb[0].mxu0
      %653 = vmatprep.mubr.f32.mxu0 0.0
      %654 = vmatmul.mubr.f32.gmra.mrb[0].mxu0 %v581
      %v655 = vpop.f32.mrb[0].mxu0
      %v656 = vadd.f32 %v573, %v655
      %v657 = vpop.f32.mrb[0].mxu0
      %658 = vdwg.mxu0
      %v659 = vld [vmem:[%s401 + $0x1] sm:$0xf]
      %v660 = vld [vmem:[%s401 + $0x11] sm:$0xf]
      %v661 = vld [vmem:[%s401 + $0x21] sm:$0xf]
      %v662 = vld [vmem:[%s401 + $0x31] sm:$0xf]
      %s663 = scalar_lea.vmem %s432, 256
      %v664 = vld [vmem:[%s663] sm:$0xff]
      %v665 = vld [vmem:[%s663 + $0x8] sm:$0xff]
      %v666 = vld [vmem:[%s663 + $0x10] sm:$0xff]
      %v667 = vld [vmem:[%s663 + $0x18] sm:$0xff]
      %v668 = vld [vmem:[%s663 + $0x20] sm:$0xff]
      %v669 = vld [vmem:[%s663 + $0x28] sm:$0xff]
      %v670 = vld [vmem:[%s663 + $0x30] sm:$0xff]
      %v671 = vld [vmem:[%s663 + $0x38] sm:$0xff]
      %v672 = vld [vmem:[%s663 + $0x40] sm:$0xff]
      %v673 = vld [vmem:[%s663 + $0x48] sm:$0xff]
      %v674 = vld [vmem:[%s663 + $0x50] sm:$0xff]
      %v675 = vld [vmem:[%s663 + $0x58] sm:$0xff]
      %v676 = vld [vmem:[%s663 + $0x60] sm:$0xff]
      %v677 = vld [vmem:[%s663 + $0x68] sm:$0xff]
      %v678 = vld [vmem:[%s663 + $0x70] sm:$0xff]
      %v679 = vld [vmem:[%s663 + $0x78] sm:$0xff]
      %v684 = vcombine.low %v659, %v660
      %v685 = vcombine.low %v661, %v662
      %688 = vmatprep.subr.mxu0 0.0
      %689 = vmatpush1.msra.mxu0 %v664
      %690 = vmatprep.subr.mxu0 0.0
      %691 = vmatpush1.msra.mxu0 %v665
      %692 = vmatprep.subr.mxu0 0.0
      %693 = vmatpush1.msra.mxu0 %v666
      %694 = vmatprep.subr.mxu0 0.0
      %695 = vmatpush1.msra.mxu0 %v667
      %696 = vmatprep.subr.mxu0 0.0
      %697 = vmatpush1.msra.mxu0 %v668
      %698 = vmatprep.subr.mxu0 0.0
      %699 = vmatpush1.msra.mxu0 %v669
      %700 = vmatprep.subr.mxu0 0.0
      %701 = vmatpush1.msra.mxu0 %v670
      %702 = vmatprep.subr.mxu0 0.0
      %703 = vmatpush1.msra.mxu0 %v671
      %704 = vmatprep.subr.mxu0 0.0
      %705 = vmatpush1.msra.mxu0 %v672
      %706 = vmatprep.subr.mxu0 0.0
      %707 = vmatpush1.msra.mxu0 %v673
      %708 = vmatprep.subr.mxu0 0.0
      %709 = vmatpush1.msra.mxu0 %v674
      %710 = vmatprep.subr.mxu0 0.0
      %711 = vmatpush1.msra.mxu0 %v675
      %712 = vmatprep.subr.mxu0 0.0
      %713 = vmatpush1.msra.mxu0 %v676
      %714 = vmatprep.subr.mxu0 0.0
      %715 = vmatpush1.msra.mxu0 %v677
      %716 = vmatprep.subr.mxu0 0.0
      %717 = vmatpush1.msra.mxu0 %v678
      %718 = vmatprep.subr.mxu0 0.0
      %719 = vmatpush1.msra.mxu0 %v679
      %720 = vmatprep.subr.mxu0 0.0
      %721 = vmatpush1.msra.mxu0 0.0
      %722 = vmatprep.subr.mxu0 0.0
      %723 = vmatpush1.msra.mxu0 0.0
      %724 = vmatprep.subr.mxu0 0.0
      %725 = vmatpush1.msra.mxu0 0.0
      %726 = vmatprep.subr.mxu0 0.0
      %727 = vmatpush1.msra.mxu0 0.0
      %728 = vmatprep.subr.mxu0 0.0
      %729 = vmatpush1.msra.mxu0 0.0
      %730 = vmatprep.subr.mxu0 0.0
      %731 = vmatpush1.msra.mxu0 0.0
      %732 = vmatprep.subr.mxu0 0.0
      %733 = vmatpush1.msra.mxu0 0.0
      %734 = vmatprep.subr.mxu0 0.0
      %735 = vmatpush1.msra.mxu0 0.0
      %736 = vmatprep.subr.mxu0 0.0
      %737 = vmatpush1.msra.mxu0 0.0
      %738 = vmatprep.subr.mxu0 0.0
      %739 = vmatpush1.msra.mxu0 0.0
      %740 = vmatprep.subr.mxu0 0.0
      %741 = vmatpush1.msra.mxu0 0.0
      %742 = vmatprep.subr.mxu0 0.0
      %743 = vmatpush1.msra.mxu0 0.0
      %744 = vmatprep.subr.mxu0 0.0
      %745 = vmatpush1.msra.mxu0 0.0
      %746 = vmatprep.subr.mxu0 0.0
      %747 = vmatpush1.msra.mxu0 0.0
      %748 = vmatprep.subr.mxu0 0.0
      %749 = vmatpush1.msra.mxu0 0.0
      %750 = vmatprep.subr.mxu0 0.0
      %751 = vmatpush1.msra.mxu0 0.0
      %752 = vmatprep.mubr.f32.mxu0 0.0
      %753 = vmatmul.mubr.f32.gmra.mrb[0].mxu0 %v684
      %v754 = vpop.f32.mrb[0].mxu0
      %v755 = vadd.f32 0.0, %v754
      %v756 = vpop.f32.mrb[0].mxu0
      %757 = vmatprep.mubr.f32.mxu0 0.0
      %758 = vmatmul.mubr.f32.gmra.mrb[0].mxu0 %v685
      %v759 = vpop.f32.mrb[0].mxu0
      %v760 = vadd.f32 0.0, %v759
      %v761 = vpop.f32.mrb[0].mxu0
      %762 = vdwg.mxu0
      %v763 = vadd.f32 %v651, %v755
      %v764 = vadd.f32 %v656, %v760
      %s765 = scalar_lea.vmem %s401, 80
      %v766 = vld [vmem:[%s765] sm:$0xf]
      %v767 = vld [vmem:[%s765 + $0x10] sm:$0xf]
      %v768 = vld [vmem:[%s765 + $0x20] sm:$0xf]
      %v769 = vld [vmem:[%s765 + $0x30] sm:$0xf]
      %s770 = scalar_lea.vmem %s432, 384
      %v771 = vld [vmem:[%s770] sm:$0xff]
      %v772 = vld [vmem:[%s770 + $0x8] sm:$0xff]
      %v773 = vld [vmem:[%s770 + $0x10] sm:$0xff]
      %v774 = vld [vmem:[%s770 + $0x18] sm:$0xff]
      %v775 = vld [vmem:[%s770 + $0x20] sm:$0xff]
      %v776 = vld [vmem:[%s770 + $0x28] sm:$0xff]
      %v777 = vld [vmem:[%s770 + $0x30] sm:$0xff]
      %v778 = vld [vmem:[%s770 + $0x38] sm:$0xff]
      %v779 = vld [vmem:[%s770 + $0x40] sm:$0xff]
      %v780 = vld [vmem:[%s770 + $0x48] sm:$0xff]
      %v781 = vld [vmem:[%s770 + $0x50] sm:$0xff]
      %v782 = vld [vmem:[%s770 + $0x58] sm:$0xff]
      %v783 = vld [vmem:[%s770 + $0x60] sm:$0xff]
      %v784 = vld [vmem:[%s770 + $0x68] sm:$0xff]
      %v785 = vld [vmem:[%s770 + $0x70] sm:$0xff]
      %v786 = vld [vmem:[%s770 + $0x78] sm:$0xff]
      %v791 = vcombine.low %v766, %v767
      %v792 = vcombine.low %v768, %v769
      %795 = vmatprep.subr.mxu0 0.0
      %796 = vmatpush1.msra.mxu0 %v771
      %797 = vmatprep.subr.mxu0 0.0
      %798 = vmatpush1.msra.mxu0 %v772
      %799 = vmatprep.subr.mxu0 0.0
      %800 = vmatpush1.msra.mxu0 %v773
      %801 = vmatprep.subr.mxu0 0.0
      %802 = vmatpush1.msra.mxu0 %v774
      %803 = vmatprep.subr.mxu0 0.0
      %804 = vmatpush1.msra.mxu0 %v775
      %805 = vmatprep.subr.mxu0 0.0
      %806 = vmatpush1.msra.mxu0 %v776
      %807 = vmatprep.subr.mxu0 0.0
      %808 = vmatpush1.msra.mxu0 %v777
      %809 = vmatprep.subr.mxu0 0.0
      %810 = vmatpush1.msra.mxu0 %v778
      %811 = vmatprep.subr.mxu0 0.0
      %812 = vmatpush1.msra.mxu0 %v779
      %813 = vmatprep.subr.mxu0 0.0
      %814 = vmatpush1.msra.mxu0 %v780
      %815 = vmatprep.subr.mxu0 0.0
      %816 = vmatpush1.msra.mxu0 %v781
      %817 = vmatprep.subr.mxu0 0.0
      %818 = vmatpush1.msra.mxu0 %v782
      %819 = vmatprep.subr.mxu0 0.0
      %820 = vmatpush1.msra.mxu0 %v783
      %821 = vmatprep.subr.mxu0 0.0
      %822 = vmatpush1.msra.mxu0 %v784
      %823 = vmatprep.subr.mxu0 0.0
      %824 = vmatpush1.msra.mxu0 %v785
      %825 = vmatprep.subr.mxu0 0.0
      %826 = vmatpush1.msra.mxu0 %v786
      %827 = vmatprep.subr.mxu0 0.0
      %828 = vmatpush1.msra.mxu0 0.0
      %829 = vmatprep.subr.mxu0 0.0
      %830 = vmatpush1.msra.mxu0 0.0
      %831 = vmatprep.subr.mxu0 0.0
      %832 = vmatpush1.msra.mxu0 0.0
      %833 = vmatprep.subr.mxu0 0.0
      %834 = vmatpush1.msra.mxu0 0.0
      %835 = vmatprep.subr.mxu0 0.0
      %836 = vmatpush1.msra.mxu0 0.0
      %837 = vmatprep.subr.mxu0 0.0
      %838 = vmatpush1.msra.mxu0 0.0
      %839 = vmatprep.subr.mxu0 0.0
      %840 = vmatpush1.msra.mxu0 0.0
      %841 = vmatprep.subr.mxu0 0.0
      %842 = vmatpush1.msra.mxu0 0.0
      %843 = vmatprep.subr.mxu0 0.0
      %844 = vmatpush1.msra.mxu0 0.0
      %845 = vmatprep.subr.mxu0 0.0
      %846 = vmatpush1.msra.mxu0 0.0
      %847 = vmatprep.subr.mxu0 0.0
      %848 = vmatpush1.msra.mxu0 0.0
      %849 = vmatprep.subr.mxu0 0.0
      %850 = vmatpush1.msra.mxu0 0.0
      %851 = vmatprep.subr.mxu0 0.0
      %852 = vmatpush1.msra.mxu0 0.0
      %853 = vmatprep.subr.mxu0 0.0
      %854 = vmatpush1.msra.mxu0 0.0
      %855 = vmatprep.subr.mxu0 0.0
      %856 = vmatpush1.msra.mxu0 0.0
      %857 = vmatprep.subr.mxu0 0.0
      %858 = vmatpush1.msra.mxu0 0.0
      %859 = vmatprep.mubr.f32.mxu0 0.0
      %860 = vmatmul.mubr.f32.gmra.mrb[0].mxu0 %v791
      %v861 = vpop.f32.mrb[0].mxu0
      %v862 = vadd.f32 0.0, %v861
      %v863 = vpop.f32.mrb[0].mxu0
      %864 = vmatprep.mubr.f32.mxu0 0.0
      %865 = vmatmul.mubr.f32.gmra.mrb[0].mxu0 %v792
      %v866 = vpop.f32.mrb[0].mxu0
      %v867 = vadd.f32 0.0, %v866
      %v868 = vpop.f32.mrb[0].mxu0
      %869 = vdwg.mxu0
      %v870 = vadd.f32 %v763, %v862
      %v871 = vadd.f32 %v764, %v867
      %s872 = scalar_lea.vmem %s401, 88
      %v873 = vld [vmem:[%s872] sm:$0xf]
      %v874 = vld [vmem:[%s872 + $0x10] sm:$0xf]
      %v875 = vld [vmem:[%s872 + $0x20] sm:$0xf]
      %v876 = vld [vmem:[%s872 + $0x30] sm:$0xf]
      %s877 = scalar_lea.vmem %s432, 512
      %v878 = vld [vmem:[%s877] sm:$0xff]
      %v879 = vld [vmem:[%s877 + $0x8] sm:$0xff]
      %v880 = vld [vmem:[%s877 + $0x10] sm:$0xff]
      %v881 = vld [vmem:[%s877 + $0x18] sm:$0xff]
      %v882 = vld [vmem:[%s877 + $0x20] sm:$0xff]
      %v883 = vld [vmem:[%s877 + $0x28] sm:$0xff]
      %v884 = vld [vmem:[%s877 + $0x30] sm:$0xff]
      %v885 = vld [vmem:[%s877 + $0x38] sm:$0xff]
      %v886 = vld [vmem:[%s877 + $0x40] sm:$0xff]
      %v887 = vld [vmem:[%s877 + $0x48] sm:$0xff]
      %v888 = vld [vmem:[%s877 + $0x50] sm:$0xff]
      %v889 = vld [vmem:[%s877 + $0x58] sm:$0xff]
      %v890 = vld [vmem:[%s877 + $0x60] sm:$0xff]
      %v891 = vld [vmem:[%s877 + $0x68] sm:$0xff]
      %v892 = vld [vmem:[%s877 + $0x70] sm:$0xff]
      %v893 = vld [vmem:[%s877 + $0x78] sm:$0xff]
      %v898 = vcombine.low %v873, %v874
      %v899 = vcombine.low %v875, %v876
      %902 = vmatprep.subr.mxu0 0.0
      %903 = vmatpush1.msra.mxu0 %v878
      %904 = vmatprep.subr.mxu0 0.0
      %905 = vmatpush1.msra.mxu0 %v879
      %906 = vmatprep.subr.mxu0 0.0
      %907 = vmatpush1.msra.mxu0 %v880
      %908 = vmatprep.subr.mxu0 0.0
      %909 = vmatpush1.msra.mxu0 %v881
      %910 = vmatprep.subr.mxu0 0.0
      %911 = vmatpush1.msra.mxu0 %v882
      %912 = vmatprep.subr.mxu0 0.0
      %913 = vmatpush1.msra.mxu0 %v883
      %914 = vmatprep.subr.mxu0 0.0
      %915 = vmatpush1.msra.mxu0 %v884
      %916 = vmatprep.subr.mxu0 0.0
      %917 = vmatpush1.msra.mxu0 %v885
      %918 = vmatprep.subr.mxu0 0.0
      %919 = vmatpush1.msra.mxu0 %v886
      %920 = vmatprep.subr.mxu0 0.0
      %921 = vmatpush1.msra.mxu0 %v887
      %922 = vmatprep.subr.mxu0 0.0
      %923 = vmatpush1.msra.mxu0 %v888
      %924 = vmatprep.subr.mxu0 0.0
      %925 = vmatpush1.msra.mxu0 %v889
      %926 = vmatprep.subr.mxu0 0.0
      %927 = vmatpush1.msra.mxu0 %v890
      %928 = vmatprep.subr.mxu0 0.0
      %929 = vmatpush1.msra.mxu0 %v891
      %930 = vmatprep.subr.mxu0 0.0
      %931 = vmatpush1.msra.mxu0 %v892
      %932 = vmatprep.subr.mxu0 0.0
      %933 = vmatpush1.msra.mxu0 %v893
      %934 = vmatprep.subr.mxu0 0.0
      %935 = vmatpush1.msra.mxu0 0.0
      %936 = vmatprep.subr.mxu0 0.0
      %937 = vmatpush1.msra.mxu0 0.0
      %938 = vmatprep.subr.mxu0 0.0
      %939 = vmatpush1.msra.mxu0 0.0
      %940 = vmatprep.subr.mxu0 0.0
      %941 = vmatpush1.msra.mxu0 0.0
      %942 = vmatprep.subr.mxu0 0.0
      %943 = vmatpush1.msra.mxu0 0.0
      %944 = vmatprep.subr.mxu0 0.0
      %945 = vmatpush1.msra.mxu0 0.0
      %946 = vmatprep.subr.mxu0 0.0
      %947 = vmatpush1.msra.mxu0 0.0
      %948 = vmatprep.subr.mxu0 0.0
      %949 = vmatpush1.msra.mxu0 0.0
      %950 = vmatprep.subr.mxu0 0.0
      %951 = vmatpush1.msra.mxu0 0.0
      %952 = vmatprep.subr.mxu0 0.0
      %953 = vmatpush1.msra.mxu0 0.0
      %954 = vmatprep.subr.mxu0 0.0
      %955 = vmatpush1.msra.mxu0 0.0
      %956 = vmatprep.subr.mxu0 0.0
      %957 = vmatpush1.msra.mxu0 0.0
      %958 = vmatprep.subr.mxu0 0.0
      %959 = vmatpush1.msra.mxu0 0.0
      %960 = vmatprep.subr.mxu0 0.0
      %961 = vmatpush1.msra.mxu0 0.0
      %962 = vmatprep.subr.mxu0 0.0
      %963 = vmatpush1.msra.mxu0 0.0
      %964 = vmatprep.subr.mxu0 0.0
      %965 = vmatpush1.msra.mxu0 0.0
      %966 = vmatprep.mubr.f32.mxu0 0.0
      %967 = vmatmul.mubr.f32.gmra.mrb[0].mxu0 %v898
      %v968 = vpop.f32.mrb[0].mxu0
      %v969 = vadd.f32 0.0, %v968
      %v970 = vpop.f32.mrb[0].mxu0
      %971 = vmatprep.mubr.f32.mxu0 0.0
      %972 = vmatmul.mubr.f32.gmra.mrb[0].mxu0 %v899
      %v973 = vpop.f32.mrb[0].mxu0
      %v974 = vadd.f32 0.0, %v973
      %v975 = vpop.f32.mrb[0].mxu0
      %976 = vdwg.mxu0
      %v977 = vadd.f32 %v870, %v969
      %v978 = vadd.f32 %v871, %v974
      %v979 = vld [vmem:[%s765 + $0x1] sm:$0xf]
      %v980 = vld [vmem:[%s765 + $0x11] sm:$0xf]
      %v981 = vld [vmem:[%s765 + $0x21] sm:$0xf]
      %v982 = vld [vmem:[%s765 + $0x31] sm:$0xf]
      %s983 = scalar_lea.vmem %s432, 640
      %v984 = vld [vmem:[%s983] sm:$0xff]
      %v985 = vld [vmem:[%s983 + $0x8] sm:$0xff]
      %v986 = vld [vmem:[%s983 + $0x10] sm:$0xff]
      %v987 = vld [vmem:[%s983 + $0x18] sm:$0xff]
      %v988 = vld [vmem:[%s983 + $0x20] sm:$0xff]
      %v989 = vld [vmem:[%s983 + $0x28] sm:$0xff]
      %v990 = vld [vmem:[%s983 + $0x30] sm:$0xff]
      %v991 = vld [vmem:[%s983 + $0x38] sm:$0xff]
      %v992 = vld [vmem:[%s983 + $0x40] sm:$0xff]
      %v993 = vld [vmem:[%s983 + $0x48] sm:$0xff]
      %v994 = vld [vmem:[%s983 + $0x50] sm:$0xff]
      %v995 = vld [vmem:[%s983 + $0x58] sm:$0xff]
      %v996 = vld [vmem:[%s983 + $0x60] sm:$0xff]
      %v997 = vld [vmem:[%s983 + $0x68] sm:$0xff]
      %v998 = vld [vmem:[%s983 + $0x70] sm:$0xff]
      %v999 = vld [vmem:[%s983 + $0x78] sm:$0xff]
      %v1004 = vcombine.low %v979, %v980
      %v1005 = vcombine.low %v981, %v982
      %1008 = vmatprep.subr.mxu0 0.0
      %1009 = vmatpush1.msra.mxu0 %v984
      %1010 = vmatprep.subr.mxu0 0.0
      %1011 = vmatpush1.msra.mxu0 %v985
      %1012 = vmatprep.subr.mxu0 0.0
      %1013 = vmatpush1.msra.mxu0 %v986
      %1014 = vmatprep.subr.mxu0 0.0
      %1015 = vmatpush1.msra.mxu0 %v987
      %1016 = vmatprep.subr.mxu0 0.0
      %1017 = vmatpush1.msra.mxu0 %v988
      %1018 = vmatprep.subr.mxu0 0.0
      %1019 = vmatpush1.msra.mxu0 %v989
      %1020 = vmatprep.subr.mxu0 0.0
      %1021 = vmatpush1.msra.mxu0 %v990
      %1022 = vmatprep.subr.mxu0 0.0
      %1023 = vmatpush1.msra.mxu0 %v991
      %1024 = vmatprep.subr.mxu0 0.0
      %1025 = vmatpush1.msra.mxu0 %v992
      %1026 = vmatprep.subr.mxu0 0.0
      %1027 = vmatpush1.msra.mxu0 %v993
      %1028 = vmatprep.subr.mxu0 0.0
      %1029 = vmatpush1.msra.mxu0 %v994
      %1030 = vmatprep.subr.mxu0 0.0
      %1031 = vmatpush1.msra.mxu0 %v995
      %1032 = vmatprep.subr.mxu0 0.0
      %1033 = vmatpush1.msra.mxu0 %v996
      %1034 = vmatprep.subr.mxu0 0.0
      %1035 = vmatpush1.msra.mxu0 %v997
      %1036 = vmatprep.subr.mxu0 0.0
      %1037 = vmatpush1.msra.mxu0 %v998
      %1038 = vmatprep.subr.mxu0 0.0
      %1039 = vmatpush1.msra.mxu0 %v999
      %1040 = vmatprep.subr.mxu0 0.0
      %1041 = vmatpush1.msra.mxu0 0.0
      %1042 = vmatprep.subr.mxu0 0.0
      %1043 = vmatpush1.msra.mxu0 0.0
      %1044 = vmatprep.subr.mxu0 0.0
      %1045 = vmatpush1.msra.mxu0 0.0
      %1046 = vmatprep.subr.mxu0 0.0
      %1047 = vmatpush1.msra.mxu0 0.0
      %1048 = vmatprep.subr.mxu0 0.0
      %1049 = vmatpush1.msra.mxu0 0.0
      %1050 = vmatprep.subr.mxu0 0.0
      %1051 = vmatpush1.msra.mxu0 0.0
      %1052 = vmatprep.subr.mxu0 0.0
      %1053 = vmatpush1.msra.mxu0 0.0
      %1054 = vmatprep.subr.mxu0 0.0
      %1055 = vmatpush1.msra.mxu0 0.0
      %1056 = vmatprep.subr.mxu0 0.0
      %1057 = vmatpush1.msra.mxu0 0.0
      %1058 = vmatprep.subr.mxu0 0.0
      %1059 = vmatpush1.msra.mxu0 0.0
      %1060 = vmatprep.subr.mxu0 0.0
      %1061 = vmatpush1.msra.mxu0 0.0
      %1062 = vmatprep.subr.mxu0 0.0
      %1063 = vmatpush1.msra.mxu0 0.0
      %1064 = vmatprep.subr.mxu0 0.0
      %1065 = vmatpush1.msra.mxu0 0.0
      %1066 = vmatprep.subr.mxu0 0.0
      %1067 = vmatpush1.msra.mxu0 0.0
      %1068 = vmatprep.subr.mxu0 0.0
      %1069 = vmatpush1.msra.mxu0 0.0
      %1070 = vmatprep.subr.mxu0 0.0
      %1071 = vmatpush1.msra.mxu0 0.0
      %1072 = vmatprep.mubr.f32.mxu0 0.0
      %1073 = vmatmul.mubr.f32.gmra.mrb[0].mxu0 %v1004
      %v1074 = vpop.f32.mrb[0].mxu0
      %v1075 = vadd.f32 0.0, %v1074
      %v1076 = vpop.f32.mrb[0].mxu0
      %1077 = vmatprep.mubr.f32.mxu0 0.0
      %1078 = vmatmul.mubr.f32.gmra.mrb[0].mxu0 %v1005
      %v1079 = vpop.f32.mrb[0].mxu0
      %v1080 = vadd.f32 0.0, %v1079
      %v1081 = vpop.f32.mrb[0].mxu0
      %1082 = vdwg.mxu0
      %v1083 = vadd.f32 %v977, %v1075
      %v1084 = vadd.f32 %v978, %v1080
      %s1085 = scalar_lea.vmem %s401, 16
      %v1086 = vld [vmem:[%s1085] sm:$0xf]
      %v1087 = vld [vmem:[%s1085 + $0x10] sm:$0xf]
      %v1088 = vld [vmem:[%s1085 + $0x20] sm:$0xf]
      %v1089 = vld [vmem:[%s1085 + $0x30] sm:$0xf]
      %s1090 = scalar_lea.vmem %s432, 768
      %v1091 = vld [vmem:[%s1090] sm:$0xff]
      %v1092 = vld [vmem:[%s1090 + $0x8] sm:$0xff]
      %v1093 = vld [vmem:[%s1090 + $0x10] sm:$0xff]
      %v1094 = vld [vmem:[%s1090 + $0x18] sm:$0xff]
      %v1095 = vld [vmem:[%s1090 + $0x20] sm:$0xff]
      %v1096 = vld [vmem:[%s1090 + $0x28] sm:$0xff]
      %v1097 = vld [vmem:[%s1090 + $0x30] sm:$0xff]
      %v1098 = vld [vmem:[%s1090 + $0x38] sm:$0xff]
      %v1099 = vld [vmem:[%s1090 + $0x40] sm:$0xff]
      %v1100 = vld [vmem:[%s1090 + $0x48] sm:$0xff]
      %v1101 = vld [vmem:[%s1090 + $0x50] sm:$0xff]
      %v1102 = vld [vmem:[%s1090 + $0x58] sm:$0xff]
      %v1103 = vld [vmem:[%s1090 + $0x60] sm:$0xff]
      %v1104 = vld [vmem:[%s1090 + $0x68] sm:$0xff]
      %v1105 = vld [vmem:[%s1090 + $0x70] sm:$0xff]
      %v1106 = vld [vmem:[%s1090 + $0x78] sm:$0xff]
      %v1111 = vcombine.low %v1086, %v1087
      %v1112 = vcombine.low %v1088, %v1089
      %1115 = vmatprep.subr.mxu0 0.0
      %1116 = vmatpush1.msra.mxu0 %v1091
      %1117 = vmatprep.subr.mxu0 0.0
      %1118 = vmatpush1.msra.mxu0 %v1092
      %1119 = vmatprep.subr.mxu0 0.0
      %1120 = vmatpush1.msra.mxu0 %v1093
      %1121 = vmatprep.subr.mxu0 0.0
      %1122 = vmatpush1.msra.mxu0 %v1094
      %1123 = vmatprep.subr.mxu0 0.0
      %1124 = vmatpush1.msra.mxu0 %v1095
      %1125 = vmatprep.subr.mxu0 0.0
      %1126 = vmatpush1.msra.mxu0 %v1096
      %1127 = vmatprep.subr.mxu0 0.0
      %1128 = vmatpush1.msra.mxu0 %v1097
      %1129 = vmatprep.subr.mxu0 0.0
      %1130 = vmatpush1.msra.mxu0 %v1098
      %1131 = vmatprep.subr.mxu0 0.0
      %1132 = vmatpush1.msra.mxu0 %v1099
      %1133 = vmatprep.subr.mxu0 0.0
      %1134 = vmatpush1.msra.mxu0 %v1100
      %1135 = vmatprep.subr.mxu0 0.0
      %1136 = vmatpush1.msra.mxu0 %v1101
      %1137 = vmatprep.subr.mxu0 0.0
      %1138 = vmatpush1.msra.mxu0 %v1102
      %1139 = vmatprep.subr.mxu0 0.0
      %1140 = vmatpush1.msra.mxu0 %v1103
      %1141 = vmatprep.subr.mxu0 0.0
      %1142 = vmatpush1.msra.mxu0 %v1104
      %1143 = vmatprep.subr.mxu0 0.0
      %1144 = vmatpush1.msra.mxu0 %v1105
      %1145 = vmatprep.subr.mxu0 0.0
      %1146 = vmatpush1.msra.mxu0 %v1106
      %1147 = vmatprep.subr.mxu0 0.0
      %1148 = vmatpush1.msra.mxu0 0.0
      %1149 = vmatprep.subr.mxu0 0.0
      %1150 = vmatpush1.msra.mxu0 0.0
      %1151 = vmatprep.subr.mxu0 0.0
      %1152 = vmatpush1.msra.mxu0 0.0
      %1153 = vmatprep.subr.mxu0 0.0
      %1154 = vmatpush1.msra.mxu0 0.0
      %1155 = vmatprep.subr.mxu0 0.0
      %1156 = vmatpush1.msra.mxu0 0.0
      %1157 = vmatprep.subr.mxu0 0.0
      %1158 = vmatpush1.msra.mxu0 0.0
      %1159 = vmatprep.subr.mxu0 0.0
      %1160 = vmatpush1.msra.mxu0 0.0
      %1161 = vmatprep.subr.mxu0 0.0
      %1162 = vmatpush1.msra.mxu0 0.0
      %1163 = vmatprep.subr.mxu0 0.0
      %1164 = vmatpush1.msra.mxu0 0.0
      %1165 = vmatprep.subr.mxu0 0.0
      %1166 = vmatpush1.msra.mxu0 0.0
      %1167 = vmatprep.subr.mxu0 0.0
      %1168 = vmatpush1.msra.mxu0 0.0
      %1169 = vmatprep.subr.mxu0 0.0
      %1170 = vmatpush1.msra.mxu0 0.0
      %1171 = vmatprep.subr.mxu0 0.0
      %1172 = vmatpush1.msra.mxu0 0.0
      %1173 = vmatprep.subr.mxu0 0.0
      %1174 = vmatpush1.msra.mxu0 0.0
      %1175 = vmatprep.subr.mxu0 0.0
      %1176 = vmatpush1.msra.mxu0 0.0
      %1177 = vmatprep.subr.mxu0 0.0
      %1178 = vmatpush1.msra.mxu0 0.0
      %1179 = vmatprep.mubr.f32.mxu0 0.0
      %1180 = vmatmul.mubr.f32.gmra.mrb[0].mxu0 %v1111
      %v1181 = vpop.f32.mrb[0].mxu0
      %v1182 = vadd.f32 0.0, %v1181
      %v1183 = vpop.f32.mrb[0].mxu0
      %1184 = vmatprep.mubr.f32.mxu0 0.0
      %1185 = vmatmul.mubr.f32.gmra.mrb[0].mxu0 %v1112
      %v1186 = vpop.f32.mrb[0].mxu0
      %v1187 = vadd.f32 0.0, %v1186
      %v1188 = vpop.f32.mrb[0].mxu0
      %1189 = vdwg.mxu0
      %v1190 = vadd.f32 %v1083, %v1182
      %v1191 = vadd.f32 %v1084, %v1187
      %s1192 = scalar_lea.vmem %s401, 24
      %v1193 = vld [vmem:[%s1192] sm:$0xf]
      %v1194 = vld [vmem:[%s1192 + $0x10] sm:$0xf]
      %v1195 = vld [vmem:[%s1192 + $0x20] sm:$0xf]
      %v1196 = vld [vmem:[%s1192 + $0x30] sm:$0xf]
      %s1197 = scalar_lea.vmem %s432, 896
      %v1198 = vld [vmem:[%s1197] sm:$0xff]
      %v1199 = vld [vmem:[%s1197 + $0x8] sm:$0xff]
      %v1200 = vld [vmem:[%s1197 + $0x10] sm:$0xff]
      %v1201 = vld [vmem:[%s1197 + $0x18] sm:$0xff]
      %v1202 = vld [vmem:[%s1197 + $0x20] sm:$0xff]
      %v1203 = vld [vmem:[%s1197 + $0x28] sm:$0xff]
      %v1204 = vld [vmem:[%s1197 + $0x30] sm:$0xff]
      %v1205 = vld [vmem:[%s1197 + $0x38] sm:$0xff]
      %v1206 = vld [vmem:[%s1197 + $0x40] sm:$0xff]
      %v1207 = vld [vmem:[%s1197 + $0x48] sm:$0xff]
      %v1208 = vld [vmem:[%s1197 + $0x50] sm:$0xff]
      %v1209 = vld [vmem:[%s1197 + $0x58] sm:$0xff]
      %v1210 = vld [vmem:[%s1197 + $0x60] sm:$0xff]
      %v1211 = vld [vmem:[%s1197 + $0x68] sm:$0xff]
      %v1212 = vld [vmem:[%s1197 + $0x70] sm:$0xff]
      %v1213 = vld [vmem:[%s1197 + $0x78] sm:$0xff]
      %v1218 = vcombine.low %v1193, %v1194
      %v1219 = vcombine.low %v1195, %v1196
      %1222 = vmatprep.subr.mxu0 0.0
      %1223 = vmatpush1.msra.mxu0 %v1198
      %1224 = vmatprep.subr.mxu0 0.0
      %1225 = vmatpush1.msra.mxu0 %v1199
      %1226 = vmatprep.subr.mxu0 0.0
      %1227 = vmatpush1.msra.mxu0 %v1200
      %1228 = vmatprep.subr.mxu0 0.0
      %1229 = vmatpush1.msra.mxu0 %v1201
      %1230 = vmatprep.subr.mxu0 0.0
      %1231 = vmatpush1.msra.mxu0 %v1202
      %1232 = vmatprep.subr.mxu0 0.0
      %1233 = vmatpush1.msra.mxu0 %v1203
      %1234 = vmatprep.subr.mxu0 0.0
      %1235 = vmatpush1.msra.mxu0 %v1204
      %1236 = vmatprep.subr.mxu0 0.0
      %1237 = vmatpush1.msra.mxu0 %v1205
      %1238 = vmatprep.subr.mxu0 0.0
      %1239 = vmatpush1.msra.mxu0 %v1206
      %1240 = vmatprep.subr.mxu0 0.0
      %1241 = vmatpush1.msra.mxu0 %v1207
      %1242 = vmatprep.subr.mxu0 0.0
      %1243 = vmatpush1.msra.mxu0 %v1208
      %1244 = vmatprep.subr.mxu0 0.0
      %1245 = vmatpush1.msra.mxu0 %v1209
      %1246 = vmatprep.subr.mxu0 0.0
      %1247 = vmatpush1.msra.mxu0 %v1210
      %1248 = vmatprep.subr.mxu0 0.0
      %1249 = vmatpush1.msra.mxu0 %v1211
      %1250 = vmatprep.subr.mxu0 0.0
      %1251 = vmatpush1.msra.mxu0 %v1212
      %1252 = vmatprep.subr.mxu0 0.0
      %1253 = vmatpush1.msra.mxu0 %v1213
      %1254 = vmatprep.subr.mxu0 0.0
      %1255 = vmatpush1.msra.mxu0 0.0
      %1256 = vmatprep.subr.mxu0 0.0
      %1257 = vmatpush1.msra.mxu0 0.0
      %1258 = vmatprep.subr.mxu0 0.0
      %1259 = vmatpush1.msra.mxu0 0.0
      %1260 = vmatprep.subr.mxu0 0.0
      %1261 = vmatpush1.msra.mxu0 0.0
      %1262 = vmatprep.subr.mxu0 0.0
      %1263 = vmatpush1.msra.mxu0 0.0
      %1264 = vmatprep.subr.mxu0 0.0
      %1265 = vmatpush1.msra.mxu0 0.0
      %1266 = vmatprep.subr.mxu0 0.0
      %1267 = vmatpush1.msra.mxu0 0.0
      %1268 = vmatprep.subr.mxu0 0.0
      %1269 = vmatpush1.msra.mxu0 0.0
      %1270 = vmatprep.subr.mxu0 0.0
      %1271 = vmatpush1.msra.mxu0 0.0
      %1272 = vmatprep.subr.mxu0 0.0
      %1273 = vmatpush1.msra.mxu0 0.0
      %1274 = vmatprep.subr.mxu0 0.0
      %1275 = vmatpush1.msra.mxu0 0.0
      %1276 = vmatprep.subr.mxu0 0.0
      %1277 = vmatpush1.msra.mxu0 0.0
      %1278 = vmatprep.subr.mxu0 0.0
      %1279 = vmatpush1.msra.mxu0 0.0
      %1280 = vmatprep.subr.mxu0 0.0
      %1281 = vmatpush1.msra.mxu0 0.0
      %1282 = vmatprep.subr.mxu0 0.0
      %1283 = vmatpush1.msra.mxu0 0.0
      %1284 = vmatprep.subr.mxu0 0.0
      %1285 = vmatpush1.msra.mxu0 0.0
      %1286 = vmatprep.mubr.f32.mxu0 0.0
      %1287 = vmatmul.mubr.f32.gmra.mrb[0].mxu0 %v1218
      %v1288 = vpop.f32.mrb[0].mxu0
      %v1289 = vadd.f32 0.0, %v1288
      %v1290 = vpop.f32.mrb[0].mxu0
      %1291 = vmatprep.mubr.f32.mxu0 0.0
      %1292 = vmatmul.mubr.f32.gmra.mrb[0].mxu0 %v1219
      %v1293 = vpop.f32.mrb[0].mxu0
      %v1294 = vadd.f32 0.0, %v1293
      %v1295 = vpop.f32.mrb[0].mxu0
      %1296 = vdwg.mxu0
      %v1297 = vadd.f32 %v1190, %v1289
      %v1298 = vadd.f32 %v1191, %v1294
      %v1299 = vld [vmem:[%s1085 + $0x1] sm:$0xf]
      %v1300 = vld [vmem:[%s1085 + $0x11] sm:$0xf]
      %v1301 = vld [vmem:[%s1085 + $0x21] sm:$0xf]
      %v1302 = vld [vmem:[%s1085 + $0x31] sm:$0xf]
      %s1303 = scalar_lea.vmem %s432, 1024
      %v1304 = vld [vmem:[%s1303] sm:$0xff]
      %v1305 = vld [vmem:[%s1303 + $0x8] sm:$0xff]
      %v1306 = vld [vmem:[%s1303 + $0x10] sm:$0xff]
      %v1307 = vld [vmem:[%s1303 + $0x18] sm:$0xff]
      %v1308 = vld [vmem:[%s1303 + $0x20] sm:$0xff]
      %v1309 = vld [vmem:[%s1303 + $0x28] sm:$0xff]
      %v1310 = vld [vmem:[%s1303 + $0x30] sm:$0xff]
      %v1311 = vld [vmem:[%s1303 + $0x38] sm:$0xff]
      %v1312 = vld [vmem:[%s1303 + $0x40] sm:$0xff]
      %v1313 = vld [vmem:[%s1303 + $0x48] sm:$0xff]
      %v1314 = vld [vmem:[%s1303 + $0x50] sm:$0xff]
      %v1315 = vld [vmem:[%s1303 + $0x58] sm:$0xff]
      %v1316 = vld [vmem:[%s1303 + $0x60] sm:$0xff]
      %v1317 = vld [vmem:[%s1303 + $0x68] sm:$0xff]
      %v1318 = vld [vmem:[%s1303 + $0x70] sm:$0xff]
      %v1319 = vld [vmem:[%s1303 + $0x78] sm:$0xff]
      %v1324 = vcombine.low %v1299, %v1300
      %v1325 = vcombine.low %v1301, %v1302
      %1328 = vmatprep.subr.mxu0 0.0
      %1329 = vmatpush1.msra.mxu0 %v1304
      %1330 = vmatprep.subr.mxu0 0.0
      %1331 = vmatpush1.msra.mxu0 %v1305
      %1332 = vmatprep.subr.mxu0 0.0
      %1333 = vmatpush1.msra.mxu0 %v1306
      %1334 = vmatprep.subr.mxu0 0.0
      %1335 = vmatpush1.msra.mxu0 %v1307
      %1336 = vmatprep.subr.mxu0 0.0
      %1337 = vmatpush1.msra.mxu0 %v1308
      %1338 = vmatprep.subr.mxu0 0.0
      %1339 = vmatpush1.msra.mxu0 %v1309
      %1340 = vmatprep.subr.mxu0 0.0
      %1341 = vmatpush1.msra.mxu0 %v1310
      %1342 = vmatprep.subr.mxu0 0.0
      %1343 = vmatpush1.msra.mxu0 %v1311
      %1344 = vmatprep.subr.mxu0 0.0
      %1345 = vmatpush1.msra.mxu0 %v1312
      %1346 = vmatprep.subr.mxu0 0.0
      %1347 = vmatpush1.msra.mxu0 %v1313
      %1348 = vmatprep.subr.mxu0 0.0
      %1349 = vmatpush1.msra.mxu0 %v1314
      %1350 = vmatprep.subr.mxu0 0.0
      %1351 = vmatpush1.msra.mxu0 %v1315
      %1352 = vmatprep.subr.mxu0 0.0
      %1353 = vmatpush1.msra.mxu0 %v1316
      %1354 = vmatprep.subr.mxu0 0.0
      %1355 = vmatpush1.msra.mxu0 %v1317
      %1356 = vmatprep.subr.mxu0 0.0
      %1357 = vmatpush1.msra.mxu0 %v1318
      %1358 = vmatprep.subr.mxu0 0.0
      %1359 = vmatpush1.msra.mxu0 %v1319
      %1360 = vmatprep.subr.mxu0 0.0
      %1361 = vmatpush1.msra.mxu0 0.0
      %1362 = vmatprep.subr.mxu0 0.0
      %1363 = vmatpush1.msra.mxu0 0.0
      %1364 = vmatprep.subr.mxu0 0.0
      %1365 = vmatpush1.msra.mxu0 0.0
      %1366 = vmatprep.subr.mxu0 0.0
      %1367 = vmatpush1.msra.mxu0 0.0
      %1368 = vmatprep.subr.mxu0 0.0
      %1369 = vmatpush1.msra.mxu0 0.0
      %1370 = vmatprep.subr.mxu0 0.0
      %1371 = vmatpush1.msra.mxu0 0.0
      %1372 = vmatprep.subr.mxu0 0.0
      %1373 = vmatpush1.msra.mxu0 0.0
      %1374 = vmatprep.subr.mxu0 0.0
      %1375 = vmatpush1.msra.mxu0 0.0
      %1376 = vmatprep.subr.mxu0 0.0
      %1377 = vmatpush1.msra.mxu0 0.0
      %1378 = vmatprep.subr.mxu0 0.0
      %1379 = vmatpush1.msra.mxu0 0.0
      %1380 = vmatprep.subr.mxu0 0.0
      %1381 = vmatpush1.msra.mxu0 0.0
      %1382 = vmatprep.subr.mxu0 0.0
      %1383 = vmatpush1.msra.mxu0 0.0
      %1384 = vmatprep.subr.mxu0 0.0
      %1385 = vmatpush1.msra.mxu0 0.0
      %1386 = vmatprep.subr.mxu0 0.0
      %1387 = vmatpush1.msra.mxu0 0.0
      %1388 = vmatprep.subr.mxu0 0.0
      %1389 = vmatpush1.msra.mxu0 0.0
      %1390 = vmatprep.subr.mxu0 0.0
      %1391 = vmatpush1.msra.mxu0 0.0
      %1392 = vmatprep.mubr.f32.mxu0 0.0
      %1393 = vmatmul.mubr.f32.gmra.mrb[0].mxu0 %v1324
      %v1394 = vpop.f32.mrb[0].mxu0
      %v1395 = vadd.f32 0.0, %v1394
      %v1396 = vpop.f32.mrb[0].mxu0
      %1397 = vmatprep.mubr.f32.mxu0 0.0
      %1398 = vmatmul.mubr.f32.gmra.mrb[0].mxu0 %v1325
      %v1399 = vpop.f32.mrb[0].mxu0
      %v1400 = vadd.f32 0.0, %v1399
      %v1401 = vpop.f32.mrb[0].mxu0
      %1402 = vdwg.mxu0
      %v1403 = vadd.f32 %v1297, %v1395
      %v1404 = vadd.f32 %v1298, %v1400
      %v1405 = vld [vmem:[%s413] sm:$0xf]
      %v1406 = vld [vmem:[%s413 + $0x10] sm:$0xf]
      %v1407 = vld [vmem:[%s413 + $0x20] sm:$0xf]
      %v1408 = vld [vmem:[%s413 + $0x30] sm:$0xf]
      %s1409 = scalar_lea.vmem %s432, 1152
      %v1410 = vld [vmem:[%s1409] sm:$0xff]
      %v1411 = vld [vmem:[%s1409 + $0x8] sm:$0xff]
      %v1412 = vld [vmem:[%s1409 + $0x10] sm:$0xff]
      %v1413 = vld [vmem:[%s1409 + $0x18] sm:$0xff]
      %v1414 = vld [vmem:[%s1409 + $0x20] sm:$0xff]
      %v1415 = vld [vmem:[%s1409 + $0x28] sm:$0xff]
      %v1416 = vld [vmem:[%s1409 + $0x30] sm:$0xff]
      %v1417 = vld [vmem:[%s1409 + $0x38] sm:$0xff]
      %v1418 = vld [vmem:[%s1409 + $0x40] sm:$0xff]
      %v1419 = vld [vmem:[%s1409 + $0x48] sm:$0xff]
      %v1420 = vld [vmem:[%s1409 + $0x50] sm:$0xff]
      %v1421 = vld [vmem:[%s1409 + $0x58] sm:$0xff]
      %v1422 = vld [vmem:[%s1409 + $0x60] sm:$0xff]
      %v1423 = vld [vmem:[%s1409 + $0x68] sm:$0xff]
      %v1424 = vld [vmem:[%s1409 + $0x70] sm:$0xff]
      %v1425 = vld [vmem:[%s1409 + $0x78] sm:$0xff]
      %v1430 = vcombine.low %v1405, %v1406
      %v1431 = vcombine.low %v1407, %v1408
      %1434 = vmatprep.subr.mxu0 0.0
      %1435 = vmatpush1.msra.mxu0 %v1410
      %1436 = vmatprep.subr.mxu0 0.0
      %1437 = vmatpush1.msra.mxu0 %v1411
      %1438 = vmatprep.subr.mxu0 0.0
      %1439 = vmatpush1.msra.mxu0 %v1412
      %1440 = vmatprep.subr.mxu0 0.0
      %1441 = vmatpush1.msra.mxu0 %v1413
      %1442 = vmatprep.subr.mxu0 0.0
      %1443 = vmatpush1.msra.mxu0 %v1414
      %1444 = vmatprep.subr.mxu0 0.0
      %1445 = vmatpush1.msra.mxu0 %v1415
      %1446 = vmatprep.subr.mxu0 0.0
      %1447 = vmatpush1.msra.mxu0 %v1416
      %1448 = vmatprep.subr.mxu0 0.0
      %1449 = vmatpush1.msra.mxu0 %v1417
      %1450 = vmatprep.subr.mxu0 0.0
      %1451 = vmatpush1.msra.mxu0 %v1418
      %1452 = vmatprep.subr.mxu0 0.0
      %1453 = vmatpush1.msra.mxu0 %v1419
      %1454 = vmatprep.subr.mxu0 0.0
      %1455 = vmatpush1.msra.mxu0 %v1420
      %1456 = vmatprep.subr.mxu0 0.0
      %1457 = vmatpush1.msra.mxu0 %v1421
      %1458 = vmatprep.subr.mxu0 0.0
      %1459 = vmatpush1.msra.mxu0 %v1422
      %1460 = vmatprep.subr.mxu0 0.0
      %1461 = vmatpush1.msra.mxu0 %v1423
      %1462 = vmatprep.subr.mxu0 0.0
      %1463 = vmatpush1.msra.mxu0 %v1424
      %1464 = vmatprep.subr.mxu0 0.0
      %1465 = vmatpush1.msra.mxu0 %v1425
      %1466 = vmatprep.subr.mxu0 0.0
      %1467 = vmatpush1.msra.mxu0 0.0
      %1468 = vmatprep.subr.mxu0 0.0
      %1469 = vmatpush1.msra.mxu0 0.0
      %1470 = vmatprep.subr.mxu0 0.0
      %1471 = vmatpush1.msra.mxu0 0.0
      %1472 = vmatprep.subr.mxu0 0.0
      %1473 = vmatpush1.msra.mxu0 0.0
      %1474 = vmatprep.subr.mxu0 0.0
      %1475 = vmatpush1.msra.mxu0 0.0
      %1476 = vmatprep.subr.mxu0 0.0
      %1477 = vmatpush1.msra.mxu0 0.0
      %1478 = vmatprep.subr.mxu0 0.0
      %1479 = vmatpush1.msra.mxu0 0.0
      %1480 = vmatprep.subr.mxu0 0.0
      %1481 = vmatpush1.msra.mxu0 0.0
      %1482 = vmatprep.subr.mxu0 0.0
      %1483 = vmatpush1.msra.mxu0 0.0
      %1484 = vmatprep.subr.mxu0 0.0
      %1485 = vmatpush1.msra.mxu0 0.0
      %1486 = vmatprep.subr.mxu0 0.0
      %1487 = vmatpush1.msra.mxu0 0.0
      %1488 = vmatprep.subr.mxu0 0.0
      %1489 = vmatpush1.msra.mxu0 0.0
      %1490 = vmatprep.subr.mxu0 0.0
      %1491 = vmatpush1.msra.mxu0 0.0
      %1492 = vmatprep.subr.mxu0 0.0
      %1493 = vmatpush1.msra.mxu0 0.0
      %1494 = vmatprep.subr.mxu0 0.0
      %1495 = vmatpush1.msra.mxu0 0.0
      %1496 = vmatprep.subr.mxu0 0.0
      %1497 = vmatpush1.msra.mxu0 0.0
      %1498 = vmatprep.mubr.f32.mxu0 0.0
      %1499 = vmatmul.mubr.f32.gmra.mrb[0].mxu0 %v1430
      %v1500 = vpop.f32.mrb[0].mxu0
      %v1501 = vadd.f32 0.0, %v1500
      %v1502 = vpop.f32.mrb[0].mxu0
      %1503 = vmatprep.mubr.f32.mxu0 0.0
      %1504 = vmatmul.mubr.f32.gmra.mrb[0].mxu0 %v1431
      %v1505 = vpop.f32.mrb[0].mxu0
      %v1506 = vadd.f32 0.0, %v1505
      %v1507 = vpop.f32.mrb[0].mxu0
      %1508 = vdwg.mxu0
      %v1509 = vadd.f32 %v1403, %v1501
      %v1510 = vadd.f32 %v1404, %v1506
      %s1511 = scalar_lea.vmem %s413, 8
      %v1512 = vld [vmem:[%s1511] sm:$0xf]
      %v1513 = vld [vmem:[%s1511 + $0x10] sm:$0xf]
      %v1514 = vld [vmem:[%s1511 + $0x20] sm:$0xf]
      %v1515 = vld [vmem:[%s1511 + $0x30] sm:$0xf]
      %s1516 = scalar_lea.vmem %s432, 1280
      %v1517 = vld [vmem:[%s1516] sm:$0xff]
      %v1518 = vld [vmem:[%s1516 + $0x8] sm:$0xff]
      %v1519 = vld [vmem:[%s1516 + $0x10] sm:$0xff]
      %v1520 = vld [vmem:[%s1516 + $0x18] sm:$0xff]
      %v1521 = vld [vmem:[%s1516 + $0x20] sm:$0xff]
      %v1522 = vld [vmem:[%s1516 + $0x28] sm:$0xff]
      %v1523 = vld [vmem:[%s1516 + $0x30] sm:$0xff]
      %v1524 = vld [vmem:[%s1516 + $0x38] sm:$0xff]
      %v1525 = vld [vmem:[%s1516 + $0x40] sm:$0xff]
      %v1526 = vld [vmem:[%s1516 + $0x48] sm:$0xff]
      %v1527 = vld [vmem:[%s1516 + $0x50] sm:$0xff]
      %v1528 = vld [vmem:[%s1516 + $0x58] sm:$0xff]
      %v1529 = vld [vmem:[%s1516 + $0x60] sm:$0xff]
      %v1530 = vld [vmem:[%s1516 + $0x68] sm:$0xff]
      %v1531 = vld [vmem:[%s1516 + $0x70] sm:$0xff]
      %v1532 = vld [vmem:[%s1516 + $0x78] sm:$0xff]
      %v1537 = vcombine.low %v1512, %v1513
      %v1538 = vcombine.low %v1514, %v1515
      %1541 = vmatprep.subr.mxu0 0.0
      %1542 = vmatpush1.msra.mxu0 %v1517
      %1543 = vmatprep.subr.mxu0 0.0
      %1544 = vmatpush1.msra.mxu0 %v1518
      %1545 = vmatprep.subr.mxu0 0.0
      %1546 = vmatpush1.msra.mxu0 %v1519
      %1547 = vmatprep.subr.mxu0 0.0
      %1548 = vmatpush1.msra.mxu0 %v1520
      %1549 = vmatprep.subr.mxu0 0.0
      %1550 = vmatpush1.msra.mxu0 %v1521
      %1551 = vmatprep.subr.mxu0 0.0
      %1552 = vmatpush1.msra.mxu0 %v1522
      %1553 = vmatprep.subr.mxu0 0.0
      %1554 = vmatpush1.msra.mxu0 %v1523
      %1555 = vmatprep.subr.mxu0 0.0
      %1556 = vmatpush1.msra.mxu0 %v1524
      %1557 = vmatprep.subr.mxu0 0.0
      %1558 = vmatpush1.msra.mxu0 %v1525
      %1559 = vmatprep.subr.mxu0 0.0
      %1560 = vmatpush1.msra.mxu0 %v1526
      %1561 = vmatprep.subr.mxu0 0.0
      %1562 = vmatpush1.msra.mxu0 %v1527
      %1563 = vmatprep.subr.mxu0 0.0
      %1564 = vmatpush1.msra.mxu0 %v1528
      %1565 = vmatprep.subr.mxu0 0.0
      %1566 = vmatpush1.msra.mxu0 %v1529
      %1567 = vmatprep.subr.mxu0 0.0
      %1568 = vmatpush1.msra.mxu0 %v1530
      %1569 = vmatprep.subr.mxu0 0.0
      %1570 = vmatpush1.msra.mxu0 %v1531
      %1571 = vmatprep.subr.mxu0 0.0
      %1572 = vmatpush1.msra.mxu0 %v1532
      %1573 = vmatprep.subr.mxu0 0.0
      %1574 = vmatpush1.msra.mxu0 0.0
      %1575 = vmatprep.subr.mxu0 0.0
      %1576 = vmatpush1.msra.mxu0 0.0
      %1577 = vmatprep.subr.mxu0 0.0
      %1578 = vmatpush1.msra.mxu0 0.0
      %1579 = vmatprep.subr.mxu0 0.0
      %1580 = vmatpush1.msra.mxu0 0.0
      %1581 = vmatprep.subr.mxu0 0.0
      %1582 = vmatpush1.msra.mxu0 0.0
      %1583 = vmatprep.subr.mxu0 0.0
      %1584 = vmatpush1.msra.mxu0 0.0
      %1585 = vmatprep.subr.mxu0 0.0
      %1586 = vmatpush1.msra.mxu0 0.0
      %1587 = vmatprep.subr.mxu0 0.0
      %1588 = vmatpush1.msra.mxu0 0.0
      %1589 = vmatprep.subr.mxu0 0.0
      %1590 = vmatpush1.msra.mxu0 0.0
      %1591 = vmatprep.subr.mxu0 0.0
      %1592 = vmatpush1.msra.mxu0 0.0
      %1593 = vmatprep.subr.mxu0 0.0
      %1594 = vmatpush1.msra.mxu0 0.0
      %1595 = vmatprep.subr.mxu0 0.0
      %1596 = vmatpush1.msra.mxu0 0.0
      %1597 = vmatprep.subr.mxu0 0.0
      %1598 = vmatpush1.msra.mxu0 0.0
      %1599 = vmatprep.subr.mxu0 0.0
      %1600 = vmatpush1.msra.mxu0 0.0
      %1601 = vmatprep.subr.mxu0 0.0
      %1602 = vmatpush1.msra.mxu0 0.0
      %1603 = vmatprep.subr.mxu0 0.0
      %1604 = vmatpush1.msra.mxu0 0.0
      %1605 = vmatprep.mubr.f32.mxu0 0.0
      %1606 = vmatmul.mubr.f32.gmra.mrb[0].mxu0 %v1537
      %v1607 = vpop.f32.mrb[0].mxu0
      %v1608 = vadd.f32 0.0, %v1607
      %v1609 = vpop.f32.mrb[0].mxu0
      %1610 = vmatprep.mubr.f32.mxu0 0.0
      %1611 = vmatmul.mubr.f32.gmra.mrb[0].mxu0 %v1538
      %v1612 = vpop.f32.mrb[0].mxu0
      %v1613 = vadd.f32 0.0, %v1612
      %v1614 = vpop.f32.mrb[0].mxu0
      %1615 = vdwg.mxu0
      %v1616 = vadd.f32 %v1509, %v1608
      %v1617 = vadd.f32 %v1510, %v1613
      %v1618 = vld [vmem:[%s413 + $0x1] sm:$0xf]
      %v1619 = vld [vmem:[%s413 + $0x11] sm:$0xf]
      %v1620 = vld [vmem:[%s413 + $0x21] sm:$0xf]
      %v1621 = vld [vmem:[%s413 + $0x31] sm:$0xf]
      %s1622 = scalar_lea.vmem %s432, 1408
      %v1623 = vld [vmem:[%s1622] sm:$0xff]
      %v1624 = vld [vmem:[%s1622 + $0x8] sm:$0xff]
      %v1625 = vld [vmem:[%s1622 + $0x10] sm:$0xff]
      %v1626 = vld [vmem:[%s1622 + $0x18] sm:$0xff]
      %v1627 = vld [vmem:[%s1622 + $0x20] sm:$0xff]
      %v1628 = vld [vmem:[%s1622 + $0x28] sm:$0xff]
      %v1629 = vld [vmem:[%s1622 + $0x30] sm:$0xff]
      %v1630 = vld [vmem:[%s1622 + $0x38] sm:$0xff]
      %v1631 = vld [vmem:[%s1622 + $0x40] sm:$0xff]
      %v1632 = vld [vmem:[%s1622 + $0x48] sm:$0xff]
      %v1633 = vld [vmem:[%s1622 + $0x50] sm:$0xff]
      %v1634 = vld [vmem:[%s1622 + $0x58] sm:$0xff]
      %v1635 = vld [vmem:[%s1622 + $0x60] sm:$0xff]
      %v1636 = vld [vmem:[%s1622 + $0x68] sm:$0xff]
      %v1637 = vld [vmem:[%s1622 + $0x70] sm:$0xff]
      %v1638 = vld [vmem:[%s1622 + $0x78] sm:$0xff]
      %v1643 = vcombine.low %v1618, %v1619
      %v1644 = vcombine.low %v1620, %v1621
      %1647 = vmatprep.subr.mxu0 0.0
      %1648 = vmatpush1.msra.mxu0 %v1623
      %1649 = vmatprep.subr.mxu0 0.0
      %1650 = vmatpush1.msra.mxu0 %v1624
      %1651 = vmatprep.subr.mxu0 0.0
      %1652 = vmatpush1.msra.mxu0 %v1625
      %1653 = vmatprep.subr.mxu0 0.0
      %1654 = vmatpush1.msra.mxu0 %v1626
      %1655 = vmatprep.subr.mxu0 0.0
      %1656 = vmatpush1.msra.mxu0 %v1627
      %1657 = vmatprep.subr.mxu0 0.0
      %1658 = vmatpush1.msra.mxu0 %v1628
      %1659 = vmatprep.subr.mxu0 0.0
      %1660 = vmatpush1.msra.mxu0 %v1629
      %1661 = vmatprep.subr.mxu0 0.0
      %1662 = vmatpush1.msra.mxu0 %v1630
      %1663 = vmatprep.subr.mxu0 0.0
      %1664 = vmatpush1.msra.mxu0 %v1631
      %1665 = vmatprep.subr.mxu0 0.0
      %1666 = vmatpush1.msra.mxu0 %v1632
      %1667 = vmatprep.subr.mxu0 0.0
      %1668 = vmatpush1.msra.mxu0 %v1633
      %1669 = vmatprep.subr.mxu0 0.0
      %1670 = vmatpush1.msra.mxu0 %v1634
      %1671 = vmatprep.subr.mxu0 0.0
      %1672 = vmatpush1.msra.mxu0 %v1635
      %1673 = vmatprep.subr.mxu0 0.0
      %1674 = vmatpush1.msra.mxu0 %v1636
      %1675 = vmatprep.subr.mxu0 0.0
      %1676 = vmatpush1.msra.mxu0 %v1637
      %1677 = vmatprep.subr.mxu0 0.0
      %1678 = vmatpush1.msra.mxu0 %v1638
      %1679 = vmatprep.subr.mxu0 0.0
      %1680 = vmatpush1.msra.mxu0 0.0
      %1681 = vmatprep.subr.mxu0 0.0
      %1682 = vmatpush1.msra.mxu0 0.0
      %1683 = vmatprep.subr.mxu0 0.0
      %1684 = vmatpush1.msra.mxu0 0.0
      %1685 = vmatprep.subr.mxu0 0.0
      %1686 = vmatpush1.msra.mxu0 0.0
      %1687 = vmatprep.subr.mxu0 0.0
      %1688 = vmatpush1.msra.mxu0 0.0
      %1689 = vmatprep.subr.mxu0 0.0
      %1690 = vmatpush1.msra.mxu0 0.0
      %1691 = vmatprep.subr.mxu0 0.0
      %1692 = vmatpush1.msra.mxu0 0.0
      %1693 = vmatprep.subr.mxu0 0.0
      %1694 = vmatpush1.msra.mxu0 0.0
      %1695 = vmatprep.subr.mxu0 0.0
      %1696 = vmatpush1.msra.mxu0 0.0
      %1697 = vmatprep.subr.mxu0 0.0
      %1698 = vmatpush1.msra.mxu0 0.0
      %1699 = vmatprep.subr.mxu0 0.0
      %1700 = vmatpush1.msra.mxu0 0.0
      %1701 = vmatprep.subr.mxu0 0.0
      %1702 = vmatpush1.msra.mxu0 0.0
      %1703 = vmatprep.subr.mxu0 0.0
      %1704 = vmatpush1.msra.mxu0 0.0
      %1705 = vmatprep.subr.mxu0 0.0
      %1706 = vmatpush1.msra.mxu0 0.0
      %1707 = vmatprep.subr.mxu0 0.0
      %1708 = vmatpush1.msra.mxu0 0.0
      %1709 = vmatprep.subr.mxu0 0.0
      %1710 = vmatpush1.msra.mxu0 0.0
      %1711 = vmatprep.mubr.f32.mxu0 0.0
      %1712 = vmatmul.mubr.f32.gmra.mrb[0].mxu0 %v1643
      %v1713 = vpop.f32.mrb[0].mxu0
      %v1714 = vadd.f32 0.0, %v1713
      %v1715 = vpop.f32.mrb[0].mxu0
      %1716 = vmatprep.mubr.f32.mxu0 0.0
      %1717 = vmatmul.mubr.f32.gmra.mrb[0].mxu0 %v1644
      %v1718 = vpop.f32.mrb[0].mxu0
      %v1719 = vadd.f32 0.0, %v1718
      %v1720 = vpop.f32.mrb[0].mxu0
      %1721 = vdwg.mxu0
      %v1722 = vadd.f32 %v1616, %v1714
      %v1723 = vadd.f32 %v1617, %v1719
      %s1724 = scalar_lea.vmem %s413, 80
      %v1725 = vld [vmem:[%s1724] sm:$0xf]
      %v1726 = vld [vmem:[%s1724 + $0x10] sm:$0xf]
      %v1727 = vld [vmem:[%s1724 + $0x20] sm:$0xf]
      %v1728 = vld [vmem:[%s1724 + $0x30] sm:$0xf]
      %s1729 = scalar_lea.vmem %s432, 1536
      %v1730 = vld [vmem:[%s1729] sm:$0xff]
      %v1731 = vld [vmem:[%s1729 + $0x8] sm:$0xff]
      %v1732 = vld [vmem:[%s1729 + $0x10] sm:$0xff]
      %v1733 = vld [vmem:[%s1729 + $0x18] sm:$0xff]
      %v1734 = vld [vmem:[%s1729 + $0x20] sm:$0xff]
      %v1735 = vld [vmem:[%s1729 + $0x28] sm:$0xff]
      %v1736 = vld [vmem:[%s1729 + $0x30] sm:$0xff]
      %v1737 = vld [vmem:[%s1729 + $0x38] sm:$0xff]
      %v1738 = vld [vmem:[%s1729 + $0x40] sm:$0xff]
      %v1739 = vld [vmem:[%s1729 + $0x48] sm:$0xff]
      %v1740 = vld [vmem:[%s1729 + $0x50] sm:$0xff]
      %v1741 = vld [vmem:[%s1729 + $0x58] sm:$0xff]
      %v1742 = vld [vmem:[%s1729 + $0x60] sm:$0xff]
      %v1743 = vld [vmem:[%s1729 + $0x68] sm:$0xff]
      %v1744 = vld [vmem:[%s1729 + $0x70] sm:$0xff]
      %v1745 = vld [vmem:[%s1729 + $0x78] sm:$0xff]
      %v1750 = vcombine.low %v1725, %v1726
      %v1751 = vcombine.low %v1727, %v1728
      %1754 = vmatprep.subr.mxu0 0.0
      %1755 = vmatpush1.msra.mxu0 %v1730
      %1756 = vmatprep.subr.mxu0 0.0
      %1757 = vmatpush1.msra.mxu0 %v1731
      %1758 = vmatprep.subr.mxu0 0.0
      %1759 = vmatpush1.msra.mxu0 %v1732
      %1760 = vmatprep.subr.mxu0 0.0
      %1761 = vmatpush1.msra.mxu0 %v1733
      %1762 = vmatprep.subr.mxu0 0.0
      %1763 = vmatpush1.msra.mxu0 %v1734
      %1764 = vmatprep.subr.mxu0 0.0
      %1765 = vmatpush1.msra.mxu0 %v1735
      %1766 = vmatprep.subr.mxu0 0.0
      %1767 = vmatpush1.msra.mxu0 %v1736
      %1768 = vmatprep.subr.mxu0 0.0
      %1769 = vmatpush1.msra.mxu0 %v1737
      %1770 = vmatprep.subr.mxu0 0.0
      %1771 = vmatpush1.msra.mxu0 %v1738
      %1772 = vmatprep.subr.mxu0 0.0
      %1773 = vmatpush1.msra.mxu0 %v1739
      %1774 = vmatprep.subr.mxu0 0.0
      %1775 = vmatpush1.msra.mxu0 %v1740
      %1776 = vmatprep.subr.mxu0 0.0
      %1777 = vmatpush1.msra.mxu0 %v1741
      %1778 = vmatprep.subr.mxu0 0.0
      %1779 = vmatpush1.msra.mxu0 %v1742
      %1780 = vmatprep.subr.mxu0 0.0
      %1781 = vmatpush1.msra.mxu0 %v1743
      %1782 = vmatprep.subr.mxu0 0.0
      %1783 = vmatpush1.msra.mxu0 %v1744
      %1784 = vmatprep.subr.mxu0 0.0
      %1785 = vmatpush1.msra.mxu0 %v1745
      %1786 = vmatprep.subr.mxu0 0.0
      %1787 = vmatpush1.msra.mxu0 0.0
      %1788 = vmatprep.subr.mxu0 0.0
      %1789 = vmatpush1.msra.mxu0 0.0
      %1790 = vmatprep.subr.mxu0 0.0
      %1791 = vmatpush1.msra.mxu0 0.0
      %1792 = vmatprep.subr.mxu0 0.0
      %1793 = vmatpush1.msra.mxu0 0.0
      %1794 = vmatprep.subr.mxu0 0.0
      %1795 = vmatpush1.msra.mxu0 0.0
      %1796 = vmatprep.subr.mxu0 0.0
      %1797 = vmatpush1.msra.mxu0 0.0
      %1798 = vmatprep.subr.mxu0 0.0
      %1799 = vmatpush1.msra.mxu0 0.0
      %1800 = vmatprep.subr.mxu0 0.0
      %1801 = vmatpush1.msra.mxu0 0.0
      %1802 = vmatprep.subr.mxu0 0.0
      %1803 = vmatpush1.msra.mxu0 0.0
      %1804 = vmatprep.subr.mxu0 0.0
      %1805 = vmatpush1.msra.mxu0 0.0
      %1806 = vmatprep.subr.mxu0 0.0
      %1807 = vmatpush1.msra.mxu0 0.0
      %1808 = vmatprep.subr.mxu0 0.0
      %1809 = vmatpush1.msra.mxu0 0.0
      %1810 = vmatprep.subr.mxu0 0.0
      %1811 = vmatpush1.msra.mxu0 0.0
      %1812 = vmatprep.subr.mxu0 0.0
      %1813 = vmatpush1.msra.mxu0 0.0
      %1814 = vmatprep.subr.mxu0 0.0
      %1815 = vmatpush1.msra.mxu0 0.0
      %1816 = vmatprep.subr.mxu0 0.0
      %1817 = vmatpush1.msra.mxu0 0.0
      %1818 = vmatprep.mubr.f32.mxu0 0.0
      %1819 = vmatmul.mubr.f32.gmra.mrb[0].mxu0 %v1750
      %v1820 = vpop.f32.mrb[0].mxu0
      %v1821 = vadd.f32 0.0, %v1820
      %v1822 = vpop.f32.mrb[0].mxu0
      %1823 = vmatprep.mubr.f32.mxu0 0.0
      %1824 = vmatmul.mubr.f32.gmra.mrb[0].mxu0 %v1751
      %v1825 = vpop.f32.mrb[0].mxu0
      %v1826 = vadd.f32 0.0, %v1825
      %v1827 = vpop.f32.mrb[0].mxu0
      %1828 = vdwg.mxu0
      %v1829 = vadd.f32 %v1722, %v1821
      %v1830 = vadd.f32 %v1723, %v1826
      %s1831 = scalar_lea.vmem %s413, 88
      %v1832 = vld [vmem:[%s1831] sm:$0xf]
      %v1833 = vld [vmem:[%s1831 + $0x10] sm:$0xf]
      %v1834 = vld [vmem:[%s1831 + $0x20] sm:$0xf]
      %v1835 = vld [vmem:[%s1831 + $0x30] sm:$0xf]
      %s1836 = scalar_lea.vmem %s432, 1664
      %v1837 = vld [vmem:[%s1836] sm:$0xff]
      %v1838 = vld [vmem:[%s1836 + $0x8] sm:$0xff]
      %v1839 = vld [vmem:[%s1836 + $0x10] sm:$0xff]
      %v1840 = vld [vmem:[%s1836 + $0x18] sm:$0xff]
      %v1841 = vld [vmem:[%s1836 + $0x20] sm:$0xff]
      %v1842 = vld [vmem:[%s1836 + $0x28] sm:$0xff]
      %v1843 = vld [vmem:[%s1836 + $0x30] sm:$0xff]
      %v1844 = vld [vmem:[%s1836 + $0x38] sm:$0xff]
      %v1845 = vld [vmem:[%s1836 + $0x40] sm:$0xff]
      %v1846 = vld [vmem:[%s1836 + $0x48] sm:$0xff]
      %v1847 = vld [vmem:[%s1836 + $0x50] sm:$0xff]
      %v1848 = vld [vmem:[%s1836 + $0x58] sm:$0xff]
      %v1849 = vld [vmem:[%s1836 + $0x60] sm:$0xff]
      %v1850 = vld [vmem:[%s1836 + $0x68] sm:$0xff]
      %v1851 = vld [vmem:[%s1836 + $0x70] sm:$0xff]
      %v1852 = vld [vmem:[%s1836 + $0x78] sm:$0xff]
      %v1857 = vcombine.low %v1832, %v1833
      %v1858 = vcombine.low %v1834, %v1835
      %1861 = vmatprep.subr.mxu0 0.0
      %1862 = vmatpush1.msra.mxu0 %v1837
      %1863 = vmatprep.subr.mxu0 0.0
      %1864 = vmatpush1.msra.mxu0 %v1838
      %1865 = vmatprep.subr.mxu0 0.0
      %1866 = vmatpush1.msra.mxu0 %v1839
      %1867 = vmatprep.subr.mxu0 0.0
      %1868 = vmatpush1.msra.mxu0 %v1840
      %1869 = vmatprep.subr.mxu0 0.0
      %1870 = vmatpush1.msra.mxu0 %v1841
      %1871 = vmatprep.subr.mxu0 0.0
      %1872 = vmatpush1.msra.mxu0 %v1842
      %1873 = vmatprep.subr.mxu0 0.0
      %1874 = vmatpush1.msra.mxu0 %v1843
      %1875 = vmatprep.subr.mxu0 0.0
      %1876 = vmatpush1.msra.mxu0 %v1844
      %1877 = vmatprep.subr.mxu0 0.0
      %1878 = vmatpush1.msra.mxu0 %v1845
      %1879 = vmatprep.subr.mxu0 0.0
      %1880 = vmatpush1.msra.mxu0 %v1846
      %1881 = vmatprep.subr.mxu0 0.0
      %1882 = vmatpush1.msra.mxu0 %v1847
      %1883 = vmatprep.subr.mxu0 0.0
      %1884 = vmatpush1.msra.mxu0 %v1848
      %1885 = vmatprep.subr.mxu0 0.0
      %1886 = vmatpush1.msra.mxu0 %v1849
      %1887 = vmatprep.subr.mxu0 0.0
      %1888 = vmatpush1.msra.mxu0 %v1850
      %1889 = vmatprep.subr.mxu0 0.0
      %1890 = vmatpush1.msra.mxu0 %v1851
      %1891 = vmatprep.subr.mxu0 0.0
      %1892 = vmatpush1.msra.mxu0 %v1852
      %1893 = vmatprep.subr.mxu0 0.0
      %1894 = vmatpush1.msra.mxu0 0.0
      %1895 = vmatprep.subr.mxu0 0.0
      %1896 = vmatpush1.msra.mxu0 0.0
      %1897 = vmatprep.subr.mxu0 0.0
      %1898 = vmatpush1.msra.mxu0 0.0
      %1899 = vmatprep.subr.mxu0 0.0
      %1900 = vmatpush1.msra.mxu0 0.0
      %1901 = vmatprep.subr.mxu0 0.0
      %1902 = vmatpush1.msra.mxu0 0.0
      %1903 = vmatprep.subr.mxu0 0.0
      %1904 = vmatpush1.msra.mxu0 0.0
      %1905 = vmatprep.subr.mxu0 0.0
      %1906 = vmatpush1.msra.mxu0 0.0
      %1907 = vmatprep.subr.mxu0 0.0
      %1908 = vmatpush1.msra.mxu0 0.0
      %1909 = vmatprep.subr.mxu0 0.0
      %1910 = vmatpush1.msra.mxu0 0.0
      %1911 = vmatprep.subr.mxu0 0.0
      %1912 = vmatpush1.msra.mxu0 0.0
      %1913 = vmatprep.subr.mxu0 0.0
      %1914 = vmatpush1.msra.mxu0 0.0
      %1915 = vmatprep.subr.mxu0 0.0
      %1916 = vmatpush1.msra.mxu0 0.0
      %1917 = vmatprep.subr.mxu0 0.0
      %1918 = vmatpush1.msra.mxu0 0.0
      %1919 = vmatprep.subr.mxu0 0.0
      %1920 = vmatpush1.msra.mxu0 0.0
      %1921 = vmatprep.subr.mxu0 0.0
      %1922 = vmatpush1.msra.mxu0 0.0
      %1923 = vmatprep.subr.mxu0 0.0
      %1924 = vmatpush1.msra.mxu0 0.0
      %1925 = vmatprep.mubr.f32.mxu0 0.0
      %1926 = vmatmul.mubr.f32.gmra.mrb[0].mxu0 %v1857
      %v1927 = vpop.f32.mrb[0].mxu0
      %v1928 = vadd.f32 0.0, %v1927
      %v1929 = vpop.f32.mrb[0].mxu0
      %1930 = vmatprep.mubr.f32.mxu0 0.0
      %1931 = vmatmul.mubr.f32.gmra.mrb[0].mxu0 %v1858
      %v1932 = vpop.f32.mrb[0].mxu0
      %v1933 = vadd.f32 0.0, %v1932
      %v1934 = vpop.f32.mrb[0].mxu0
      %1935 = vdwg.mxu0
      %v1936 = vadd.f32 %v1829, %v1928
      %v1937 = vadd.f32 %v1830, %v1933
      %v1938 = vld [vmem:[%s1724 + $0x1] sm:$0xf]
      %v1939 = vld [vmem:[%s1724 + $0x11] sm:$0xf]
      %v1940 = vld [vmem:[%s1724 + $0x21] sm:$0xf]
      %v1941 = vld [vmem:[%s1724 + $0x31] sm:$0xf]
      %s1942 = scalar_lea.vmem %s432, 1792
      %v1943 = vld [vmem:[%s1942] sm:$0xff]
      %v1944 = vld [vmem:[%s1942 + $0x8] sm:$0xff]
      %v1945 = vld [vmem:[%s1942 + $0x10] sm:$0xff]
      %v1946 = vld [vmem:[%s1942 + $0x18] sm:$0xff]
      %v1947 = vld [vmem:[%s1942 + $0x20] sm:$0xff]
      %v1948 = vld [vmem:[%s1942 + $0x28] sm:$0xff]
      %v1949 = vld [vmem:[%s1942 + $0x30] sm:$0xff]
      %v1950 = vld [vmem:[%s1942 + $0x38] sm:$0xff]
      %v1951 = vld [vmem:[%s1942 + $0x40] sm:$0xff]
      %v1952 = vld [vmem:[%s1942 + $0x48] sm:$0xff]
      %v1953 = vld [vmem:[%s1942 + $0x50] sm:$0xff]
      %v1954 = vld [vmem:[%s1942 + $0x58] sm:$0xff]
      %v1955 = vld [vmem:[%s1942 + $0x60] sm:$0xff]
      %v1956 = vld [vmem:[%s1942 + $0x68] sm:$0xff]
      %v1957 = vld [vmem:[%s1942 + $0x70] sm:$0xff]
      %v1958 = vld [vmem:[%s1942 + $0x78] sm:$0xff]
      %v1963 = vcombine.low %v1938, %v1939
      %v1964 = vcombine.low %v1940, %v1941
      %1967 = vmatprep.subr.mxu0 0.0
      %1968 = vmatpush1.msra.mxu0 %v1943
      %1969 = vmatprep.subr.mxu0 0.0
      %1970 = vmatpush1.msra.mxu0 %v1944
      %1971 = vmatprep.subr.mxu0 0.0
      %1972 = vmatpush1.msra.mxu0 %v1945
      %1973 = vmatprep.subr.mxu0 0.0
      %1974 = vmatpush1.msra.mxu0 %v1946
      %1975 = vmatprep.subr.mxu0 0.0
      %1976 = vmatpush1.msra.mxu0 %v1947
      %1977 = vmatprep.subr.mxu0 0.0
      %1978 = vmatpush1.msra.mxu0 %v1948
      %1979 = vmatprep.subr.mxu0 0.0
      %1980 = vmatpush1.msra.mxu0 %v1949
      %1981 = vmatprep.subr.mxu0 0.0
      %1982 = vmatpush1.msra.mxu0 %v1950
      %1983 = vmatprep.subr.mxu0 0.0
      %1984 = vmatpush1.msra.mxu0 %v1951
      %1985 = vmatprep.subr.mxu0 0.0
      %1986 = vmatpush1.msra.mxu0 %v1952
      %1987 = vmatprep.subr.mxu0 0.0
      %1988 = vmatpush1.msra.mxu0 %v1953
      %1989 = vmatprep.subr.mxu0 0.0
      %1990 = vmatpush1.msra.mxu0 %v1954
      %1991 = vmatprep.subr.mxu0 0.0
      %1992 = vmatpush1.msra.mxu0 %v1955
      %1993 = vmatprep.subr.mxu0 0.0
      %1994 = vmatpush1.msra.mxu0 %v1956
      %1995 = vmatprep.subr.mxu0 0.0
      %1996 = vmatpush1.msra.mxu0 %v1957
      %1997 = vmatprep.subr.mxu0 0.0
      %1998 = vmatpush1.msra.mxu0 %v1958
      %1999 = vmatprep.subr.mxu0 0.0
      %2000 = vmatpush1.msra.mxu0 0.0
      %2001 = vmatprep.subr.mxu0 0.0
      %2002 = vmatpush1.msra.mxu0 0.0
      %2003 = vmatprep.subr.mxu0 0.0
      %2004 = vmatpush1.msra.mxu0 0.0
      %2005 = vmatprep.subr.mxu0 0.0
      %2006 = vmatpush1.msra.mxu0 0.0
      %2007 = vmatprep.subr.mxu0 0.0
      %2008 = vmatpush1.msra.mxu0 0.0
      %2009 = vmatprep.subr.mxu0 0.0
      %2010 = vmatpush1.msra.mxu0 0.0
      %2011 = vmatprep.subr.mxu0 0.0
      %2012 = vmatpush1.msra.mxu0 0.0
      %2013 = vmatprep.subr.mxu0 0.0
      %2014 = vmatpush1.msra.mxu0 0.0
      %2015 = vmatprep.subr.mxu0 0.0
      %2016 = vmatpush1.msra.mxu0 0.0
      %2017 = vmatprep.subr.mxu0 0.0
      %2018 = vmatpush1.msra.mxu0 0.0
      %2019 = vmatprep.subr.mxu0 0.0
      %2020 = vmatpush1.msra.mxu0 0.0
      %2021 = vmatprep.subr.mxu0 0.0
      %2022 = vmatpush1.msra.mxu0 0.0
      %2023 = vmatprep.subr.mxu0 0.0
      %2024 = vmatpush1.msra.mxu0 0.0
      %2025 = vmatprep.subr.mxu0 0.0
      %2026 = vmatpush1.msra.mxu0 0.0
      %2027 = vmatprep.subr.mxu0 0.0
      %2028 = vmatpush1.msra.mxu0 0.0
      %2029 = vmatprep.subr.mxu0 0.0
      %2030 = vmatpush1.msra.mxu0 0.0
      %2031 = vmatprep.mubr.f32.mxu0 0.0
      %2032 = vmatmul.mubr.f32.gmra.mrb[0].mxu0 %v1963
      %v2033 = vpop.f32.mrb[0].mxu0
      %v2034 = vadd.f32 0.0, %v2033
      %v2035 = vpop.f32.mrb[0].mxu0
      %2036 = vmatprep.mubr.f32.mxu0 0.0
      %2037 = vmatmul.mubr.f32.gmra.mrb[0].mxu0 %v1964
      %v2038 = vpop.f32.mrb[0].mxu0
      %v2039 = vadd.f32 0.0, %v2038
      %v2040 = vpop.f32.mrb[0].mxu0
      %2041 = vdwg.mxu0
      %v2042 = vadd.f32 %v1936, %v2034
      %v2043 = vadd.f32 %v1937, %v2039
      %s2044 = scalar_lea.vmem %s413, 16
      %v2045 = vld [vmem:[%s2044] sm:$0xf]
      %v2046 = vld [vmem:[%s2044 + $0x10] sm:$0xf]
      %v2047 = vld [vmem:[%s2044 + $0x20] sm:$0xf]
      %v2048 = vld [vmem:[%s2044 + $0x30] sm:$0xf]
      %s2049 = scalar_lea.vmem %s432, 1920
      %v2050 = vld [vmem:[%s2049] sm:$0xff]
      %v2051 = vld [vmem:[%s2049 + $0x8] sm:$0xff]
      %v2052 = vld [vmem:[%s2049 + $0x10] sm:$0xff]
      %v2053 = vld [vmem:[%s2049 + $0x18] sm:$0xff]
      %v2054 = vld [vmem:[%s2049 + $0x20] sm:$0xff]
      %v2055 = vld [vmem:[%s2049 + $0x28] sm:$0xff]
      %v2056 = vld [vmem:[%s2049 + $0x30] sm:$0xff]
      %v2057 = vld [vmem:[%s2049 + $0x38] sm:$0xff]
      %v2058 = vld [vmem:[%s2049 + $0x40] sm:$0xff]
      %v2059 = vld [vmem:[%s2049 + $0x48] sm:$0xff]
      %v2060 = vld [vmem:[%s2049 + $0x50] sm:$0xff]
      %v2061 = vld [vmem:[%s2049 + $0x58] sm:$0xff]
      %v2062 = vld [vmem:[%s2049 + $0x60] sm:$0xff]
      %v2063 = vld [vmem:[%s2049 + $0x68] sm:$0xff]
      %v2064 = vld [vmem:[%s2049 + $0x70] sm:$0xff]
      %v2065 = vld [vmem:[%s2049 + $0x78] sm:$0xff]
      %v2070 = vcombine.low %v2045, %v2046
      %v2071 = vcombine.low %v2047, %v2048
      %2074 = vmatprep.subr.mxu0 0.0
      %2075 = vmatpush1.msra.mxu0 %v2050
      %2076 = vmatprep.subr.mxu0 0.0
      %2077 = vmatpush1.msra.mxu0 %v2051
      %2078 = vmatprep.subr.mxu0 0.0
      %2079 = vmatpush1.msra.mxu0 %v2052
      %2080 = vmatprep.subr.mxu0 0.0
      %2081 = vmatpush1.msra.mxu0 %v2053
      %2082 = vmatprep.subr.mxu0 0.0
      %2083 = vmatpush1.msra.mxu0 %v2054
      %2084 = vmatprep.subr.mxu0 0.0
      %2085 = vmatpush1.msra.mxu0 %v2055
      %2086 = vmatprep.subr.mxu0 0.0
      %2087 = vmatpush1.msra.mxu0 %v2056
      %2088 = vmatprep.subr.mxu0 0.0
      %2089 = vmatpush1.msra.mxu0 %v2057
      %2090 = vmatprep.subr.mxu0 0.0
      %2091 = vmatpush1.msra.mxu0 %v2058
      %2092 = vmatprep.subr.mxu0 0.0
      %2093 = vmatpush1.msra.mxu0 %v2059
      %2094 = vmatprep.subr.mxu0 0.0
      %2095 = vmatpush1.msra.mxu0 %v2060
      %2096 = vmatprep.subr.mxu0 0.0
      %2097 = vmatpush1.msra.mxu0 %v2061
      %2098 = vmatprep.subr.mxu0 0.0
      %2099 = vmatpush1.msra.mxu0 %v2062
      %2100 = vmatprep.subr.mxu0 0.0
      %2101 = vmatpush1.msra.mxu0 %v2063
      %2102 = vmatprep.subr.mxu0 0.0
      %2103 = vmatpush1.msra.mxu0 %v2064
      %2104 = vmatprep.subr.mxu0 0.0
      %2105 = vmatpush1.msra.mxu0 %v2065
      %2106 = vmatprep.subr.mxu0 0.0
      %2107 = vmatpush1.msra.mxu0 0.0
      %2108 = vmatprep.subr.mxu0 0.0
      %2109 = vmatpush1.msra.mxu0 0.0
      %2110 = vmatprep.subr.mxu0 0.0
      %2111 = vmatpush1.msra.mxu0 0.0
      %2112 = vmatprep.subr.mxu0 0.0
      %2113 = vmatpush1.msra.mxu0 0.0
      %2114 = vmatprep.subr.mxu0 0.0
      %2115 = vmatpush1.msra.mxu0 0.0
      %2116 = vmatprep.subr.mxu0 0.0
      %2117 = vmatpush1.msra.mxu0 0.0
      %2118 = vmatprep.subr.mxu0 0.0
      %2119 = vmatpush1.msra.mxu0 0.0
      %2120 = vmatprep.subr.mxu0 0.0
      %2121 = vmatpush1.msra.mxu0 0.0
      %2122 = vmatprep.subr.mxu0 0.0
      %2123 = vmatpush1.msra.mxu0 0.0
      %2124 = vmatprep.subr.mxu0 0.0
      %2125 = vmatpush1.msra.mxu0 0.0
      %2126 = vmatprep.subr.mxu0 0.0
      %2127 = vmatpush1.msra.mxu0 0.0
      %2128 = vmatprep.subr.mxu0 0.0
      %2129 = vmatpush1.msra.mxu0 0.0
      %2130 = vmatprep.subr.mxu0 0.0
      %2131 = vmatpush1.msra.mxu0 0.0
      %2132 = vmatprep.subr.mxu0 0.0
      %2133 = vmatpush1.msra.mxu0 0.0
      %2134 = vmatprep.subr.mxu0 0.0
      %2135 = vmatpush1.msra.mxu0 0.0
      %2136 = vmatprep.subr.mxu0 0.0
      %2137 = vmatpush1.msra.mxu0 0.0
      %2138 = vmatprep.mubr.f32.mxu0 0.0
      %2139 = vmatmul.mubr.f32.gmra.mrb[0].mxu0 %v2070
      %v2140 = vpop.f32.mrb[0].mxu0
      %v2141 = vadd.f32 0.0, %v2140
      %v2142 = vpop.f32.mrb[0].mxu0
      %2143 = vmatprep.mubr.f32.mxu0 0.0
      %2144 = vmatmul.mubr.f32.gmra.mrb[0].mxu0 %v2071
      %v2145 = vpop.f32.mrb[0].mxu0
      %v2146 = vadd.f32 0.0, %v2145
      %v2147 = vpop.f32.mrb[0].mxu0
      %2148 = vdwg.mxu0
      %v2149 = vadd.f32 %v2042, %v2141
      %v2150 = vadd.f32 %v2043, %v2146
      %s2151 = scalar_lea.vmem %s413, 24
      %v2152 = vld [vmem:[%s2151] sm:$0xf]
      %v2153 = vld [vmem:[%s2151 + $0x10] sm:$0xf]
      %v2154 = vld [vmem:[%s2151 + $0x20] sm:$0xf]
      %v2155 = vld [vmem:[%s2151 + $0x30] sm:$0xf]
      %s2156 = scalar_lea.vmem %s432, 2048
      %v2157 = vld [vmem:[%s2156] sm:$0xff]
      %v2158 = vld [vmem:[%s2156 + $0x8] sm:$0xff]
      %v2159 = vld [vmem:[%s2156 + $0x10] sm:$0xff]
      %v2160 = vld [vmem:[%s2156 + $0x18] sm:$0xff]
      %v2161 = vld [vmem:[%s2156 + $0x20] sm:$0xff]
      %v2162 = vld [vmem:[%s2156 + $0x28] sm:$0xff]
      %v2163 = vld [vmem:[%s2156 + $0x30] sm:$0xff]
      %v2164 = vld [vmem:[%s2156 + $0x38] sm:$0xff]
      %v2165 = vld [vmem:[%s2156 + $0x40] sm:$0xff]
      %v2166 = vld [vmem:[%s2156 + $0x48] sm:$0xff]
      %v2167 = vld [vmem:[%s2156 + $0x50] sm:$0xff]
      %v2168 = vld [vmem:[%s2156 + $0x58] sm:$0xff]
      %v2169 = vld [vmem:[%s2156 + $0x60] sm:$0xff]
      %v2170 = vld [vmem:[%s2156 + $0x68] sm:$0xff]
      %v2171 = vld [vmem:[%s2156 + $0x70] sm:$0xff]
      %v2172 = vld [vmem:[%s2156 + $0x78] sm:$0xff]
      %v2177 = vcombine.low %v2152, %v2153
      %v2178 = vcombine.low %v2154, %v2155
      %2181 = vmatprep.subr.mxu0 0.0
      %2182 = vmatpush1.msra.mxu0 %v2157
      %2183 = vmatprep.subr.mxu0 0.0
      %2184 = vmatpush1.msra.mxu0 %v2158
      %2185 = vmatprep.subr.mxu0 0.0
      %2186 = vmatpush1.msra.mxu0 %v2159
      %2187 = vmatprep.subr.mxu0 0.0
      %2188 = vmatpush1.msra.mxu0 %v2160
      %2189 = vmatprep.subr.mxu0 0.0
      %2190 = vmatpush1.msra.mxu0 %v2161
      %2191 = vmatprep.subr.mxu0 0.0
      %2192 = vmatpush1.msra.mxu0 %v2162
      %2193 = vmatprep.subr.mxu0 0.0
      %2194 = vmatpush1.msra.mxu0 %v2163
      %2195 = vmatprep.subr.mxu0 0.0
      %2196 = vmatpush1.msra.mxu0 %v2164
      %2197 = vmatprep.subr.mxu0 0.0
      %2198 = vmatpush1.msra.mxu0 %v2165
      %2199 = vmatprep.subr.mxu0 0.0
      %2200 = vmatpush1.msra.mxu0 %v2166
      %2201 = vmatprep.subr.mxu0 0.0
      %2202 = vmatpush1.msra.mxu0 %v2167
      %2203 = vmatprep.subr.mxu0 0.0
      %2204 = vmatpush1.msra.mxu0 %v2168
      %2205 = vmatprep.subr.mxu0 0.0
      %2206 = vmatpush1.msra.mxu0 %v2169
      %2207 = vmatprep.subr.mxu0 0.0
      %2208 = vmatpush1.msra.mxu0 %v2170
      %2209 = vmatprep.subr.mxu0 0.0
      %2210 = vmatpush1.msra.mxu0 %v2171
      %2211 = vmatprep.subr.mxu0 0.0
      %2212 = vmatpush1.msra.mxu0 %v2172
      %2213 = vmatprep.subr.mxu0 0.0
      %2214 = vmatpush1.msra.mxu0 0.0
      %2215 = vmatprep.subr.mxu0 0.0
      %2216 = vmatpush1.msra.mxu0 0.0
      %2217 = vmatprep.subr.mxu0 0.0
      %2218 = vmatpush1.msra.mxu0 0.0
      %2219 = vmatprep.subr.mxu0 0.0
      %2220 = vmatpush1.msra.mxu0 0.0
      %2221 = vmatprep.subr.mxu0 0.0
      %2222 = vmatpush1.msra.mxu0 0.0
      %2223 = vmatprep.subr.mxu0 0.0
      %2224 = vmatpush1.msra.mxu0 0.0
      %2225 = vmatprep.subr.mxu0 0.0
      %2226 = vmatpush1.msra.mxu0 0.0
      %2227 = vmatprep.subr.mxu0 0.0
      %2228 = vmatpush1.msra.mxu0 0.0
      %2229 = vmatprep.subr.mxu0 0.0
      %2230 = vmatpush1.msra.mxu0 0.0
      %2231 = vmatprep.subr.mxu0 0.0
      %2232 = vmatpush1.msra.mxu0 0.0
      %2233 = vmatprep.subr.mxu0 0.0
      %2234 = vmatpush1.msra.mxu0 0.0
      %2235 = vmatprep.subr.mxu0 0.0
      %2236 = vmatpush1.msra.mxu0 0.0
      %2237 = vmatprep.subr.mxu0 0.0
      %2238 = vmatpush1.msra.mxu0 0.0
      %2239 = vmatprep.subr.mxu0 0.0
      %2240 = vmatpush1.msra.mxu0 0.0
      %2241 = vmatprep.subr.mxu0 0.0
      %2242 = vmatpush1.msra.mxu0 0.0
      %2243 = vmatprep.subr.mxu0 0.0
      %2244 = vmatpush1.msra.mxu0 0.0
      %2245 = vmatprep.mubr.f32.mxu0 0.0
      %2246 = vmatmul.mubr.f32.gmra.mrb[0].mxu0 %v2177
      %v2247 = vpop.f32.mrb[0].mxu0
      %v2248 = vadd.f32 0.0, %v2247
      %v2249 = vpop.f32.mrb[0].mxu0
      %2250 = vmatprep.mubr.f32.mxu0 0.0
      %2251 = vmatmul.mubr.f32.gmra.mrb[0].mxu0 %v2178
      %v2252 = vpop.f32.mrb[0].mxu0
      %v2253 = vadd.f32 0.0, %v2252
      %v2254 = vpop.f32.mrb[0].mxu0
      %2255 = vdwg.mxu0
      %v2256 = vadd.f32 %v2149, %v2248
      %v2257 = vadd.f32 %v2150, %v2253
      %v2258 = vld [vmem:[%s2044 + $0x1] sm:$0xf]
      %v2259 = vld [vmem:[%s2044 + $0x11] sm:$0xf]
      %v2260 = vld [vmem:[%s2044 + $0x21] sm:$0xf]
      %v2261 = vld [vmem:[%s2044 + $0x31] sm:$0xf]
      %s2262 = scalar_lea.vmem %s432, 2176
      %v2263 = vld [vmem:[%s2262] sm:$0xff]
      %v2264 = vld [vmem:[%s2262 + $0x8] sm:$0xff]
      %v2265 = vld [vmem:[%s2262 + $0x10] sm:$0xff]
      %v2266 = vld [vmem:[%s2262 + $0x18] sm:$0xff]
      %v2267 = vld [vmem:[%s2262 + $0x20] sm:$0xff]
      %v2268 = vld [vmem:[%s2262 + $0x28] sm:$0xff]
      %v2269 = vld [vmem:[%s2262 + $0x30] sm:$0xff]
      %v2270 = vld [vmem:[%s2262 + $0x38] sm:$0xff]
      %v2271 = vld [vmem:[%s2262 + $0x40] sm:$0xff]
      %v2272 = vld [vmem:[%s2262 + $0x48] sm:$0xff]
      %v2273 = vld [vmem:[%s2262 + $0x50] sm:$0xff]
      %v2274 = vld [vmem:[%s2262 + $0x58] sm:$0xff]
      %v2275 = vld [vmem:[%s2262 + $0x60] sm:$0xff]
      %v2276 = vld [vmem:[%s2262 + $0x68] sm:$0xff]
      %v2277 = vld [vmem:[%s2262 + $0x70] sm:$0xff]
      %v2278 = vld [vmem:[%s2262 + $0x78] sm:$0xff]
      %v2283 = vcombine.low %v2258, %v2259
      %v2284 = vcombine.low %v2260, %v2261
      %2287 = vmatprep.subr.mxu0 0.0
      %2288 = vmatpush1.msra.mxu0 %v2263
      %2289 = vmatprep.subr.mxu0 0.0
      %2290 = vmatpush1.msra.mxu0 %v2264
      %2291 = vmatprep.subr.mxu0 0.0
      %2292 = vmatpush1.msra.mxu0 %v2265
      %2293 = vmatprep.subr.mxu0 0.0
      %2294 = vmatpush1.msra.mxu0 %v2266
      %2295 = vmatprep.subr.mxu0 0.0
      %2296 = vmatpush1.msra.mxu0 %v2267
      %2297 = vmatprep.subr.mxu0 0.0
      %2298 = vmatpush1.msra.mxu0 %v2268
      %2299 = vmatprep.subr.mxu0 0.0
      %2300 = vmatpush1.msra.mxu0 %v2269
      %2301 = vmatprep.subr.mxu0 0.0
      %2302 = vmatpush1.msra.mxu0 %v2270
      %2303 = vmatprep.subr.mxu0 0.0
      %2304 = vmatpush1.msra.mxu0 %v2271
      %2305 = vmatprep.subr.mxu0 0.0
      %2306 = vmatpush1.msra.mxu0 %v2272
      %2307 = vmatprep.subr.mxu0 0.0
      %2308 = vmatpush1.msra.mxu0 %v2273
      %2309 = vmatprep.subr.mxu0 0.0
      %2310 = vmatpush1.msra.mxu0 %v2274
      %2311 = vmatprep.subr.mxu0 0.0
      %2312 = vmatpush1.msra.mxu0 %v2275
      %2313 = vmatprep.subr.mxu0 0.0
      %2314 = vmatpush1.msra.mxu0 %v2276
      %2315 = vmatprep.subr.mxu0 0.0
      %2316 = vmatpush1.msra.mxu0 %v2277
      %2317 = vmatprep.subr.mxu0 0.0
      %2318 = vmatpush1.msra.mxu0 %v2278
      %2319 = vmatprep.subr.mxu0 0.0
      %2320 = vmatpush1.msra.mxu0 0.0
      %2321 = vmatprep.subr.mxu0 0.0
      %2322 = vmatpush1.msra.mxu0 0.0
      %2323 = vmatprep.subr.mxu0 0.0
      %2324 = vmatpush1.msra.mxu0 0.0
      %2325 = vmatprep.subr.mxu0 0.0
      %2326 = vmatpush1.msra.mxu0 0.0
      %2327 = vmatprep.subr.mxu0 0.0
      %2328 = vmatpush1.msra.mxu0 0.0
      %2329 = vmatprep.subr.mxu0 0.0
      %2330 = vmatpush1.msra.mxu0 0.0
      %2331 = vmatprep.subr.mxu0 0.0
      %2332 = vmatpush1.msra.mxu0 0.0
      %2333 = vmatprep.subr.mxu0 0.0
      %2334 = vmatpush1.msra.mxu0 0.0
      %2335 = vmatprep.subr.mxu0 0.0
      %2336 = vmatpush1.msra.mxu0 0.0
      %2337 = vmatprep.subr.mxu0 0.0
      %2338 = vmatpush1.msra.mxu0 0.0
      %2339 = vmatprep.subr.mxu0 0.0
      %2340 = vmatpush1.msra.mxu0 0.0
      %2341 = vmatprep.subr.mxu0 0.0
      %2342 = vmatpush1.msra.mxu0 0.0
      %2343 = vmatprep.subr.mxu0 0.0
      %2344 = vmatpush1.msra.mxu0 0.0
      %2345 = vmatprep.subr.mxu0 0.0
      %2346 = vmatpush1.msra.mxu0 0.0
      %2347 = vmatprep.subr.mxu0 0.0
      %2348 = vmatpush1.msra.mxu0 0.0
      %2349 = vmatprep.subr.mxu0 0.0
      %2350 = vmatpush1.msra.mxu0 0.0
      %2351 = vmatprep.mubr.f32.mxu0 0.0
      %2352 = vmatmul.mubr.f32.gmra.mrb[0].mxu0 %v2283
      %v2353 = vpop.f32.mrb[0].mxu0
      %v2354 = vadd.f32 0.0, %v2353
      %v2355 = vpop.f32.mrb[0].mxu0
      %2356 = vmatprep.mubr.f32.mxu0 0.0
      %2357 = vmatmul.mubr.f32.gmra.mrb[0].mxu0 %v2284
      %v2358 = vpop.f32.mrb[0].mxu0
      %v2359 = vadd.f32 0.0, %v2358
      %v2360 = vpop.f32.mrb[0].mxu0
      %2361 = vdwg.mxu0
      %v2362 = vadd.f32 %v2256, %v2354
      %v2363 = vadd.f32 %v2257, %v2359
      %v2364 = vld [vmem:[%s426] sm:$0xf]
      %v2365 = vld [vmem:[%s426 + $0x10] sm:$0xf]
      %v2366 = vld [vmem:[%s426 + $0x20] sm:$0xf]
      %v2367 = vld [vmem:[%s426 + $0x30] sm:$0xf]
      %s2368 = scalar_lea.vmem %s432, 2304
      %v2369 = vld [vmem:[%s2368] sm:$0xff]
      %v2370 = vld [vmem:[%s2368 + $0x8] sm:$0xff]
      %v2371 = vld [vmem:[%s2368 + $0x10] sm:$0xff]
      %v2372 = vld [vmem:[%s2368 + $0x18] sm:$0xff]
      %v2373 = vld [vmem:[%s2368 + $0x20] sm:$0xff]
      %v2374 = vld [vmem:[%s2368 + $0x28] sm:$0xff]
      %v2375 = vld [vmem:[%s2368 + $0x30] sm:$0xff]
      %v2376 = vld [vmem:[%s2368 + $0x38] sm:$0xff]
      %v2377 = vld [vmem:[%s2368 + $0x40] sm:$0xff]
      %v2378 = vld [vmem:[%s2368 + $0x48] sm:$0xff]
      %v2379 = vld [vmem:[%s2368 + $0x50] sm:$0xff]
      %v2380 = vld [vmem:[%s2368 + $0x58] sm:$0xff]
      %v2381 = vld [vmem:[%s2368 + $0x60] sm:$0xff]
      %v2382 = vld [vmem:[%s2368 + $0x68] sm:$0xff]
      %v2383 = vld [vmem:[%s2368 + $0x70] sm:$0xff]
      %v2384 = vld [vmem:[%s2368 + $0x78] sm:$0xff]
      %v2389 = vcombine.low %v2364, %v2365
      %v2390 = vcombine.low %v2366, %v2367
      %2393 = vmatprep.subr.mxu0 0.0
      %2394 = vmatpush1.msra.mxu0 %v2369
      %2395 = vmatprep.subr.mxu0 0.0
      %2396 = vmatpush1.msra.mxu0 %v2370
      %2397 = vmatprep.subr.mxu0 0.0
      %2398 = vmatpush1.msra.mxu0 %v2371
      %2399 = vmatprep.subr.mxu0 0.0
      %2400 = vmatpush1.msra.mxu0 %v2372
      %2401 = vmatprep.subr.mxu0 0.0
      %2402 = vmatpush1.msra.mxu0 %v2373
      %2403 = vmatprep.subr.mxu0 0.0
      %2404 = vmatpush1.msra.mxu0 %v2374
      %2405 = vmatprep.subr.mxu0 0.0
      %2406 = vmatpush1.msra.mxu0 %v2375
      %2407 = vmatprep.subr.mxu0 0.0
      %2408 = vmatpush1.msra.mxu0 %v2376
      %2409 = vmatprep.subr.mxu0 0.0
      %2410 = vmatpush1.msra.mxu0 %v2377
      %2411 = vmatprep.subr.mxu0 0.0
      %2412 = vmatpush1.msra.mxu0 %v2378
      %2413 = vmatprep.subr.mxu0 0.0
      %2414 = vmatpush1.msra.mxu0 %v2379
      %2415 = vmatprep.subr.mxu0 0.0
      %2416 = vmatpush1.msra.mxu0 %v2380
      %2417 = vmatprep.subr.mxu0 0.0
      %2418 = vmatpush1.msra.mxu0 %v2381
      %2419 = vmatprep.subr.mxu0 0.0
      %2420 = vmatpush1.msra.mxu0 %v2382
      %2421 = vmatprep.subr.mxu0 0.0
      %2422 = vmatpush1.msra.mxu0 %v2383
      %2423 = vmatprep.subr.mxu0 0.0
      %2424 = vmatpush1.msra.mxu0 %v2384
      %2425 = vmatprep.subr.mxu0 0.0
      %2426 = vmatpush1.msra.mxu0 0.0
      %2427 = vmatprep.subr.mxu0 0.0
      %2428 = vmatpush1.msra.mxu0 0.0
      %2429 = vmatprep.subr.mxu0 0.0
      %2430 = vmatpush1.msra.mxu0 0.0
      %2431 = vmatprep.subr.mxu0 0.0
      %2432 = vmatpush1.msra.mxu0 0.0
      %2433 = vmatprep.subr.mxu0 0.0
      %2434 = vmatpush1.msra.mxu0 0.0
      %2435 = vmatprep.subr.mxu0 0.0
      %2436 = vmatpush1.msra.mxu0 0.0
      %2437 = vmatprep.subr.mxu0 0.0
      %2438 = vmatpush1.msra.mxu0 0.0
      %2439 = vmatprep.subr.mxu0 0.0
      %2440 = vmatpush1.msra.mxu0 0.0
      %2441 = vmatprep.subr.mxu0 0.0
      %2442 = vmatpush1.msra.mxu0 0.0
      %2443 = vmatprep.subr.mxu0 0.0
      %2444 = vmatpush1.msra.mxu0 0.0
      %2445 = vmatprep.subr.mxu0 0.0
      %2446 = vmatpush1.msra.mxu0 0.0
      %2447 = vmatprep.subr.mxu0 0.0
      %2448 = vmatpush1.msra.mxu0 0.0
      %2449 = vmatprep.subr.mxu0 0.0
      %2450 = vmatpush1.msra.mxu0 0.0
      %2451 = vmatprep.subr.mxu0 0.0
      %2452 = vmatpush1.msra.mxu0 0.0
      %2453 = vmatprep.subr.mxu0 0.0
      %2454 = vmatpush1.msra.mxu0 0.0
      %2455 = vmatprep.subr.mxu0 0.0
      %2456 = vmatpush1.msra.mxu0 0.0
      %2457 = vmatprep.mubr.f32.mxu0 0.0
      %2458 = vmatmul.mubr.f32.gmra.mrb[0].mxu0 %v2389
      %v2459 = vpop.f32.mrb[0].mxu0
      %v2460 = vadd.f32 0.0, %v2459
      %v2461 = vpop.f32.mrb[0].mxu0
      %2462 = vmatprep.mubr.f32.mxu0 0.0
      %2463 = vmatmul.mubr.f32.gmra.mrb[0].mxu0 %v2390
      %v2464 = vpop.f32.mrb[0].mxu0
      %v2465 = vadd.f32 0.0, %v2464
      %v2466 = vpop.f32.mrb[0].mxu0
      %2467 = vdwg.mxu0
      %v2468 = vadd.f32 %v2362, %v2460
      %v2469 = vadd.f32 %v2363, %v2465
      %s2470 = scalar_lea.vmem %s426, 8
      %v2471 = vld [vmem:[%s2470] sm:$0xf]
      %v2472 = vld [vmem:[%s2470 + $0x10] sm:$0xf]
      %v2473 = vld [vmem:[%s2470 + $0x20] sm:$0xf]
      %v2474 = vld [vmem:[%s2470 + $0x30] sm:$0xf]
      %s2475 = scalar_lea.vmem %s432, 2432
      %v2476 = vld [vmem:[%s2475] sm:$0xff]
      %v2477 = vld [vmem:[%s2475 + $0x8] sm:$0xff]
      %v2478 = vld [vmem:[%s2475 + $0x10] sm:$0xff]
      %v2479 = vld [vmem:[%s2475 + $0x18] sm:$0xff]
      %v2480 = vld [vmem:[%s2475 + $0x20] sm:$0xff]
      %v2481 = vld [vmem:[%s2475 + $0x28] sm:$0xff]
      %v2482 = vld [vmem:[%s2475 + $0x30] sm:$0xff]
      %v2483 = vld [vmem:[%s2475 + $0x38] sm:$0xff]
      %v2484 = vld [vmem:[%s2475 + $0x40] sm:$0xff]
      %v2485 = vld [vmem:[%s2475 + $0x48] sm:$0xff]
      %v2486 = vld [vmem:[%s2475 + $0x50] sm:$0xff]
      %v2487 = vld [vmem:[%s2475 + $0x58] sm:$0xff]
      %v2488 = vld [vmem:[%s2475 + $0x60] sm:$0xff]
      %v2489 = vld [vmem:[%s2475 + $0x68] sm:$0xff]
      %v2490 = vld [vmem:[%s2475 + $0x70] sm:$0xff]
      %v2491 = vld [vmem:[%s2475 + $0x78] sm:$0xff]
      %v2496 = vcombine.low %v2471, %v2472
      %v2497 = vcombine.low %v2473, %v2474
      %2500 = vmatprep.subr.mxu0 0.0
      %2501 = vmatpush1.msra.mxu0 %v2476
      %2502 = vmatprep.subr.mxu0 0.0
      %2503 = vmatpush1.msra.mxu0 %v2477
      %2504 = vmatprep.subr.mxu0 0.0
      %2505 = vmatpush1.msra.mxu0 %v2478
      %2506 = vmatprep.subr.mxu0 0.0
      %2507 = vmatpush1.msra.mxu0 %v2479
      %2508 = vmatprep.subr.mxu0 0.0
      %2509 = vmatpush1.msra.mxu0 %v2480
      %2510 = vmatprep.subr.mxu0 0.0
      %2511 = vmatpush1.msra.mxu0 %v2481
      %2512 = vmatprep.subr.mxu0 0.0
      %2513 = vmatpush1.msra.mxu0 %v2482
      %2514 = vmatprep.subr.mxu0 0.0
      %2515 = vmatpush1.msra.mxu0 %v2483
      %2516 = vmatprep.subr.mxu0 0.0
      %2517 = vmatpush1.msra.mxu0 %v2484
      %2518 = vmatprep.subr.mxu0 0.0
      %2519 = vmatpush1.msra.mxu0 %v2485
      %2520 = vmatprep.subr.mxu0 0.0
      %2521 = vmatpush1.msra.mxu0 %v2486
      %2522 = vmatprep.subr.mxu0 0.0
      %2523 = vmatpush1.msra.mxu0 %v2487
      %2524 = vmatprep.subr.mxu0 0.0
      %2525 = vmatpush1.msra.mxu0 %v2488
      %2526 = vmatprep.subr.mxu0 0.0
      %2527 = vmatpush1.msra.mxu0 %v2489
      %2528 = vmatprep.subr.mxu0 0.0
      %2529 = vmatpush1.msra.mxu0 %v2490
      %2530 = vmatprep.subr.mxu0 0.0
      %2531 = vmatpush1.msra.mxu0 %v2491
      %2532 = vmatprep.subr.mxu0 0.0
      %2533 = vmatpush1.msra.mxu0 0.0
      %2534 = vmatprep.subr.mxu0 0.0
      %2535 = vmatpush1.msra.mxu0 0.0
      %2536 = vmatprep.subr.mxu0 0.0
      %2537 = vmatpush1.msra.mxu0 0.0
      %2538 = vmatprep.subr.mxu0 0.0
      %2539 = vmatpush1.msra.mxu0 0.0
      %2540 = vmatprep.subr.mxu0 0.0
      %2541 = vmatpush1.msra.mxu0 0.0
      %2542 = vmatprep.subr.mxu0 0.0
      %2543 = vmatpush1.msra.mxu0 0.0
      %2544 = vmatprep.subr.mxu0 0.0
      %2545 = vmatpush1.msra.mxu0 0.0
      %2546 = vmatprep.subr.mxu0 0.0
      %2547 = vmatpush1.msra.mxu0 0.0
      %2548 = vmatprep.subr.mxu0 0.0
      %2549 = vmatpush1.msra.mxu0 0.0
      %2550 = vmatprep.subr.mxu0 0.0
      %2551 = vmatpush1.msra.mxu0 0.0
      %2552 = vmatprep.subr.mxu0 0.0
      %2553 = vmatpush1.msra.mxu0 0.0
      %2554 = vmatprep.subr.mxu0 0.0
      %2555 = vmatpush1.msra.mxu0 0.0
      %2556 = vmatprep.subr.mxu0 0.0
      %2557 = vmatpush1.msra.mxu0 0.0
      %2558 = vmatprep.subr.mxu0 0.0
      %2559 = vmatpush1.msra.mxu0 0.0
      %2560 = vmatprep.subr.mxu0 0.0
      %2561 = vmatpush1.msra.mxu0 0.0
      %2562 = vmatprep.subr.mxu0 0.0
      %2563 = vmatpush1.msra.mxu0 0.0
      %2564 = vmatprep.mubr.f32.mxu0 0.0
      %2565 = vmatmul.mubr.f32.gmra.mrb[0].mxu0 %v2496
      %v2566 = vpop.f32.mrb[0].mxu0
      %v2567 = vadd.f32 0.0, %v2566
      %v2568 = vpop.f32.mrb[0].mxu0
      %2569 = vmatprep.mubr.f32.mxu0 0.0
      %2570 = vmatmul.mubr.f32.gmra.mrb[0].mxu0 %v2497
      %v2571 = vpop.f32.mrb[0].mxu0
      %v2572 = vadd.f32 0.0, %v2571
      %v2573 = vpop.f32.mrb[0].mxu0
      %2574 = vdwg.mxu0
      %v2575 = vadd.f32 %v2468, %v2567
      %v2576 = vadd.f32 %v2469, %v2572
      %v2577 = vld [vmem:[%s426 + $0x1] sm:$0xf]
      %v2578 = vld [vmem:[%s426 + $0x11] sm:$0xf]
      %v2579 = vld [vmem:[%s426 + $0x21] sm:$0xf]
      %v2580 = vld [vmem:[%s426 + $0x31] sm:$0xf]
      %s2581 = scalar_lea.vmem %s432, 2560
      %v2582 = vld [vmem:[%s2581] sm:$0xff]
      %v2583 = vld [vmem:[%s2581 + $0x8] sm:$0xff]
      %v2584 = vld [vmem:[%s2581 + $0x10] sm:$0xff]
      %v2585 = vld [vmem:[%s2581 + $0x18] sm:$0xff]
      %v2586 = vld [vmem:[%s2581 + $0x20] sm:$0xff]
      %v2587 = vld [vmem:[%s2581 + $0x28] sm:$0xff]
      %v2588 = vld [vmem:[%s2581 + $0x30] sm:$0xff]
      %v2589 = vld [vmem:[%s2581 + $0x38] sm:$0xff]
      %v2590 = vld [vmem:[%s2581 + $0x40] sm:$0xff]
      %v2591 = vld [vmem:[%s2581 + $0x48] sm:$0xff]
      %v2592 = vld [vmem:[%s2581 + $0x50] sm:$0xff]
      %v2593 = vld [vmem:[%s2581 + $0x58] sm:$0xff]
      %v2594 = vld [vmem:[%s2581 + $0x60] sm:$0xff]
      %v2595 = vld [vmem:[%s2581 + $0x68] sm:$0xff]
      %v2596 = vld [vmem:[%s2581 + $0x70] sm:$0xff]
      %v2597 = vld [vmem:[%s2581 + $0x78] sm:$0xff]
      %v2602 = vcombine.low %v2577, %v2578
      %v2603 = vcombine.low %v2579, %v2580
      %2606 = vmatprep.subr.mxu0 0.0
      %2607 = vmatpush1.msra.mxu0 %v2582
      %2608 = vmatprep.subr.mxu0 0.0
      %2609 = vmatpush1.msra.mxu0 %v2583
      %2610 = vmatprep.subr.mxu0 0.0
      %2611 = vmatpush1.msra.mxu0 %v2584
      %2612 = vmatprep.subr.mxu0 0.0
      %2613 = vmatpush1.msra.mxu0 %v2585
      %2614 = vmatprep.subr.mxu0 0.0
      %2615 = vmatpush1.msra.mxu0 %v2586
      %2616 = vmatprep.subr.mxu0 0.0
      %2617 = vmatpush1.msra.mxu0 %v2587
      %2618 = vmatprep.subr.mxu0 0.0
      %2619 = vmatpush1.msra.mxu0 %v2588
      %2620 = vmatprep.subr.mxu0 0.0
      %2621 = vmatpush1.msra.mxu0 %v2589
      %2622 = vmatprep.subr.mxu0 0.0
      %2623 = vmatpush1.msra.mxu0 %v2590
      %2624 = vmatprep.subr.mxu0 0.0
      %2625 = vmatpush1.msra.mxu0 %v2591
      %2626 = vmatprep.subr.mxu0 0.0
      %2627 = vmatpush1.msra.mxu0 %v2592
      %2628 = vmatprep.subr.mxu0 0.0
      %2629 = vmatpush1.msra.mxu0 %v2593
      %2630 = vmatprep.subr.mxu0 0.0
      %2631 = vmatpush1.msra.mxu0 %v2594
      %2632 = vmatprep.subr.mxu0 0.0
      %2633 = vmatpush1.msra.mxu0 %v2595
      %2634 = vmatprep.subr.mxu0 0.0
      %2635 = vmatpush1.msra.mxu0 %v2596
      %2636 = vmatprep.subr.mxu0 0.0
      %2637 = vmatpush1.msra.mxu0 %v2597
      %2638 = vmatprep.subr.mxu0 0.0
      %2639 = vmatpush1.msra.mxu0 0.0
      %2640 = vmatprep.subr.mxu0 0.0
      %2641 = vmatpush1.msra.mxu0 0.0
      %2642 = vmatprep.subr.mxu0 0.0
      %2643 = vmatpush1.msra.mxu0 0.0
      %2644 = vmatprep.subr.mxu0 0.0
      %2645 = vmatpush1.msra.mxu0 0.0
      %2646 = vmatprep.subr.mxu0 0.0
      %2647 = vmatpush1.msra.mxu0 0.0
      %2648 = vmatprep.subr.mxu0 0.0
      %2649 = vmatpush1.msra.mxu0 0.0
      %2650 = vmatprep.subr.mxu0 0.0
      %2651 = vmatpush1.msra.mxu0 0.0
      %2652 = vmatprep.subr.mxu0 0.0
      %2653 = vmatpush1.msra.mxu0 0.0
      %2654 = vmatprep.subr.mxu0 0.0
      %2655 = vmatpush1.msra.mxu0 0.0
      %2656 = vmatprep.subr.mxu0 0.0
      %2657 = vmatpush1.msra.mxu0 0.0
      %2658 = vmatprep.subr.mxu0 0.0
      %2659 = vmatpush1.msra.mxu0 0.0
      %2660 = vmatprep.subr.mxu0 0.0
      %2661 = vmatpush1.msra.mxu0 0.0
      %2662 = vmatprep.subr.mxu0 0.0
      %2663 = vmatpush1.msra.mxu0 0.0
      %2664 = vmatprep.subr.mxu0 0.0
      %2665 = vmatpush1.msra.mxu0 0.0
      %2666 = vmatprep.subr.mxu0 0.0
      %2667 = vmatpush1.msra.mxu0 0.0
      %2668 = vmatprep.subr.mxu0 0.0
      %2669 = vmatpush1.msra.mxu0 0.0
      %2670 = vmatprep.mubr.f32.mxu0 0.0
      %2671 = vmatmul.mubr.f32.gmra.mrb[0].mxu0 %v2602
      %v2672 = vpop.f32.mrb[0].mxu0
      %v2673 = vadd.f32 0.0, %v2672
      %v2674 = vpop.f32.mrb[0].mxu0
      %2675 = vmatprep.mubr.f32.mxu0 0.0
      %2676 = vmatmul.mubr.f32.gmra.mrb[0].mxu0 %v2603
      %v2677 = vpop.f32.mrb[0].mxu0
      %v2678 = vadd.f32 0.0, %v2677
      %v2679 = vpop.f32.mrb[0].mxu0
      %2680 = vdwg.mxu0
      %v2681 = vadd.f32 %v2575, %v2673
      %v2682 = vadd.f32 %v2576, %v2678
      %s2683 = scalar_lea.vmem %s426, 80
      %v2684 = vld [vmem:[%s2683] sm:$0xf]
      %v2685 = vld [vmem:[%s2683 + $0x10] sm:$0xf]
      %v2686 = vld [vmem:[%s2683 + $0x20] sm:$0xf]
      %v2687 = vld [vmem:[%s2683 + $0x30] sm:$0xf]
      %s2688 = scalar_lea.vmem %s432, 2688
      %v2689 = vld [vmem:[%s2688] sm:$0xff]
      %v2690 = vld [vmem:[%s2688 + $0x8] sm:$0xff]
      %v2691 = vld [vmem:[%s2688 + $0x10] sm:$0xff]
      %v2692 = vld [vmem:[%s2688 + $0x18] sm:$0xff]
      %v2693 = vld [vmem:[%s2688 + $0x20] sm:$0xff]
      %v2694 = vld [vmem:[%s2688 + $0x28] sm:$0xff]
      %v2695 = vld [vmem:[%s2688 + $0x30] sm:$0xff]
      %v2696 = vld [vmem:[%s2688 + $0x38] sm:$0xff]
      %v2697 = vld [vmem:[%s2688 + $0x40] sm:$0xff]
      %v2698 = vld [vmem:[%s2688 + $0x48] sm:$0xff]
      %v2699 = vld [vmem:[%s2688 + $0x50] sm:$0xff]
      %v2700 = vld [vmem:[%s2688 + $0x58] sm:$0xff]
      %v2701 = vld [vmem:[%s2688 + $0x60] sm:$0xff]
      %v2702 = vld [vmem:[%s2688 + $0x68] sm:$0xff]
      %v2703 = vld [vmem:[%s2688 + $0x70] sm:$0xff]
      %v2704 = vld [vmem:[%s2688 + $0x78] sm:$0xff]
      %v2709 = vcombine.low %v2684, %v2685
      %v2710 = vcombine.low %v2686, %v2687
      %2713 = vmatprep.subr.mxu0 0.0
      %2714 = vmatpush1.msra.mxu0 %v2689
      %2715 = vmatprep.subr.mxu0 0.0
      %2716 = vmatpush1.msra.mxu0 %v2690
      %2717 = vmatprep.subr.mxu0 0.0
      %2718 = vmatpush1.msra.mxu0 %v2691
      %2719 = vmatprep.subr.mxu0 0.0
      %2720 = vmatpush1.msra.mxu0 %v2692
      %2721 = vmatprep.subr.mxu0 0.0
      %2722 = vmatpush1.msra.mxu0 %v2693
      %2723 = vmatprep.subr.mxu0 0.0
      %2724 = vmatpush1.msra.mxu0 %v2694
      %2725 = vmatprep.subr.mxu0 0.0
      %2726 = vmatpush1.msra.mxu0 %v2695
      %2727 = vmatprep.subr.mxu0 0.0
      %2728 = vmatpush1.msra.mxu0 %v2696
      %2729 = vmatprep.subr.mxu0 0.0
      %2730 = vmatpush1.msra.mxu0 %v2697
      %2731 = vmatprep.subr.mxu0 0.0
      %2732 = vmatpush1.msra.mxu0 %v2698
      %2733 = vmatprep.subr.mxu0 0.0
      %2734 = vmatpush1.msra.mxu0 %v2699
      %2735 = vmatprep.subr.mxu0 0.0
      %2736 = vmatpush1.msra.mxu0 %v2700
      %2737 = vmatprep.subr.mxu0 0.0
      %2738 = vmatpush1.msra.mxu0 %v2701
      %2739 = vmatprep.subr.mxu0 0.0
      %2740 = vmatpush1.msra.mxu0 %v2702
      %2741 = vmatprep.subr.mxu0 0.0
      %2742 = vmatpush1.msra.mxu0 %v2703
      %2743 = vmatprep.subr.mxu0 0.0
      %2744 = vmatpush1.msra.mxu0 %v2704
      %2745 = vmatprep.subr.mxu0 0.0
      %2746 = vmatpush1.msra.mxu0 0.0
      %2747 = vmatprep.subr.mxu0 0.0
      %2748 = vmatpush1.msra.mxu0 0.0
      %2749 = vmatprep.subr.mxu0 0.0
      %2750 = vmatpush1.msra.mxu0 0.0
      %2751 = vmatprep.subr.mxu0 0.0
      %2752 = vmatpush1.msra.mxu0 0.0
      %2753 = vmatprep.subr.mxu0 0.0
      %2754 = vmatpush1.msra.mxu0 0.0
      %2755 = vmatprep.subr.mxu0 0.0
      %2756 = vmatpush1.msra.mxu0 0.0
      %2757 = vmatprep.subr.mxu0 0.0
      %2758 = vmatpush1.msra.mxu0 0.0
      %2759 = vmatprep.subr.mxu0 0.0
      %2760 = vmatpush1.msra.mxu0 0.0
      %2761 = vmatprep.subr.mxu0 0.0
      %2762 = vmatpush1.msra.mxu0 0.0
      %2763 = vmatprep.subr.mxu0 0.0
      %2764 = vmatpush1.msra.mxu0 0.0
      %2765 = vmatprep.subr.mxu0 0.0
      %2766 = vmatpush1.msra.mxu0 0.0
      %2767 = vmatprep.subr.mxu0 0.0
      %2768 = vmatpush1.msra.mxu0 0.0
      %2769 = vmatprep.subr.mxu0 0.0
      %2770 = vmatpush1.msra.mxu0 0.0
      %2771 = vmatprep.subr.mxu0 0.0
      %2772 = vmatpush1.msra.mxu0 0.0
      %2773 = vmatprep.subr.mxu0 0.0
      %2774 = vmatpush1.msra.mxu0 0.0
      %2775 = vmatprep.subr.mxu0 0.0
      %2776 = vmatpush1.msra.mxu0 0.0
      %2777 = vmatprep.mubr.f32.mxu0 0.0
      %2778 = vmatmul.mubr.f32.gmra.mrb[0].mxu0 %v2709
      %v2779 = vpop.f32.mrb[0].mxu0
      %v2780 = vadd.f32 0.0, %v2779
      %v2781 = vpop.f32.mrb[0].mxu0
      %2782 = vmatprep.mubr.f32.mxu0 0.0
      %2783 = vmatmul.mubr.f32.gmra.mrb[0].mxu0 %v2710
      %v2784 = vpop.f32.mrb[0].mxu0
      %v2785 = vadd.f32 0.0, %v2784
      %v2786 = vpop.f32.mrb[0].mxu0
      %2787 = vdwg.mxu0
      %v2788 = vadd.f32 %v2681, %v2780
      %v2789 = vadd.f32 %v2682, %v2785
      %s2790 = scalar_lea.vmem %s426, 88
      %v2791 = vld [vmem:[%s2790] sm:$0xf]
      %v2792 = vld [vmem:[%s2790 + $0x10] sm:$0xf]
      %v2793 = vld [vmem:[%s2790 + $0x20] sm:$0xf]
      %v2794 = vld [vmem:[%s2790 + $0x30] sm:$0xf]
      %s2795 = scalar_lea.vmem %s432, 2816
      %v2796 = vld [vmem:[%s2795] sm:$0xff]
      %v2797 = vld [vmem:[%s2795 + $0x8] sm:$0xff]
      %v2798 = vld [vmem:[%s2795 + $0x10] sm:$0xff]
      %v2799 = vld [vmem:[%s2795 + $0x18] sm:$0xff]
      %v2800 = vld [vmem:[%s2795 + $0x20] sm:$0xff]
      %v2801 = vld [vmem:[%s2795 + $0x28] sm:$0xff]
      %v2802 = vld [vmem:[%s2795 + $0x30] sm:$0xff]
      %v2803 = vld [vmem:[%s2795 + $0x38] sm:$0xff]
      %v2804 = vld [vmem:[%s2795 + $0x40] sm:$0xff]
      %v2805 = vld [vmem:[%s2795 + $0x48] sm:$0xff]
      %v2806 = vld [vmem:[%s2795 + $0x50] sm:$0xff]
      %v2807 = vld [vmem:[%s2795 + $0x58] sm:$0xff]
      %v2808 = vld [vmem:[%s2795 + $0x60] sm:$0xff]
      %v2809 = vld [vmem:[%s2795 + $0x68] sm:$0xff]
      %v2810 = vld [vmem:[%s2795 + $0x70] sm:$0xff]
      %v2811 = vld [vmem:[%s2795 + $0x78] sm:$0xff]
      %v2816 = vcombine.low %v2791, %v2792
      %v2817 = vcombine.low %v2793, %v2794
      %2820 = vmatprep.subr.mxu0 0.0
      %2821 = vmatpush1.msra.mxu0 %v2796
      %2822 = vmatprep.subr.mxu0 0.0
      %2823 = vmatpush1.msra.mxu0 %v2797
      %2824 = vmatprep.subr.mxu0 0.0
      %2825 = vmatpush1.msra.mxu0 %v2798
      %2826 = vmatprep.subr.mxu0 0.0
      %2827 = vmatpush1.msra.mxu0 %v2799
      %2828 = vmatprep.subr.mxu0 0.0
      %2829 = vmatpush1.msra.mxu0 %v2800
      %2830 = vmatprep.subr.mxu0 0.0
      %2831 = vmatpush1.msra.mxu0 %v2801
      %2832 = vmatprep.subr.mxu0 0.0
      %2833 = vmatpush1.msra.mxu0 %v2802
      %2834 = vmatprep.subr.mxu0 0.0
      %2835 = vmatpush1.msra.mxu0 %v2803
      %2836 = vmatprep.subr.mxu0 0.0
      %2837 = vmatpush1.msra.mxu0 %v2804
      %2838 = vmatprep.subr.mxu0 0.0
      %2839 = vmatpush1.msra.mxu0 %v2805
      %2840 = vmatprep.subr.mxu0 0.0
      %2841 = vmatpush1.msra.mxu0 %v2806
      %2842 = vmatprep.subr.mxu0 0.0
      %2843 = vmatpush1.msra.mxu0 %v2807
      %2844 = vmatprep.subr.mxu0 0.0
      %2845 = vmatpush1.msra.mxu0 %v2808
      %2846 = vmatprep.subr.mxu0 0.0
      %2847 = vmatpush1.msra.mxu0 %v2809
      %2848 = vmatprep.subr.mxu0 0.0
      %2849 = vmatpush1.msra.mxu0 %v2810
      %2850 = vmatprep.subr.mxu0 0.0
      %2851 = vmatpush1.msra.mxu0 %v2811
      %2852 = vmatprep.subr.mxu0 0.0
      %2853 = vmatpush1.msra.mxu0 0.0
      %2854 = vmatprep.subr.mxu0 0.0
      %2855 = vmatpush1.msra.mxu0 0.0
      %2856 = vmatprep.subr.mxu0 0.0
      %2857 = vmatpush1.msra.mxu0 0.0
      %2858 = vmatprep.subr.mxu0 0.0
      %2859 = vmatpush1.msra.mxu0 0.0
      %2860 = vmatprep.subr.mxu0 0.0
      %2861 = vmatpush1.msra.mxu0 0.0
      %2862 = vmatprep.subr.mxu0 0.0
      %2863 = vmatpush1.msra.mxu0 0.0
      %2864 = vmatprep.subr.mxu0 0.0
      %2865 = vmatpush1.msra.mxu0 0.0
      %2866 = vmatprep.subr.mxu0 0.0
      %2867 = vmatpush1.msra.mxu0 0.0
      %2868 = vmatprep.subr.mxu0 0.0
      %2869 = vmatpush1.msra.mxu0 0.0
      %2870 = vmatprep.subr.mxu0 0.0
      %2871 = vmatpush1.msra.mxu0 0.0
      %2872 = vmatprep.subr.mxu0 0.0
      %2873 = vmatpush1.msra.mxu0 0.0
      %2874 = vmatprep.subr.mxu0 0.0
      %2875 = vmatpush1.msra.mxu0 0.0
      %2876 = vmatprep.subr.mxu0 0.0
      %2877 = vmatpush1.msra.mxu0 0.0
      %2878 = vmatprep.subr.mxu0 0.0
      %2879 = vmatpush1.msra.mxu0 0.0
      %2880 = vmatprep.subr.mxu0 0.0
      %2881 = vmatpush1.msra.mxu0 0.0
      %2882 = vmatprep.subr.mxu0 0.0
      %2883 = vmatpush1.msra.mxu0 0.0
      %2884 = vmatprep.mubr.f32.mxu0 0.0
      %2885 = vmatmul.mubr.f32.gmra.mrb[0].mxu0 %v2816
      %v2886 = vpop.f32.mrb[0].mxu0
      %v2887 = vadd.f32 0.0, %v2886
      %v2888 = vpop.f32.mrb[0].mxu0
      %2889 = vmatprep.mubr.f32.mxu0 0.0
      %2890 = vmatmul.mubr.f32.gmra.mrb[0].mxu0 %v2817
      %v2891 = vpop.f32.mrb[0].mxu0
      %v2892 = vadd.f32 0.0, %v2891
      %v2893 = vpop.f32.mrb[0].mxu0
      %2894 = vdwg.mxu0
      %v2895 = vadd.f32 %v2788, %v2887
      %v2896 = vadd.f32 %v2789, %v2892
      %v2897 = vld [vmem:[%s2683 + $0x1] sm:$0xf]
      %v2898 = vld [vmem:[%s2683 + $0x11] sm:$0xf]
      %v2899 = vld [vmem:[%s2683 + $0x21] sm:$0xf]
      %v2900 = vld [vmem:[%s2683 + $0x31] sm:$0xf]
      %s2901 = scalar_lea.vmem %s432, 2944
      %v2902 = vld [vmem:[%s2901] sm:$0xff]
      %v2903 = vld [vmem:[%s2901 + $0x8] sm:$0xff]
      %v2904 = vld [vmem:[%s2901 + $0x10] sm:$0xff]
      %v2905 = vld [vmem:[%s2901 + $0x18] sm:$0xff]
      %v2906 = vld [vmem:[%s2901 + $0x20] sm:$0xff]
      %v2907 = vld [vmem:[%s2901 + $0x28] sm:$0xff]
      %v2908 = vld [vmem:[%s2901 + $0x30] sm:$0xff]
      %v2909 = vld [vmem:[%s2901 + $0x38] sm:$0xff]
      %v2910 = vld [vmem:[%s2901 + $0x40] sm:$0xff]
      %v2911 = vld [vmem:[%s2901 + $0x48] sm:$0xff]
      %v2912 = vld [vmem:[%s2901 + $0x50] sm:$0xff]
      %v2913 = vld [vmem:[%s2901 + $0x58] sm:$0xff]
      %v2914 = vld [vmem:[%s2901 + $0x60] sm:$0xff]
      %v2915 = vld [vmem:[%s2901 + $0x68] sm:$0xff]
      %v2916 = vld [vmem:[%s2901 + $0x70] sm:$0xff]
      %v2917 = vld [vmem:[%s2901 + $0x78] sm:$0xff]
      %v2922 = vcombine.low %v2897, %v2898
      %v2923 = vcombine.low %v2899, %v2900
      %2926 = vmatprep.subr.mxu0 0.0
      %2927 = vmatpush1.msra.mxu0 %v2902
      %2928 = vmatprep.subr.mxu0 0.0
      %2929 = vmatpush1.msra.mxu0 %v2903
      %2930 = vmatprep.subr.mxu0 0.0
      %2931 = vmatpush1.msra.mxu0 %v2904
      %2932 = vmatprep.subr.mxu0 0.0
      %2933 = vmatpush1.msra.mxu0 %v2905
      %2934 = vmatprep.subr.mxu0 0.0
      %2935 = vmatpush1.msra.mxu0 %v2906
      %2936 = vmatprep.subr.mxu0 0.0
      %2937 = vmatpush1.msra.mxu0 %v2907
      %2938 = vmatprep.subr.mxu0 0.0
      %2939 = vmatpush1.msra.mxu0 %v2908
      %2940 = vmatprep.subr.mxu0 0.0
      %2941 = vmatpush1.msra.mxu0 %v2909
      %2942 = vmatprep.subr.mxu0 0.0
      %2943 = vmatpush1.msra.mxu0 %v2910
      %2944 = vmatprep.subr.mxu0 0.0
      %2945 = vmatpush1.msra.mxu0 %v2911
      %2946 = vmatprep.subr.mxu0 0.0
      %2947 = vmatpush1.msra.mxu0 %v2912
      %2948 = vmatprep.subr.mxu0 0.0
      %2949 = vmatpush1.msra.mxu0 %v2913
      %2950 = vmatprep.subr.mxu0 0.0
      %2951 = vmatpush1.msra.mxu0 %v2914
      %2952 = vmatprep.subr.mxu0 0.0
      %2953 = vmatpush1.msra.mxu0 %v2915
      %2954 = vmatprep.subr.mxu0 0.0
      %2955 = vmatpush1.msra.mxu0 %v2916
      %2956 = vmatprep.subr.mxu0 0.0
      %2957 = vmatpush1.msra.mxu0 %v2917
      %2958 = vmatprep.subr.mxu0 0.0
      %2959 = vmatpush1.msra.mxu0 0.0
      %2960 = vmatprep.subr.mxu0 0.0
      %2961 = vmatpush1.msra.mxu0 0.0
      %2962 = vmatprep.subr.mxu0 0.0
      %2963 = vmatpush1.msra.mxu0 0.0
      %2964 = vmatprep.subr.mxu0 0.0
      %2965 = vmatpush1.msra.mxu0 0.0
      %2966 = vmatprep.subr.mxu0 0.0
      %2967 = vmatpush1.msra.mxu0 0.0
      %2968 = vmatprep.subr.mxu0 0.0
      %2969 = vmatpush1.msra.mxu0 0.0
      %2970 = vmatprep.subr.mxu0 0.0
      %2971 = vmatpush1.msra.mxu0 0.0
      %2972 = vmatprep.subr.mxu0 0.0
      %2973 = vmatpush1.msra.mxu0 0.0
      %2974 = vmatprep.subr.mxu0 0.0
      %2975 = vmatpush1.msra.mxu0 0.0
      %2976 = vmatprep.subr.mxu0 0.0
      %2977 = vmatpush1.msra.mxu0 0.0
      %2978 = vmatprep.subr.mxu0 0.0
      %2979 = vmatpush1.msra.mxu0 0.0
      %2980 = vmatprep.subr.mxu0 0.0
      %2981 = vmatpush1.msra.mxu0 0.0
      %2982 = vmatprep.subr.mxu0 0.0
      %2983 = vmatpush1.msra.mxu0 0.0
      %2984 = vmatprep.subr.mxu0 0.0
      %2985 = vmatpush1.msra.mxu0 0.0
      %2986 = vmatprep.subr.mxu0 0.0
      %2987 = vmatpush1.msra.mxu0 0.0
      %2988 = vmatprep.subr.mxu0 0.0
      %2989 = vmatpush1.msra.mxu0 0.0
      %2990 = vmatprep.mubr.f32.mxu0 0.0
      %2991 = vmatmul.mubr.f32.gmra.mrb[0].mxu0 %v2922
      %v2992 = vpop.f32.mrb[0].mxu0
      %v2993 = vadd.f32 0.0, %v2992
      %v2994 = vpop.f32.mrb[0].mxu0
      %2995 = vmatprep.mubr.f32.mxu0 0.0
      %2996 = vmatmul.mubr.f32.gmra.mrb[0].mxu0 %v2923
      %v2997 = vpop.f32.mrb[0].mxu0
      %v2998 = vadd.f32 0.0, %v2997
      %v2999 = vpop.f32.mrb[0].mxu0
      %3000 = vdwg.mxu0
      %v3001 = vadd.f32 %v2895, %v2993
      %v3002 = vadd.f32 %v2896, %v2998
      %s3003 = scalar_lea.vmem %s426, 16
      %v3004 = vld [vmem:[%s3003] sm:$0xf]
      %v3005 = vld [vmem:[%s3003 + $0x10] sm:$0xf]
      %v3006 = vld [vmem:[%s3003 + $0x20] sm:$0xf]
      %v3007 = vld [vmem:[%s3003 + $0x30] sm:$0xf]
      %s3008 = scalar_lea.vmem %s432, 3072
      %v3009 = vld [vmem:[%s3008] sm:$0xff]
      %v3010 = vld [vmem:[%s3008 + $0x8] sm:$0xff]
      %v3011 = vld [vmem:[%s3008 + $0x10] sm:$0xff]
      %v3012 = vld [vmem:[%s3008 + $0x18] sm:$0xff]
      %v3013 = vld [vmem:[%s3008 + $0x20] sm:$0xff]
      %v3014 = vld [vmem:[%s3008 + $0x28] sm:$0xff]
      %v3015 = vld [vmem:[%s3008 + $0x30] sm:$0xff]
      %v3016 = vld [vmem:[%s3008 + $0x38] sm:$0xff]
      %v3017 = vld [vmem:[%s3008 + $0x40] sm:$0xff]
      %v3018 = vld [vmem:[%s3008 + $0x48] sm:$0xff]
      %v3019 = vld [vmem:[%s3008 + $0x50] sm:$0xff]
      %v3020 = vld [vmem:[%s3008 + $0x58] sm:$0xff]
      %v3021 = vld [vmem:[%s3008 + $0x60] sm:$0xff]
      %v3022 = vld [vmem:[%s3008 + $0x68] sm:$0xff]
      %v3023 = vld [vmem:[%s3008 + $0x70] sm:$0xff]
      %v3024 = vld [vmem:[%s3008 + $0x78] sm:$0xff]
      %v3029 = vcombine.low %v3004, %v3005
      %v3030 = vcombine.low %v3006, %v3007
      %3033 = vmatprep.subr.mxu0 0.0
      %3034 = vmatpush1.msra.mxu0 %v3009
      %3035 = vmatprep.subr.mxu0 0.0
      %3036 = vmatpush1.msra.mxu0 %v3010
      %3037 = vmatprep.subr.mxu0 0.0
      %3038 = vmatpush1.msra.mxu0 %v3011
      %3039 = vmatprep.subr.mxu0 0.0
      %3040 = vmatpush1.msra.mxu0 %v3012
      %3041 = vmatprep.subr.mxu0 0.0
      %3042 = vmatpush1.msra.mxu0 %v3013
      %3043 = vmatprep.subr.mxu0 0.0
      %3044 = vmatpush1.msra.mxu0 %v3014
      %3045 = vmatprep.subr.mxu0 0.0
      %3046 = vmatpush1.msra.mxu0 %v3015
      %3047 = vmatprep.subr.mxu0 0.0
      %3048 = vmatpush1.msra.mxu0 %v3016
      %3049 = vmatprep.subr.mxu0 0.0
      %3050 = vmatpush1.msra.mxu0 %v3017
      %3051 = vmatprep.subr.mxu0 0.0
      %3052 = vmatpush1.msra.mxu0 %v3018
      %3053 = vmatprep.subr.mxu0 0.0
      %3054 = vmatpush1.msra.mxu0 %v3019
      %3055 = vmatprep.subr.mxu0 0.0
      %3056 = vmatpush1.msra.mxu0 %v3020
      %3057 = vmatprep.subr.mxu0 0.0
      %3058 = vmatpush1.msra.mxu0 %v3021
      %3059 = vmatprep.subr.mxu0 0.0
      %3060 = vmatpush1.msra.mxu0 %v3022
      %3061 = vmatprep.subr.mxu0 0.0
      %3062 = vmatpush1.msra.mxu0 %v3023
      %3063 = vmatprep.subr.mxu0 0.0
      %3064 = vmatpush1.msra.mxu0 %v3024
      %3065 = vmatprep.subr.mxu0 0.0
      %3066 = vmatpush1.msra.mxu0 0.0
      %3067 = vmatprep.subr.mxu0 0.0
      %3068 = vmatpush1.msra.mxu0 0.0
      %3069 = vmatprep.subr.mxu0 0.0
      %3070 = vmatpush1.msra.mxu0 0.0
      %3071 = vmatprep.subr.mxu0 0.0
      %3072 = vmatpush1.msra.mxu0 0.0
      %3073 = vmatprep.subr.mxu0 0.0
      %3074 = vmatpush1.msra.mxu0 0.0
      %3075 = vmatprep.subr.mxu0 0.0
      %3076 = vmatpush1.msra.mxu0 0.0
      %3077 = vmatprep.subr.mxu0 0.0
      %3078 = vmatpush1.msra.mxu0 0.0
      %3079 = vmatprep.subr.mxu0 0.0
      %3080 = vmatpush1.msra.mxu0 0.0
      %3081 = vmatprep.subr.mxu0 0.0
      %3082 = vmatpush1.msra.mxu0 0.0
      %3083 = vmatprep.subr.mxu0 0.0
      %3084 = vmatpush1.msra.mxu0 0.0
      %3085 = vmatprep.subr.mxu0 0.0
      %3086 = vmatpush1.msra.mxu0 0.0
      %3087 = vmatprep.subr.mxu0 0.0
      %3088 = vmatpush1.msra.mxu0 0.0
      %3089 = vmatprep.subr.mxu0 0.0
      %3090 = vmatpush1.msra.mxu0 0.0
      %3091 = vmatprep.subr.mxu0 0.0
      %3092 = vmatpush1.msra.mxu0 0.0
      %3093 = vmatprep.subr.mxu0 0.0
      %3094 = vmatpush1.msra.mxu0 0.0
      %3095 = vmatprep.subr.mxu0 0.0
      %3096 = vmatpush1.msra.mxu0 0.0
      %3097 = vmatprep.mubr.f32.mxu0 0.0
      %3098 = vmatmul.mubr.f32.gmra.mrb[0].mxu0 %v3029
      %v3099 = vpop.f32.mrb[0].mxu0
      %v3100 = vadd.f32 0.0, %v3099
      %v3101 = vpop.f32.mrb[0].mxu0
      %3102 = vmatprep.mubr.f32.mxu0 0.0
      %3103 = vmatmul.mubr.f32.gmra.mrb[0].mxu0 %v3030
      %v3104 = vpop.f32.mrb[0].mxu0
      %v3105 = vadd.f32 0.0, %v3104
      %v3106 = vpop.f32.mrb[0].mxu0
      %3107 = vdwg.mxu0
      %v3108 = vadd.f32 %v3001, %v3100
      %v3109 = vadd.f32 %v3002, %v3105
      %s3110 = scalar_lea.vmem %s426, 24
      %v3111 = vld [vmem:[%s3110] sm:$0xf]
      %v3112 = vld [vmem:[%s3110 + $0x10] sm:$0xf]
      %v3113 = vld [vmem:[%s3110 + $0x20] sm:$0xf]
      %v3114 = vld [vmem:[%s3110 + $0x30] sm:$0xf]
      %s3115 = scalar_lea.vmem %s432, 3200
      %v3116 = vld [vmem:[%s3115] sm:$0xff]
      %v3117 = vld [vmem:[%s3115 + $0x8] sm:$0xff]
      %v3118 = vld [vmem:[%s3115 + $0x10] sm:$0xff]
      %v3119 = vld [vmem:[%s3115 + $0x18] sm:$0xff]
      %v3120 = vld [vmem:[%s3115 + $0x20] sm:$0xff]
      %v3121 = vld [vmem:[%s3115 + $0x28] sm:$0xff]
      %v3122 = vld [vmem:[%s3115 + $0x30] sm:$0xff]
      %v3123 = vld [vmem:[%s3115 + $0x38] sm:$0xff]
      %v3124 = vld [vmem:[%s3115 + $0x40] sm:$0xff]
      %v3125 = vld [vmem:[%s3115 + $0x48] sm:$0xff]
      %v3126 = vld [vmem:[%s3115 + $0x50] sm:$0xff]
      %v3127 = vld [vmem:[%s3115 + $0x58] sm:$0xff]
      %v3128 = vld [vmem:[%s3115 + $0x60] sm:$0xff]
      %v3129 = vld [vmem:[%s3115 + $0x68] sm:$0xff]
      %v3130 = vld [vmem:[%s3115 + $0x70] sm:$0xff]
      %v3131 = vld [vmem:[%s3115 + $0x78] sm:$0xff]
      %v3136 = vcombine.low %v3111, %v3112
      %v3137 = vcombine.low %v3113, %v3114
      %3140 = vmatprep.subr.mxu0 0.0
      %3141 = vmatpush1.msra.mxu0 %v3116
      %3142 = vmatprep.subr.mxu0 0.0
      %3143 = vmatpush1.msra.mxu0 %v3117
      %3144 = vmatprep.subr.mxu0 0.0
      %3145 = vmatpush1.msra.mxu0 %v3118
      %3146 = vmatprep.subr.mxu0 0.0
      %3147 = vmatpush1.msra.mxu0 %v3119
      %3148 = vmatprep.subr.mxu0 0.0
      %3149 = vmatpush1.msra.mxu0 %v3120
      %3150 = vmatprep.subr.mxu0 0.0
      %3151 = vmatpush1.msra.mxu0 %v3121
      %3152 = vmatprep.subr.mxu0 0.0
      %3153 = vmatpush1.msra.mxu0 %v3122
      %3154 = vmatprep.subr.mxu0 0.0
      %3155 = vmatpush1.msra.mxu0 %v3123
      %3156 = vmatprep.subr.mxu0 0.0
      %3157 = vmatpush1.msra.mxu0 %v3124
      %3158 = vmatprep.subr.mxu0 0.0
      %3159 = vmatpush1.msra.mxu0 %v3125
      %3160 = vmatprep.subr.mxu0 0.0
      %3161 = vmatpush1.msra.mxu0 %v3126
      %3162 = vmatprep.subr.mxu0 0.0
      %3163 = vmatpush1.msra.mxu0 %v3127
      %3164 = vmatprep.subr.mxu0 0.0
      %3165 = vmatpush1.msra.mxu0 %v3128
      %3166 = vmatprep.subr.mxu0 0.0
      %3167 = vmatpush1.msra.mxu0 %v3129
      %3168 = vmatprep.subr.mxu0 0.0
      %3169 = vmatpush1.msra.mxu0 %v3130
      %3170 = vmatprep.subr.mxu0 0.0
      %3171 = vmatpush1.msra.mxu0 %v3131
      %3172 = vmatprep.subr.mxu0 0.0
      %3173 = vmatpush1.msra.mxu0 0.0
      %3174 = vmatprep.subr.mxu0 0.0
      %3175 = vmatpush1.msra.mxu0 0.0
      %3176 = vmatprep.subr.mxu0 0.0
      %3177 = vmatpush1.msra.mxu0 0.0
      %3178 = vmatprep.subr.mxu0 0.0
      %3179 = vmatpush1.msra.mxu0 0.0
      %3180 = vmatprep.subr.mxu0 0.0
      %3181 = vmatpush1.msra.mxu0 0.0
      %3182 = vmatprep.subr.mxu0 0.0
      %3183 = vmatpush1.msra.mxu0 0.0
      %3184 = vmatprep.subr.mxu0 0.0
      %3185 = vmatpush1.msra.mxu0 0.0
      %3186 = vmatprep.subr.mxu0 0.0
      %3187 = vmatpush1.msra.mxu0 0.0
      %3188 = vmatprep.subr.mxu0 0.0
      %3189 = vmatpush1.msra.mxu0 0.0
      %3190 = vmatprep.subr.mxu0 0.0
      %3191 = vmatpush1.msra.mxu0 0.0
      %3192 = vmatprep.subr.mxu0 0.0
      %3193 = vmatpush1.msra.mxu0 0.0
      %3194 = vmatprep.subr.mxu0 0.0
      %3195 = vmatpush1.msra.mxu0 0.0
      %3196 = vmatprep.subr.mxu0 0.0
      %3197 = vmatpush1.msra.mxu0 0.0
      %3198 = vmatprep.subr.mxu0 0.0
      %3199 = vmatpush1.msra.mxu0 0.0
      %3200 = vmatprep.subr.mxu0 0.0
      %3201 = vmatpush1.msra.mxu0 0.0
      %3202 = vmatprep.subr.mxu0 0.0
      %3203 = vmatpush1.msra.mxu0 0.0
      %3204 = vmatprep.mubr.f32.mxu0 0.0
      %3205 = vmatmul.mubr.f32.gmra.mrb[0].mxu0 %v3136
      %v3206 = vpop.f32.mrb[0].mxu0
      %v3207 = vadd.f32 0.0, %v3206
      %v3208 = vpop.f32.mrb[0].mxu0
      %3209 = vmatprep.mubr.f32.mxu0 0.0
      %3210 = vmatmul.mubr.f32.gmra.mrb[0].mxu0 %v3137
      %v3211 = vpop.f32.mrb[0].mxu0
      %v3212 = vadd.f32 0.0, %v3211
      %v3213 = vpop.f32.mrb[0].mxu0
      %3214 = vdwg.mxu0
      %v3215 = vadd.f32 %v3108, %v3207
      %v3216 = vadd.f32 %v3109, %v3212
      %v3217 = vld [vmem:[%s3003 + $0x1] sm:$0xf]
      %v3218 = vld [vmem:[%s3003 + $0x11] sm:$0xf]
      %v3219 = vld [vmem:[%s3003 + $0x21] sm:$0xf]
      %v3220 = vld [vmem:[%s3003 + $0x31] sm:$0xf]
      %s3221 = scalar_lea.vmem %s432, 3328
      %v3222 = vld [vmem:[%s3221] sm:$0xff]
      %v3223 = vld [vmem:[%s3221 + $0x8] sm:$0xff]
      %v3224 = vld [vmem:[%s3221 + $0x10] sm:$0xff]
      %v3225 = vld [vmem:[%s3221 + $0x18] sm:$0xff]
      %v3226 = vld [vmem:[%s3221 + $0x20] sm:$0xff]
      %v3227 = vld [vmem:[%s3221 + $0x28] sm:$0xff]
      %v3228 = vld [vmem:[%s3221 + $0x30] sm:$0xff]
      %v3229 = vld [vmem:[%s3221 + $0x38] sm:$0xff]
      %v3230 = vld [vmem:[%s3221 + $0x40] sm:$0xff]
      %v3231 = vld [vmem:[%s3221 + $0x48] sm:$0xff]
      %v3232 = vld [vmem:[%s3221 + $0x50] sm:$0xff]
      %v3233 = vld [vmem:[%s3221 + $0x58] sm:$0xff]
      %v3234 = vld [vmem:[%s3221 + $0x60] sm:$0xff]
      %v3235 = vld [vmem:[%s3221 + $0x68] sm:$0xff]
      %v3236 = vld [vmem:[%s3221 + $0x70] sm:$0xff]
      %v3237 = vld [vmem:[%s3221 + $0x78] sm:$0xff]
      %v3242 = vcombine.low %v3217, %v3218
      %v3243 = vcombine.low %v3219, %v3220
      %3246 = vmatprep.subr.mxu0 0.0
      %3247 = vmatpush1.msra.mxu0 %v3222
      %3248 = vmatprep.subr.mxu0 0.0
      %3249 = vmatpush1.msra.mxu0 %v3223
      %3250 = vmatprep.subr.mxu0 0.0
      %3251 = vmatpush1.msra.mxu0 %v3224
      %3252 = vmatprep.subr.mxu0 0.0
      %3253 = vmatpush1.msra.mxu0 %v3225
      %3254 = vmatprep.subr.mxu0 0.0
      %3255 = vmatpush1.msra.mxu0 %v3226
      %3256 = vmatprep.subr.mxu0 0.0
      %3257 = vmatpush1.msra.mxu0 %v3227
      %3258 = vmatprep.subr.mxu0 0.0
      %3259 = vmatpush1.msra.mxu0 %v3228
      %3260 = vmatprep.subr.mxu0 0.0
      %3261 = vmatpush1.msra.mxu0 %v3229
      %3262 = vmatprep.subr.mxu0 0.0
      %3263 = vmatpush1.msra.mxu0 %v3230
      %3264 = vmatprep.subr.mxu0 0.0
      %3265 = vmatpush1.msra.mxu0 %v3231
      %3266 = vmatprep.subr.mxu0 0.0
      %3267 = vmatpush1.msra.mxu0 %v3232
      %3268 = vmatprep.subr.mxu0 0.0
      %3269 = vmatpush1.msra.mxu0 %v3233
      %3270 = vmatprep.subr.mxu0 0.0
      %3271 = vmatpush1.msra.mxu0 %v3234
      %3272 = vmatprep.subr.mxu0 0.0
      %3273 = vmatpush1.msra.mxu0 %v3235
      %3274 = vmatprep.subr.mxu0 0.0
      %3275 = vmatpush1.msra.mxu0 %v3236
      %3276 = vmatprep.subr.mxu0 0.0
      %3277 = vmatpush1.msra.mxu0 %v3237
      %3278 = vmatprep.subr.mxu0 0.0
      %3279 = vmatpush1.msra.mxu0 0.0
      %3280 = vmatprep.subr.mxu0 0.0
      %3281 = vmatpush1.msra.mxu0 0.0
      %3282 = vmatprep.subr.mxu0 0.0
      %3283 = vmatpush1.msra.mxu0 0.0
      %3284 = vmatprep.subr.mxu0 0.0
      %3285 = vmatpush1.msra.mxu0 0.0
      %3286 = vmatprep.subr.mxu0 0.0
      %3287 = vmatpush1.msra.mxu0 0.0
      %3288 = vmatprep.subr.mxu0 0.0
      %3289 = vmatpush1.msra.mxu0 0.0
      %3290 = vmatprep.subr.mxu0 0.0
      %3291 = vmatpush1.msra.mxu0 0.0
      %3292 = vmatprep.subr.mxu0 0.0
      %3293 = vmatpush1.msra.mxu0 0.0
      %3294 = vmatprep.subr.mxu0 0.0
      %3295 = vmatpush1.msra.mxu0 0.0
      %3296 = vmatprep.subr.mxu0 0.0
      %3297 = vmatpush1.msra.mxu0 0.0
      %3298 = vmatprep.subr.mxu0 0.0
      %3299 = vmatpush1.msra.mxu0 0.0
      %3300 = vmatprep.subr.mxu0 0.0
      %3301 = vmatpush1.msra.mxu0 0.0
      %3302 = vmatprep.subr.mxu0 0.0
      %3303 = vmatpush1.msra.mxu0 0.0
      %3304 = vmatprep.subr.mxu0 0.0
      %3305 = vmatpush1.msra.mxu0 0.0
      %3306 = vmatprep.subr.mxu0 0.0
      %3307 = vmatpush1.msra.mxu0 0.0
      %3308 = vmatprep.subr.mxu0 0.0
      %3309 = vmatpush1.msra.mxu0 0.0
      %3310 = vmatprep.mubr.f32.mxu0 0.0
      %3311 = vmatmul.mubr.f32.gmra.mrb[0].mxu0 %v3242
      %v3312 = vpop.f32.mrb[0].mxu0
      %v3313 = vadd.f32 0.0, %v3312
      %v3314 = vpop.f32.mrb[0].mxu0
      %3315 = vmatprep.mubr.f32.mxu0 0.0
      %3316 = vmatmul.mubr.f32.gmra.mrb[0].mxu0 %v3243
      %v3317 = vpop.f32.mrb[0].mxu0
      %v3318 = vadd.f32 0.0, %v3317
      %v3319 = vpop.f32.mrb[0].mxu0
      %3320 = vdwg.mxu0
      %v3321 = vadd.f32 %v3215, %v3313
      %v3322 = vadd.f32 %v3216, %v3318
      %v3323 = vld [vmem:[%s435] sm:$0x1]
      %v3325 = vlaneseq
      %v3326 = vshrl.u32 %v3325, 7
      %v3327 = vsub.s32 0, %v3326
      %v3328 = vrot.slane %v3323, %v3327
      %v3330 = vmul.f32 %v3321, %v3328
      %v3331 = vmul.f32 %v3322, %v3328
      %v3332 = vld [vmem:[%s438] sm:$0x1]
      %v3334 = vlaneseq
      %v3335 = vshrl.u32 %v3334, 7
      %v3336 = vsub.s32 0, %v3335
      %v3337 = vrot.slane %v3332, %v3336
      %v3339 = vadd.f32 %v3330, %v3337
      %v3340 = vadd.f32 %v3331, %v3337
      %v3341 = vmax.f32 %v3339, 0.0
      %v3342 = vmax.f32 %v3340, 0.0
      %3343 = vst [vmem:[%s450] sm:$0xff] %v3341
      %3344 = vst [vmem:[%s450 + $0x8] sm:$0xff] %v3342
      %p3345 = scmp.lt.s32.totalorder %s22, 1
      %s3346 = scalar_select %p3345, %s22, 1
      %p3347 = scmp.lt.s32.totalorder %s24, 3
      %s3348 = scalar_select %p3347, %s24, 3
      %p3349 = scmp.lt.s32.totalorder %s23, 0
      %s3350 = scalar_select %p3349, %s23, 0
      %s3351 = smul.addr %s3348, 2
      %s3352 = sadd.s32 %s3350, %s3351
      %s3353 = smul.addr %s3346, 8
      %s3354 = sadd.s32 %s3352, %s3353
      %s3355 = smul.addr %s3354, 8
      %s3356 = scalar_lea.vmem %s6, %s3355
      // Predicated region
      $region45: #{postres_forward.2} parent=43 // pred_check
        %p3357 = pneg %p230
      $region46: #{postres_forward.2} parent=43 // pred_check_branch
        %3359 = sbr.rel (%p3357) target = $region48
      $region47: #{postres_forward.2} parent=43 // pred_region
        _
      $region48: #{postres_forward.2} parent=43 // pred_fallthru
        _
    $region44: #{postres_forward.2} parent=5 // pred_fallthru
      _
    %p3360 = scmp.le.s32.totalorder 2, %s12
    // Predicated region
    $region49: #{postres_forward.2} parent=5 // pred_check
      %p3361 = pneg %p3360
    $region50: #{postres_forward.2} parent=5 // pred_check_branch
      %3363 = sbr.rel (%p3361) target = $region52
    $region51: #{postres_forward.2} parent=5 // pred_region
      %s3364 = ssub.s32 %s12, 2
      // Predicated region
      $region53: #{postres_forward.2} parent=51 // pred_check
        %p3365 = pneg %p236
      $region54: #{postres_forward.2} parent=51 // pred_check_branch
        %3367 = sbr.rel (%p3365) target = $region56
      $region55: #{postres_forward.2} parent=51 // pred_region
        %p3368 = scmp.lt.s32.totalorder %s25, 1
        %s3369 = scalar_select %p3368, %s25, 1
        %p3370 = scmp.lt.s32.totalorder %s27, 3
        %s3371 = scalar_select %p3370, %s27, 3
        %p3372 = scmp.lt.s32.totalorder %s26, 0
        %s3373 = scalar_select %p3372, %s26, 0
        %s3374 = smul.addr %s3371, 2
        %s3375 = sadd.s32 %s3373, %s3374
        %s3376 = smul.addr %s3369, 8
        %s3377 = sadd.s32 %s3375, %s3376
        %s3378 = smul.addr %s3377, 8
        %s3379 = scalar_lea.vmem %s6, %s3378
      $region56: #{postres_forward.2} parent=51 // pred_fallthru
        _
    $region52: #{postres_forward.2} parent=5 // pred_fallthru
      _
  $region6: #{postres_forward.2} parent=0 // loop_footer
    %s16 = sadd.s32 1, %s12
  $region7: #{postres_forward.2} parent=0 // loop_footer_branch
    %11 = sbr.rel target = $region3
  $region8: #{postres_forward.2} parent=0 // loop_exit
    _

// kernel: postres_forward.3
$region0: #{postres_forward.3}
  #allocation0 [shape = 'u32[]', space=smem, size = 0x4, offset = 0x4, fixed_abs, tag = 'smem constant byte address 0x4 - core index']
  #allocation1 [shape = 'u32[144,128]{1,0:T(1,128)}', space=vmem, size = 0x12000, scoped, tag = 'internal scratch']
  %s0 = inlined_call_operand.vmem [shape: f32[2,6,1,6,1,6,128], index: 0, kind: input, shape index: {}, may-alias: {0,1,2}]
  %s1 = inlined_call_operand.vmem [shape: f32[2,6,1,6,1,6,128], index: 1, kind: input, shape index: {}, may-alias: {0,1,2}]
  %s2 = inlined_call_operand.vmem [shape: f32[2,6,1,6,1,6,128], index: 2, kind: input, shape index: {}, may-alias: {0,1,2}]
  %s3 = inlined_call_operand.vmem [shape: f32[27,128,128], index: 3, kind: input, shape index: {}]
  %s4 = inlined_call_operand.vmem [shape: f32[1,128], index: 4, kind: input, shape index: {}]
  %s5 = inlined_call_operand.vmem [shape: f32[1,128], index: 5, kind: input, shape index: {}]
  %s6 = inlined_call_operand.vmem [shape: f32[2,4,16,128], index: 6, kind: input, shape index: {}]
  %s7 = inlined_call_operand.vmem [shape: f32[128,128], index: 7, kind: input, shape index: {}]
  %s8 = inlined_call_operand.vmem [shape: f32[1,128], index: 8, kind: input, shape index: {}]
  %s9 = inlined_call_operand.vmem [shape: f32[1,128], index: 9, kind: input, shape index: {}]
  %s10 = inlined_call_operand.hbm [shape: f32[2,4,16,128], index: 10, kind: output, shape index: {}]
  %s11 = sld [smem:[#allocation0]]
  $region73: #{postres_forward.3} parent=0
    _
  %s13 = ssub.s32 1, %s11
  %s14 = scalar_select 0, %s13, %s11
  $region1: #{postres_forward.3} parent=0
    #allocation2 [shape = 'u8[16384]{0}', space=vmem, size = 0x4000, scoped, tag = 'output window, operand 0']
    #allocation3 [shape = 's32[2]{0}', space=sflag, size = 0x8, scoped, tag = 'scoped memory for postres_forward.3']
    %15 = vsyncpa [#allocation3], 0
    %s16 = scalar_lea.sflag [#allocation3], 1
    %17 = vsyncpa %s16, 0
    loop: start=0, step=1, limit=10
    $region2: #{postres_forward.3} parent=1 // loop_pre_header
      _
    $region3: #{postres_forward.3} parent=1 // loop_header
      %s19 = sphi 0, %s23
      %p20 = scmp.ge.s32.totalorder %s19, 10
      %s26 = sphi 0, %s45
      %s27 = sphi 0, %s41
      %s28 = sphi 0, %s37
      %s29 = sphi 0, %s26
      %s30 = sphi 0, %s27
      %s31 = sphi 0, %s28
      %s32 = sphi 0, %s29
      %s33 = sphi 0, %s30
      %s34 = sphi 0, %s31
      %s50 = sphi 0, %s52
      %s53 = sphi 0, %s50
      %s54 = sphi 0, %s53
      %s70 = sphi 0, %s54
      %s80 = sphi 0, %s82
      %s83 = sphi 0, %s80
      %s84 = sphi 0, %s83
      %s100 = sphi 0, %s84
      %s110 = sphi 0, %s112
      %s113 = sphi 0, %s110
      %s114 = sphi 0, %s113
      %s130 = sphi 0, %s114
      %s136 = sphi 0, %s138
      %s139 = sphi 0, %s136
      %s140 = sphi 0, %s139
      %s156 = sphi 0, %s140
      %s162 = sphi 0, %s164
      %s165 = sphi 0, %s162
      %s166 = sphi 0, %s165
      %s182 = sphi 0, %s166
      %s188 = sphi 0, %s190
      %s191 = sphi 0, %s188
      %s192 = sphi 0, %s191
      %s208 = sphi 0, %s192
      %s216 = sphi 0, %s218
      %s219 = sphi 0, %s216
      %s220 = sphi 0, %s219
      %s236 = sphi 0, %s220
      %s242 = sphi 0, %s244
      %s245 = sphi 0, %s242
      %s246 = sphi 0, %s245
      %s262 = sphi 0, %s246
      %s268 = sphi 0, %s270
      %s271 = sphi 0, %s268
      %s272 = sphi 0, %s271
      %s288 = sphi 0, %s272
      %s294 = sphi 0, %s296
      %s297 = sphi 0, %s294
      %s298 = sphi 0, %s297
      %s314 = sphi 0, %s298
      %s324 = sphi 0, %s326
      %s327 = sphi 0, %s324
      %s328 = sphi 0, %s327
      %s344 = sphi 0, %s328
    $region4: #{postres_forward.3} parent=1 // loop_header_branch
      %22 = sbr.rel (%p20) target = $region8
    $region5: #{postres_forward.3} parent=1 // loop_body
      %s24 = ssub.s32 %s19, 1
      %s25 = ssub.s32 %s19, 2
      %s35 = sadd.s32 1, %s28
      %p36 = scmp.ge.s32.totalorder %s35, 4
      %s37 = scalar_select %p36, 0, %s35
      %s38 = sadd.s32 1, %s27
      %s39 = scalar_select %p36, %s38, %s27
      %p40 = scmp.ge.s32.totalorder %s39, 1
      %s41 = scalar_select %p40, 0, %s39
      %s42 = sadd.s32 1, %s26
      %s43 = scalar_select %p40, %s42, %s26
      %p44 = scmp.ge.s32.totalorder %s43, 2
      %s45 = scalar_select %p44, 0, %s43
      %s46 = ssub.s32 %s26, %s45
      %s47 = ssub.s32 %s28, %s37
      %s48 = sor.u32 %s46, %s47
      %p49 = scmp.eq.s32.totalorder %s48, 0
      %s51 = sadd.s32 %s50, 1
      %s52 = scalar_select %p49, %s50, %s51
      %p55 = pneg %p49
      %p56 = scmp.eq.s32.totalorder %s19, 7
      %p57 = por %p55, %p56
      %p58 = scmp.ne.s32.totalorder %s50, %s53
      %p59 = scmp.eq.s32.totalorder %s19, 0
      %p60 = por %p58, %p59
      %p61 = scmp.ne.s32.totalorder %s50, %s53
      %p62 = scmp.eq.s32.totalorder %s24, 7
      %p63 = por %p61, %p62
      %p64 = scmp.ne.s32.totalorder %s53, %s54
      %p65 = scmp.eq.s32.totalorder %s24, 0
      %p66 = por %p64, %p65
      %p67 = scmp.ne.s32.totalorder %s53, %s54
      %p68 = scmp.eq.s32.totalorder %s25, 7
      %p69 = por %p67, %p68
      %p71 = scmp.ne.s32.totalorder %s54, %s70
      %p72 = scmp.eq.s32.totalorder %s25, 0
      %p73 = por %p71, %p72
      %s74 = sadd.s32 %s28, 1
      %s75 = sadd.s32 %s37, 1
      %s76 = ssub.s32 %s26, %s45
      %s77 = ssub.s32 %s74, %s75
      %s78 = sor.u32 %s76, %s77
      %p79 = scmp.eq.s32.totalorder %s78, 0
      %s81 = sadd.s32 %s80, 1
      %s82 = scalar_select %p79, %s80, %s81
      %p85 = pneg %p79
      %p86 = scmp.eq.s32.totalorder %s19, 7
      %p87 = por %p85, %p86
      %p88 = scmp.ne.s32.totalorder %s80, %s83
      %p89 = scmp.eq.s32.totalorder %s19, 0
      %p90 = por %p88, %p89
      %p91 = scmp.ne.s32.totalorder %s80, %s83
      %p92 = scmp.eq.s32.totalorder %s24, 7
      %p93 = por %p91, %p92
      %p94 = scmp.ne.s32.totalorder %s83, %s84
      %p95 = scmp.eq.s32.totalorder %s24, 0
      %p96 = por %p94, %p95
      %p97 = scmp.ne.s32.totalorder %s83, %s84
      %p98 = scmp.eq.s32.totalorder %s25, 7
      %p99 = por %p97, %p98
      %p101 = scmp.ne.s32.totalorder %s84, %s100
      %p102 = scmp.eq.s32.totalorder %s25, 0
      %p103 = por %p101, %p102
      %s104 = sadd.s32 %s28, 2
      %s105 = sadd.s32 %s37, 2
      %s106 = ssub.s32 %s26, %s45
      %s107 = ssub.s32 %s104, %s105
      %s108 = sor.u32 %s106, %s107
      %p109 = scmp.eq.s32.totalorder %s108, 0
      %s111 = sadd.s32 %s110, 1
      %s112 = scalar_select %p109, %s110, %s111
      %p115 = pneg %p109
      %p116 = scmp.eq.s32.totalorder %s19, 7
      %p117 = por %p115, %p116
      %p118 = scmp.ne.s32.totalorder %s110, %s113
      %p119 = scmp.eq.s32.totalorder %s19, 0
      %p120 = por %p118, %p119
      %p121 = scmp.ne.s32.totalorder %s110, %s113
      %p122 = scmp.eq.s32.totalorder %s24, 7
      %p123 = por %p121, %p122
      %p124 = scmp.ne.s32.totalorder %s113, %s114
      %p125 = scmp.eq.s32.totalorder %s24, 0
      %p126 = por %p124, %p125
      %p127 = scmp.ne.s32.totalorder %s113, %s114
      %p128 = scmp.eq.s32.totalorder %s25, 7
      %p129 = por %p127, %p128
      %p131 = scmp.ne.s32.totalorder %s114, %s130
      %p132 = scmp.eq.s32.totalorder %s25, 0
      %p133 = por %p131, %p132
      %s134 = ssub.s32 %s27, %s41
      %p135 = scmp.eq.s32.totalorder %s134, 0
      %s137 = sadd.s32 %s136, 1
      %s138 = scalar_select %p135, %s136, %s137
      %p141 = pneg %p135
      %p142 = scmp.eq.s32.totalorder %s19, 7
      %p143 = por %p141, %p142
      %p144 = scmp.ne.s32.totalorder %s136, %s139
      %p145 = scmp.eq.s32.totalorder %s19, 0
      %p146 = por %p144, %p145
      %p147 = scmp.ne.s32.totalorder %s136, %s139
      %p148 = scmp.eq.s32.totalorder %s24, 7
      %p149 = por %p147, %p148
      %p150 = scmp.ne.s32.totalorder %s139, %s140
      %p151 = scmp.eq.s32.totalorder %s24, 0
      %p152 = por %p150, %p151
      %p153 = scmp.ne.s32.totalorder %s139, %s140
      %p154 = scmp.eq.s32.totalorder %s25, 7
      %p155 = por %p153, %p154
      %p157 = scmp.ne.s32.totalorder %s140, %s156
      %p158 = scmp.eq.s32.totalorder %s25, 0
      %p159 = por %p157, %p158
      %s160 = ssub.s32 %s27, %s41
      %p161 = scmp.eq.s32.totalorder %s160, 0
      %s163 = sadd.s32 %s162, 1
      %s164 = scalar_select %p161, %s162, %s163
      %p167 = pneg %p161
      %p168 = scmp.eq.s32.totalorder %s19, 7
      %p169 = por %p167, %p168
      %p170 = scmp.ne.s32.totalorder %s162, %s165
      %p171 = scmp.eq.s32.totalorder %s19, 0
      %p172 = por %p170, %p171
      %p173 = scmp.ne.s32.totalorder %s162, %s165
      %p174 = scmp.eq.s32.totalorder %s24, 7
      %p175 = por %p173, %p174
      %p176 = scmp.ne.s32.totalorder %s165, %s166
      %p177 = scmp.eq.s32.totalorder %s24, 0
      %p178 = por %p176, %p177
      %p179 = scmp.ne.s32.totalorder %s165, %s166
      %p180 = scmp.eq.s32.totalorder %s25, 7
      %p181 = por %p179, %p180
      %p183 = scmp.ne.s32.totalorder %s166, %s182
      %p184 = scmp.eq.s32.totalorder %s25, 0
      %p185 = por %p183, %p184
      %s186 = ssub.s32 %s27, %s41
      %p187 = scmp.eq.s32.totalorder %s186, 0
      %s189 = sadd.s32 %s188, 1
      %s190 = scalar_select %p187, %s188, %s189
      %p193 = pneg %p187
      %p194 = scmp.eq.s32.totalorder %s19, 7
      %p195 = por %p193, %p194
      %p196 = scmp.ne.s32.totalorder %s188, %s191
      %p197 = scmp.eq.s32.totalorder %s19, 0
      %p198 = por %p196, %p197
      %p199 = scmp.ne.s32.totalorder %s188, %s191
      %p200 = scmp.eq.s32.totalorder %s24, 7
      %p201 = por %p199, %p200
      %p202 = scmp.ne.s32.totalorder %s191, %s192
      %p203 = scmp.eq.s32.totalorder %s24, 0
      %p204 = por %p202, %p203
      %p205 = scmp.ne.s32.totalorder %s191, %s192
      %p206 = scmp.eq.s32.totalorder %s25, 7
      %p207 = por %p205, %p206
      %p209 = scmp.ne.s32.totalorder %s192, %s208
      %p210 = scmp.eq.s32.totalorder %s25, 0
      %p211 = por %p209, %p210
      %s212 = ssub.s32 %s26, %s45
      %s213 = ssub.s32 %s28, %s37
      %s214 = sor.u32 %s212, %s213
      %p215 = scmp.eq.s32.totalorder %s214, 0
      %s217 = sadd.s32 %s216, 1
      %s218 = scalar_select %p215, %s216, %s217
      %p221 = pneg %p215
      %p222 = scmp.eq.s32.totalorder %s19, 7
      %p223 = por %p221, %p222
      %p224 = scmp.ne.s32.totalorder %s216, %s219
      %p225 = scmp.eq.s32.totalorder %s19, 0
      %p226 = por %p224, %p225
      %p227 = scmp.ne.s32.totalorder %s216, %s219
      %p228 = scmp.eq.s32.totalorder %s24, 7
      %p229 = por %p227, %p228
      %p230 = scmp.ne.s32.totalorder %s219, %s220
      %p231 = scmp.eq.s32.totalorder %s24, 0
      %p232 = por %p230, %p231
      %p233 = scmp.ne.s32.totalorder %s219, %s220
      %p234 = scmp.eq.s32.totalorder %s25, 7
      %p235 = por %p233, %p234
      %p237 = scmp.ne.s32.totalorder %s220, %s236
      %p238 = scmp.eq.s32.totalorder %s25, 0
      %p239 = por %p237, %p238
      %s240 = ssub.s32 %s27, %s41
      %p241 = scmp.eq.s32.totalorder %s240, 0
      %s243 = sadd.s32 %s242, 1
      %s244 = scalar_select %p241, %s242, %s243
      %p247 = pneg %p241
      %p248 = scmp.eq.s32.totalorder %s19, 7
      %p249 = por %p247, %p248
      %p250 = scmp.ne.s32.totalorder %s242, %s245
      %p251 = scmp.eq.s32.totalorder %s19, 0
      %p252 = por %p250, %p251
      %p253 = scmp.ne.s32.totalorder %s242, %s245
      %p254 = scmp.eq.s32.totalorder %s24, 7
      %p255 = por %p253, %p254
      %p256 = scmp.ne.s32.totalorder %s245, %s246
      %p257 = scmp.eq.s32.totalorder %s24, 0
      %p258 = por %p256, %p257
      %p259 = scmp.ne.s32.totalorder %s245, %s246
      %p260 = scmp.eq.s32.totalorder %s25, 7
      %p261 = por %p259, %p260
      %p263 = scmp.ne.s32.totalorder %s246, %s262
      %p264 = scmp.eq.s32.totalorder %s25, 0
      %p265 = por %p263, %p264
      %s266 = ssub.s32 %s27, %s41
      %p267 = scmp.eq.s32.totalorder %s266, 0
      %s269 = sadd.s32 %s268, 1
      %s270 = scalar_select %p267, %s268, %s269
      %p273 = pneg %p267
      %p274 = scmp.eq.s32.totalorder %s19, 7
      %p275 = por %p273, %p274
      %p276 = scmp.ne.s32.totalorder %s268, %s271
      %p277 = scmp.eq.s32.totalorder %s19, 0
      %p278 = por %p276, %p277
      %p279 = scmp.ne.s32.totalorder %s268, %s271
      %p280 = scmp.eq.s32.totalorder %s24, 7
      %p281 = por %p279, %p280
      %p282 = scmp.ne.s32.totalorder %s271, %s272
      %p283 = scmp.eq.s32.totalorder %s24, 0
      %p284 = por %p282, %p283
      %p285 = scmp.ne.s32.totalorder %s271, %s272
      %p286 = scmp.eq.s32.totalorder %s25, 7
      %p287 = por %p285, %p286
      %p289 = scmp.ne.s32.totalorder %s272, %s288
      %p290 = scmp.eq.s32.totalorder %s25, 0
      %p291 = por %p289, %p290
      %s292 = ssub.s32 %s27, %s41
      %p293 = scmp.eq.s32.totalorder %s292, 0
      %s295 = sadd.s32 %s294, 1
      %s296 = scalar_select %p293, %s294, %s295
      %p299 = pneg %p293
      %p300 = scmp.eq.s32.totalorder %s19, 7
      %p301 = por %p299, %p300
      %p302 = scmp.ne.s32.totalorder %s294, %s297
      %p303 = scmp.eq.s32.totalorder %s19, 0
      %p304 = por %p302, %p303
      %p305 = scmp.ne.s32.totalorder %s294, %s297
      %p306 = scmp.eq.s32.totalorder %s24, 7
      %p307 = por %p305, %p306
      %p308 = scmp.ne.s32.totalorder %s297, %s298
      %p309 = scmp.eq.s32.totalorder %s24, 0
      %p310 = por %p308, %p309
      %p311 = scmp.ne.s32.totalorder %s297, %s298
      %p312 = scmp.eq.s32.totalorder %s25, 7
      %p313 = por %p311, %p312
      %p315 = scmp.ne.s32.totalorder %s298, %s314
      %p316 = scmp.eq.s32.totalorder %s25, 0
      %p317 = por %p315, %p316
      %s318 = ssub.s32 %s26, %s45
      %s319 = ssub.s32 %s28, %s37
      %s320 = sor.u32 %s318, %s319
      %s321 = ssub.s32 %s27, %s41
      %s322 = sor.u32 %s320, %s321
      %p323 = scmp.eq.s32.totalorder %s322, 0
      %s325 = sadd.s32 %s324, 1
      %s326 = scalar_select %p323, %s324, %s325
      %p329 = pneg %p323
      %p330 = scmp.eq.s32.totalorder %s19, 7
      %p331 = por %p329, %p330
      %p332 = scmp.ne.s32.totalorder %s324, %s327
      %p333 = scmp.eq.s32.totalorder %s19, 0
      %p334 = por %p332, %p333
      %p335 = scmp.ne.s32.totalorder %s324, %s327
      %p336 = scmp.eq.s32.totalorder %s24, 7
      %p337 = por %p335, %p336
      %p338 = scmp.ne.s32.totalorder %s327, %s328
      %p339 = scmp.eq.s32.totalorder %s24, 0
      %p340 = por %p338, %p339
      %p341 = scmp.ne.s32.totalorder %s327, %s328
      %p342 = scmp.eq.s32.totalorder %s25, 7
      %p343 = por %p341, %p342
      %p345 = scmp.ne.s32.totalorder %s328, %s344
      %p346 = scmp.eq.s32.totalorder %s25, 0
      %p347 = por %p345, %p346
      %p348 = scmp.le.s32.totalorder 1, %s19
      %p349 = scmp.lt.s32.totalorder %s19, 9
      %p350 = pnand %p348, %p349
      %p351 = pneg %p350
      // Predicated region
      $region9: #{postres_forward.3} parent=5 // pred_check
        _
      $region10: #{postres_forward.3} parent=5 // pred_check_branch
        %353 = sbr.rel (%p350) target = $region12
      $region11: #{postres_forward.3} parent=5 // pred_region
        %s354 = ssub.s32 %s19, 1
        // Predicated region
        $region13: #{postres_forward.3} parent=11 // pred_check
          %p355 = pneg %p152
        $region14: #{postres_forward.3} parent=11 // pred_check_branch
          %357 = sbr.rel (%p355) target = $region16
        $region15: #{postres_forward.3} parent=11 // pred_region
          %p358 = scmp.lt.s32.totalorder %s30, 0
          %s359 = scalar_select %p358, %s30, 0
          %s360 = smul.addr %s359, 8
          %s361 = scalar_lea.vmem %s3, %s360
        $region16: #{postres_forward.3} parent=11 // pred_fallthru
          _
        // Predicated region
        $region17: #{postres_forward.3} parent=11 // pred_check
          %p362 = pneg %p178
        $region18: #{postres_forward.3} parent=11 // pred_check_branch
          %364 = sbr.rel (%p362) target = $region20
        $region19: #{postres_forward.3} parent=11 // pred_region
          %p365 = scmp.lt.s32.totalorder %s30, 0
          %s366 = scalar_select %p365, %s30, 0
          %s367 = scalar_lea.vmem %s4, %s366
        $region20: #{postres_forward.3} parent=11 // pred_fallthru
          _
        // Predicated region
        $region21: #{postres_forward.3} parent=11 // pred_check
          %p368 = pneg %p204
        $region22: #{postres_forward.3} parent=11 // pred_check_branch
          %370 = sbr.rel (%p368) target = $region24
        $region23: #{postres_forward.3} parent=11 // pred_region
          %p371 = scmp.lt.s32.totalorder %s30, 0
          %s372 = scalar_select %p371, %s30, 0
          %s373 = scalar_lea.vmem %s5, %s372
        $region24: #{postres_forward.3} parent=11 // pred_fallthru
          _
        // Predicated region
        $region25: #{postres_forward.3} parent=11 // pred_check
          %p374 = pneg %p258
        $region26: #{postres_forward.3} parent=11 // pred_check_branch
          %376 = sbr.rel (%p374) target = $region28
        $region27: #{postres_forward.3} parent=11 // pred_region
          %p377 = scmp.lt.s32.totalorder %s30, 0
          %s378 = scalar_select %p377, %s30, 0
          %s379 = smul.addr %s378, 8
          %s380 = scalar_lea.vmem %s7, %s379
        $region28: #{postres_forward.3} parent=11 // pred_fallthru
          _
        // Predicated region
        $region29: #{postres_forward.3} parent=11 // pred_check
          %p381 = pneg %p284
        $region30: #{postres_forward.3} parent=11 // pred_check_branch
          %383 = sbr.rel (%p381) target = $region32
        $region31: #{postres_forward.3} parent=11 // pred_region
          %p384 = scmp.lt.s32.totalorder %s30, 0
          %s385 = scalar_select %p384, %s30, 0
          %s386 = scalar_lea.vmem %s8, %s385
        $region32: #{postres_forward.3} parent=11 // pred_fallthru
          _
        // Predicated region
        $region33: #{postres_forward.3} parent=11 // pred_check
          %p387 = pneg %p310
        $region34: #{postres_forward.3} parent=11 // pred_check_branch
          %389 = sbr.rel (%p387) target = $region36
        $region35: #{postres_forward.3} parent=11 // pred_region
          %p390 = scmp.lt.s32.totalorder %s30, 0
          %s391 = scalar_select %p390, %s30, 0
          %s392 = scalar_lea.vmem %s9, %s391
        $region36: #{postres_forward.3} parent=11 // pred_fallthru
          _
      $region12: #{postres_forward.3} parent=5 // pred_fallthru
        _
      %p393 = scmp.lt.s32.totalorder %s19, 8
      // Predicated region
      $region37: #{postres_forward.3} parent=5 // pred_check
        %p394 = pneg %p393
      $region38: #{postres_forward.3} parent=5 // pred_check_branch
        %396 = sbr.rel (%p394) target = $region40
      $region39: #{postres_forward.3} parent=5 // pred_region
        // Predicated region
        $region41: #{postres_forward.3} parent=39 // pred_check
          %p397 = pneg %p60
        $region42: #{postres_forward.3} parent=39 // pred_check_branch
          %399 = sbr.rel (%p397) target = $region44
        $region43: #{postres_forward.3} parent=39 // pred_region
          %p400 = scmp.lt.s32.totalorder %s26, 1
          %s401 = scalar_select %p400, %s26, 1
          %p402 = scmp.lt.s32.totalorder %s28, 5
          %s403 = scalar_select %p402, %s28, 5
          %s404 = smul.addr %s403, 6
          %s405 = smul.addr %s401, 36
          %s406 = sadd.s32 %s404, %s405
          %s407 = smul.addr %s406, 8
          %s408 = scalar_lea.vmem %s0, %s407
        $region44: #{postres_forward.3} parent=39 // pred_fallthru
          _
        // Predicated region
        $region45: #{postres_forward.3} parent=39 // pred_check
          %p409 = pneg %p90
        $region46: #{postres_forward.3} parent=39 // pred_check_branch
          %411 = sbr.rel (%p409) target = $region48
        $region47: #{postres_forward.3} parent=39 // pred_region
          %s412 = sadd.s32 %s28, 1
          %p413 = scmp.lt.s32.totalorder %s26, 1
          %s414 = scalar_select %p413, %s26, 1
          %p415 = scmp.lt.s32.totalorder %s412, 5
          %s416 = scalar_select %p415, %s412, 5
          %s417 = smul.addr %s416, 6
          %s418 = smul.addr %s414, 36
          %s419 = sadd.s32 %s417, %s418
          %s420 = smul.addr %s419, 8
          %s421 = scalar_lea.vmem %s1, %s420
          %s422 = sadd.s32 %s28, 1
        $region48: #{postres_forward.3} parent=39 // pred_fallthru
          _
        // Predicated region
        $region49: #{postres_forward.3} parent=39 // pred_check
          %p423 = pneg %p120
        $region50: #{postres_forward.3} parent=39 // pred_check_branch
          %425 = sbr.rel (%p423) target = $region52
        $region51: #{postres_forward.3} parent=39 // pred_region
          %s426 = sadd.s32 %s28, 2
          %p427 = scmp.lt.s32.totalorder %s26, 1
          %s428 = scalar_select %p427, %s26, 1
          %p429 = scmp.lt.s32.totalorder %s426, 5
          %s430 = scalar_select %p429, %s426, 5
          %s431 = smul.addr %s430, 6
          %s432 = smul.addr %s428, 36
          %s433 = sadd.s32 %s431, %s432
          %s434 = smul.addr %s433, 8
          %s435 = scalar_lea.vmem %s2, %s434
          %s436 = sadd.s32 %s28, 2
        $region52: #{postres_forward.3} parent=39 // pred_fallthru
          _
        // Predicated region
        $region53: #{postres_forward.3} parent=39 // pred_check
          %p437 = pneg %p226
        $region54: #{postres_forward.3} parent=39 // pred_check_branch
          %439 = sbr.rel (%p437) target = $region56
        $region55: #{postres_forward.3} parent=39 // pred_region
          %p440 = scmp.lt.s32.totalorder %s26, 1
          %s441 = scalar_select %p440, %s26, 1
          %p442 = scmp.lt.s32.totalorder %s28, 3
          %s443 = scalar_select %p442, %s28, 3
          %s444 = smul.addr %s443, 2
          %s445 = smul.addr %s441, 8
          %s446 = sadd.s32 %s444, %s445
          %s447 = smul.addr %s446, 8
          %s448 = scalar_lea.vmem %s6, %s447
        $region56: #{postres_forward.3} parent=39 // pred_fallthru
          _
      $region40: #{postres_forward.3} parent=5 // pred_fallthru
        _
      %p449 = scmp.le.s32.totalorder 1, %s19
      %p450 = scmp.lt.s32.totalorder %s19, 9
      %p451 = pnand %p449, %p450
      %p452 = pneg %p451
      // Predicated region
      $region57: #{postres_forward.3} parent=5 // pred_check
        _
      $region58: #{postres_forward.3} parent=5 // pred_check_branch
        %454 = sbr.rel (%p451) target = $region60
      $region59: #{postres_forward.3} parent=5 // pred_region
        %s455 = ssub.s32 %s19, 1
        %p456 = scmp.lt.s32.totalorder %s29, 1
        %s457 = scalar_select %p456, %s29, 1
        %p458 = scmp.lt.s32.totalorder %s31, 5
        %s459 = scalar_select %p458, %s31, 5
        %s460 = smul.addr %s459, 6
        %s461 = smul.addr %s457, 36
        %s462 = sadd.s32 %s460, %s461
        %s463 = smul.addr %s462, 8
        %s464 = scalar_lea.vmem %s0, %s463
        %p465 = pneg %p66
        %p466 = pneg %p63
        %s467 = sadd.s32 %s31, 1
        %p468 = scmp.lt.s32.totalorder %s29, 1
        %s469 = scalar_select %p468, %s29, 1
        %p470 = scmp.lt.s32.totalorder %s467, 5
        %s471 = scalar_select %p470, %s467, 5
        %s472 = smul.addr %s471, 6
        %s473 = smul.addr %s469, 36
        %s474 = sadd.s32 %s472, %s473
        %s475 = smul.addr %s474, 8
        %s476 = scalar_lea.vmem %s1, %s475
        %p477 = pneg %p96
        %p478 = pneg %p93
        %s479 = sadd.s32 %s31, 2
        %p480 = scmp.lt.s32.totalorder %s29, 1
        %s481 = scalar_select %p480, %s29, 1
        %p482 = scmp.lt.s32.totalorder %s479, 5
        %s483 = scalar_select %p482, %s479, 5
        %s484 = smul.addr %s483, 6
        %s485 = smul.addr %s481, 36
        %s486 = sadd.s32 %s484, %s485
        %s487 = smul.addr %s486, 8
        %s488 = scalar_lea.vmem %s2, %s487
        %p489 = pneg %p126
        %p490 = pneg %p123
        %p491 = scmp.lt.s32.totalorder %s30, 0
        %s492 = scalar_select %p491, %s30, 0
        %s493 = smul.addr %s492, 8
        %s494 = scalar_lea.vmem %s3, %s493
        %p495 = pneg %p152
        %p496 = pneg %p149
        %p497 = scmp.lt.s32.totalorder %s30, 0
        %s498 = scalar_select %p497, %s30, 0
        %s499 = scalar_lea.vmem %s4, %s498
        %p500 = pneg %p178
        %p501 = pneg %p175
        %p502 = scmp.lt.s32.totalorder %s30, 0
        %s503 = scalar_select %p502, %s30, 0
        %s504 = scalar_lea.vmem %s5, %s503
        %p505 = pneg %p204
        %p506 = pneg %p201
        %p507 = scmp.lt.s32.totalorder %s29, 1
        %s508 = scalar_select %p507, %s29, 1
        %p509 = scmp.lt.s32.totalorder %s31, 3
        %s510 = scalar_select %p509, %s31, 3
        %s511 = smul.addr %s510, 2
        %s512 = smul.addr %s508, 8
        %s513 = sadd.s32 %s511, %s512
        %s514 = smul.addr %s513, 8
        %s515 = scalar_lea.vmem %s6, %s514
        %p516 = pneg %p232
        %p517 = pneg %p229
        %p518 = scmp.lt.s32.totalorder %s30, 0
        %s519 = scalar_select %p518, %s30, 0
        %s520 = smul.addr %s519, 8
        %s521 = scalar_lea.vmem %s7, %s520
        %p522 = pneg %p258
        %p523 = pneg %p255
        %p524 = scmp.lt.s32.totalorder %s30, 0
        %s525 = scalar_select %p524, %s30, 0
        %s526 = scalar_lea.vmem %s8, %s525
        %p527 = pneg %p284
        %p528 = pneg %p281
        %p529 = scmp.lt.s32.totalorder %s30, 0
        %s530 = scalar_select %p529, %s30, 0
        %s531 = scalar_lea.vmem %s9, %s530
        %p532 = pneg %p310
        %p533 = pneg %p307
        %p534 = pneg %p340
        %p535 = pneg %p337
        %s536 = sand.u32 %s327, 1
        %s537 = scalar_lea.sflag [#allocation3], %s536
        %s538 = sand.u32 %s327, 1
        %s539 = smul.addr %s538, 16
        %s540 = scalar_lea.vmem [#allocation2], %s539
        %p541 = scmp.lt.s32.totalorder %s29, 1
        %s542 = scalar_select %p541, %s29, 1
        %p543 = scmp.lt.s32.totalorder %s31, 5
        %s544 = scalar_select %p543, %s31, 5
        %s545 = smul.addr %s544, 6
        %s546 = smul.addr %s542, 36
        %s547 = sadd.s32 %s545, %s546
        %s548 = smul.addr %s547, 8
        %s549 = scalar_lea.vmem %s0, %s548
        %s550 = sadd.s32 %s31, 1
        %p551 = scmp.lt.s32.totalorder %s29, 1
        %s552 = scalar_select %p551, %s29, 1
        %p553 = scmp.lt.s32.totalorder %s550, 5
        %s554 = scalar_select %p553, %s550, 5
        %s555 = smul.addr %s554, 6
        %s556 = smul.addr %s552, 36
        %s557 = sadd.s32 %s555, %s556
        %s558 = smul.addr %s557, 8
        %s559 = scalar_lea.vmem %s1, %s558
        %s560 = sadd.s32 %s31, 1
        %s561 = sadd.s32 %s31, 2
        %p562 = scmp.lt.s32.totalorder %s29, 1
        %s563 = scalar_select %p562, %s29, 1
        %p564 = scmp.lt.s32.totalorder %s561, 5
        %s565 = scalar_select %p564, %s561, 5
        %s566 = smul.addr %s565, 6
        %s567 = smul.addr %s563, 36
        %s568 = sadd.s32 %s566, %s567
        %s569 = smul.addr %s568, 8
        %s570 = scalar_lea.vmem %s2, %s569
        %s571 = sadd.s32 %s31, 2
        %p572 = scmp.lt.s32.totalorder %s30, 0
        %s573 = scalar_select %p572, %s30, 0
        %s574 = smul.addr %s573, 8
        %s575 = scalar_lea.vmem %s3, %s574
        %p576 = scmp.lt.s32.totalorder %s30, 0
        %s577 = scalar_select %p576, %s30, 0
        %s578 = scalar_lea.vmem %s4, %s577
        %p579 = scmp.lt.s32.totalorder %s30, 0
        %s580 = scalar_select %p579, %s30, 0
        %s581 = scalar_lea.vmem %s5, %s580
        %p582 = scmp.lt.s32.totalorder %s29, 1
        %s583 = scalar_select %p582, %s29, 1
        %p584 = scmp.lt.s32.totalorder %s31, 3
        %s585 = scalar_select %p584, %s31, 3
        %s586 = smul.addr %s585, 2
        %s587 = smul.addr %s583, 8
        %s588 = sadd.s32 %s586, %s587
        %s589 = smul.addr %s588, 8
        %s590 = scalar_lea.vmem %s6, %s589
        %p591 = scmp.lt.s32.totalorder %s30, 0
        %s592 = scalar_select %p591, %s30, 0
        %s593 = smul.addr %s592, 8
        %s594 = scalar_lea.vmem %s7, %s593
        %p595 = scmp.lt.s32.totalorder %s30, 0
        %s596 = scalar_select %p595, %s30, 0
        %s597 = scalar_lea.vmem %s8, %s596
        %p598 = scmp.lt.s32.totalorder %s30, 0
        %s599 = scalar_select %p598, %s30, 0
        %s600 = scalar_lea.vmem %s9, %s599
        %v601 = vld [vmem:[%s549] sm:$0xf]
        %v602 = vld [vmem:[%s549 + $0x8] sm:$0xf]
        %v603 = vld [vmem:[%s549 + $0x10] sm:$0xf]
        %v604 = vld [vmem:[%s549 + $0x18] sm:$0xf]
        %v605 = vld [vmem:[%s575] sm:$0xff]
        %v606 = vld [vmem:[%s575 + $0x8] sm:$0xff]
        %v607 = vld [vmem:[%s575 + $0x10] sm:$0xff]
        %v608 = vld [vmem:[%s575 + $0x18] sm:$0xff]
        %v609 = vld [vmem:[%s575 + $0x20] sm:$0xff]
        %v610 = vld [vmem:[%s575 + $0x28] sm:$0xff]
        %v611 = vld [vmem:[%s575 + $0x30] sm:$0xff]
        %v612 = vld [vmem:[%s575 + $0x38] sm:$0xff]
        %v613 = vld [vmem:[%s575 + $0x40] sm:$0xff]
        %v614 = vld [vmem:[%s575 + $0x48] sm:$0xff]
        %v615 = vld [vmem:[%s575 + $0x50] sm:$0xff]
        %v616 = vld [vmem:[%s575 + $0x58] sm:$0xff]
        %v617 = vld [vmem:[%s575 + $0x60] sm:$0xff]
        %v618 = vld [vmem:[%s575 + $0x68] sm:$0xff]
        %v619 = vld [vmem:[%s575 + $0x70] sm:$0xff]
        %v620 = vld [vmem:[%s575 + $0x78] sm:$0xff]
        %v621 = vld [vmem:[%s549 + $0x1] sm:$0xf]
        %v622 = vld [vmem:[%s549 + $0x9] sm:$0xf]
        %v623 = vld [vmem:[%s549 + $0x11] sm:$0xf]
        %v624 = vld [vmem:[%s549 + $0x19] sm:$0xf]
        %s625 = scalar_lea.vmem %s575, 128
        %v626 = vld [vmem:[%s625] sm:$0xff]
        %v627 = vld [vmem:[%s625 + $0x8] sm:$0xff]
        %v628 = vld [vmem:[%s625 + $0x10] sm:$0xff]
        %v629 = vld [vmem:[%s625 + $0x18] sm:$0xff]
        %v630 = vld [vmem:[%s625 + $0x20] sm:$0xff]
        %v631 = vld [vmem:[%s625 + $0x28] sm:$0xff]
        %v632 = vld [vmem:[%s625 + $0x30] sm:$0xff]
        %v633 = vld [vmem:[%s625 + $0x38] sm:$0xff]
        %v634 = vld [vmem:[%s625 + $0x40] sm:$0xff]
        %v635 = vld [vmem:[%s625 + $0x48] sm:$0xff]
        %v636 = vld [vmem:[%s625 + $0x50] sm:$0xff]
        %v637 = vld [vmem:[%s625 + $0x58] sm:$0xff]
        %v638 = vld [vmem:[%s625 + $0x60] sm:$0xff]
        %v639 = vld [vmem:[%s625 + $0x68] sm:$0xff]
        %v640 = vld [vmem:[%s625 + $0x70] sm:$0xff]
        %v641 = vld [vmem:[%s625 + $0x78] sm:$0xff]
        %v646 = vcombine.low %v621, %v622
        %v647 = vcombine.low %v623, %v624
        %650 = vmatprep.subr.mxu0 0.0
        %651 = vmatpush1.msra.mxu0 %v626
        %652 = vmatprep.subr.mxu0 0.0
        %653 = vmatpush1.msra.mxu0 %v627
        %654 = vmatprep.subr.mxu0 0.0
        %655 = vmatpush1.msra.mxu0 %v628
        %656 = vmatprep.subr.mxu0 0.0
        %657 = vmatpush1.msra.mxu0 %v629
        %658 = vmatprep.subr.mxu0 0.0
        %659 = vmatpush1.msra.mxu0 %v630
        %660 = vmatprep.subr.mxu0 0.0
        %661 = vmatpush1.msra.mxu0 %v631
        %662 = vmatprep.subr.mxu0 0.0
        %663 = vmatpush1.msra.mxu0 %v632
        %664 = vmatprep.subr.mxu0 0.0
        %665 = vmatpush1.msra.mxu0 %v633
        %666 = vmatprep.subr.mxu0 0.0
        %667 = vmatpush1.msra.mxu0 %v634
        %668 = vmatprep.subr.mxu0 0.0
        %669 = vmatpush1.msra.mxu0 %v635
        %670 = vmatprep.subr.mxu0 0.0
        %671 = vmatpush1.msra.mxu0 %v636
        %672 = vmatprep.subr.mxu0 0.0
        %673 = vmatpush1.msra.mxu0 %v637
        %674 = vmatprep.subr.mxu0 0.0
        %675 = vmatpush1.msra.mxu0 %v638
        %676 = vmatprep.subr.mxu0 0.0
        %677 = vmatpush1.msra.mxu0 %v639
        %678 = vmatprep.subr.mxu0 0.0
        %679 = vmatpush1.msra.mxu0 %v640
        %680 = vmatprep.subr.mxu0 0.0
        %681 = vmatpush1.msra.mxu0 %v641
        %682 = vmatprep.subr.mxu0 0.0
        %683 = vmatpush1.msra.mxu0 0.0
        %684 = vmatprep.subr.mxu0 0.0
        %685 = vmatpush1.msra.mxu0 0.0
        %686 = vmatprep.subr.mxu0 0.0
        %687 = vmatpush1.msra.mxu0 0.0
        %688 = vmatprep.subr.mxu0 0.0
        %689 = vmatpush1.msra.mxu0 0.0
        %690 = vmatprep.subr.mxu0 0.0
        %691 = vmatpush1.msra.mxu0 0.0
        %692 = vmatprep.subr.mxu0 0.0
        %693 = vmatpush1.msra.mxu0 0.0
        %694 = vmatprep.subr.mxu0 0.0
        %695 = vmatpush1.msra.mxu0 0.0
        %696 = vmatprep.subr.mxu0 0.0
        %697 = vmatpush1.msra.mxu0 0.0
        %698 = vmatprep.subr.mxu0 0.0
        %699 = vmatpush1.msra.mxu0 0.0
        %700 = vmatprep.subr.mxu0 0.0
        %701 = vmatpush1.msra.mxu0 0.0
        %702 = vmatprep.subr.mxu0 0.0
        %703 = vmatpush1.msra.mxu0 0.0
        %704 = vmatprep.subr.mxu0 0.0
        %705 = vmatpush1.msra.mxu0 0.0
        %706 = vmatprep.subr.mxu0 0.0
        %707 = vmatpush1.msra.mxu0 0.0
        %708 = vmatprep.subr.mxu0 0.0
        %709 = vmatpush1.msra.mxu0 0.0
        %710 = vmatprep.subr.mxu0 0.0
        %711 = vmatpush1.msra.mxu0 0.0
        %712 = vmatprep.subr.mxu0 0.0
        %713 = vmatpush1.msra.mxu0 0.0
        %714 = vmatprep.mubr.f32.mxu0 0.0
        %715 = vmatmul.mubr.f32.gmra.mrb[0].mxu0 %v646
        %v716 = vpop.f32.mrb[0].mxu0
        %v717 = vadd.f32 0.0, %v716
        %v718 = vpop.f32.mrb[0].mxu0
        %719 = vmatprep.mubr.f32.mxu0 0.0
        %720 = vmatmul.mubr.f32.gmra.mrb[0].mxu0 %v647
        %v721 = vpop.f32.mrb[0].mxu0
        %v722 = vadd.f32 0.0, %v721
        %v723 = vpop.f32.mrb[0].mxu0
        %724 = vdwg.mxu0
        %v729 = vcombine.low %v601, %v602
        %v730 = vcombine.low %v603, %v604
        %733 = vmatprep.subr.mxu0 0.0
        %734 = vmatpush1.msra.mxu0 %v605
        %735 = vmatprep.subr.mxu0 0.0
        %736 = vmatpush1.msra.mxu0 %v606
        %737 = vmatprep.subr.mxu0 0.0
        %738 = vmatpush1.msra.mxu0 %v607
        %739 = vmatprep.subr.mxu0 0.0
        %740 = vmatpush1.msra.mxu0 %v608
        %741 = vmatprep.subr.mxu0 0.0
        %742 = vmatpush1.msra.mxu0 %v609
        %743 = vmatprep.subr.mxu0 0.0
        %744 = vmatpush1.msra.mxu0 %v610
        %745 = vmatprep.subr.mxu0 0.0
        %746 = vmatpush1.msra.mxu0 %v611
        %747 = vmatprep.subr.mxu0 0.0
        %748 = vmatpush1.msra.mxu0 %v612
        %749 = vmatprep.subr.mxu0 0.0
        %750 = vmatpush1.msra.mxu0 %v613
        %751 = vmatprep.subr.mxu0 0.0
        %752 = vmatpush1.msra.mxu0 %v614
        %753 = vmatprep.subr.mxu0 0.0
        %754 = vmatpush1.msra.mxu0 %v615
        %755 = vmatprep.subr.mxu0 0.0
        %756 = vmatpush1.msra.mxu0 %v616
        %757 = vmatprep.subr.mxu0 0.0
        %758 = vmatpush1.msra.mxu0 %v617
        %759 = vmatprep.subr.mxu0 0.0
        %760 = vmatpush1.msra.mxu0 %v618
        %761 = vmatprep.subr.mxu0 0.0
        %762 = vmatpush1.msra.mxu0 %v619
        %763 = vmatprep.subr.mxu0 0.0
        %764 = vmatpush1.msra.mxu0 %v620
        %765 = vmatprep.subr.mxu0 0.0
        %766 = vmatpush1.msra.mxu0 0.0
        %767 = vmatprep.subr.mxu0 0.0
        %768 = vmatpush1.msra.mxu0 0.0
        %769 = vmatprep.subr.mxu0 0.0
        %770 = vmatpush1.msra.mxu0 0.0
        %771 = vmatprep.subr.mxu0 0.0
        %772 = vmatpush1.msra.mxu0 0.0
        %773 = vmatprep.subr.mxu0 0.0
        %774 = vmatpush1.msra.mxu0 0.0
        %775 = vmatprep.subr.mxu0 0.0
        %776 = vmatpush1.msra.mxu0 0.0
        %777 = vmatprep.subr.mxu0 0.0
        %778 = vmatpush1.msra.mxu0 0.0
        %779 = vmatprep.subr.mxu0 0.0
        %780 = vmatpush1.msra.mxu0 0.0
        %781 = vmatprep.subr.mxu0 0.0
        %782 = vmatpush1.msra.mxu0 0.0
        %783 = vmatprep.subr.mxu0 0.0
        %784 = vmatpush1.msra.mxu0 0.0
        %785 = vmatprep.subr.mxu0 0.0
        %786 = vmatpush1.msra.mxu0 0.0
        %787 = vmatprep.subr.mxu0 0.0
        %788 = vmatpush1.msra.mxu0 0.0
        %789 = vmatprep.subr.mxu0 0.0
        %790 = vmatpush1.msra.mxu0 0.0
        %791 = vmatprep.subr.mxu0 0.0
        %792 = vmatpush1.msra.mxu0 0.0
        %793 = vmatprep.subr.mxu0 0.0
        %794 = vmatpush1.msra.mxu0 0.0
        %795 = vmatprep.subr.mxu0 0.0
        %796 = vmatpush1.msra.mxu0 0.0
        %797 = vmatprep.mubr.f32.mxu0 0.0
        %798 = vmatmul.mubr.f32.gmra.mrb[0].mxu0 %v729
        %v799 = vpop.f32.mrb[0].mxu0
        %v800 = vadd.f32 %v717, %v799
        %v801 = vpop.f32.mrb[0].mxu0
        %802 = vmatprep.mubr.f32.mxu0 0.0
        %803 = vmatmul.mubr.f32.gmra.mrb[0].mxu0 %v730
        %v804 = vpop.f32.mrb[0].mxu0
        %v805 = vadd.f32 %v722, %v804
        %v806 = vpop.f32.mrb[0].mxu0
        %807 = vdwg.mxu0
        %v808 = vld [vmem:[%s549 + $0x2] sm:$0xf]
        %v809 = vld [vmem:[%s549 + $0xa] sm:$0xf]
        %v810 = vld [vmem:[%s549 + $0x12] sm:$0xf]
        %v811 = vld [vmem:[%s549 + $0x1a] sm:$0xf]
        %s812 = scalar_lea.vmem %s575, 256
        %v813 = vld [vmem:[%s812] sm:$0xff]
        %v814 = vld [vmem:[%s812 + $0x8] sm:$0xff]
        %v815 = vld [vmem:[%s812 + $0x10] sm:$0xff]
        %v816 = vld [vmem:[%s812 + $0x18] sm:$0xff]
        %v817 = vld [vmem:[%s812 + $0x20] sm:$0xff]
        %v818 = vld [vmem:[%s812 + $0x28] sm:$0xff]
        %v819 = vld [vmem:[%s812 + $0x30] sm:$0xff]
        %v820 = vld [vmem:[%s812 + $0x38] sm:$0xff]
        %v821 = vld [vmem:[%s812 + $0x40] sm:$0xff]
        %v822 = vld [vmem:[%s812 + $0x48] sm:$0xff]
        %v823 = vld [vmem:[%s812 + $0x50] sm:$0xff]
        %v824 = vld [vmem:[%s812 + $0x58] sm:$0xff]
        %v825 = vld [vmem:[%s812 + $0x60] sm:$0xff]
        %v826 = vld [vmem:[%s812 + $0x68] sm:$0xff]
        %v827 = vld [vmem:[%s812 + $0x70] sm:$0xff]
        %v828 = vld [vmem:[%s812 + $0x78] sm:$0xff]
        %v833 = vcombine.low %v808, %v809
        %v834 = vcombine.low %v810, %v811
        %837 = vmatprep.subr.mxu0 0.0
        %838 = vmatpush1.msra.mxu0 %v813
        %839 = vmatprep.subr.mxu0 0.0
        %840 = vmatpush1.msra.mxu0 %v814
        %841 = vmatprep.subr.mxu0 0.0
        %842 = vmatpush1.msra.mxu0 %v815
        %843 = vmatprep.subr.mxu0 0.0
        %844 = vmatpush1.msra.mxu0 %v816
        %845 = vmatprep.subr.mxu0 0.0
        %846 = vmatpush1.msra.mxu0 %v817
        %847 = vmatprep.subr.mxu0 0.0
        %848 = vmatpush1.msra.mxu0 %v818
        %849 = vmatprep.subr.mxu0 0.0
        %850 = vmatpush1.msra.mxu0 %v819
        %851 = vmatprep.subr.mxu0 0.0
        %852 = vmatpush1.msra.mxu0 %v820
        %853 = vmatprep.subr.mxu0 0.0
        %854 = vmatpush1.msra.mxu0 %v821
        %855 = vmatprep.subr.mxu0 0.0
        %856 = vmatpush1.msra.mxu0 %v822
        %857 = vmatprep.subr.mxu0 0.0
        %858 = vmatpush1.msra.mxu0 %v823
        %859 = vmatprep.subr.mxu0 0.0
        %860 = vmatpush1.msra.mxu0 %v824
        %861 = vmatprep.subr.mxu0 0.0
        %862 = vmatpush1.msra.mxu0 %v825
        %863 = vmatprep.subr.mxu0 0.0
        %864 = vmatpush1.msra.mxu0 %v826
        %865 = vmatprep.subr.mxu0 0.0
        %866 = vmatpush1.msra.mxu0 %v827
        %867 = vmatprep.subr.mxu0 0.0
        %868 = vmatpush1.msra.mxu0 %v828
        %869 = vmatprep.subr.mxu0 0.0
        %870 = vmatpush1.msra.mxu0 0.0
        %871 = vmatprep.subr.mxu0 0.0
        %872 = vmatpush1.msra.mxu0 0.0
        %873 = vmatprep.subr.mxu0 0.0
        %874 = vmatpush1.msra.mxu0 0.0
        %875 = vmatprep.subr.mxu0 0.0
        %876 = vmatpush1.msra.mxu0 0.0
        %877 = vmatprep.subr.mxu0 0.0
        %878 = vmatpush1.msra.mxu0 0.0
        %879 = vmatprep.subr.mxu0 0.0
        %880 = vmatpush1.msra.mxu0 0.0
        %881 = vmatprep.subr.mxu0 0.0
        %882 = vmatpush1.msra.mxu0 0.0
        %883 = vmatprep.subr.mxu0 0.0
        %884 = vmatpush1.msra.mxu0 0.0
        %885 = vmatprep.subr.mxu0 0.0
        %886 = vmatpush1.msra.mxu0 0.0
        %887 = vmatprep.subr.mxu0 0.0
        %888 = vmatpush1.msra.mxu0 0.0
        %889 = vmatprep.subr.mxu0 0.0
        %890 = vmatpush1.msra.mxu0 0.0
        %891 = vmatprep.subr.mxu0 0.0
        %892 = vmatpush1.msra.mxu0 0.0
        %893 = vmatprep.subr.mxu0 0.0
        %894 = vmatpush1.msra.mxu0 0.0
        %895 = vmatprep.subr.mxu0 0.0
        %896 = vmatpush1.msra.mxu0 0.0
        %897 = vmatprep.subr.mxu0 0.0
        %898 = vmatpush1.msra.mxu0 0.0
        %899 = vmatprep.subr.mxu0 0.0
        %900 = vmatpush1.msra.mxu0 0.0
        %901 = vmatprep.mubr.f32.mxu0 0.0
        %902 = vmatmul.mubr.f32.gmra.mrb[0].mxu0 %v833
        %v903 = vpop.f32.mrb[0].mxu0
        %v904 = vadd.f32 0.0, %v903
        %v905 = vpop.f32.mrb[0].mxu0
        %906 = vmatprep.mubr.f32.mxu0 0.0
        %907 = vmatmul.mubr.f32.gmra.mrb[0].mxu0 %v834
        %v908 = vpop.f32.mrb[0].mxu0
        %v909 = vadd.f32 0.0, %v908
        %v910 = vpop.f32.mrb[0].mxu0
        %911 = vdwg.mxu0
        %v912 = vadd.f32 %v800, %v904
        %v913 = vadd.f32 %v805, %v909
        %s914 = scalar_lea.vmem %s549, 8
        %v915 = vld [vmem:[%s914] sm:$0xf]
        %v916 = vld [vmem:[%s914 + $0x8] sm:$0xf]
        %v917 = vld [vmem:[%s914 + $0x10] sm:$0xf]
        %v918 = vld [vmem:[%s914 + $0x18] sm:$0xf]
        %s919 = scalar_lea.vmem %s575, 384
        %v920 = vld [vmem:[%s919] sm:$0xff]
        %v921 = vld [vmem:[%s919 + $0x8] sm:$0xff]
        %v922 = vld [vmem:[%s919 + $0x10] sm:$0xff]
        %v923 = vld [vmem:[%s919 + $0x18] sm:$0xff]
        %v924 = vld [vmem:[%s919 + $0x20] sm:$0xff]
        %v925 = vld [vmem:[%s919 + $0x28] sm:$0xff]
        %v926 = vld [vmem:[%s919 + $0x30] sm:$0xff]
        %v927 = vld [vmem:[%s919 + $0x38] sm:$0xff]
        %v928 = vld [vmem:[%s919 + $0x40] sm:$0xff]
        %v929 = vld [vmem:[%s919 + $0x48] sm:$0xff]
        %v930 = vld [vmem:[%s919 + $0x50] sm:$0xff]
        %v931 = vld [vmem:[%s919 + $0x58] sm:$0xff]
        %v932 = vld [vmem:[%s919 + $0x60] sm:$0xff]
        %v933 = vld [vmem:[%s919 + $0x68] sm:$0xff]
        %v934 = vld [vmem:[%s919 + $0x70] sm:$0xff]
        %v935 = vld [vmem:[%s919 + $0x78] sm:$0xff]
        %v940 = vcombine.low %v915, %v916
        %v941 = vcombine.low %v917, %v918
        %944 = vmatprep.subr.mxu0 0.0
        %945 = vmatpush1.msra.mxu0 %v920
        %946 = vmatprep.subr.mxu0 0.0
        %947 = vmatpush1.msra.mxu0 %v921
        %948 = vmatprep.subr.mxu0 0.0
        %949 = vmatpush1.msra.mxu0 %v922
        %950 = vmatprep.subr.mxu0 0.0
        %951 = vmatpush1.msra.mxu0 %v923
        %952 = vmatprep.subr.mxu0 0.0
        %953 = vmatpush1.msra.mxu0 %v924
        %954 = vmatprep.subr.mxu0 0.0
        %955 = vmatpush1.msra.mxu0 %v925
        %956 = vmatprep.subr.mxu0 0.0
        %957 = vmatpush1.msra.mxu0 %v926
        %958 = vmatprep.subr.mxu0 0.0
        %959 = vmatpush1.msra.mxu0 %v927
        %960 = vmatprep.subr.mxu0 0.0
        %961 = vmatpush1.msra.mxu0 %v928
        %962 = vmatprep.subr.mxu0 0.0
        %963 = vmatpush1.msra.mxu0 %v929
        %964 = vmatprep.subr.mxu0 0.0
        %965 = vmatpush1.msra.mxu0 %v930
        %966 = vmatprep.subr.mxu0 0.0
        %967 = vmatpush1.msra.mxu0 %v931
        %968 = vmatprep.subr.mxu0 0.0
        %969 = vmatpush1.msra.mxu0 %v932
        %970 = vmatprep.subr.mxu0 0.0
        %971 = vmatpush1.msra.mxu0 %v933
        %972 = vmatprep.subr.mxu0 0.0
        %973 = vmatpush1.msra.mxu0 %v934
        %974 = vmatprep.subr.mxu0 0.0
        %975 = vmatpush1.msra.mxu0 %v935
        %976 = vmatprep.subr.mxu0 0.0
        %977 = vmatpush1.msra.mxu0 0.0
        %978 = vmatprep.subr.mxu0 0.0
        %979 = vmatpush1.msra.mxu0 0.0
        %980 = vmatprep.subr.mxu0 0.0
        %981 = vmatpush1.msra.mxu0 0.0
        %982 = vmatprep.subr.mxu0 0.0
        %983 = vmatpush1.msra.mxu0 0.0
        %984 = vmatprep.subr.mxu0 0.0
        %985 = vmatpush1.msra.mxu0 0.0
        %986 = vmatprep.subr.mxu0 0.0
        %987 = vmatpush1.msra.mxu0 0.0
        %988 = vmatprep.subr.mxu0 0.0
        %989 = vmatpush1.msra.mxu0 0.0
        %990 = vmatprep.subr.mxu0 0.0
        %991 = vmatpush1.msra.mxu0 0.0
        %992 = vmatprep.subr.mxu0 0.0
        %993 = vmatpush1.msra.mxu0 0.0
        %994 = vmatprep.subr.mxu0 0.0
        %995 = vmatpush1.msra.mxu0 0.0
        %996 = vmatprep.subr.mxu0 0.0
        %997 = vmatpush1.msra.mxu0 0.0
        %998 = vmatprep.subr.mxu0 0.0
        %999 = vmatpush1.msra.mxu0 0.0
        %1000 = vmatprep.subr.mxu0 0.0
        %1001 = vmatpush1.msra.mxu0 0.0
        %1002 = vmatprep.subr.mxu0 0.0
        %1003 = vmatpush1.msra.mxu0 0.0
        %1004 = vmatprep.subr.mxu0 0.0
        %1005 = vmatpush1.msra.mxu0 0.0
        %1006 = vmatprep.subr.mxu0 0.0
        %1007 = vmatpush1.msra.mxu0 0.0
        %1008 = vmatprep.mubr.f32.mxu0 0.0
        %1009 = vmatmul.mubr.f32.gmra.mrb[0].mxu0 %v940
        %v1010 = vpop.f32.mrb[0].mxu0
        %v1011 = vadd.f32 0.0, %v1010
        %v1012 = vpop.f32.mrb[0].mxu0
        %1013 = vmatprep.mubr.f32.mxu0 0.0
        %1014 = vmatmul.mubr.f32.gmra.mrb[0].mxu0 %v941
        %v1015 = vpop.f32.mrb[0].mxu0
        %v1016 = vadd.f32 0.0, %v1015
        %v1017 = vpop.f32.mrb[0].mxu0
        %1018 = vdwg.mxu0
        %v1019 = vadd.f32 %v912, %v1011
        %v1020 = vadd.f32 %v913, %v1016
        %v1021 = vld [vmem:[%s914 + $0x1] sm:$0xf]
        %v1022 = vld [vmem:[%s914 + $0x9] sm:$0xf]
        %v1023 = vld [vmem:[%s914 + $0x11] sm:$0xf]
        %v1024 = vld [vmem:[%s914 + $0x19] sm:$0xf]
        %s1025 = scalar_lea.vmem %s575, 512
        %v1026 = vld [vmem:[%s1025] sm:$0xff]
        %v1027 = vld [vmem:[%s1025 + $0x8] sm:$0xff]
        %v1028 = vld [vmem:[%s1025 + $0x10] sm:$0xff]
        %v1029 = vld [vmem:[%s1025 + $0x18] sm:$0xff]
        %v1030 = vld [vmem:[%s1025 + $0x20] sm:$0xff]
        %v1031 = vld [vmem:[%s1025 + $0x28] sm:$0xff]
        %v1032 = vld [vmem:[%s1025 + $0x30] sm:$0xff]
        %v1033 = vld [vmem:[%s1025 + $0x38] sm:$0xff]
        %v1034 = vld [vmem:[%s1025 + $0x40] sm:$0xff]
        %v1035 = vld [vmem:[%s1025 + $0x48] sm:$0xff]
        %v1036 = vld [vmem:[%s1025 + $0x50] sm:$0xff]
        %v1037 = vld [vmem:[%s1025 + $0x58] sm:$0xff]
        %v1038 = vld [vmem:[%s1025 + $0x60] sm:$0xff]
        %v1039 = vld [vmem:[%s1025 + $0x68] sm:$0xff]
        %v1040 = vld [vmem:[%s1025 + $0x70] sm:$0xff]
        %v1041 = vld [vmem:[%s1025 + $0x78] sm:$0xff]
        %v1046 = vcombine.low %v1021, %v1022
        %v1047 = vcombine.low %v1023, %v1024
        %1050 = vmatprep.subr.mxu0 0.0
        %1051 = vmatpush1.msra.mxu0 %v1026
        %1052 = vmatprep.subr.mxu0 0.0
        %1053 = vmatpush1.msra.mxu0 %v1027
        %1054 = vmatprep.subr.mxu0 0.0
        %1055 = vmatpush1.msra.mxu0 %v1028
        %1056 = vmatprep.subr.mxu0 0.0
        %1057 = vmatpush1.msra.mxu0 %v1029
        %1058 = vmatprep.subr.mxu0 0.0
        %1059 = vmatpush1.msra.mxu0 %v1030
        %1060 = vmatprep.subr.mxu0 0.0
        %1061 = vmatpush1.msra.mxu0 %v1031
        %1062 = vmatprep.subr.mxu0 0.0
        %1063 = vmatpush1.msra.mxu0 %v1032
        %1064 = vmatprep.subr.mxu0 0.0
        %1065 = vmatpush1.msra.mxu0 %v1033
        %1066 = vmatprep.subr.mxu0 0.0
        %1067 = vmatpush1.msra.mxu0 %v1034
        %1068 = vmatprep.subr.mxu0 0.0
        %1069 = vmatpush1.msra.mxu0 %v1035
        %1070 = vmatprep.subr.mxu0 0.0
        %1071 = vmatpush1.msra.mxu0 %v1036
        %1072 = vmatprep.subr.mxu0 0.0
        %1073 = vmatpush1.msra.mxu0 %v1037
        %1074 = vmatprep.subr.mxu0 0.0
        %1075 = vmatpush1.msra.mxu0 %v1038
        %1076 = vmatprep.subr.mxu0 0.0
        %1077 = vmatpush1.msra.mxu0 %v1039
        %1078 = vmatprep.subr.mxu0 0.0
        %1079 = vmatpush1.msra.mxu0 %v1040
        %1080 = vmatprep.subr.mxu0 0.0
        %1081 = vmatpush1.msra.mxu0 %v1041
        %1082 = vmatprep.subr.mxu0 0.0
        %1083 = vmatpush1.msra.mxu0 0.0
        %1084 = vmatprep.subr.mxu0 0.0
        %1085 = vmatpush1.msra.mxu0 0.0
        %1086 = vmatprep.subr.mxu0 0.0
        %1087 = vmatpush1.msra.mxu0 0.0
        %1088 = vmatprep.subr.mxu0 0.0
        %1089 = vmatpush1.msra.mxu0 0.0
        %1090 = vmatprep.subr.mxu0 0.0
        %1091 = vmatpush1.msra.mxu0 0.0
        %1092 = vmatprep.subr.mxu0 0.0
        %1093 = vmatpush1.msra.mxu0 0.0
        %1094 = vmatprep.subr.mxu0 0.0
        %1095 = vmatpush1.msra.mxu0 0.0
        %1096 = vmatprep.subr.mxu0 0.0
        %1097 = vmatpush1.msra.mxu0 0.0
        %1098 = vmatprep.subr.mxu0 0.0
        %1099 = vmatpush1.msra.mxu0 0.0
        %1100 = vmatprep.subr.mxu0 0.0
        %1101 = vmatpush1.msra.mxu0 0.0
        %1102 = vmatprep.subr.mxu0 0.0
        %1103 = vmatpush1.msra.mxu0 0.0
        %1104 = vmatprep.subr.mxu0 0.0
        %1105 = vmatpush1.msra.mxu0 0.0
        %1106 = vmatprep.subr.mxu0 0.0
        %1107 = vmatpush1.msra.mxu0 0.0
        %1108 = vmatprep.subr.mxu0 0.0
        %1109 = vmatpush1.msra.mxu0 0.0
        %1110 = vmatprep.subr.mxu0 0.0
        %1111 = vmatpush1.msra.mxu0 0.0
        %1112 = vmatprep.subr.mxu0 0.0
        %1113 = vmatpush1.msra.mxu0 0.0
        %1114 = vmatprep.mubr.f32.mxu0 0.0
        %1115 = vmatmul.mubr.f32.gmra.mrb[0].mxu0 %v1046
        %v1116 = vpop.f32.mrb[0].mxu0
        %v1117 = vadd.f32 0.0, %v1116
        %v1118 = vpop.f32.mrb[0].mxu0
        %1119 = vmatprep.mubr.f32.mxu0 0.0
        %1120 = vmatmul.mubr.f32.gmra.mrb[0].mxu0 %v1047
        %v1121 = vpop.f32.mrb[0].mxu0
        %v1122 = vadd.f32 0.0, %v1121
        %v1123 = vpop.f32.mrb[0].mxu0
        %1124 = vdwg.mxu0
        %v1125 = vadd.f32 %v1019, %v1117
        %v1126 = vadd.f32 %v1020, %v1122
        %v1127 = vld [vmem:[%s914 + $0x2] sm:$0xf]
        %v1128 = vld [vmem:[%s914 + $0xa] sm:$0xf]
        %v1129 = vld [vmem:[%s914 + $0x12] sm:$0xf]
        %v1130 = vld [vmem:[%s914 + $0x1a] sm:$0xf]
        %s1131 = scalar_lea.vmem %s575, 640
        %v1132 = vld [vmem:[%s1131] sm:$0xff]
        %v1133 = vld [vmem:[%s1131 + $0x8] sm:$0xff]
        %v1134 = vld [vmem:[%s1131 + $0x10] sm:$0xff]
        %v1135 = vld [vmem:[%s1131 + $0x18] sm:$0xff]
        %v1136 = vld [vmem:[%s1131 + $0x20] sm:$0xff]
        %v1137 = vld [vmem:[%s1131 + $0x28] sm:$0xff]
        %v1138 = vld [vmem:[%s1131 + $0x30] sm:$0xff]
        %v1139 = vld [vmem:[%s1131 + $0x38] sm:$0xff]
        %v1140 = vld [vmem:[%s1131 + $0x40] sm:$0xff]
        %v1141 = vld [vmem:[%s1131 + $0x48] sm:$0xff]
        %v1142 = vld [vmem:[%s1131 + $0x50] sm:$0xff]
        %v1143 = vld [vmem:[%s1131 + $0x58] sm:$0xff]
        %v1144 = vld [vmem:[%s1131 + $0x60] sm:$0xff]
        %v1145 = vld [vmem:[%s1131 + $0x68] sm:$0xff]
        %v1146 = vld [vmem:[%s1131 + $0x70] sm:$0xff]
        %v1147 = vld [vmem:[%s1131 + $0x78] sm:$0xff]
        %v1152 = vcombine.low %v1127, %v1128
        %v1153 = vcombine.low %v1129, %v1130
        %1156 = vmatprep.subr.mxu0 0.0
        %1157 = vmatpush1.msra.mxu0 %v1132
        %1158 = vmatprep.subr.mxu0 0.0
        %1159 = vmatpush1.msra.mxu0 %v1133
        %1160 = vmatprep.subr.mxu0 0.0
        %1161 = vmatpush1.msra.mxu0 %v1134
        %1162 = vmatprep.subr.mxu0 0.0
        %1163 = vmatpush1.msra.mxu0 %v1135
        %1164 = vmatprep.subr.mxu0 0.0
        %1165 = vmatpush1.msra.mxu0 %v1136
        %1166 = vmatprep.subr.mxu0 0.0
        %1167 = vmatpush1.msra.mxu0 %v1137
        %1168 = vmatprep.subr.mxu0 0.0
        %1169 = vmatpush1.msra.mxu0 %v1138
        %1170 = vmatprep.subr.mxu0 0.0
        %1171 = vmatpush1.msra.mxu0 %v1139
        %1172 = vmatprep.subr.mxu0 0.0
        %1173 = vmatpush1.msra.mxu0 %v1140
        %1174 = vmatprep.subr.mxu0 0.0
        %1175 = vmatpush1.msra.mxu0 %v1141
        %1176 = vmatprep.subr.mxu0 0.0
        %1177 = vmatpush1.msra.mxu0 %v1142
        %1178 = vmatprep.subr.mxu0 0.0
        %1179 = vmatpush1.msra.mxu0 %v1143
        %1180 = vmatprep.subr.mxu0 0.0
        %1181 = vmatpush1.msra.mxu0 %v1144
        %1182 = vmatprep.subr.mxu0 0.0
        %1183 = vmatpush1.msra.mxu0 %v1145
        %1184 = vmatprep.subr.mxu0 0.0
        %1185 = vmatpush1.msra.mxu0 %v1146
        %1186 = vmatprep.subr.mxu0 0.0
        %1187 = vmatpush1.msra.mxu0 %v1147
        %1188 = vmatprep.subr.mxu0 0.0
        %1189 = vmatpush1.msra.mxu0 0.0
        %1190 = vmatprep.subr.mxu0 0.0
        %1191 = vmatpush1.msra.mxu0 0.0
        %1192 = vmatprep.subr.mxu0 0.0
        %1193 = vmatpush1.msra.mxu0 0.0
        %1194 = vmatprep.subr.mxu0 0.0
        %1195 = vmatpush1.msra.mxu0 0.0
        %1196 = vmatprep.subr.mxu0 0.0
        %1197 = vmatpush1.msra.mxu0 0.0
        %1198 = vmatprep.subr.mxu0 0.0
        %1199 = vmatpush1.msra.mxu0 0.0
        %1200 = vmatprep.subr.mxu0 0.0
        %1201 = vmatpush1.msra.mxu0 0.0
        %1202 = vmatprep.subr.mxu0 0.0
        %1203 = vmatpush1.msra.mxu0 0.0
        %1204 = vmatprep.subr.mxu0 0.0
        %1205 = vmatpush1.msra.mxu0 0.0
        %1206 = vmatprep.subr.mxu0 0.0
        %1207 = vmatpush1.msra.mxu0 0.0
        %1208 = vmatprep.subr.mxu0 0.0
        %1209 = vmatpush1.msra.mxu0 0.0
        %1210 = vmatprep.subr.mxu0 0.0
        %1211 = vmatpush1.msra.mxu0 0.0
        %1212 = vmatprep.subr.mxu0 0.0
        %1213 = vmatpush1.msra.mxu0 0.0
        %1214 = vmatprep.subr.mxu0 0.0
        %1215 = vmatpush1.msra.mxu0 0.0
        %1216 = vmatprep.subr.mxu0 0.0
        %1217 = vmatpush1.msra.mxu0 0.0
        %1218 = vmatprep.subr.mxu0 0.0
        %1219 = vmatpush1.msra.mxu0 0.0
        %1220 = vmatprep.mubr.f32.mxu0 0.0
        %1221 = vmatmul.mubr.f32.gmra.mrb[0].mxu0 %v1152
        %v1222 = vpop.f32.mrb[0].mxu0
        %v1223 = vadd.f32 0.0, %v1222
        %v1224 = vpop.f32.mrb[0].mxu0
        %1225 = vmatprep.mubr.f32.mxu0 0.0
        %1226 = vmatmul.mubr.f32.gmra.mrb[0].mxu0 %v1153
        %v1227 = vpop.f32.mrb[0].mxu0
        %v1228 = vadd.f32 0.0, %v1227
        %v1229 = vpop.f32.mrb[0].mxu0
        %1230 = vdwg.mxu0
        %v1231 = vadd.f32 %v1125, %v1223
        %v1232 = vadd.f32 %v1126, %v1228
        %s1233 = scalar_lea.vmem %s549, 16
        %v1234 = vld [vmem:[%s1233] sm:$0xf]
        %v1235 = vld [vmem:[%s1233 + $0x8] sm:$0xf]
        %v1236 = vld [vmem:[%s1233 + $0x10] sm:$0xf]
        %v1237 = vld [vmem:[%s1233 + $0x18] sm:$0xf]
        %s1238 = scalar_lea.vmem %s575, 768
        %v1239 = vld [vmem:[%s1238] sm:$0xff]
        %v1240 = vld [vmem:[%s1238 + $0x8] sm:$0xff]
        %v1241 = vld [vmem:[%s1238 + $0x10] sm:$0xff]
        %v1242 = vld [vmem:[%s1238 + $0x18] sm:$0xff]
        %v1243 = vld [vmem:[%s1238 + $0x20] sm:$0xff]
        %v1244 = vld [vmem:[%s1238 + $0x28] sm:$0xff]
        %v1245 = vld [vmem:[%s1238 + $0x30] sm:$0xff]
        %v1246 = vld [vmem:[%s1238 + $0x38] sm:$0xff]
        %v1247 = vld [vmem:[%s1238 + $0x40] sm:$0xff]
        %v1248 = vld [vmem:[%s1238 + $0x48] sm:$0xff]
        %v1249 = vld [vmem:[%s1238 + $0x50] sm:$0xff]
        %v1250 = vld [vmem:[%s1238 + $0x58] sm:$0xff]
        %v1251 = vld [vmem:[%s1238 + $0x60] sm:$0xff]
        %v1252 = vld [vmem:[%s1238 + $0x68] sm:$0xff]
        %v1253 = vld [vmem:[%s1238 + $0x70] sm:$0xff]
        %v1254 = vld [vmem:[%s1238 + $0x78] sm:$0xff]
        %v1259 = vcombine.low %v1234, %v1235
        %v1260 = vcombine.low %v1236, %v1237
        %1263 = vmatprep.subr.mxu0 0.0
        %1264 = vmatpush1.msra.mxu0 %v1239
        %1265 = vmatprep.subr.mxu0 0.0
        %1266 = vmatpush1.msra.mxu0 %v1240
        %1267 = vmatprep.subr.mxu0 0.0
        %1268 = vmatpush1.msra.mxu0 %v1241
        %1269 = vmatprep.subr.mxu0 0.0
        %1270 = vmatpush1.msra.mxu0 %v1242
        %1271 = vmatprep.subr.mxu0 0.0
        %1272 = vmatpush1.msra.mxu0 %v1243
        %1273 = vmatprep.subr.mxu0 0.0
        %1274 = vmatpush1.msra.mxu0 %v1244
        %1275 = vmatprep.subr.mxu0 0.0
        %1276 = vmatpush1.msra.mxu0 %v1245
        %1277 = vmatprep.subr.mxu0 0.0
        %1278 = vmatpush1.msra.mxu0 %v1246
        %1279 = vmatprep.subr.mxu0 0.0
        %1280 = vmatpush1.msra.mxu0 %v1247
        %1281 = vmatprep.subr.mxu0 0.0
        %1282 = vmatpush1.msra.mxu0 %v1248
        %1283 = vmatprep.subr.mxu0 0.0
        %1284 = vmatpush1.msra.mxu0 %v1249
        %1285 = vmatprep.subr.mxu0 0.0
        %1286 = vmatpush1.msra.mxu0 %v1250
        %1287 = vmatprep.subr.mxu0 0.0
        %1288 = vmatpush1.msra.mxu0 %v1251
        %1289 = vmatprep.subr.mxu0 0.0
        %1290 = vmatpush1.msra.mxu0 %v1252
        %1291 = vmatprep.subr.mxu0 0.0
        %1292 = vmatpush1.msra.mxu0 %v1253
        %1293 = vmatprep.subr.mxu0 0.0
        %1294 = vmatpush1.msra.mxu0 %v1254
        %1295 = vmatprep.subr.mxu0 0.0
        %1296 = vmatpush1.msra.mxu0 0.0
        %1297 = vmatprep.subr.mxu0 0.0
        %1298 = vmatpush1.msra.mxu0 0.0
        %1299 = vmatprep.subr.mxu0 0.0
        %1300 = vmatpush1.msra.mxu0 0.0
        %1301 = vmatprep.subr.mxu0 0.0
        %1302 = vmatpush1.msra.mxu0 0.0
        %1303 = vmatprep.subr.mxu0 0.0
        %1304 = vmatpush1.msra.mxu0 0.0
        %1305 = vmatprep.subr.mxu0 0.0
        %1306 = vmatpush1.msra.mxu0 0.0
        %1307 = vmatprep.subr.mxu0 0.0
        %1308 = vmatpush1.msra.mxu0 0.0
        %1309 = vmatprep.subr.mxu0 0.0
        %1310 = vmatpush1.msra.mxu0 0.0
        %1311 = vmatprep.subr.mxu0 0.0
        %1312 = vmatpush1.msra.mxu0 0.0
        %1313 = vmatprep.subr.mxu0 0.0
        %1314 = vmatpush1.msra.mxu0 0.0
        %1315 = vmatprep.subr.mxu0 0.0
        %1316 = vmatpush1.msra.mxu0 0.0
        %1317 = vmatprep.subr.mxu0 0.0
        %1318 = vmatpush1.msra.mxu0 0.0
        %1319 = vmatprep.subr.mxu0 0.0
        %1320 = vmatpush1.msra.mxu0 0.0
        %1321 = vmatprep.subr.mxu0 0.0
        %1322 = vmatpush1.msra.mxu0 0.0
        %1323 = vmatprep.subr.mxu0 0.0
        %1324 = vmatpush1.msra.mxu0 0.0
        %1325 = vmatprep.subr.mxu0 0.0
        %1326 = vmatpush1.msra.mxu0 0.0
        %1327 = vmatprep.mubr.f32.mxu0 0.0
        %1328 = vmatmul.mubr.f32.gmra.mrb[0].mxu0 %v1259
        %v1329 = vpop.f32.mrb[0].mxu0
        %v1330 = vadd.f32 0.0, %v1329
        %v1331 = vpop.f32.mrb[0].mxu0
        %1332 = vmatprep.mubr.f32.mxu0 0.0
        %1333 = vmatmul.mubr.f32.gmra.mrb[0].mxu0 %v1260
        %v1334 = vpop.f32.mrb[0].mxu0
        %v1335 = vadd.f32 0.0, %v1334
        %v1336 = vpop.f32.mrb[0].mxu0
        %1337 = vdwg.mxu0
        %v1338 = vadd.f32 %v1231, %v1330
        %v1339 = vadd.f32 %v1232, %v1335
        %v1340 = vld [vmem:[%s1233 + $0x1] sm:$0xf]
        %v1341 = vld [vmem:[%s1233 + $0x9] sm:$0xf]
        %v1342 = vld [vmem:[%s1233 + $0x11] sm:$0xf]
        %v1343 = vld [vmem:[%s1233 + $0x19] sm:$0xf]
        %s1344 = scalar_lea.vmem %s575, 896
        %v1345 = vld [vmem:[%s1344] sm:$0xff]
        %v1346 = vld [vmem:[%s1344 + $0x8] sm:$0xff]
        %v1347 = vld [vmem:[%s1344 + $0x10] sm:$0xff]
        %v1348 = vld [vmem:[%s1344 + $0x18] sm:$0xff]
        %v1349 = vld [vmem:[%s1344 + $0x20] sm:$0xff]
        %v1350 = vld [vmem:[%s1344 + $0x28] sm:$0xff]
        %v1351 = vld [vmem:[%s1344 + $0x30] sm:$0xff]
        %v1352 = vld [vmem:[%s1344 + $0x38] sm:$0xff]
        %v1353 = vld [vmem:[%s1344 + $0x40] sm:$0xff]
        %v1354 = vld [vmem:[%s1344 + $0x48] sm:$0xff]
        %v1355 = vld [vmem:[%s1344 + $0x50] sm:$0xff]
        %v1356 = vld [vmem:[%s1344 + $0x58] sm:$0xff]
        %v1357 = vld [vmem:[%s1344 + $0x60] sm:$0xff]
        %v1358 = vld [vmem:[%s1344 + $0x68] sm:$0xff]
        %v1359 = vld [vmem:[%s1344 + $0x70] sm:$0xff]
        %v1360 = vld [vmem:[%s1344 + $0x78] sm:$0xff]
        %v1365 = vcombine.low %v1340, %v1341
        %v1366 = vcombine.low %v1342, %v1343
        %1369 = vmatprep.subr.mxu0 0.0
        %1370 = vmatpush1.msra.mxu0 %v1345
        %1371 = vmatprep.subr.mxu0 0.0
        %1372 = vmatpush1.msra.mxu0 %v1346
        %1373 = vmatprep.subr.mxu0 0.0
        %1374 = vmatpush1.msra.mxu0 %v1347
        %1375 = vmatprep.subr.mxu0 0.0
        %1376 = vmatpush1.msra.mxu0 %v1348
        %1377 = vmatprep.subr.mxu0 0.0
        %1378 = vmatpush1.msra.mxu0 %v1349
        %1379 = vmatprep.subr.mxu0 0.0
        %1380 = vmatpush1.msra.mxu0 %v1350
        %1381 = vmatprep.subr.mxu0 0.0
        %1382 = vmatpush1.msra.mxu0 %v1351
        %1383 = vmatprep.subr.mxu0 0.0
        %1384 = vmatpush1.msra.mxu0 %v1352
        %1385 = vmatprep.subr.mxu0 0.0
        %1386 = vmatpush1.msra.mxu0 %v1353
        %1387 = vmatprep.subr.mxu0 0.0
        %1388 = vmatpush1.msra.mxu0 %v1354
        %1389 = vmatprep.subr.mxu0 0.0
        %1390 = vmatpush1.msra.mxu0 %v1355
        %1391 = vmatprep.subr.mxu0 0.0
        %1392 = vmatpush1.msra.mxu0 %v1356
        %1393 = vmatprep.subr.mxu0 0.0
        %1394 = vmatpush1.msra.mxu0 %v1357
        %1395 = vmatprep.subr.mxu0 0.0
        %1396 = vmatpush1.msra.mxu0 %v1358
        %1397 = vmatprep.subr.mxu0 0.0
        %1398 = vmatpush1.msra.mxu0 %v1359
        %1399 = vmatprep.subr.mxu0 0.0
        %1400 = vmatpush1.msra.mxu0 %v1360
        %1401 = vmatprep.subr.mxu0 0.0
        %1402 = vmatpush1.msra.mxu0 0.0
        %1403 = vmatprep.subr.mxu0 0.0
        %1404 = vmatpush1.msra.mxu0 0.0
        %1405 = vmatprep.subr.mxu0 0.0
        %1406 = vmatpush1.msra.mxu0 0.0
        %1407 = vmatprep.subr.mxu0 0.0
        %1408 = vmatpush1.msra.mxu0 0.0
        %1409 = vmatprep.subr.mxu0 0.0
        %1410 = vmatpush1.msra.mxu0 0.0
        %1411 = vmatprep.subr.mxu0 0.0
        %1412 = vmatpush1.msra.mxu0 0.0
        %1413 = vmatprep.subr.mxu0 0.0
        %1414 = vmatpush1.msra.mxu0 0.0
        %1415 = vmatprep.subr.mxu0 0.0
        %1416 = vmatpush1.msra.mxu0 0.0
        %1417 = vmatprep.subr.mxu0 0.0
        %1418 = vmatpush1.msra.mxu0 0.0
        %1419 = vmatprep.subr.mxu0 0.0
        %1420 = vmatpush1.msra.mxu0 0.0
        %1421 = vmatprep.subr.mxu0 0.0
        %1422 = vmatpush1.msra.mxu0 0.0
        %1423 = vmatprep.subr.mxu0 0.0
        %1424 = vmatpush1.msra.mxu0 0.0
        %1425 = vmatprep.subr.mxu0 0.0
        %1426 = vmatpush1.msra.mxu0 0.0
        %1427 = vmatprep.subr.mxu0 0.0
        %1428 = vmatpush1.msra.mxu0 0.0
        %1429 = vmatprep.subr.mxu0 0.0
        %1430 = vmatpush1.msra.mxu0 0.0
        %1431 = vmatprep.subr.mxu0 0.0
        %1432 = vmatpush1.msra.mxu0 0.0
        %1433 = vmatprep.mubr.f32.mxu0 0.0
        %1434 = vmatmul.mubr.f32.gmra.mrb[0].mxu0 %v1365
        %v1435 = vpop.f32.mrb[0].mxu0
        %v1436 = vadd.f32 0.0, %v1435
        %v1437 = vpop.f32.mrb[0].mxu0
        %1438 = vmatprep.mubr.f32.mxu0 0.0
        %1439 = vmatmul.mubr.f32.gmra.mrb[0].mxu0 %v1366
        %v1440 = vpop.f32.mrb[0].mxu0
        %v1441 = vadd.f32 0.0, %v1440
        %v1442 = vpop.f32.mrb[0].mxu0
        %1443 = vdwg.mxu0
        %v1444 = vadd.f32 %v1338, %v1436
        %v1445 = vadd.f32 %v1339, %v1441
        %v1446 = vld [vmem:[%s1233 + $0x2] sm:$0xf]
        %v1447 = vld [vmem:[%s1233 + $0xa] sm:$0xf]
        %v1448 = vld [vmem:[%s1233 + $0x12] sm:$0xf]
        %v1449 = vld [vmem:[%s1233 + $0x1a] sm:$0xf]
        %s1450 = scalar_lea.vmem %s575, 1024
        %v1451 = vld [vmem:[%s1450] sm:$0xff]
        %v1452 = vld [vmem:[%s1450 + $0x8] sm:$0xff]
        %v1453 = vld [vmem:[%s1450 + $0x10] sm:$0xff]
        %v1454 = vld [vmem:[%s1450 + $0x18] sm:$0xff]
        %v1455 = vld [vmem:[%s1450 + $0x20] sm:$0xff]
        %v1456 = vld [vmem:[%s1450 + $0x28] sm:$0xff]
        %v1457 = vld [vmem:[%s1450 + $0x30] sm:$0xff]
        %v1458 = vld [vmem:[%s1450 + $0x38] sm:$0xff]
        %v1459 = vld [vmem:[%s1450 + $0x40] sm:$0xff]
        %v1460 = vld [vmem:[%s1450 + $0x48] sm:$0xff]
        %v1461 = vld [vmem:[%s1450 + $0x50] sm:$0xff]
        %v1462 = vld [vmem:[%s1450 + $0x58] sm:$0xff]
        %v1463 = vld [vmem:[%s1450 + $0x60] sm:$0xff]
        %v1464 = vld [vmem:[%s1450 + $0x68] sm:$0xff]
        %v1465 = vld [vmem:[%s1450 + $0x70] sm:$0xff]
        %v1466 = vld [vmem:[%s1450 + $0x78] sm:$0xff]
        %v1471 = vcombine.low %v1446, %v1447
        %v1472 = vcombine.low %v1448, %v1449
        %1475 = vmatprep.subr.mxu0 0.0
        %1476 = vmatpush1.msra.mxu0 %v1451
        %1477 = vmatprep.subr.mxu0 0.0
        %1478 = vmatpush1.msra.mxu0 %v1452
        %1479 = vmatprep.subr.mxu0 0.0
        %1480 = vmatpush1.msra.mxu0 %v1453
        %1481 = vmatprep.subr.mxu0 0.0
        %1482 = vmatpush1.msra.mxu0 %v1454
        %1483 = vmatprep.subr.mxu0 0.0
        %1484 = vmatpush1.msra.mxu0 %v1455
        %1485 = vmatprep.subr.mxu0 0.0
        %1486 = vmatpush1.msra.mxu0 %v1456
        %1487 = vmatprep.subr.mxu0 0.0
        %1488 = vmatpush1.msra.mxu0 %v1457
        %1489 = vmatprep.subr.mxu0 0.0
        %1490 = vmatpush1.msra.mxu0 %v1458
        %1491 = vmatprep.subr.mxu0 0.0
        %1492 = vmatpush1.msra.mxu0 %v1459
        %1493 = vmatprep.subr.mxu0 0.0
        %1494 = vmatpush1.msra.mxu0 %v1460
        %1495 = vmatprep.subr.mxu0 0.0
        %1496 = vmatpush1.msra.mxu0 %v1461
        %1497 = vmatprep.subr.mxu0 0.0
        %1498 = vmatpush1.msra.mxu0 %v1462
        %1499 = vmatprep.subr.mxu0 0.0
        %1500 = vmatpush1.msra.mxu0 %v1463
        %1501 = vmatprep.subr.mxu0 0.0
        %1502 = vmatpush1.msra.mxu0 %v1464
        %1503 = vmatprep.subr.mxu0 0.0
        %1504 = vmatpush1.msra.mxu0 %v1465
        %1505 = vmatprep.subr.mxu0 0.0
        %1506 = vmatpush1.msra.mxu0 %v1466
        %1507 = vmatprep.subr.mxu0 0.0
        %1508 = vmatpush1.msra.mxu0 0.0
        %1509 = vmatprep.subr.mxu0 0.0
        %1510 = vmatpush1.msra.mxu0 0.0
        %1511 = vmatprep.subr.mxu0 0.0
        %1512 = vmatpush1.msra.mxu0 0.0
        %1513 = vmatprep.subr.mxu0 0.0
        %1514 = vmatpush1.msra.mxu0 0.0
        %1515 = vmatprep.subr.mxu0 0.0
        %1516 = vmatpush1.msra.mxu0 0.0
        %1517 = vmatprep.subr.mxu0 0.0
        %1518 = vmatpush1.msra.mxu0 0.0
        %1519 = vmatprep.subr.mxu0 0.0
        %1520 = vmatpush1.msra.mxu0 0.0
        %1521 = vmatprep.subr.mxu0 0.0
        %1522 = vmatpush1.msra.mxu0 0.0
        %1523 = vmatprep.subr.mxu0 0.0
        %1524 = vmatpush1.msra.mxu0 0.0
        %1525 = vmatprep.subr.mxu0 0.0
        %1526 = vmatpush1.msra.mxu0 0.0
        %1527 = vmatprep.subr.mxu0 0.0
        %1528 = vmatpush1.msra.mxu0 0.0
        %1529 = vmatprep.subr.mxu0 0.0
        %1530 = vmatpush1.msra.mxu0 0.0
        %1531 = vmatprep.subr.mxu0 0.0
        %1532 = vmatpush1.msra.mxu0 0.0
        %1533 = vmatprep.subr.mxu0 0.0
        %1534 = vmatpush1.msra.mxu0 0.0
        %1535 = vmatprep.subr.mxu0 0.0
        %1536 = vmatpush1.msra.mxu0 0.0
        %1537 = vmatprep.subr.mxu0 0.0
        %1538 = vmatpush1.msra.mxu0 0.0
        %1539 = vmatprep.mubr.f32.mxu0 0.0
        %1540 = vmatmul.mubr.f32.gmra.mrb[0].mxu0 %v1471
        %v1541 = vpop.f32.mrb[0].mxu0
        %v1542 = vadd.f32 0.0, %v1541
        %v1543 = vpop.f32.mrb[0].mxu0
        %1544 = vmatprep.mubr.f32.mxu0 0.0
        %1545 = vmatmul.mubr.f32.gmra.mrb[0].mxu0 %v1472
        %v1546 = vpop.f32.mrb[0].mxu0
        %v1547 = vadd.f32 0.0, %v1546
        %v1548 = vpop.f32.mrb[0].mxu0
        %1549 = vdwg.mxu0
        %v1550 = vadd.f32 %v1444, %v1542
        %v1551 = vadd.f32 %v1445, %v1547
        %v1552 = vld [vmem:[%s559] sm:$0xf]
        %v1553 = vld [vmem:[%s559 + $0x8] sm:$0xf]
        %v1554 = vld [vmem:[%s559 + $0x10] sm:$0xf]
        %v1555 = vld [vmem:[%s559 + $0x18] sm:$0xf]
        %s1556 = scalar_lea.vmem %s575, 1152
        %v1557 = vld [vmem:[%s1556] sm:$0xff]
        %v1558 = vld [vmem:[%s1556 + $0x8] sm:$0xff]
        %v1559 = vld [vmem:[%s1556 + $0x10] sm:$0xff]
        %v1560 = vld [vmem:[%s1556 + $0x18] sm:$0xff]
        %v1561 = vld [vmem:[%s1556 + $0x20] sm:$0xff]
        %v1562 = vld [vmem:[%s1556 + $0x28] sm:$0xff]
        %v1563 = vld [vmem:[%s1556 + $0x30] sm:$0xff]
        %v1564 = vld [vmem:[%s1556 + $0x38] sm:$0xff]
        %v1565 = vld [vmem:[%s1556 + $0x40] sm:$0xff]
        %v1566 = vld [vmem:[%s1556 + $0x48] sm:$0xff]
        %v1567 = vld [vmem:[%s1556 + $0x50] sm:$0xff]
        %v1568 = vld [vmem:[%s1556 + $0x58] sm:$0xff]
        %v1569 = vld [vmem:[%s1556 + $0x60] sm:$0xff]
        %v1570 = vld [vmem:[%s1556 + $0x68] sm:$0xff]
        %v1571 = vld [vmem:[%s1556 + $0x70] sm:$0xff]
        %v1572 = vld [vmem:[%s1556 + $0x78] sm:$0xff]
        %v1577 = vcombine.low %v1552, %v1553
        %v1578 = vcombine.low %v1554, %v1555
        %1581 = vmatprep.subr.mxu0 0.0
        %1582 = vmatpush1.msra.mxu0 %v1557
        %1583 = vmatprep.subr.mxu0 0.0
        %1584 = vmatpush1.msra.mxu0 %v1558
        %1585 = vmatprep.subr.mxu0 0.0
        %1586 = vmatpush1.msra.mxu0 %v1559
        %1587 = vmatprep.subr.mxu0 0.0
        %1588 = vmatpush1.msra.mxu0 %v1560
        %1589 = vmatprep.subr.mxu0 0.0
        %1590 = vmatpush1.msra.mxu0 %v1561
        %1591 = vmatprep.subr.mxu0 0.0
        %1592 = vmatpush1.msra.mxu0 %v1562
        %1593 = vmatprep.subr.mxu0 0.0
        %1594 = vmatpush1.msra.mxu0 %v1563
        %1595 = vmatprep.subr.mxu0 0.0
        %1596 = vmatpush1.msra.mxu0 %v1564
        %1597 = vmatprep.subr.mxu0 0.0
        %1598 = vmatpush1.msra.mxu0 %v1565
        %1599 = vmatprep.subr.mxu0 0.0
        %1600 = vmatpush1.msra.mxu0 %v1566
        %1601 = vmatprep.subr.mxu0 0.0
        %1602 = vmatpush1.msra.mxu0 %v1567
        %1603 = vmatprep.subr.mxu0 0.0
        %1604 = vmatpush1.msra.mxu0 %v1568
        %1605 = vmatprep.subr.mxu0 0.0
        %1606 = vmatpush1.msra.mxu0 %v1569
        %1607 = vmatprep.subr.mxu0 0.0
        %1608 = vmatpush1.msra.mxu0 %v1570
        %1609 = vmatprep.subr.mxu0 0.0
        %1610 = vmatpush1.msra.mxu0 %v1571
        %1611 = vmatprep.subr.mxu0 0.0
        %1612 = vmatpush1.msra.mxu0 %v1572
        %1613 = vmatprep.subr.mxu0 0.0
        %1614 = vmatpush1.msra.mxu0 0.0
        %1615 = vmatprep.subr.mxu0 0.0
        %1616 = vmatpush1.msra.mxu0 0.0
        %1617 = vmatprep.subr.mxu0 0.0
        %1618 = vmatpush1.msra.mxu0 0.0
        %1619 = vmatprep.subr.mxu0 0.0
        %1620 = vmatpush1.msra.mxu0 0.0
        %1621 = vmatprep.subr.mxu0 0.0
        %1622 = vmatpush1.msra.mxu0 0.0
        %1623 = vmatprep.subr.mxu0 0.0
        %1624 = vmatpush1.msra.mxu0 0.0
        %1625 = vmatprep.subr.mxu0 0.0
        %1626 = vmatpush1.msra.mxu0 0.0
        %1627 = vmatprep.subr.mxu0 0.0
        %1628 = vmatpush1.msra.mxu0 0.0
        %1629 = vmatprep.subr.mxu0 0.0
        %1630 = vmatpush1.msra.mxu0 0.0
        %1631 = vmatprep.subr.mxu0 0.0
        %1632 = vmatpush1.msra.mxu0 0.0
        %1633 = vmatprep.subr.mxu0 0.0
        %1634 = vmatpush1.msra.mxu0 0.0
        %1635 = vmatprep.subr.mxu0 0.0
        %1636 = vmatpush1.msra.mxu0 0.0
        %1637 = vmatprep.subr.mxu0 0.0
        %1638 = vmatpush1.msra.mxu0 0.0
        %1639 = vmatprep.subr.mxu0 0.0
        %1640 = vmatpush1.msra.mxu0 0.0
        %1641 = vmatprep.subr.mxu0 0.0
        %1642 = vmatpush1.msra.mxu0 0.0
        %1643 = vmatprep.subr.mxu0 0.0
        %1644 = vmatpush1.msra.mxu0 0.0
        %1645 = vmatprep.mubr.f32.mxu0 0.0
        %1646 = vmatmul.mubr.f32.gmra.mrb[0].mxu0 %v1577
        %v1647 = vpop.f32.mrb[0].mxu0
        %v1648 = vadd.f32 0.0, %v1647
        %v1649 = vpop.f32.mrb[0].mxu0
        %1650 = vmatprep.mubr.f32.mxu0 0.0
        %1651 = vmatmul.mubr.f32.gmra.mrb[0].mxu0 %v1578
        %v1652 = vpop.f32.mrb[0].mxu0
        %v1653 = vadd.f32 0.0, %v1652
        %v1654 = vpop.f32.mrb[0].mxu0
        %1655 = vdwg.mxu0
        %v1656 = vadd.f32 %v1550, %v1648
        %v1657 = vadd.f32 %v1551, %v1653
        %v1658 = vld [vmem:[%s559 + $0x1] sm:$0xf]
        %v1659 = vld [vmem:[%s559 + $0x9] sm:$0xf]
        %v1660 = vld [vmem:[%s559 + $0x11] sm:$0xf]
        %v1661 = vld [vmem:[%s559 + $0x19] sm:$0xf]
        %s1662 = scalar_lea.vmem %s575, 1280
        %v1663 = vld [vmem:[%s1662] sm:$0xff]
        %v1664 = vld [vmem:[%s1662 + $0x8] sm:$0xff]
        %v1665 = vld [vmem:[%s1662 + $0x10] sm:$0xff]
        %v1666 = vld [vmem:[%s1662 + $0x18] sm:$0xff]
        %v1667 = vld [vmem:[%s1662 + $0x20] sm:$0xff]
        %v1668 = vld [vmem:[%s1662 + $0x28] sm:$0xff]
        %v1669 = vld [vmem:[%s1662 + $0x30] sm:$0xff]
        %v1670 = vld [vmem:[%s1662 + $0x38] sm:$0xff]
        %v1671 = vld [vmem:[%s1662 + $0x40] sm:$0xff]
        %v1672 = vld [vmem:[%s1662 + $0x48] sm:$0xff]
        %v1673 = vld [vmem:[%s1662 + $0x50] sm:$0xff]
        %v1674 = vld [vmem:[%s1662 + $0x58] sm:$0xff]
        %v1675 = vld [vmem:[%s1662 + $0x60] sm:$0xff]
        %v1676 = vld [vmem:[%s1662 + $0x68] sm:$0xff]
        %v1677 = vld [vmem:[%s1662 + $0x70] sm:$0xff]
        %v1678 = vld [vmem:[%s1662 + $0x78] sm:$0xff]
        %v1683 = vcombine.low %v1658, %v1659
        %v1684 = vcombine.low %v1660, %v1661
        %1687 = vmatprep.subr.mxu0 0.0
        %1688 = vmatpush1.msra.mxu0 %v1663
        %1689 = vmatprep.subr.mxu0 0.0
        %1690 = vmatpush1.msra.mxu0 %v1664
        %1691 = vmatprep.subr.mxu0 0.0
        %1692 = vmatpush1.msra.mxu0 %v1665
        %1693 = vmatprep.subr.mxu0 0.0
        %1694 = vmatpush1.msra.mxu0 %v1666
        %1695 = vmatprep.subr.mxu0 0.0
        %1696 = vmatpush1.msra.mxu0 %v1667
        %1697 = vmatprep.subr.mxu0 0.0
        %1698 = vmatpush1.msra.mxu0 %v1668
        %1699 = vmatprep.subr.mxu0 0.0
        %1700 = vmatpush1.msra.mxu0 %v1669
        %1701 = vmatprep.subr.mxu0 0.0
        %1702 = vmatpush1.msra.mxu0 %v1670
        %1703 = vmatprep.subr.mxu0 0.0
        %1704 = vmatpush1.msra.mxu0 %v1671
        %1705 = vmatprep.subr.mxu0 0.0
        %1706 = vmatpush1.msra.mxu0 %v1672
        %1707 = vmatprep.subr.mxu0 0.0
        %1708 = vmatpush1.msra.mxu0 %v1673
        %1709 = vmatprep.subr.mxu0 0.0
        %1710 = vmatpush1.msra.mxu0 %v1674
        %1711 = vmatprep.subr.mxu0 0.0
        %1712 = vmatpush1.msra.mxu0 %v1675
        %1713 = vmatprep.subr.mxu0 0.0
        %1714 = vmatpush1.msra.mxu0 %v1676
        %1715 = vmatprep.subr.mxu0 0.0
        %1716 = vmatpush1.msra.mxu0 %v1677
        %1717 = vmatprep.subr.mxu0 0.0
        %1718 = vmatpush1.msra.mxu0 %v1678
        %1719 = vmatprep.subr.mxu0 0.0
        %1720 = vmatpush1.msra.mxu0 0.0
        %1721 = vmatprep.subr.mxu0 0.0
        %1722 = vmatpush1.msra.mxu0 0.0
        %1723 = vmatprep.subr.mxu0 0.0
        %1724 = vmatpush1.msra.mxu0 0.0
        %1725 = vmatprep.subr.mxu0 0.0
        %1726 = vmatpush1.msra.mxu0 0.0
        %1727 = vmatprep.subr.mxu0 0.0
        %1728 = vmatpush1.msra.mxu0 0.0
        %1729 = vmatprep.subr.mxu0 0.0
        %1730 = vmatpush1.msra.mxu0 0.0
        %1731 = vmatprep.subr.mxu0 0.0
        %1732 = vmatpush1.msra.mxu0 0.0
        %1733 = vmatprep.subr.mxu0 0.0
        %1734 = vmatpush1.msra.mxu0 0.0
        %1735 = vmatprep.subr.mxu0 0.0
        %1736 = vmatpush1.msra.mxu0 0.0
        %1737 = vmatprep.subr.mxu0 0.0
        %1738 = vmatpush1.msra.mxu0 0.0
        %1739 = vmatprep.subr.mxu0 0.0
        %1740 = vmatpush1.msra.mxu0 0.0
        %1741 = vmatprep.subr.mxu0 0.0
        %1742 = vmatpush1.msra.mxu0 0.0
        %1743 = vmatprep.subr.mxu0 0.0
        %1744 = vmatpush1.msra.mxu0 0.0
        %1745 = vmatprep.subr.mxu0 0.0
        %1746 = vmatpush1.msra.mxu0 0.0
        %1747 = vmatprep.subr.mxu0 0.0
        %1748 = vmatpush1.msra.mxu0 0.0
        %1749 = vmatprep.subr.mxu0 0.0
        %1750 = vmatpush1.msra.mxu0 0.0
        %1751 = vmatprep.mubr.f32.mxu0 0.0
        %1752 = vmatmul.mubr.f32.gmra.mrb[0].mxu0 %v1683
        %v1753 = vpop.f32.mrb[0].mxu0
        %v1754 = vadd.f32 0.0, %v1753
        %v1755 = vpop.f32.mrb[0].mxu0
        %1756 = vmatprep.mubr.f32.mxu0 0.0
        %1757 = vmatmul.mubr.f32.gmra.mrb[0].mxu0 %v1684
        %v1758 = vpop.f32.mrb[0].mxu0
        %v1759 = vadd.f32 0.0, %v1758
        %v1760 = vpop.f32.mrb[0].mxu0
        %1761 = vdwg.mxu0
        %v1762 = vadd.f32 %v1656, %v1754
        %v1763 = vadd.f32 %v1657, %v1759
        %v1764 = vld [vmem:[%s559 + $0x2] sm:$0xf]
        %v1765 = vld [vmem:[%s559 + $0xa] sm:$0xf]
        %v1766 = vld [vmem:[%s559 + $0x12] sm:$0xf]
        %v1767 = vld [vmem:[%s559 + $0x1a] sm:$0xf]
        %s1768 = scalar_lea.vmem %s575, 1408
        %v1769 = vld [vmem:[%s1768] sm:$0xff]
        %v1770 = vld [vmem:[%s1768 + $0x8] sm:$0xff]
        %v1771 = vld [vmem:[%s1768 + $0x10] sm:$0xff]
        %v1772 = vld [vmem:[%s1768 + $0x18] sm:$0xff]
        %v1773 = vld [vmem:[%s1768 + $0x20] sm:$0xff]
        %v1774 = vld [vmem:[%s1768 + $0x28] sm:$0xff]
        %v1775 = vld [vmem:[%s1768 + $0x30] sm:$0xff]
        %v1776 = vld [vmem:[%s1768 + $0x38] sm:$0xff]
        %v1777 = vld [vmem:[%s1768 + $0x40] sm:$0xff]
        %v1778 = vld [vmem:[%s1768 + $0x48] sm:$0xff]
        %v1779 = vld [vmem:[%s1768 + $0x50] sm:$0xff]
        %v1780 = vld [vmem:[%s1768 + $0x58] sm:$0xff]
        %v1781 = vld [vmem:[%s1768 + $0x60] sm:$0xff]
        %v1782 = vld [vmem:[%s1768 + $0x68] sm:$0xff]
        %v1783 = vld [vmem:[%s1768 + $0x70] sm:$0xff]
        %v1784 = vld [vmem:[%s1768 + $0x78] sm:$0xff]
        %v1789 = vcombine.low %v1764, %v1765
        %v1790 = vcombine.low %v1766, %v1767
        %1793 = vmatprep.subr.mxu0 0.0
        %1794 = vmatpush1.msra.mxu0 %v1769
        %1795 = vmatprep.subr.mxu0 0.0
        %1796 = vmatpush1.msra.mxu0 %v1770
        %1797 = vmatprep.subr.mxu0 0.0
        %1798 = vmatpush1.msra.mxu0 %v1771
        %1799 = vmatprep.subr.mxu0 0.0
        %1800 = vmatpush1.msra.mxu0 %v1772
        %1801 = vmatprep.subr.mxu0 0.0
        %1802 = vmatpush1.msra.mxu0 %v1773
        %1803 = vmatprep.subr.mxu0 0.0
        %1804 = vmatpush1.msra.mxu0 %v1774
        %1805 = vmatprep.subr.mxu0 0.0
        %1806 = vmatpush1.msra.mxu0 %v1775
        %1807 = vmatprep.subr.mxu0 0.0
        %1808 = vmatpush1.msra.mxu0 %v1776
        %1809 = vmatprep.subr.mxu0 0.0
        %1810 = vmatpush1.msra.mxu0 %v1777
        %1811 = vmatprep.subr.mxu0 0.0
        %1812 = vmatpush1.msra.mxu0 %v1778
        %1813 = vmatprep.subr.mxu0 0.0
        %1814 = vmatpush1.msra.mxu0 %v1779
        %1815 = vmatprep.subr.mxu0 0.0
        %1816 = vmatpush1.msra.mxu0 %v1780
        %1817 = vmatprep.subr.mxu0 0.0
        %1818 = vmatpush1.msra.mxu0 %v1781
        %1819 = vmatprep.subr.mxu0 0.0
        %1820 = vmatpush1.msra.mxu0 %v1782
        %1821 = vmatprep.subr.mxu0 0.0
        %1822 = vmatpush1.msra.mxu0 %v1783
        %1823 = vmatprep.subr.mxu0 0.0
        %1824 = vmatpush1.msra.mxu0 %v1784
        %1825 = vmatprep.subr.mxu0 0.0
        %1826 = vmatpush1.msra.mxu0 0.0
        %1827 = vmatprep.subr.mxu0 0.0
        %1828 = vmatpush1.msra.mxu0 0.0
        %1829 = vmatprep.subr.mxu0 0.0
        %1830 = vmatpush1.msra.mxu0 0.0
        %1831 = vmatprep.subr.mxu0 0.0
        %1832 = vmatpush1.msra.mxu0 0.0
        %1833 = vmatprep.subr.mxu0 0.0
        %1834 = vmatpush1.msra.mxu0 0.0
        %1835 = vmatprep.subr.mxu0 0.0
        %1836 = vmatpush1.msra.mxu0 0.0
        %1837 = vmatprep.subr.mxu0 0.0
        %1838 = vmatpush1.msra.mxu0 0.0
        %1839 = vmatprep.subr.mxu0 0.0
        %1840 = vmatpush1.msra.mxu0 0.0
        %1841 = vmatprep.subr.mxu0 0.0
        %1842 = vmatpush1.msra.mxu0 0.0
        %1843 = vmatprep.subr.mxu0 0.0
        %1844 = vmatpush1.msra.mxu0 0.0
        %1845 = vmatprep.subr.mxu0 0.0
        %1846 = vmatpush1.msra.mxu0 0.0
        %1847 = vmatprep.subr.mxu0 0.0
        %1848 = vmatpush1.msra.mxu0 0.0
        %1849 = vmatprep.subr.mxu0 0.0
        %1850 = vmatpush1.msra.mxu0 0.0
        %1851 = vmatprep.subr.mxu0 0.0
        %1852 = vmatpush1.msra.mxu0 0.0
        %1853 = vmatprep.subr.mxu0 0.0
        %1854 = vmatpush1.msra.mxu0 0.0
        %1855 = vmatprep.subr.mxu0 0.0
        %1856 = vmatpush1.msra.mxu0 0.0
        %1857 = vmatprep.mubr.f32.mxu0 0.0
        %1858 = vmatmul.mubr.f32.gmra.mrb[0].mxu0 %v1789
        %v1859 = vpop.f32.mrb[0].mxu0
        %v1860 = vadd.f32 0.0, %v1859
        %v1861 = vpop.f32.mrb[0].mxu0
        %1862 = vmatprep.mubr.f32.mxu0 0.0
        %1863 = vmatmul.mubr.f32.gmra.mrb[0].mxu0 %v1790
        %v1864 = vpop.f32.mrb[0].mxu0
        %v1865 = vadd.f32 0.0, %v1864
        %v1866 = vpop.f32.mrb[0].mxu0
        %1867 = vdwg.mxu0
        %v1868 = vadd.f32 %v1762, %v1860
        %v1869 = vadd.f32 %v1763, %v1865
        %s1870 = scalar_lea.vmem %s559, 8
        %v1871 = vld [vmem:[%s1870] sm:$0xf]
        %v1872 = vld [vmem:[%s1870 + $0x8] sm:$0xf]
        %v1873 = vld [vmem:[%s1870 + $0x10] sm:$0xf]
        %v1874 = vld [vmem:[%s1870 + $0x18] sm:$0xf]
        %s1875 = scalar_lea.vmem %s575, 1536
        %v1876 = vld [vmem:[%s1875] sm:$0xff]
        %v1877 = vld [vmem:[%s1875 + $0x8] sm:$0xff]
        %v1878 = vld [vmem:[%s1875 + $0x10] sm:$0xff]
        %v1879 = vld [vmem:[%s1875 + $0x18] sm:$0xff]
        %v1880 = vld [vmem:[%s1875 + $0x20] sm:$0xff]
        %v1881 = vld [vmem:[%s1875 + $0x28] sm:$0xff]
        %v1882 = vld [vmem:[%s1875 + $0x30] sm:$0xff]
        %v1883 = vld [vmem:[%s1875 + $0x38] sm:$0xff]
        %v1884 = vld [vmem:[%s1875 + $0x40] sm:$0xff]
        %v1885 = vld [vmem:[%s1875 + $0x48] sm:$0xff]
        %v1886 = vld [vmem:[%s1875 + $0x50] sm:$0xff]
        %v1887 = vld [vmem:[%s1875 + $0x58] sm:$0xff]
        %v1888 = vld [vmem:[%s1875 + $0x60] sm:$0xff]
        %v1889 = vld [vmem:[%s1875 + $0x68] sm:$0xff]
        %v1890 = vld [vmem:[%s1875 + $0x70] sm:$0xff]
        %v1891 = vld [vmem:[%s1875 + $0x78] sm:$0xff]
        %v1896 = vcombine.low %v1871, %v1872
        %v1897 = vcombine.low %v1873, %v1874
        %1900 = vmatprep.subr.mxu0 0.0
        %1901 = vmatpush1.msra.mxu0 %v1876
        %1902 = vmatprep.subr.mxu0 0.0
        %1903 = vmatpush1.msra.mxu0 %v1877
        %1904 = vmatprep.subr.mxu0 0.0
        %1905 = vmatpush1.msra.mxu0 %v1878
        %1906 = vmatprep.subr.mxu0 0.0
        %1907 = vmatpush1.msra.mxu0 %v1879
        %1908 = vmatprep.subr.mxu0 0.0
        %1909 = vmatpush1.msra.mxu0 %v1880
        %1910 = vmatprep.subr.mxu0 0.0
        %1911 = vmatpush1.msra.mxu0 %v1881
        %1912 = vmatprep.subr.mxu0 0.0
        %1913 = vmatpush1.msra.mxu0 %v1882
        %1914 = vmatprep.subr.mxu0 0.0
        %1915 = vmatpush1.msra.mxu0 %v1883
        %1916 = vmatprep.subr.mxu0 0.0
        %1917 = vmatpush1.msra.mxu0 %v1884
        %1918 = vmatprep.subr.mxu0 0.0
        %1919 = vmatpush1.msra.mxu0 %v1885
        %1920 = vmatprep.subr.mxu0 0.0
        %1921 = vmatpush1.msra.mxu0 %v1886
        %1922 = vmatprep.subr.mxu0 0.0
        %1923 = vmatpush1.msra.mxu0 %v1887
        %1924 = vmatprep.subr.mxu0 0.0
        %1925 = vmatpush1.msra.mxu0 %v1888
        %1926 = vmatprep.subr.mxu0 0.0
        %1927 = vmatpush1.msra.mxu0 %v1889
        %1928 = vmatprep.subr.mxu0 0.0
        %1929 = vmatpush1.msra.mxu0 %v1890
        %1930 = vmatprep.subr.mxu0 0.0
        %1931 = vmatpush1.msra.mxu0 %v1891
        %1932 = vmatprep.subr.mxu0 0.0
        %1933 = vmatpush1.msra.mxu0 0.0
        %1934 = vmatprep.subr.mxu0 0.0
        %1935 = vmatpush1.msra.mxu0 0.0
        %1936 = vmatprep.subr.mxu0 0.0
        %1937 = vmatpush1.msra.mxu0 0.0
        %1938 = vmatprep.subr.mxu0 0.0
        %1939 = vmatpush1.msra.mxu0 0.0
        %1940 = vmatprep.subr.mxu0 0.0
        %1941 = vmatpush1.msra.mxu0 0.0
        %1942 = vmatprep.subr.mxu0 0.0
        %1943 = vmatpush1.msra.mxu0 0.0
        %1944 = vmatprep.subr.mxu0 0.0
        %1945 = vmatpush1.msra.mxu0 0.0
        %1946 = vmatprep.subr.mxu0 0.0
        %1947 = vmatpush1.msra.mxu0 0.0
        %1948 = vmatprep.subr.mxu0 0.0
        %1949 = vmatpush1.msra.mxu0 0.0
        %1950 = vmatprep.subr.mxu0 0.0
        %1951 = vmatpush1.msra.mxu0 0.0
        %1952 = vmatprep.subr.mxu0 0.0
        %1953 = vmatpush1.msra.mxu0 0.0
        %1954 = vmatprep.subr.mxu0 0.0
        %1955 = vmatpush1.msra.mxu0 0.0
        %1956 = vmatprep.subr.mxu0 0.0
        %1957 = vmatpush1.msra.mxu0 0.0
        %1958 = vmatprep.subr.mxu0 0.0
        %1959 = vmatpush1.msra.mxu0 0.0
        %1960 = vmatprep.subr.mxu0 0.0
        %1961 = vmatpush1.msra.mxu0 0.0
        %1962 = vmatprep.subr.mxu0 0.0
        %1963 = vmatpush1.msra.mxu0 0.0
        %1964 = vmatprep.mubr.f32.mxu0 0.0
        %1965 = vmatmul.mubr.f32.gmra.mrb[0].mxu0 %v1896
        %v1966 = vpop.f32.mrb[0].mxu0
        %v1967 = vadd.f32 0.0, %v1966
        %v1968 = vpop.f32.mrb[0].mxu0
        %1969 = vmatprep.mubr.f32.mxu0 0.0
        %1970 = vmatmul.mubr.f32.gmra.mrb[0].mxu0 %v1897
        %v1971 = vpop.f32.mrb[0].mxu0
        %v1972 = vadd.f32 0.0, %v1971
        %v1973 = vpop.f32.mrb[0].mxu0
        %1974 = vdwg.mxu0
        %v1975 = vadd.f32 %v1868, %v1967
        %v1976 = vadd.f32 %v1869, %v1972
        %v1977 = vld [vmem:[%s1870 + $0x1] sm:$0xf]
        %v1978 = vld [vmem:[%s1870 + $0x9] sm:$0xf]
        %v1979 = vld [vmem:[%s1870 + $0x11] sm:$0xf]
        %v1980 = vld [vmem:[%s1870 + $0x19] sm:$0xf]
        %s1981 = scalar_lea.vmem %s575, 1664
        %v1982 = vld [vmem:[%s1981] sm:$0xff]
        %v1983 = vld [vmem:[%s1981 + $0x8] sm:$0xff]
        %v1984 = vld [vmem:[%s1981 + $0x10] sm:$0xff]
        %v1985 = vld [vmem:[%s1981 + $0x18] sm:$0xff]
        %v1986 = vld [vmem:[%s1981 + $0x20] sm:$0xff]
        %v1987 = vld [vmem:[%s1981 + $0x28] sm:$0xff]
        %v1988 = vld [vmem:[%s1981 + $0x30] sm:$0xff]
        %v1989 = vld [vmem:[%s1981 + $0x38] sm:$0xff]
        %v1990 = vld [vmem:[%s1981 + $0x40] sm:$0xff]
        %v1991 = vld [vmem:[%s1981 + $0x48] sm:$0xff]
        %v1992 = vld [vmem:[%s1981 + $0x50] sm:$0xff]
        %v1993 = vld [vmem:[%s1981 + $0x58] sm:$0xff]
        %v1994 = vld [vmem:[%s1981 + $0x60] sm:$0xff]
        %v1995 = vld [vmem:[%s1981 + $0x68] sm:$0xff]
        %v1996 = vld [vmem:[%s1981 + $0x70] sm:$0xff]
        %v1997 = vld [vmem:[%s1981 + $0x78] sm:$0xff]
        %v2002 = vcombine.low %v1977, %v1978
        %v2003 = vcombine.low %v1979, %v1980
        %2006 = vmatprep.subr.mxu0 0.0
        %2007 = vmatpush1.msra.mxu0 %v1982
        %2008 = vmatprep.subr.mxu0 0.0
        %2009 = vmatpush1.msra.mxu0 %v1983
        %2010 = vmatprep.subr.mxu0 0.0
        %2011 = vmatpush1.msra.mxu0 %v1984
        %2012 = vmatprep.subr.mxu0 0.0
        %2013 = vmatpush1.msra.mxu0 %v1985
        %2014 = vmatprep.subr.mxu0 0.0
        %2015 = vmatpush1.msra.mxu0 %v1986
        %2016 = vmatprep.subr.mxu0 0.0
        %2017 = vmatpush1.msra.mxu0 %v1987
        %2018 = vmatprep.subr.mxu0 0.0
        %2019 = vmatpush1.msra.mxu0 %v1988
        %2020 = vmatprep.subr.mxu0 0.0
        %2021 = vmatpush1.msra.mxu0 %v1989
        %2022 = vmatprep.subr.mxu0 0.0
        %2023 = vmatpush1.msra.mxu0 %v1990
        %2024 = vmatprep.subr.mxu0 0.0
        %2025 = vmatpush1.msra.mxu0 %v1991
        %2026 = vmatprep.subr.mxu0 0.0
        %2027 = vmatpush1.msra.mxu0 %v1992
        %2028 = vmatprep.subr.mxu0 0.0
        %2029 = vmatpush1.msra.mxu0 %v1993
        %2030 = vmatprep.subr.mxu0 0.0
        %2031 = vmatpush1.msra.mxu0 %v1994
        %2032 = vmatprep.subr.mxu0 0.0
        %2033 = vmatpush1.msra.mxu0 %v1995
        %2034 = vmatprep.subr.mxu0 0.0
        %2035 = vmatpush1.msra.mxu0 %v1996
        %2036 = vmatprep.subr.mxu0 0.0
        %2037 = vmatpush1.msra.mxu0 %v1997
        %2038 = vmatprep.subr.mxu0 0.0
        %2039 = vmatpush1.msra.mxu0 0.0
        %2040 = vmatprep.subr.mxu0 0.0
        %2041 = vmatpush1.msra.mxu0 0.0
        %2042 = vmatprep.subr.mxu0 0.0
        %2043 = vmatpush1.msra.mxu0 0.0
        %2044 = vmatprep.subr.mxu0 0.0
        %2045 = vmatpush1.msra.mxu0 0.0
        %2046 = vmatprep.subr.mxu0 0.0
        %2047 = vmatpush1.msra.mxu0 0.0
        %2048 = vmatprep.subr.mxu0 0.0
        %2049 = vmatpush1.msra.mxu0 0.0
        %2050 = vmatprep.subr.mxu0 0.0
        %2051 = vmatpush1.msra.mxu0 0.0
        %2052 = vmatprep.subr.mxu0 0.0
        %2053 = vmatpush1.msra.mxu0 0.0
        %2054 = vmatprep.subr.mxu0 0.0
        %2055 = vmatpush1.msra.mxu0 0.0
        %2056 = vmatprep.subr.mxu0 0.0
        %2057 = vmatpush1.msra.mxu0 0.0
        %2058 = vmatprep.subr.mxu0 0.0
        %2059 = vmatpush1.msra.mxu0 0.0
        %2060 = vmatprep.subr.mxu0 0.0
        %2061 = vmatpush1.msra.mxu0 0.0
        %2062 = vmatprep.subr.mxu0 0.0
        %2063 = vmatpush1.msra.mxu0 0.0
        %2064 = vmatprep.subr.mxu0 0.0
        %2065 = vmatpush1.msra.mxu0 0.0
        %2066 = vmatprep.subr.mxu0 0.0
        %2067 = vmatpush1.msra.mxu0 0.0
        %2068 = vmatprep.subr.mxu0 0.0
        %2069 = vmatpush1.msra.mxu0 0.0
        %2070 = vmatprep.mubr.f32.mxu0 0.0
        %2071 = vmatmul.mubr.f32.gmra.mrb[0].mxu0 %v2002
        %v2072 = vpop.f32.mrb[0].mxu0
        %v2073 = vadd.f32 0.0, %v2072
        %v2074 = vpop.f32.mrb[0].mxu0
        %2075 = vmatprep.mubr.f32.mxu0 0.0
        %2076 = vmatmul.mubr.f32.gmra.mrb[0].mxu0 %v2003
        %v2077 = vpop.f32.mrb[0].mxu0
        %v2078 = vadd.f32 0.0, %v2077
        %v2079 = vpop.f32.mrb[0].mxu0
        %2080 = vdwg.mxu0
        %v2081 = vadd.f32 %v1975, %v2073
        %v2082 = vadd.f32 %v1976, %v2078
        %v2083 = vld [vmem:[%s1870 + $0x2] sm:$0xf]
        %v2084 = vld [vmem:[%s1870 + $0xa] sm:$0xf]
        %v2085 = vld [vmem:[%s1870 + $0x12] sm:$0xf]
        %v2086 = vld [vmem:[%s1870 + $0x1a] sm:$0xf]
        %s2087 = scalar_lea.vmem %s575, 1792
        %v2088 = vld [vmem:[%s2087] sm:$0xff]
        %v2089 = vld [vmem:[%s2087 + $0x8] sm:$0xff]
        %v2090 = vld [vmem:[%s2087 + $0x10] sm:$0xff]
        %v2091 = vld [vmem:[%s2087 + $0x18] sm:$0xff]
        %v2092 = vld [vmem:[%s2087 + $0x20] sm:$0xff]
        %v2093 = vld [vmem:[%s2087 + $0x28] sm:$0xff]
        %v2094 = vld [vmem:[%s2087 + $0x30] sm:$0xff]
        %v2095 = vld [vmem:[%s2087 + $0x38] sm:$0xff]
        %v2096 = vld [vmem:[%s2087 + $0x40] sm:$0xff]
        %v2097 = vld [vmem:[%s2087 + $0x48] sm:$0xff]
        %v2098 = vld [vmem:[%s2087 + $0x50] sm:$0xff]
        %v2099 = vld [vmem:[%s2087 + $0x58] sm:$0xff]
        %v2100 = vld [vmem:[%s2087 + $0x60] sm:$0xff]
        %v2101 = vld [vmem:[%s2087 + $0x68] sm:$0xff]
        %v2102 = vld [vmem:[%s2087 + $0x70] sm:$0xff]
        %v2103 = vld [vmem:[%s2087 + $0x78] sm:$0xff]
        %v2108 = vcombine.low %v2083, %v2084
        %v2109 = vcombine.low %v2085, %v2086
        %2112 = vmatprep.subr.mxu0 0.0
        %2113 = vmatpush1.msra.mxu0 %v2088
        %2114 = vmatprep.subr.mxu0 0.0
        %2115 = vmatpush1.msra.mxu0 %v2089
        %2116 = vmatprep.subr.mxu0 0.0
        %2117 = vmatpush1.msra.mxu0 %v2090
        %2118 = vmatprep.subr.mxu0 0.0
        %2119 = vmatpush1.msra.mxu0 %v2091
        %2120 = vmatprep.subr.mxu0 0.0
        %2121 = vmatpush1.msra.mxu0 %v2092
        %2122 = vmatprep.subr.mxu0 0.0
        %2123 = vmatpush1.msra.mxu0 %v2093
        %2124 = vmatprep.subr.mxu0 0.0
        %2125 = vmatpush1.msra.mxu0 %v2094
        %2126 = vmatprep.subr.mxu0 0.0
        %2127 = vmatpush1.msra.mxu0 %v2095
        %2128 = vmatprep.subr.mxu0 0.0
        %2129 = vmatpush1.msra.mxu0 %v2096
        %2130 = vmatprep.subr.mxu0 0.0
        %2131 = vmatpush1.msra.mxu0 %v2097
        %2132 = vmatprep.subr.mxu0 0.0
        %2133 = vmatpush1.msra.mxu0 %v2098
        %2134 = vmatprep.subr.mxu0 0.0
        %2135 = vmatpush1.msra.mxu0 %v2099
        %2136 = vmatprep.subr.mxu0 0.0
        %2137 = vmatpush1.msra.mxu0 %v2100
        %2138 = vmatprep.subr.mxu0 0.0
        %2139 = vmatpush1.msra.mxu0 %v2101
        %2140 = vmatprep.subr.mxu0 0.0
        %2141 = vmatpush1.msra.mxu0 %v2102
        %2142 = vmatprep.subr.mxu0 0.0
        %2143 = vmatpush1.msra.mxu0 %v2103
        %2144 = vmatprep.subr.mxu0 0.0
        %2145 = vmatpush1.msra.mxu0 0.0
        %2146 = vmatprep.subr.mxu0 0.0
        %2147 = vmatpush1.msra.mxu0 0.0
        %2148 = vmatprep.subr.mxu0 0.0
        %2149 = vmatpush1.msra.mxu0 0.0
        %2150 = vmatprep.subr.mxu0 0.0
        %2151 = vmatpush1.msra.mxu0 0.0
        %2152 = vmatprep.subr.mxu0 0.0
        %2153 = vmatpush1.msra.mxu0 0.0
        %2154 = vmatprep.subr.mxu0 0.0
        %2155 = vmatpush1.msra.mxu0 0.0
        %2156 = vmatprep.subr.mxu0 0.0
        %2157 = vmatpush1.msra.mxu0 0.0
        %2158 = vmatprep.subr.mxu0 0.0
        %2159 = vmatpush1.msra.mxu0 0.0
        %2160 = vmatprep.subr.mxu0 0.0
        %2161 = vmatpush1.msra.mxu0 0.0
        %2162 = vmatprep.subr.mxu0 0.0
        %2163 = vmatpush1.msra.mxu0 0.0
        %2164 = vmatprep.subr.mxu0 0.0
        %2165 = vmatpush1.msra.mxu0 0.0
        %2166 = vmatprep.subr.mxu0 0.0
        %2167 = vmatpush1.msra.mxu0 0.0
        %2168 = vmatprep.subr.mxu0 0.0
        %2169 = vmatpush1.msra.mxu0 0.0
        %2170 = vmatprep.subr.mxu0 0.0
        %2171 = vmatpush1.msra.mxu0 0.0
        %2172 = vmatprep.subr.mxu0 0.0
        %2173 = vmatpush1.msra.mxu0 0.0
        %2174 = vmatprep.subr.mxu0 0.0
        %2175 = vmatpush1.msra.mxu0 0.0
        %2176 = vmatprep.mubr.f32.mxu0 0.0
        %2177 = vmatmul.mubr.f32.gmra.mrb[0].mxu0 %v2108
        %v2178 = vpop.f32.mrb[0].mxu0
        %v2179 = vadd.f32 0.0, %v2178
        %v2180 = vpop.f32.mrb[0].mxu0
        %2181 = vmatprep.mubr.f32.mxu0 0.0
        %2182 = vmatmul.mubr.f32.gmra.mrb[0].mxu0 %v2109
        %v2183 = vpop.f32.mrb[0].mxu0
        %v2184 = vadd.f32 0.0, %v2183
        %v2185 = vpop.f32.mrb[0].mxu0
        %2186 = vdwg.mxu0
        %v2187 = vadd.f32 %v2081, %v2179
        %v2188 = vadd.f32 %v2082, %v2184
        %s2189 = scalar_lea.vmem %s559, 16
        %v2190 = vld [vmem:[%s2189] sm:$0xf]
        %v2191 = vld [vmem:[%s2189 + $0x8] sm:$0xf]
        %v2192 = vld [vmem:[%s2189 + $0x10] sm:$0xf]
        %v2193 = vld [vmem:[%s2189 + $0x18] sm:$0xf]
        %s2194 = scalar_lea.vmem %s575, 1920
        %v2195 = vld [vmem:[%s2194] sm:$0xff]
        %v2196 = vld [vmem:[%s2194 + $0x8] sm:$0xff]
        %v2197 = vld [vmem:[%s2194 + $0x10] sm:$0xff]
        %v2198 = vld [vmem:[%s2194 + $0x18] sm:$0xff]
        %v2199 = vld [vmem:[%s2194 + $0x20] sm:$0xff]
        %v2200 = vld [vmem:[%s2194 + $0x28] sm:$0xff]
        %v2201 = vld [vmem:[%s2194 + $0x30] sm:$0xff]
        %v2202 = vld [vmem:[%s2194 + $0x38] sm:$0xff]
        %v2203 = vld [vmem:[%s2194 + $0x40] sm:$0xff]
        %v2204 = vld [vmem:[%s2194 + $0x48] sm:$0xff]
        %v2205 = vld [vmem:[%s2194 + $0x50] sm:$0xff]
        %v2206 = vld [vmem:[%s2194 + $0x58] sm:$0xff]
        %v2207 = vld [vmem:[%s2194 + $0x60] sm:$0xff]
        %v2208 = vld [vmem:[%s2194 + $0x68] sm:$0xff]
        %v2209 = vld [vmem:[%s2194 + $0x70] sm:$0xff]
        %v2210 = vld [vmem:[%s2194 + $0x78] sm:$0xff]
        %v2215 = vcombine.low %v2190, %v2191
        %v2216 = vcombine.low %v2192, %v2193
        %2219 = vmatprep.subr.mxu0 0.0
        %2220 = vmatpush1.msra.mxu0 %v2195
        %2221 = vmatprep.subr.mxu0 0.0
        %2222 = vmatpush1.msra.mxu0 %v2196
        %2223 = vmatprep.subr.mxu0 0.0
        %2224 = vmatpush1.msra.mxu0 %v2197
        %2225 = vmatprep.subr.mxu0 0.0
        %2226 = vmatpush1.msra.mxu0 %v2198
        %2227 = vmatprep.subr.mxu0 0.0
        %2228 = vmatpush1.msra.mxu0 %v2199
        %2229 = vmatprep.subr.mxu0 0.0
        %2230 = vmatpush1.msra.mxu0 %v2200
        %2231 = vmatprep.subr.mxu0 0.0
        %2232 = vmatpush1.msra.mxu0 %v2201
        %2233 = vmatprep.subr.mxu0 0.0
        %2234 = vmatpush1.msra.mxu0 %v2202
        %2235 = vmatprep.subr.mxu0 0.0
        %2236 = vmatpush1.msra.mxu0 %v2203
        %2237 = vmatprep.subr.mxu0 0.0
        %2238 = vmatpush1.msra.mxu0 %v2204
        %2239 = vmatprep.subr.mxu0 0.0
        %2240 = vmatpush1.msra.mxu0 %v2205
        %2241 = vmatprep.subr.mxu0 0.0
        %2242 = vmatpush1.msra.mxu0 %v2206
        %2243 = vmatprep.subr.mxu0 0.0
        %2244 = vmatpush1.msra.mxu0 %v2207
        %2245 = vmatprep.subr.mxu0 0.0
        %2246 = vmatpush1.msra.mxu0 %v2208
        %2247 = vmatprep.subr.mxu0 0.0
        %2248 = vmatpush1.msra.mxu0 %v2209
        %2249 = vmatprep.subr.mxu0 0.0
        %2250 = vmatpush1.msra.mxu0 %v2210
        %2251 = vmatprep.subr.mxu0 0.0
        %2252 = vmatpush1.msra.mxu0 0.0
        %2253 = vmatprep.subr.mxu0 0.0
        %2254 = vmatpush1.msra.mxu0 0.0
        %2255 = vmatprep.subr.mxu0 0.0
        %2256 = vmatpush1.msra.mxu0 0.0
        %2257 = vmatprep.subr.mxu0 0.0
        %2258 = vmatpush1.msra.mxu0 0.0
        %2259 = vmatprep.subr.mxu0 0.0
        %2260 = vmatpush1.msra.mxu0 0.0
        %2261 = vmatprep.subr.mxu0 0.0
        %2262 = vmatpush1.msra.mxu0 0.0
        %2263 = vmatprep.subr.mxu0 0.0
        %2264 = vmatpush1.msra.mxu0 0.0
        %2265 = vmatprep.subr.mxu0 0.0
        %2266 = vmatpush1.msra.mxu0 0.0
        %2267 = vmatprep.subr.mxu0 0.0
        %2268 = vmatpush1.msra.mxu0 0.0
        %2269 = vmatprep.subr.mxu0 0.0
        %2270 = vmatpush1.msra.mxu0 0.0
        %2271 = vmatprep.subr.mxu0 0.0
        %2272 = vmatpush1.msra.mxu0 0.0
        %2273 = vmatprep.subr.mxu0 0.0
        %2274 = vmatpush1.msra.mxu0 0.0
        %2275 = vmatprep.subr.mxu0 0.0
        %2276 = vmatpush1.msra.mxu0 0.0
        %2277 = vmatprep.subr.mxu0 0.0
        %2278 = vmatpush1.msra.mxu0 0.0
        %2279 = vmatprep.subr.mxu0 0.0
        %2280 = vmatpush1.msra.mxu0 0.0
        %2281 = vmatprep.subr.mxu0 0.0
        %2282 = vmatpush1.msra.mxu0 0.0
        %2283 = vmatprep.mubr.f32.mxu0 0.0
        %2284 = vmatmul.mubr.f32.gmra.mrb[0].mxu0 %v2215
        %v2285 = vpop.f32.mrb[0].mxu0
        %v2286 = vadd.f32 0.0, %v2285
        %v2287 = vpop.f32.mrb[0].mxu0
        %2288 = vmatprep.mubr.f32.mxu0 0.0
        %2289 = vmatmul.mubr.f32.gmra.mrb[0].mxu0 %v2216
        %v2290 = vpop.f32.mrb[0].mxu0
        %v2291 = vadd.f32 0.0, %v2290
        %v2292 = vpop.f32.mrb[0].mxu0
        %2293 = vdwg.mxu0
        %v2294 = vadd.f32 %v2187, %v2286
        %v2295 = vadd.f32 %v2188, %v2291
        %v2296 = vld [vmem:[%s2189 + $0x1] sm:$0xf]
        %v2297 = vld [vmem:[%s2189 + $0x9] sm:$0xf]
        %v2298 = vld [vmem:[%s2189 + $0x11] sm:$0xf]
        %v2299 = vld [vmem:[%s2189 + $0x19] sm:$0xf]
        %s2300 = scalar_lea.vmem %s575, 2048
        %v2301 = vld [vmem:[%s2300] sm:$0xff]
        %v2302 = vld [vmem:[%s2300 + $0x8] sm:$0xff]
        %v2303 = vld [vmem:[%s2300 + $0x10] sm:$0xff]
        %v2304 = vld [vmem:[%s2300 + $0x18] sm:$0xff]
        %v2305 = vld [vmem:[%s2300 + $0x20] sm:$0xff]
        %v2306 = vld [vmem:[%s2300 + $0x28] sm:$0xff]
        %v2307 = vld [vmem:[%s2300 + $0x30] sm:$0xff]
        %v2308 = vld [vmem:[%s2300 + $0x38] sm:$0xff]
        %v2309 = vld [vmem:[%s2300 + $0x40] sm:$0xff]
        %v2310 = vld [vmem:[%s2300 + $0x48] sm:$0xff]
        %v2311 = vld [vmem:[%s2300 + $0x50] sm:$0xff]
        %v2312 = vld [vmem:[%s2300 + $0x58] sm:$0xff]
        %v2313 = vld [vmem:[%s2300 + $0x60] sm:$0xff]
        %v2314 = vld [vmem:[%s2300 + $0x68] sm:$0xff]
        %v2315 = vld [vmem:[%s2300 + $0x70] sm:$0xff]
        %v2316 = vld [vmem:[%s2300 + $0x78] sm:$0xff]
        %v2321 = vcombine.low %v2296, %v2297
        %v2322 = vcombine.low %v2298, %v2299
        %2325 = vmatprep.subr.mxu0 0.0
        %2326 = vmatpush1.msra.mxu0 %v2301
        %2327 = vmatprep.subr.mxu0 0.0
        %2328 = vmatpush1.msra.mxu0 %v2302
        %2329 = vmatprep.subr.mxu0 0.0
        %2330 = vmatpush1.msra.mxu0 %v2303
        %2331 = vmatprep.subr.mxu0 0.0
        %2332 = vmatpush1.msra.mxu0 %v2304
        %2333 = vmatprep.subr.mxu0 0.0
        %2334 = vmatpush1.msra.mxu0 %v2305
        %2335 = vmatprep.subr.mxu0 0.0
        %2336 = vmatpush1.msra.mxu0 %v2306
        %2337 = vmatprep.subr.mxu0 0.0
        %2338 = vmatpush1.msra.mxu0 %v2307
        %2339 = vmatprep.subr.mxu0 0.0
        %2340 = vmatpush1.msra.mxu0 %v2308
        %2341 = vmatprep.subr.mxu0 0.0
        %2342 = vmatpush1.msra.mxu0 %v2309
        %2343 = vmatprep.subr.mxu0 0.0
        %2344 = vmatpush1.msra.mxu0 %v2310
        %2345 = vmatprep.subr.mxu0 0.0
        %2346 = vmatpush1.msra.mxu0 %v2311
        %2347 = vmatprep.subr.mxu0 0.0
        %2348 = vmatpush1.msra.mxu0 %v2312
        %2349 = vmatprep.subr.mxu0 0.0
        %2350 = vmatpush1.msra.mxu0 %v2313
        %2351 = vmatprep.subr.mxu0 0.0
        %2352 = vmatpush1.msra.mxu0 %v2314
        %2353 = vmatprep.subr.mxu0 0.0
        %2354 = vmatpush1.msra.mxu0 %v2315
        %2355 = vmatprep.subr.mxu0 0.0
        %2356 = vmatpush1.msra.mxu0 %v2316
        %2357 = vmatprep.subr.mxu0 0.0
        %2358 = vmatpush1.msra.mxu0 0.0
        %2359 = vmatprep.subr.mxu0 0.0
        %2360 = vmatpush1.msra.mxu0 0.0
        %2361 = vmatprep.subr.mxu0 0.0
        %2362 = vmatpush1.msra.mxu0 0.0
        %2363 = vmatprep.subr.mxu0 0.0
        %2364 = vmatpush1.msra.mxu0 0.0
        %2365 = vmatprep.subr.mxu0 0.0
        %2366 = vmatpush1.msra.mxu0 0.0
        %2367 = vmatprep.subr.mxu0 0.0
        %2368 = vmatpush1.msra.mxu0 0.0
        %2369 = vmatprep.subr.mxu0 0.0
        %2370 = vmatpush1.msra.mxu0 0.0
        %2371 = vmatprep.subr.mxu0 0.0
        %2372 = vmatpush1.msra.mxu0 0.0
        %2373 = vmatprep.subr.mxu0 0.0
        %2374 = vmatpush1.msra.mxu0 0.0
        %2375 = vmatprep.subr.mxu0 0.0
        %2376 = vmatpush1.msra.mxu0 0.0
        %2377 = vmatprep.subr.mxu0 0.0
        %2378 = vmatpush1.msra.mxu0 0.0
        %2379 = vmatprep.subr.mxu0 0.0
        %2380 = vmatpush1.msra.mxu0 0.0
        %2381 = vmatprep.subr.mxu0 0.0
        %2382 = vmatpush1.msra.mxu0 0.0
        %2383 = vmatprep.subr.mxu0 0.0
        %2384 = vmatpush1.msra.mxu0 0.0
        %2385 = vmatprep.subr.mxu0 0.0
        %2386 = vmatpush1.msra.mxu0 0.0
        %2387 = vmatprep.subr.mxu0 0.0
        %2388 = vmatpush1.msra.mxu0 0.0
        %2389 = vmatprep.mubr.f32.mxu0 0.0
        %2390 = vmatmul.mubr.f32.gmra.mrb[0].mxu0 %v2321
        %v2391 = vpop.f32.mrb[0].mxu0
        %v2392 = vadd.f32 0.0, %v2391
        %v2393 = vpop.f32.mrb[0].mxu0
        %2394 = vmatprep.mubr.f32.mxu0 0.0
        %2395 = vmatmul.mubr.f32.gmra.mrb[0].mxu0 %v2322
        %v2396 = vpop.f32.mrb[0].mxu0
        %v2397 = vadd.f32 0.0, %v2396
        %v2398 = vpop.f32.mrb[0].mxu0
        %2399 = vdwg.mxu0
        %v2400 = vadd.f32 %v2294, %v2392
        %v2401 = vadd.f32 %v2295, %v2397
        %v2402 = vld [vmem:[%s2189 + $0x2] sm:$0xf]
        %v2403 = vld [vmem:[%s2189 + $0xa] sm:$0xf]
        %v2404 = vld [vmem:[%s2189 + $0x12] sm:$0xf]
        %v2405 = vld [vmem:[%s2189 + $0x1a] sm:$0xf]
        %s2406 = scalar_lea.vmem %s575, 2176
        %v2407 = vld [vmem:[%s2406] sm:$0xff]
        %v2408 = vld [vmem:[%s2406 + $0x8] sm:$0xff]
        %v2409 = vld [vmem:[%s2406 + $0x10] sm:$0xff]
        %v2410 = vld [vmem:[%s2406 + $0x18] sm:$0xff]
        %v2411 = vld [vmem:[%s2406 + $0x20] sm:$0xff]
        %v2412 = vld [vmem:[%s2406 + $0x28] sm:$0xff]
        %v2413 = vld [vmem:[%s2406 + $0x30] sm:$0xff]
        %v2414 = vld [vmem:[%s2406 + $0x38] sm:$0xff]
        %v2415 = vld [vmem:[%s2406 + $0x40] sm:$0xff]
        %v2416 = vld [vmem:[%s2406 + $0x48] sm:$0xff]
        %v2417 = vld [vmem:[%s2406 + $0x50] sm:$0xff]
        %v2418 = vld [vmem:[%s2406 + $0x58] sm:$0xff]
        %v2419 = vld [vmem:[%s2406 + $0x60] sm:$0xff]
        %v2420 = vld [vmem:[%s2406 + $0x68] sm:$0xff]
        %v2421 = vld [vmem:[%s2406 + $0x70] sm:$0xff]
        %v2422 = vld [vmem:[%s2406 + $0x78] sm:$0xff]
        %v2427 = vcombine.low %v2402, %v2403
        %v2428 = vcombine.low %v2404, %v2405
        %2431 = vmatprep.subr.mxu0 0.0
        %2432 = vmatpush1.msra.mxu0 %v2407
        %2433 = vmatprep.subr.mxu0 0.0
        %2434 = vmatpush1.msra.mxu0 %v2408
        %2435 = vmatprep.subr.mxu0 0.0
        %2436 = vmatpush1.msra.mxu0 %v2409
        %2437 = vmatprep.subr.mxu0 0.0
        %2438 = vmatpush1.msra.mxu0 %v2410
        %2439 = vmatprep.subr.mxu0 0.0
        %2440 = vmatpush1.msra.mxu0 %v2411
        %2441 = vmatprep.subr.mxu0 0.0
        %2442 = vmatpush1.msra.mxu0 %v2412
        %2443 = vmatprep.subr.mxu0 0.0
        %2444 = vmatpush1.msra.mxu0 %v2413
        %2445 = vmatprep.subr.mxu0 0.0
        %2446 = vmatpush1.msra.mxu0 %v2414
        %2447 = vmatprep.subr.mxu0 0.0
        %2448 = vmatpush1.msra.mxu0 %v2415
        %2449 = vmatprep.subr.mxu0 0.0
        %2450 = vmatpush1.msra.mxu0 %v2416
        %2451 = vmatprep.subr.mxu0 0.0
        %2452 = vmatpush1.msra.mxu0 %v2417
        %2453 = vmatprep.subr.mxu0 0.0
        %2454 = vmatpush1.msra.mxu0 %v2418
        %2455 = vmatprep.subr.mxu0 0.0
        %2456 = vmatpush1.msra.mxu0 %v2419
        %2457 = vmatprep.subr.mxu0 0.0
        %2458 = vmatpush1.msra.mxu0 %v2420
        %2459 = vmatprep.subr.mxu0 0.0
        %2460 = vmatpush1.msra.mxu0 %v2421
        %2461 = vmatprep.subr.mxu0 0.0
        %2462 = vmatpush1.msra.mxu0 %v2422
        %2463 = vmatprep.subr.mxu0 0.0
        %2464 = vmatpush1.msra.mxu0 0.0
        %2465 = vmatprep.subr.mxu0 0.0
        %2466 = vmatpush1.msra.mxu0 0.0
        %2467 = vmatprep.subr.mxu0 0.0
        %2468 = vmatpush1.msra.mxu0 0.0
        %2469 = vmatprep.subr.mxu0 0.0
        %2470 = vmatpush1.msra.mxu0 0.0
        %2471 = vmatprep.subr.mxu0 0.0
        %2472 = vmatpush1.msra.mxu0 0.0
        %2473 = vmatprep.subr.mxu0 0.0
        %2474 = vmatpush1.msra.mxu0 0.0
        %2475 = vmatprep.subr.mxu0 0.0
        %2476 = vmatpush1.msra.mxu0 0.0
        %2477 = vmatprep.subr.mxu0 0.0
        %2478 = vmatpush1.msra.mxu0 0.0
        %2479 = vmatprep.subr.mxu0 0.0
        %2480 = vmatpush1.msra.mxu0 0.0
        %2481 = vmatprep.subr.mxu0 0.0
        %2482 = vmatpush1.msra.mxu0 0.0
        %2483 = vmatprep.subr.mxu0 0.0
        %2484 = vmatpush1.msra.mxu0 0.0
        %2485 = vmatprep.subr.mxu0 0.0
        %2486 = vmatpush1.msra.mxu0 0.0
        %2487 = vmatprep.subr.mxu0 0.0
        %2488 = vmatpush1.msra.mxu0 0.0
        %2489 = vmatprep.subr.mxu0 0.0
        %2490 = vmatpush1.msra.mxu0 0.0
        %2491 = vmatprep.subr.mxu0 0.0
        %2492 = vmatpush1.msra.mxu0 0.0
        %2493 = vmatprep.subr.mxu0 0.0
        %2494 = vmatpush1.msra.mxu0 0.0
        %2495 = vmatprep.mubr.f32.mxu0 0.0
        %2496 = vmatmul.mubr.f32.gmra.mrb[0].mxu0 %v2427
        %v2497 = vpop.f32.mrb[0].mxu0
        %v2498 = vadd.f32 0.0, %v2497
        %v2499 = vpop.f32.mrb[0].mxu0
        %2500 = vmatprep.mubr.f32.mxu0 0.0
        %2501 = vmatmul.mubr.f32.gmra.mrb[0].mxu0 %v2428
        %v2502 = vpop.f32.mrb[0].mxu0
        %v2503 = vadd.f32 0.0, %v2502
        %v2504 = vpop.f32.mrb[0].mxu0
        %2505 = vdwg.mxu0
        %v2506 = vadd.f32 %v2400, %v2498
        %v2507 = vadd.f32 %v2401, %v2503
        %v2508 = vld [vmem:[%s570] sm:$0xf]
        %v2509 = vld [vmem:[%s570 + $0x8] sm:$0xf]
        %v2510 = vld [vmem:[%s570 + $0x10] sm:$0xf]
        %v2511 = vld [vmem:[%s570 + $0x18] sm:$0xf]
        %s2512 = scalar_lea.vmem %s575, 2304
        %v2513 = vld [vmem:[%s2512] sm:$0xff]
        %v2514 = vld [vmem:[%s2512 + $0x8] sm:$0xff]
        %v2515 = vld [vmem:[%s2512 + $0x10] sm:$0xff]
        %v2516 = vld [vmem:[%s2512 + $0x18] sm:$0xff]
        %v2517 = vld [vmem:[%s2512 + $0x20] sm:$0xff]
        %v2518 = vld [vmem:[%s2512 + $0x28] sm:$0xff]
        %v2519 = vld [vmem:[%s2512 + $0x30] sm:$0xff]
        %v2520 = vld [vmem:[%s2512 + $0x38] sm:$0xff]
        %v2521 = vld [vmem:[%s2512 + $0x40] sm:$0xff]
        %v2522 = vld [vmem:[%s2512 + $0x48] sm:$0xff]
        %v2523 = vld [vmem:[%s2512 + $0x50] sm:$0xff]
        %v2524 = vld [vmem:[%s2512 + $0x58] sm:$0xff]
        %v2525 = vld [vmem:[%s2512 + $0x60] sm:$0xff]
        %v2526 = vld [vmem:[%s2512 + $0x68] sm:$0xff]
        %v2527 = vld [vmem:[%s2512 + $0x70] sm:$0xff]
        %v2528 = vld [vmem:[%s2512 + $0x78] sm:$0xff]
        %v2533 = vcombine.low %v2508, %v2509
        %v2534 = vcombine.low %v2510, %v2511
        %2537 = vmatprep.subr.mxu0 0.0
        %2538 = vmatpush1.msra.mxu0 %v2513
        %2539 = vmatprep.subr.mxu0 0.0
        %2540 = vmatpush1.msra.mxu0 %v2514
        %2541 = vmatprep.subr.mxu0 0.0
        %2542 = vmatpush1.msra.mxu0 %v2515
        %2543 = vmatprep.subr.mxu0 0.0
        %2544 = vmatpush1.msra.mxu0 %v2516
        %2545 = vmatprep.subr.mxu0 0.0
        %2546 = vmatpush1.msra.mxu0 %v2517
        %2547 = vmatprep.subr.mxu0 0.0
        %2548 = vmatpush1.msra.mxu0 %v2518
        %2549 = vmatprep.subr.mxu0 0.0
        %2550 = vmatpush1.msra.mxu0 %v2519
        %2551 = vmatprep.subr.mxu0 0.0
        %2552 = vmatpush1.msra.mxu0 %v2520
        %2553 = vmatprep.subr.mxu0 0.0
        %2554 = vmatpush1.msra.mxu0 %v2521
        %2555 = vmatprep.subr.mxu0 0.0
        %2556 = vmatpush1.msra.mxu0 %v2522
        %2557 = vmatprep.subr.mxu0 0.0
        %2558 = vmatpush1.msra.mxu0 %v2523
        %2559 = vmatprep.subr.mxu0 0.0
        %2560 = vmatpush1.msra.mxu0 %v2524
        %2561 = vmatprep.subr.mxu0 0.0
        %2562 = vmatpush1.msra.mxu0 %v2525
        %2563 = vmatprep.subr.mxu0 0.0
        %2564 = vmatpush1.msra.mxu0 %v2526
        %2565 = vmatprep.subr.mxu0 0.0
        %2566 = vmatpush1.msra.mxu0 %v2527
        %2567 = vmatprep.subr.mxu0 0.0
        %2568 = vmatpush1.msra.mxu0 %v2528
        %2569 = vmatprep.subr.mxu0 0.0
        %2570 = vmatpush1.msra.mxu0 0.0
        %2571 = vmatprep.subr.mxu0 0.0
        %2572 = vmatpush1.msra.mxu0 0.0
        %2573 = vmatprep.subr.mxu0 0.0
        %2574 = vmatpush1.msra.mxu0 0.0
        %2575 = vmatprep.subr.mxu0 0.0
        %2576 = vmatpush1.msra.mxu0 0.0
        %2577 = vmatprep.subr.mxu0 0.0
        %2578 = vmatpush1.msra.mxu0 0.0
        %2579 = vmatprep.subr.mxu0 0.0
        %2580 = vmatpush1.msra.mxu0 0.0
        %2581 = vmatprep.subr.mxu0 0.0
        %2582 = vmatpush1.msra.mxu0 0.0
        %2583 = vmatprep.subr.mxu0 0.0
        %2584 = vmatpush1.msra.mxu0 0.0
        %2585 = vmatprep.subr.mxu0 0.0
        %2586 = vmatpush1.msra.mxu0 0.0
        %2587 = vmatprep.subr.mxu0 0.0
        %2588 = vmatpush1.msra.mxu0 0.0
        %2589 = vmatprep.subr.mxu0 0.0
        %2590 = vmatpush1.msra.mxu0 0.0
        %2591 = vmatprep.subr.mxu0 0.0
        %2592 = vmatpush1.msra.mxu0 0.0
        %2593 = vmatprep.subr.mxu0 0.0
        %2594 = vmatpush1.msra.mxu0 0.0
        %2595 = vmatprep.subr.mxu0 0.0
        %2596 = vmatpush1.msra.mxu0 0.0
        %2597 = vmatprep.subr.mxu0 0.0
        %2598 = vmatpush1.msra.mxu0 0.0
        %2599 = vmatprep.subr.mxu0 0.0
        %2600 = vmatpush1.msra.mxu0 0.0
        %2601 = vmatprep.mubr.f32.mxu0 0.0
        %2602 = vmatmul.mubr.f32.gmra.mrb[0].mxu0 %v2533
        %v2603 = vpop.f32.mrb[0].mxu0
        %v2604 = vadd.f32 0.0, %v2603
        %v2605 = vpop.f32.mrb[0].mxu0
        %2606 = vmatprep.mubr.f32.mxu0 0.0
        %2607 = vmatmul.mubr.f32.gmra.mrb[0].mxu0 %v2534
        %v2608 = vpop.f32.mrb[0].mxu0
        %v2609 = vadd.f32 0.0, %v2608
        %v2610 = vpop.f32.mrb[0].mxu0
        %2611 = vdwg.mxu0
        %v2612 = vadd.f32 %v2506, %v2604
        %v2613 = vadd.f32 %v2507, %v2609
        %v2614 = vld [vmem:[%s570 + $0x1] sm:$0xf]
        %v2615 = vld [vmem:[%s570 + $0x9] sm:$0xf]
        %v2616 = vld [vmem:[%s570 + $0x11] sm:$0xf]
        %v2617 = vld [vmem:[%s570 + $0x19] sm:$0xf]
        %s2618 = scalar_lea.vmem %s575, 2432
        %v2619 = vld [vmem:[%s2618] sm:$0xff]
        %v2620 = vld [vmem:[%s2618 + $0x8] sm:$0xff]
        %v2621 = vld [vmem:[%s2618 + $0x10] sm:$0xff]
        %v2622 = vld [vmem:[%s2618 + $0x18] sm:$0xff]
        %v2623 = vld [vmem:[%s2618 + $0x20] sm:$0xff]
        %v2624 = vld [vmem:[%s2618 + $0x28] sm:$0xff]
        %v2625 = vld [vmem:[%s2618 + $0x30] sm:$0xff]
        %v2626 = vld [vmem:[%s2618 + $0x38] sm:$0xff]
        %v2627 = vld [vmem:[%s2618 + $0x40] sm:$0xff]
        %v2628 = vld [vmem:[%s2618 + $0x48] sm:$0xff]
        %v2629 = vld [vmem:[%s2618 + $0x50] sm:$0xff]
        %v2630 = vld [vmem:[%s2618 + $0x58] sm:$0xff]
        %v2631 = vld [vmem:[%s2618 + $0x60] sm:$0xff]
        %v2632 = vld [vmem:[%s2618 + $0x68] sm:$0xff]
        %v2633 = vld [vmem:[%s2618 + $0x70] sm:$0xff]
        %v2634 = vld [vmem:[%s2618 + $0x78] sm:$0xff]
        %v2639 = vcombine.low %v2614, %v2615
        %v2640 = vcombine.low %v2616, %v2617
        %2643 = vmatprep.subr.mxu0 0.0
        %2644 = vmatpush1.msra.mxu0 %v2619
        %2645 = vmatprep.subr.mxu0 0.0
        %2646 = vmatpush1.msra.mxu0 %v2620
        %2647 = vmatprep.subr.mxu0 0.0
        %2648 = vmatpush1.msra.mxu0 %v2621
        %2649 = vmatprep.subr.mxu0 0.0
        %2650 = vmatpush1.msra.mxu0 %v2622
        %2651 = vmatprep.subr.mxu0 0.0
        %2652 = vmatpush1.msra.mxu0 %v2623
        %2653 = vmatprep.subr.mxu0 0.0
        %2654 = vmatpush1.msra.mxu0 %v2624
        %2655 = vmatprep.subr.mxu0 0.0
        %2656 = vmatpush1.msra.mxu0 %v2625
        %2657 = vmatprep.subr.mxu0 0.0
        %2658 = vmatpush1.msra.mxu0 %v2626
        %2659 = vmatprep.subr.mxu0 0.0
        %2660 = vmatpush1.msra.mxu0 %v2627
        %2661 = vmatprep.subr.mxu0 0.0
        %2662 = vmatpush1.msra.mxu0 %v2628
        %2663 = vmatprep.subr.mxu0 0.0
        %2664 = vmatpush1.msra.mxu0 %v2629
        %2665 = vmatprep.subr.mxu0 0.0
        %2666 = vmatpush1.msra.mxu0 %v2630
        %2667 = vmatprep.subr.mxu0 0.0
        %2668 = vmatpush1.msra.mxu0 %v2631
        %2669 = vmatprep.subr.mxu0 0.0
        %2670 = vmatpush1.msra.mxu0 %v2632
        %2671 = vmatprep.subr.mxu0 0.0
        %2672 = vmatpush1.msra.mxu0 %v2633
        %2673 = vmatprep.subr.mxu0 0.0
        %2674 = vmatpush1.msra.mxu0 %v2634
        %2675 = vmatprep.subr.mxu0 0.0
        %2676 = vmatpush1.msra.mxu0 0.0
        %2677 = vmatprep.subr.mxu0 0.0
        %2678 = vmatpush1.msra.mxu0 0.0
        %2679 = vmatprep.subr.mxu0 0.0
        %2680 = vmatpush1.msra.mxu0 0.0
        %2681 = vmatprep.subr.mxu0 0.0
        %2682 = vmatpush1.msra.mxu0 0.0
        %2683 = vmatprep.subr.mxu0 0.0
        %2684 = vmatpush1.msra.mxu0 0.0
        %2685 = vmatprep.subr.mxu0 0.0
        %2686 = vmatpush1.msra.mxu0 0.0
        %2687 = vmatprep.subr.mxu0 0.0
        %2688 = vmatpush1.msra.mxu0 0.0
        %2689 = vmatprep.subr.mxu0 0.0
        %2690 = vmatpush1.msra.mxu0 0.0
        %2691 = vmatprep.subr.mxu0 0.0
        %2692 = vmatpush1.msra.mxu0 0.0
        %2693 = vmatprep.subr.mxu0 0.0
        %2694 = vmatpush1.msra.mxu0 0.0
        %2695 = vmatprep.subr.mxu0 0.0
        %2696 = vmatpush1.msra.mxu0 0.0
        %2697 = vmatprep.subr.mxu0 0.0
        %2698 = vmatpush1.msra.mxu0 0.0
        %2699 = vmatprep.subr.mxu0 0.0
        %2700 = vmatpush1.msra.mxu0 0.0
        %2701 = vmatprep.subr.mxu0 0.0
        %2702 = vmatpush1.msra.mxu0 0.0
        %2703 = vmatprep.subr.mxu0 0.0
        %2704 = vmatpush1.msra.mxu0 0.0
        %2705 = vmatprep.subr.mxu0 0.0
        %2706 = vmatpush1.msra.mxu0 0.0
        %2707 = vmatprep.mubr.f32.mxu0 0.0
        %2708 = vmatmul.mubr.f32.gmra.mrb[0].mxu0 %v2639
        %v2709 = vpop.f32.mrb[0].mxu0
        %v2710 = vadd.f32 0.0, %v2709
        %v2711 = vpop.f32.mrb[0].mxu0
        %2712 = vmatprep.mubr.f32.mxu0 0.0
        %2713 = vmatmul.mubr.f32.gmra.mrb[0].mxu0 %v2640
        %v2714 = vpop.f32.mrb[0].mxu0
        %v2715 = vadd.f32 0.0, %v2714
        %v2716 = vpop.f32.mrb[0].mxu0
        %2717 = vdwg.mxu0
        %v2718 = vadd.f32 %v2612, %v2710
        %v2719 = vadd.f32 %v2613, %v2715
        %v2720 = vld [vmem:[%s570 + $0x2] sm:$0xf]
        %v2721 = vld [vmem:[%s570 + $0xa] sm:$0xf]
        %v2722 = vld [vmem:[%s570 + $0x12] sm:$0xf]
        %v2723 = vld [vmem:[%s570 + $0x1a] sm:$0xf]
        %s2724 = scalar_lea.vmem %s575, 2560
        %v2725 = vld [vmem:[%s2724] sm:$0xff]
        %v2726 = vld [vmem:[%s2724 + $0x8] sm:$0xff]
        %v2727 = vld [vmem:[%s2724 + $0x10] sm:$0xff]
        %v2728 = vld [vmem:[%s2724 + $0x18] sm:$0xff]
        %v2729 = vld [vmem:[%s2724 + $0x20] sm:$0xff]
        %v2730 = vld [vmem:[%s2724 + $0x28] sm:$0xff]
        %v2731 = vld [vmem:[%s2724 + $0x30] sm:$0xff]
        %v2732 = vld [vmem:[%s2724 + $0x38] sm:$0xff]
        %v2733 = vld [vmem:[%s2724 + $0x40] sm:$0xff]
        %v2734 = vld [vmem:[%s2724 + $0x48] sm:$0xff]
        %v2735 = vld [vmem:[%s2724 + $0x50] sm:$0xff]
        %v2736 = vld [vmem:[%s2724 + $0x58] sm:$0xff]
        %v2737 = vld [vmem:[%s2724 + $0x60] sm:$0xff]
        %v2738 = vld [vmem:[%s2724 + $0x68] sm:$0xff]
        %v2739 = vld [vmem:[%s2724 + $0x70] sm:$0xff]
        %v2740 = vld [vmem:[%s2724 + $0x78] sm:$0xff]
        %v2745 = vcombine.low %v2720, %v2721
        %v2746 = vcombine.low %v2722, %v2723
        %2749 = vmatprep.subr.mxu0 0.0
        %2750 = vmatpush1.msra.mxu0 %v2725
        %2751 = vmatprep.subr.mxu0 0.0
        %2752 = vmatpush1.msra.mxu0 %v2726
        %2753 = vmatprep.subr.mxu0 0.0
        %2754 = vmatpush1.msra.mxu0 %v2727
        %2755 = vmatprep.subr.mxu0 0.0
        %2756 = vmatpush1.msra.mxu0 %v2728
        %2757 = vmatprep.subr.mxu0 0.0
        %2758 = vmatpush1.msra.mxu0 %v2729
        %2759 = vmatprep.subr.mxu0 0.0
        %2760 = vmatpush1.msra.mxu0 %v2730
        %2761 = vmatprep.subr.mxu0 0.0
        %2762 = vmatpush1.msra.mxu0 %v2731
        %2763 = vmatprep.subr.mxu0 0.0
        %2764 = vmatpush1.msra.mxu0 %v2732
        %2765 = vmatprep.subr.mxu0 0.0
        %2766 = vmatpush1.msra.mxu0 %v2733
        %2767 = vmatprep.subr.mxu0 0.0
        %2768 = vmatpush1.msra.mxu0 %v2734
        %2769 = vmatprep.subr.mxu0 0.0
        %2770 = vmatpush1.msra.mxu0 %v2735
        %2771 = vmatprep.subr.mxu0 0.0
        %2772 = vmatpush1.msra.mxu0 %v2736
        %2773 = vmatprep.subr.mxu0 0.0
        %2774 = vmatpush1.msra.mxu0 %v2737
        %2775 = vmatprep.subr.mxu0 0.0
        %2776 = vmatpush1.msra.mxu0 %v2738
        %2777 = vmatprep.subr.mxu0 0.0
        %2778 = vmatpush1.msra.mxu0 %v2739
        %2779 = vmatprep.subr.mxu0 0.0
        %2780 = vmatpush1.msra.mxu0 %v2740
        %2781 = vmatprep.subr.mxu0 0.0
        %2782 = vmatpush1.msra.mxu0 0.0
        %2783 = vmatprep.subr.mxu0 0.0
        %2784 = vmatpush1.msra.mxu0 0.0
        %2785 = vmatprep.subr.mxu0 0.0
        %2786 = vmatpush1.msra.mxu0 0.0
        %2787 = vmatprep.subr.mxu0 0.0
        %2788 = vmatpush1.msra.mxu0 0.0
        %2789 = vmatprep.subr.mxu0 0.0
        %2790 = vmatpush1.msra.mxu0 0.0
        %2791 = vmatprep.subr.mxu0 0.0
        %2792 = vmatpush1.msra.mxu0 0.0
        %2793 = vmatprep.subr.mxu0 0.0
        %2794 = vmatpush1.msra.mxu0 0.0
        %2795 = vmatprep.subr.mxu0 0.0
        %2796 = vmatpush1.msra.mxu0 0.0
        %2797 = vmatprep.subr.mxu0 0.0
        %2798 = vmatpush1.msra.mxu0 0.0
        %2799 = vmatprep.subr.mxu0 0.0
        %2800 = vmatpush1.msra.mxu0 0.0
        %2801 = vmatprep.subr.mxu0 0.0
        %2802 = vmatpush1.msra.mxu0 0.0
        %2803 = vmatprep.subr.mxu0 0.0
        %2804 = vmatpush1.msra.mxu0 0.0
        %2805 = vmatprep.subr.mxu0 0.0
        %2806 = vmatpush1.msra.mxu0 0.0
        %2807 = vmatprep.subr.mxu0 0.0
        %2808 = vmatpush1.msra.mxu0 0.0
        %2809 = vmatprep.subr.mxu0 0.0
        %2810 = vmatpush1.msra.mxu0 0.0
        %2811 = vmatprep.subr.mxu0 0.0
        %2812 = vmatpush1.msra.mxu0 0.0
        %2813 = vmatprep.mubr.f32.mxu0 0.0
        %2814 = vmatmul.mubr.f32.gmra.mrb[0].mxu0 %v2745
        %v2815 = vpop.f32.mrb[0].mxu0
        %v2816 = vadd.f32 0.0, %v2815
        %v2817 = vpop.f32.mrb[0].mxu0
        %2818 = vmatprep.mubr.f32.mxu0 0.0
        %2819 = vmatmul.mubr.f32.gmra.mrb[0].mxu0 %v2746
        %v2820 = vpop.f32.mrb[0].mxu0
        %v2821 = vadd.f32 0.0, %v2820
        %v2822 = vpop.f32.mrb[0].mxu0
        %2823 = vdwg.mxu0
        %v2824 = vadd.f32 %v2718, %v2816
        %v2825 = vadd.f32 %v2719, %v2821
        %s2826 = scalar_lea.vmem %s570, 8
        %v2827 = vld [vmem:[%s2826] sm:$0xf]
        %v2828 = vld [vmem:[%s2826 + $0x8] sm:$0xf]
        %v2829 = vld [vmem:[%s2826 + $0x10] sm:$0xf]
        %v2830 = vld [vmem:[%s2826 + $0x18] sm:$0xf]
        %s2831 = scalar_lea.vmem %s575, 2688
        %v2832 = vld [vmem:[%s2831] sm:$0xff]
        %v2833 = vld [vmem:[%s2831 + $0x8] sm:$0xff]
        %v2834 = vld [vmem:[%s2831 + $0x10] sm:$0xff]
        %v2835 = vld [vmem:[%s2831 + $0x18] sm:$0xff]
        %v2836 = vld [vmem:[%s2831 + $0x20] sm:$0xff]
        %v2837 = vld [vmem:[%s2831 + $0x28] sm:$0xff]
        %v2838 = vld [vmem:[%s2831 + $0x30] sm:$0xff]
        %v2839 = vld [vmem:[%s2831 + $0x38] sm:$0xff]
        %v2840 = vld [vmem:[%s2831 + $0x40] sm:$0xff]
        %v2841 = vld [vmem:[%s2831 + $0x48] sm:$0xff]
        %v2842 = vld [vmem:[%s2831 + $0x50] sm:$0xff]
        %v2843 = vld [vmem:[%s2831 + $0x58] sm:$0xff]
        %v2844 = vld [vmem:[%s2831 + $0x60] sm:$0xff]
        %v2845 = vld [vmem:[%s2831 + $0x68] sm:$0xff]
        %v2846 = vld [vmem:[%s2831 + $0x70] sm:$0xff]
        %v2847 = vld [vmem:[%s2831 + $0x78] sm:$0xff]
        %v2852 = vcombine.low %v2827, %v2828
        %v2853 = vcombine.low %v2829, %v2830
        %2856 = vmatprep.subr.mxu0 0.0
        %2857 = vmatpush1.msra.mxu0 %v2832
        %2858 = vmatprep.subr.mxu0 0.0
        %2859 = vmatpush1.msra.mxu0 %v2833
        %2860 = vmatprep.subr.mxu0 0.0
        %2861 = vmatpush1.msra.mxu0 %v2834
        %2862 = vmatprep.subr.mxu0 0.0
        %2863 = vmatpush1.msra.mxu0 %v2835
        %2864 = vmatprep.subr.mxu0 0.0
        %2865 = vmatpush1.msra.mxu0 %v2836
        %2866 = vmatprep.subr.mxu0 0.0
        %2867 = vmatpush1.msra.mxu0 %v2837
        %2868 = vmatprep.subr.mxu0 0.0
        %2869 = vmatpush1.msra.mxu0 %v2838
        %2870 = vmatprep.subr.mxu0 0.0
        %2871 = vmatpush1.msra.mxu0 %v2839
        %2872 = vmatprep.subr.mxu0 0.0
        %2873 = vmatpush1.msra.mxu0 %v2840
        %2874 = vmatprep.subr.mxu0 0.0
        %2875 = vmatpush1.msra.mxu0 %v2841
        %2876 = vmatprep.subr.mxu0 0.0
        %2877 = vmatpush1.msra.mxu0 %v2842
        %2878 = vmatprep.subr.mxu0 0.0
        %2879 = vmatpush1.msra.mxu0 %v2843
        %2880 = vmatprep.subr.mxu0 0.0
        %2881 = vmatpush1.msra.mxu0 %v2844
        %2882 = vmatprep.subr.mxu0 0.0
        %2883 = vmatpush1.msra.mxu0 %v2845
        %2884 = vmatprep.subr.mxu0 0.0
        %2885 = vmatpush1.msra.mxu0 %v2846
        %2886 = vmatprep.subr.mxu0 0.0
        %2887 = vmatpush1.msra.mxu0 %v2847
        %2888 = vmatprep.subr.mxu0 0.0
        %2889 = vmatpush1.msra.mxu0 0.0
        %2890 = vmatprep.subr.mxu0 0.0
        %2891 = vmatpush1.msra.mxu0 0.0
        %2892 = vmatprep.subr.mxu0 0.0
        %2893 = vmatpush1.msra.mxu0 0.0
        %2894 = vmatprep.subr.mxu0 0.0
        %2895 = vmatpush1.msra.mxu0 0.0
        %2896 = vmatprep.subr.mxu0 0.0
        %2897 = vmatpush1.msra.mxu0 0.0
        %2898 = vmatprep.subr.mxu0 0.0
        %2899 = vmatpush1.msra.mxu0 0.0
        %2900 = vmatprep.subr.mxu0 0.0
        %2901 = vmatpush1.msra.mxu0 0.0
        %2902 = vmatprep.subr.mxu0 0.0
        %2903 = vmatpush1.msra.mxu0 0.0
        %2904 = vmatprep.subr.mxu0 0.0
        %2905 = vmatpush1.msra.mxu0 0.0
        %2906 = vmatprep.subr.mxu0 0.0
        %2907 = vmatpush1.msra.mxu0 0.0
        %2908 = vmatprep.subr.mxu0 0.0
        %2909 = vmatpush1.msra.mxu0 0.0
        %2910 = vmatprep.subr.mxu0 0.0
        %2911 = vmatpush1.msra.mxu0 0.0
        %2912 = vmatprep.subr.mxu0 0.0
        %2913 = vmatpush1.msra.mxu0 0.0
        %2914 = vmatprep.subr.mxu0 0.0
        %2915 = vmatpush1.msra.mxu0 0.0
        %2916 = vmatprep.subr.mxu0 0.0
        %2917 = vmatpush1.msra.mxu0 0.0
        %2918 = vmatprep.subr.mxu0 0.0
        %2919 = vmatpush1.msra.mxu0 0.0
        %2920 = vmatprep.mubr.f32.mxu0 0.0
        %2921 = vmatmul.mubr.f32.gmra.mrb[0].mxu0 %v2852
        %v2922 = vpop.f32.mrb[0].mxu0
        %v2923 = vadd.f32 0.0, %v2922
        %v2924 = vpop.f32.mrb[0].mxu0
        %2925 = vmatprep.mubr.f32.mxu0 0.0
        %2926 = vmatmul.mubr.f32.gmra.mrb[0].mxu0 %v2853
        %v2927 = vpop.f32.mrb[0].mxu0
        %v2928 = vadd.f32 0.0, %v2927
        %v2929 = vpop.f32.mrb[0].mxu0
        %2930 = vdwg.mxu0
        %v2931 = vadd.f32 %v2824, %v2923
        %v2932 = vadd.f32 %v2825, %v2928
        %v2933 = vld [vmem:[%s2826 + $0x1] sm:$0xf]
        %v2934 = vld [vmem:[%s2826 + $0x9] sm:$0xf]
        %v2935 = vld [vmem:[%s2826 + $0x11] sm:$0xf]
        %v2936 = vld [vmem:[%s2826 + $0x19] sm:$0xf]
        %s2937 = scalar_lea.vmem %s575, 2816
        %v2938 = vld [vmem:[%s2937] sm:$0xff]
        %v2939 = vld [vmem:[%s2937 + $0x8] sm:$0xff]
        %v2940 = vld [vmem:[%s2937 + $0x10] sm:$0xff]
        %v2941 = vld [vmem:[%s2937 + $0x18] sm:$0xff]
        %v2942 = vld [vmem:[%s2937 + $0x20] sm:$0xff]
        %v2943 = vld [vmem:[%s2937 + $0x28] sm:$0xff]
        %v2944 = vld [vmem:[%s2937 + $0x30] sm:$0xff]
        %v2945 = vld [vmem:[%s2937 + $0x38] sm:$0xff]
        %v2946 = vld [vmem:[%s2937 + $0x40] sm:$0xff]
        %v2947 = vld [vmem:[%s2937 + $0x48] sm:$0xff]
        %v2948 = vld [vmem:[%s2937 + $0x50] sm:$0xff]
        %v2949 = vld [vmem:[%s2937 + $0x58] sm:$0xff]
        %v2950 = vld [vmem:[%s2937 + $0x60] sm:$0xff]
        %v2951 = vld [vmem:[%s2937 + $0x68] sm:$0xff]
        %v2952 = vld [vmem:[%s2937 + $0x70] sm:$0xff]
        %v2953 = vld [vmem:[%s2937 + $0x78] sm:$0xff]
        %v2958 = vcombine.low %v2933, %v2934
        %v2959 = vcombine.low %v2935, %v2936
        %2962 = vmatprep.subr.mxu0 0.0
        %2963 = vmatpush1.msra.mxu0 %v2938
        %2964 = vmatprep.subr.mxu0 0.0
        %2965 = vmatpush1.msra.mxu0 %v2939
        %2966 = vmatprep.subr.mxu0 0.0
        %2967 = vmatpush1.msra.mxu0 %v2940
        %2968 = vmatprep.subr.mxu0 0.0
        %2969 = vmatpush1.msra.mxu0 %v2941
        %2970 = vmatprep.subr.mxu0 0.0
        %2971 = vmatpush1.msra.mxu0 %v2942
        %2972 = vmatprep.subr.mxu0 0.0
        %2973 = vmatpush1.msra.mxu0 %v2943
        %2974 = vmatprep.subr.mxu0 0.0
        %2975 = vmatpush1.msra.mxu0 %v2944
        %2976 = vmatprep.subr.mxu0 0.0
        %2977 = vmatpush1.msra.mxu0 %v2945
        %2978 = vmatprep.subr.mxu0 0.0
        %2979 = vmatpush1.msra.mxu0 %v2946
        %2980 = vmatprep.subr.mxu0 0.0
        %2981 = vmatpush1.msra.mxu0 %v2947
        %2982 = vmatprep.subr.mxu0 0.0
        %2983 = vmatpush1.msra.mxu0 %v2948
        %2984 = vmatprep.subr.mxu0 0.0
        %2985 = vmatpush1.msra.mxu0 %v2949
        %2986 = vmatprep.subr.mxu0 0.0
        %2987 = vmatpush1.msra.mxu0 %v2950
        %2988 = vmatprep.subr.mxu0 0.0
        %2989 = vmatpush1.msra.mxu0 %v2951
        %2990 = vmatprep.subr.mxu0 0.0
        %2991 = vmatpush1.msra.mxu0 %v2952
        %2992 = vmatprep.subr.mxu0 0.0
        %2993 = vmatpush1.msra.mxu0 %v2953
        %2994 = vmatprep.subr.mxu0 0.0
        %2995 = vmatpush1.msra.mxu0 0.0
        %2996 = vmatprep.subr.mxu0 0.0
        %2997 = vmatpush1.msra.mxu0 0.0
        %2998 = vmatprep.subr.mxu0 0.0
        %2999 = vmatpush1.msra.mxu0 0.0
        %3000 = vmatprep.subr.mxu0 0.0
        %3001 = vmatpush1.msra.mxu0 0.0
        %3002 = vmatprep.subr.mxu0 0.0
        %3003 = vmatpush1.msra.mxu0 0.0
        %3004 = vmatprep.subr.mxu0 0.0
        %3005 = vmatpush1.msra.mxu0 0.0
        %3006 = vmatprep.subr.mxu0 0.0
        %3007 = vmatpush1.msra.mxu0 0.0
        %3008 = vmatprep.subr.mxu0 0.0
        %3009 = vmatpush1.msra.mxu0 0.0
        %3010 = vmatprep.subr.mxu0 0.0
        %3011 = vmatpush1.msra.mxu0 0.0
        %3012 = vmatprep.subr.mxu0 0.0
        %3013 = vmatpush1.msra.mxu0 0.0
        %3014 = vmatprep.subr.mxu0 0.0
        %3015 = vmatpush1.msra.mxu0 0.0
        %3016 = vmatprep.subr.mxu0 0.0
        %3017 = vmatpush1.msra.mxu0 0.0
        %3018 = vmatprep.subr.mxu0 0.0
        %3019 = vmatpush1.msra.mxu0 0.0
        %3020 = vmatprep.subr.mxu0 0.0
        %3021 = vmatpush1.msra.mxu0 0.0
        %3022 = vmatprep.subr.mxu0 0.0
        %3023 = vmatpush1.msra.mxu0 0.0
        %3024 = vmatprep.subr.mxu0 0.0
        %3025 = vmatpush1.msra.mxu0 0.0
        %3026 = vmatprep.mubr.f32.mxu0 0.0
        %3027 = vmatmul.mubr.f32.gmra.mrb[0].mxu0 %v2958
        %v3028 = vpop.f32.mrb[0].mxu0
        %v3029 = vadd.f32 0.0, %v3028
        %v3030 = vpop.f32.mrb[0].mxu0
        %3031 = vmatprep.mubr.f32.mxu0 0.0
        %3032 = vmatmul.mubr.f32.gmra.mrb[0].mxu0 %v2959
        %v3033 = vpop.f32.mrb[0].mxu0
        %v3034 = vadd.f32 0.0, %v3033
        %v3035 = vpop.f32.mrb[0].mxu0
        %3036 = vdwg.mxu0
        %v3037 = vadd.f32 %v2931, %v3029
        %v3038 = vadd.f32 %v2932, %v3034
        %v3039 = vld [vmem:[%s2826 + $0x2] sm:$0xf]
        %v3040 = vld [vmem:[%s2826 + $0xa] sm:$0xf]
        %v3041 = vld [vmem:[%s2826 + $0x12] sm:$0xf]
        %v3042 = vld [vmem:[%s2826 + $0x1a] sm:$0xf]
        %s3043 = scalar_lea.vmem %s575, 2944
        %v3044 = vld [vmem:[%s3043] sm:$0xff]
        %v3045 = vld [vmem:[%s3043 + $0x8] sm:$0xff]
        %v3046 = vld [vmem:[%s3043 + $0x10] sm:$0xff]
        %v3047 = vld [vmem:[%s3043 + $0x18] sm:$0xff]
        %v3048 = vld [vmem:[%s3043 + $0x20] sm:$0xff]
        %v3049 = vld [vmem:[%s3043 + $0x28] sm:$0xff]
        %v3050 = vld [vmem:[%s3043 + $0x30] sm:$0xff]
        %v3051 = vld [vmem:[%s3043 + $0x38] sm:$0xff]
        %v3052 = vld [vmem:[%s3043 + $0x40] sm:$0xff]
        %v3053 = vld [vmem:[%s3043 + $0x48] sm:$0xff]
        %v3054 = vld [vmem:[%s3043 + $0x50] sm:$0xff]
        %v3055 = vld [vmem:[%s3043 + $0x58] sm:$0xff]
        %v3056 = vld [vmem:[%s3043 + $0x60] sm:$0xff]
        %v3057 = vld [vmem:[%s3043 + $0x68] sm:$0xff]
        %v3058 = vld [vmem:[%s3043 + $0x70] sm:$0xff]
        %v3059 = vld [vmem:[%s3043 + $0x78] sm:$0xff]
        %v3064 = vcombine.low %v3039, %v3040
        %v3065 = vcombine.low %v3041, %v3042
        %3068 = vmatprep.subr.mxu0 0.0
        %3069 = vmatpush1.msra.mxu0 %v3044
        %3070 = vmatprep.subr.mxu0 0.0
        %3071 = vmatpush1.msra.mxu0 %v3045
        %3072 = vmatprep.subr.mxu0 0.0
        %3073 = vmatpush1.msra.mxu0 %v3046
        %3074 = vmatprep.subr.mxu0 0.0
        %3075 = vmatpush1.msra.mxu0 %v3047
        %3076 = vmatprep.subr.mxu0 0.0
        %3077 = vmatpush1.msra.mxu0 %v3048
        %3078 = vmatprep.subr.mxu0 0.0
        %3079 = vmatpush1.msra.mxu0 %v3049
        %3080 = vmatprep.subr.mxu0 0.0
        %3081 = vmatpush1.msra.mxu0 %v3050
        %3082 = vmatprep.subr.mxu0 0.0
        %3083 = vmatpush1.msra.mxu0 %v3051
        %3084 = vmatprep.subr.mxu0 0.0
        %3085 = vmatpush1.msra.mxu0 %v3052
        %3086 = vmatprep.subr.mxu0 0.0
        %3087 = vmatpush1.msra.mxu0 %v3053
        %3088 = vmatprep.subr.mxu0 0.0
        %3089 = vmatpush1.msra.mxu0 %v3054
        %3090 = vmatprep.subr.mxu0 0.0
        %3091 = vmatpush1.msra.mxu0 %v3055
        %3092 = vmatprep.subr.mxu0 0.0
        %3093 = vmatpush1.msra.mxu0 %v3056
        %3094 = vmatprep.subr.mxu0 0.0
        %3095 = vmatpush1.msra.mxu0 %v3057
        %3096 = vmatprep.subr.mxu0 0.0
        %3097 = vmatpush1.msra.mxu0 %v3058
        %3098 = vmatprep.subr.mxu0 0.0
        %3099 = vmatpush1.msra.mxu0 %v3059
        %3100 = vmatprep.subr.mxu0 0.0
        %3101 = vmatpush1.msra.mxu0 0.0
        %3102 = vmatprep.subr.mxu0 0.0
        %3103 = vmatpush1.msra.mxu0 0.0
        %3104 = vmatprep.subr.mxu0 0.0
        %3105 = vmatpush1.msra.mxu0 0.0
        %3106 = vmatprep.subr.mxu0 0.0
        %3107 = vmatpush1.msra.mxu0 0.0
        %3108 = vmatprep.subr.mxu0 0.0
        %3109 = vmatpush1.msra.mxu0 0.0
        %3110 = vmatprep.subr.mxu0 0.0
        %3111 = vmatpush1.msra.mxu0 0.0
        %3112 = vmatprep.subr.mxu0 0.0
        %3113 = vmatpush1.msra.mxu0 0.0
        %3114 = vmatprep.subr.mxu0 0.0
        %3115 = vmatpush1.msra.mxu0 0.0
        %3116 = vmatprep.subr.mxu0 0.0
        %3117 = vmatpush1.msra.mxu0 0.0
        %3118 = vmatprep.subr.mxu0 0.0
        %3119 = vmatpush1.msra.mxu0 0.0
        %3120 = vmatprep.subr.mxu0 0.0
        %3121 = vmatpush1.msra.mxu0 0.0
        %3122 = vmatprep.subr.mxu0 0.0
        %3123 = vmatpush1.msra.mxu0 0.0
        %3124 = vmatprep.subr.mxu0 0.0
        %3125 = vmatpush1.msra.mxu0 0.0
        %3126 = vmatprep.subr.mxu0 0.0
        %3127 = vmatpush1.msra.mxu0 0.0
        %3128 = vmatprep.subr.mxu0 0.0
        %3129 = vmatpush1.msra.mxu0 0.0
        %3130 = vmatprep.subr.mxu0 0.0
        %3131 = vmatpush1.msra.mxu0 0.0
        %3132 = vmatprep.mubr.f32.mxu0 0.0
        %3133 = vmatmul.mubr.f32.gmra.mrb[0].mxu0 %v3064
        %v3134 = vpop.f32.mrb[0].mxu0
        %v3135 = vadd.f32 0.0, %v3134
        %v3136 = vpop.f32.mrb[0].mxu0
        %3137 = vmatprep.mubr.f32.mxu0 0.0
        %3138 = vmatmul.mubr.f32.gmra.mrb[0].mxu0 %v3065
        %v3139 = vpop.f32.mrb[0].mxu0
        %v3140 = vadd.f32 0.0, %v3139
        %v3141 = vpop.f32.mrb[0].mxu0
        %3142 = vdwg.mxu0
        %v3143 = vadd.f32 %v3037, %v3135
        %v3144 = vadd.f32 %v3038, %v3140
        %s3145 = scalar_lea.vmem %s570, 16
        %v3146 = vld [vmem:[%s3145] sm:$0xf]
        %v3147 = vld [vmem:[%s3145 + $0x8] sm:$0xf]
        %v3148 = vld [vmem:[%s3145 + $0x10] sm:$0xf]
        %v3149 = vld [vmem:[%s3145 + $0x18] sm:$0xf]
        %s3150 = scalar_lea.vmem %s575, 3072
        %v3151 = vld [vmem:[%s3150] sm:$0xff]
        %v3152 = vld [vmem:[%s3150 + $0x8] sm:$0xff]
        %v3153 = vld [vmem:[%s3150 + $0x10] sm:$0xff]
        %v3154 = vld [vmem:[%s3150 + $0x18] sm:$0xff]
        %v3155 = vld [vmem:[%s3150 + $0x20] sm:$0xff]
        %v3156 = vld [vmem:[%s3150 + $0x28] sm:$0xff]
        %v3157 = vld [vmem:[%s3150 + $0x30] sm:$0xff]
        %v3158 = vld [vmem:[%s3150 + $0x38] sm:$0xff]
        %v3159 = vld [vmem:[%s3150 + $0x40] sm:$0xff]
        %v3160 = vld [vmem:[%s3150 + $0x48] sm:$0xff]
        %v3161 = vld [vmem:[%s3150 + $0x50] sm:$0xff]
        %v3162 = vld [vmem:[%s3150 + $0x58] sm:$0xff]
        %v3163 = vld [vmem:[%s3150 + $0x60] sm:$0xff]
        %v3164 = vld [vmem:[%s3150 + $0x68] sm:$0xff]
        %v3165 = vld [vmem:[%s3150 + $0x70] sm:$0xff]
        %v3166 = vld [vmem:[%s3150 + $0x78] sm:$0xff]
        %v3171 = vcombine.low %v3146, %v3147
        %v3172 = vcombine.low %v3148, %v3149
        %3175 = vmatprep.subr.mxu0 0.0
        %3176 = vmatpush1.msra.mxu0 %v3151
        %3177 = vmatprep.subr.mxu0 0.0
        %3178 = vmatpush1.msra.mxu0 %v3152
        %3179 = vmatprep.subr.mxu0 0.0
        %3180 = vmatpush1.msra.mxu0 %v3153
        %3181 = vmatprep.subr.mxu0 0.0
        %3182 = vmatpush1.msra.mxu0 %v3154
        %3183 = vmatprep.subr.mxu0 0.0
        %3184 = vmatpush1.msra.mxu0 %v3155
        %3185 = vmatprep.subr.mxu0 0.0
        %3186 = vmatpush1.msra.mxu0 %v3156
        %3187 = vmatprep.subr.mxu0 0.0
        %3188 = vmatpush1.msra.mxu0 %v3157
        %3189 = vmatprep.subr.mxu0 0.0
        %3190 = vmatpush1.msra.mxu0 %v3158
        %3191 = vmatprep.subr.mxu0 0.0
        %3192 = vmatpush1.msra.mxu0 %v3159
        %3193 = vmatprep.subr.mxu0 0.0
        %3194 = vmatpush1.msra.mxu0 %v3160
        %3195 = vmatprep.subr.mxu0 0.0
        %3196 = vmatpush1.msra.mxu0 %v3161
        %3197 = vmatprep.subr.mxu0 0.0
        %3198 = vmatpush1.msra.mxu0 %v3162
        %3199 = vmatprep.subr.mxu0 0.0
        %3200 = vmatpush1.msra.mxu0 %v3163
        %3201 = vmatprep.subr.mxu0 0.0
        %3202 = vmatpush1.msra.mxu0 %v3164
        %3203 = vmatprep.subr.mxu0 0.0
        %3204 = vmatpush1.msra.mxu0 %v3165
        %3205 = vmatprep.subr.mxu0 0.0
        %3206 = vmatpush1.msra.mxu0 %v3166
        %3207 = vmatprep.subr.mxu0 0.0
        %3208 = vmatpush1.msra.mxu0 0.0
        %3209 = vmatprep.subr.mxu0 0.0
        %3210 = vmatpush1.msra.mxu0 0.0
        %3211 = vmatprep.subr.mxu0 0.0
        %3212 = vmatpush1.msra.mxu0 0.0
        %3213 = vmatprep.subr.mxu0 0.0
        %3214 = vmatpush1.msra.mxu0 0.0
        %3215 = vmatprep.subr.mxu0 0.0
        %3216 = vmatpush1.msra.mxu0 0.0
        %3217 = vmatprep.subr.mxu0 0.0
        %3218 = vmatpush1.msra.mxu0 0.0
        %3219 = vmatprep.subr.mxu0 0.0
        %3220 = vmatpush1.msra.mxu0 0.0
        %3221 = vmatprep.subr.mxu0 0.0
        %3222 = vmatpush1.msra.mxu0 0.0
        %3223 = vmatprep.subr.mxu0 0.0
        %3224 = vmatpush1.msra.mxu0 0.0
        %3225 = vmatprep.subr.mxu0 0.0
        %3226 = vmatpush1.msra.mxu0 0.0
        %3227 = vmatprep.subr.mxu0 0.0
        %3228 = vmatpush1.msra.mxu0 0.0
        %3229 = vmatprep.subr.mxu0 0.0
        %3230 = vmatpush1.msra.mxu0 0.0
        %3231 = vmatprep.subr.mxu0 0.0
        %3232 = vmatpush1.msra.mxu0 0.0
        %3233 = vmatprep.subr.mxu0 0.0
        %3234 = vmatpush1.msra.mxu0 0.0
        %3235 = vmatprep.subr.mxu0 0.0
        %3236 = vmatpush1.msra.mxu0 0.0
        %3237 = vmatprep.subr.mxu0 0.0
        %3238 = vmatpush1.msra.mxu0 0.0
        %3239 = vmatprep.mubr.f32.mxu0 0.0
        %3240 = vmatmul.mubr.f32.gmra.mrb[0].mxu0 %v3171
        %v3241 = vpop.f32.mrb[0].mxu0
        %v3242 = vadd.f32 0.0, %v3241
        %v3243 = vpop.f32.mrb[0].mxu0
        %3244 = vmatprep.mubr.f32.mxu0 0.0
        %3245 = vmatmul.mubr.f32.gmra.mrb[0].mxu0 %v3172
        %v3246 = vpop.f32.mrb[0].mxu0
        %v3247 = vadd.f32 0.0, %v3246
        %v3248 = vpop.f32.mrb[0].mxu0
        %3249 = vdwg.mxu0
        %v3250 = vadd.f32 %v3143, %v3242
        %v3251 = vadd.f32 %v3144, %v3247
        %v3252 = vld [vmem:[%s3145 + $0x1] sm:$0xf]
        %v3253 = vld [vmem:[%s3145 + $0x9] sm:$0xf]
        %v3254 = vld [vmem:[%s3145 + $0x11] sm:$0xf]
        %v3255 = vld [vmem:[%s3145 + $0x19] sm:$0xf]
        %s3256 = scalar_lea.vmem %s575, 3200
        %v3257 = vld [vmem:[%s3256] sm:$0xff]
        %v3258 = vld [vmem:[%s3256 + $0x8] sm:$0xff]
        %v3259 = vld [vmem:[%s3256 + $0x10] sm:$0xff]
        %v3260 = vld [vmem:[%s3256 + $0x18] sm:$0xff]
        %v3261 = vld [vmem:[%s3256 + $0x20] sm:$0xff]
        %v3262 = vld [vmem:[%s3256 + $0x28] sm:$0xff]
        %v3263 = vld [vmem:[%s3256 + $0x30] sm:$0xff]
        %v3264 = vld [vmem:[%s3256 + $0x38] sm:$0xff]
        %v3265 = vld [vmem:[%s3256 + $0x40] sm:$0xff]
        %v3266 = vld [vmem:[%s3256 + $0x48] sm:$0xff]
        %v3267 = vld [vmem:[%s3256 + $0x50] sm:$0xff]
        %v3268 = vld [vmem:[%s3256 + $0x58] sm:$0xff]
        %v3269 = vld [vmem:[%s3256 + $0x60] sm:$0xff]
        %v3270 = vld [vmem:[%s3256 + $0x68] sm:$0xff]
        %v3271 = vld [vmem:[%s3256 + $0x70] sm:$0xff]
        %v3272 = vld [vmem:[%s3256 + $0x78] sm:$0xff]
        %v3277 = vcombine.low %v3252, %v3253
        %v3278 = vcombine.low %v3254, %v3255
        %3281 = vmatprep.subr.mxu0 0.0
        %3282 = vmatpush1.msra.mxu0 %v3257
        %3283 = vmatprep.subr.mxu0 0.0
        %3284 = vmatpush1.msra.mxu0 %v3258
        %3285 = vmatprep.subr.mxu0 0.0
        %3286 = vmatpush1.msra.mxu0 %v3259
        %3287 = vmatprep.subr.mxu0 0.0
        %3288 = vmatpush1.msra.mxu0 %v3260
        %3289 = vmatprep.subr.mxu0 0.0
        %3290 = vmatpush1.msra.mxu0 %v3261
        %3291 = vmatprep.subr.mxu0 0.0
        %3292 = vmatpush1.msra.mxu0 %v3262
        %3293 = vmatprep.subr.mxu0 0.0
        %3294 = vmatpush1.msra.mxu0 %v3263
        %3295 = vmatprep.subr.mxu0 0.0
        %3296 = vmatpush1.msra.mxu0 %v3264
        %3297 = vmatprep.subr.mxu0 0.0
        %3298 = vmatpush1.msra.mxu0 %v3265
        %3299 = vmatprep.subr.mxu0 0.0
        %3300 = vmatpush1.msra.mxu0 %v3266
        %3301 = vmatprep.subr.mxu0 0.0
        %3302 = vmatpush1.msra.mxu0 %v3267
        %3303 = vmatprep.subr.mxu0 0.0
        %3304 = vmatpush1.msra.mxu0 %v3268
        %3305 = vmatprep.subr.mxu0 0.0
        %3306 = vmatpush1.msra.mxu0 %v3269
        %3307 = vmatprep.subr.mxu0 0.0
        %3308 = vmatpush1.msra.mxu0 %v3270
        %3309 = vmatprep.subr.mxu0 0.0
        %3310 = vmatpush1.msra.mxu0 %v3271
        %3311 = vmatprep.subr.mxu0 0.0
        %3312 = vmatpush1.msra.mxu0 %v3272
        %3313 = vmatprep.subr.mxu0 0.0
        %3314 = vmatpush1.msra.mxu0 0.0
        %3315 = vmatprep.subr.mxu0 0.0
        %3316 = vmatpush1.msra.mxu0 0.0
        %3317 = vmatprep.subr.mxu0 0.0
        %3318 = vmatpush1.msra.mxu0 0.0
        %3319 = vmatprep.subr.mxu0 0.0
        %3320 = vmatpush1.msra.mxu0 0.0
        %3321 = vmatprep.subr.mxu0 0.0
        %3322 = vmatpush1.msra.mxu0 0.0
        %3323 = vmatprep.subr.mxu0 0.0
        %3324 = vmatpush1.msra.mxu0 0.0
        %3325 = vmatprep.subr.mxu0 0.0
        %3326 = vmatpush1.msra.mxu0 0.0
        %3327 = vmatprep.subr.mxu0 0.0
        %3328 = vmatpush1.msra.mxu0 0.0
        %3329 = vmatprep.subr.mxu0 0.0
        %3330 = vmatpush1.msra.mxu0 0.0
        %3331 = vmatprep.subr.mxu0 0.0
        %3332 = vmatpush1.msra.mxu0 0.0
        %3333 = vmatprep.subr.mxu0 0.0
        %3334 = vmatpush1.msra.mxu0 0.0
        %3335 = vmatprep.subr.mxu0 0.0
        %3336 = vmatpush1.msra.mxu0 0.0
        %3337 = vmatprep.subr.mxu0 0.0
        %3338 = vmatpush1.msra.mxu0 0.0
        %3339 = vmatprep.subr.mxu0 0.0
        %3340 = vmatpush1.msra.mxu0 0.0
        %3341 = vmatprep.subr.mxu0 0.0
        %3342 = vmatpush1.msra.mxu0 0.0
        %3343 = vmatprep.subr.mxu0 0.0
        %3344 = vmatpush1.msra.mxu0 0.0
        %3345 = vmatprep.mubr.f32.mxu0 0.0
        %3346 = vmatmul.mubr.f32.gmra.mrb[0].mxu0 %v3277
        %v3347 = vpop.f32.mrb[0].mxu0
        %v3348 = vadd.f32 0.0, %v3347
        %v3349 = vpop.f32.mrb[0].mxu0
        %3350 = vmatprep.mubr.f32.mxu0 0.0
        %3351 = vmatmul.mubr.f32.gmra.mrb[0].mxu0 %v3278
        %v3352 = vpop.f32.mrb[0].mxu0
        %v3353 = vadd.f32 0.0, %v3352
        %v3354 = vpop.f32.mrb[0].mxu0
        %3355 = vdwg.mxu0
        %v3356 = vadd.f32 %v3250, %v3348
        %v3357 = vadd.f32 %v3251, %v3353
        %v3358 = vld [vmem:[%s3145 + $0x2] sm:$0xf]
        %v3359 = vld [vmem:[%s3145 + $0xa] sm:$0xf]
        %v3360 = vld [vmem:[%s3145 + $0x12] sm:$0xf]
        %v3361 = vld [vmem:[%s3145 + $0x1a] sm:$0xf]
        %s3362 = scalar_lea.vmem %s575, 3328
        %v3363 = vld [vmem:[%s3362] sm:$0xff]
        %v3364 = vld [vmem:[%s3362 + $0x8] sm:$0xff]
        %v3365 = vld [vmem:[%s3362 + $0x10] sm:$0xff]
        %v3366 = vld [vmem:[%s3362 + $0x18] sm:$0xff]
        %v3367 = vld [vmem:[%s3362 + $0x20] sm:$0xff]
        %v3368 = vld [vmem:[%s3362 + $0x28] sm:$0xff]
        %v3369 = vld [vmem:[%s3362 + $0x30] sm:$0xff]
        %v3370 = vld [vmem:[%s3362 + $0x38] sm:$0xff]
        %v3371 = vld [vmem:[%s3362 + $0x40] sm:$0xff]
        %v3372 = vld [vmem:[%s3362 + $0x48] sm:$0xff]
        %v3373 = vld [vmem:[%s3362 + $0x50] sm:$0xff]
        %v3374 = vld [vmem:[%s3362 + $0x58] sm:$0xff]
        %v3375 = vld [vmem:[%s3362 + $0x60] sm:$0xff]
        %v3376 = vld [vmem:[%s3362 + $0x68] sm:$0xff]
        %v3377 = vld [vmem:[%s3362 + $0x70] sm:$0xff]
        %v3378 = vld [vmem:[%s3362 + $0x78] sm:$0xff]
        %v3383 = vcombine.low %v3358, %v3359
        %v3384 = vcombine.low %v3360, %v3361
        %3387 = vmatprep.subr.mxu0 0.0
        %3388 = vmatpush1.msra.mxu0 %v3363
        %3389 = vmatprep.subr.mxu0 0.0
        %3390 = vmatpush1.msra.mxu0 %v3364
        %3391 = vmatprep.subr.mxu0 0.0
        %3392 = vmatpush1.msra.mxu0 %v3365
        %3393 = vmatprep.subr.mxu0 0.0
        %3394 = vmatpush1.msra.mxu0 %v3366
        %3395 = vmatprep.subr.mxu0 0.0
        %3396 = vmatpush1.msra.mxu0 %v3367
        %3397 = vmatprep.subr.mxu0 0.0
        %3398 = vmatpush1.msra.mxu0 %v3368
        %3399 = vmatprep.subr.mxu0 0.0
        %3400 = vmatpush1.msra.mxu0 %v3369
        %3401 = vmatprep.subr.mxu0 0.0
        %3402 = vmatpush1.msra.mxu0 %v3370
        %3403 = vmatprep.subr.mxu0 0.0
        %3404 = vmatpush1.msra.mxu0 %v3371
        %3405 = vmatprep.subr.mxu0 0.0
        %3406 = vmatpush1.msra.mxu0 %v3372
        %3407 = vmatprep.subr.mxu0 0.0
        %3408 = vmatpush1.msra.mxu0 %v3373
        %3409 = vmatprep.subr.mxu0 0.0
        %3410 = vmatpush1.msra.mxu0 %v3374
        %3411 = vmatprep.subr.mxu0 0.0
        %3412 = vmatpush1.msra.mxu0 %v3375
        %3413 = vmatprep.subr.mxu0 0.0
        %3414 = vmatpush1.msra.mxu0 %v3376
        %3415 = vmatprep.subr.mxu0 0.0
        %3416 = vmatpush1.msra.mxu0 %v3377
        %3417 = vmatprep.subr.mxu0 0.0
        %3418 = vmatpush1.msra.mxu0 %v3378
        %3419 = vmatprep.subr.mxu0 0.0
        %3420 = vmatpush1.msra.mxu0 0.0
        %3421 = vmatprep.subr.mxu0 0.0
        %3422 = vmatpush1.msra.mxu0 0.0
        %3423 = vmatprep.subr.mxu0 0.0
        %3424 = vmatpush1.msra.mxu0 0.0
        %3425 = vmatprep.subr.mxu0 0.0
        %3426 = vmatpush1.msra.mxu0 0.0
        %3427 = vmatprep.subr.mxu0 0.0
        %3428 = vmatpush1.msra.mxu0 0.0
        %3429 = vmatprep.subr.mxu0 0.0
        %3430 = vmatpush1.msra.mxu0 0.0
        %3431 = vmatprep.subr.mxu0 0.0
        %3432 = vmatpush1.msra.mxu0 0.0
        %3433 = vmatprep.subr.mxu0 0.0
        %3434 = vmatpush1.msra.mxu0 0.0
        %3435 = vmatprep.subr.mxu0 0.0
        %3436 = vmatpush1.msra.mxu0 0.0
        %3437 = vmatprep.subr.mxu0 0.0
        %3438 = vmatpush1.msra.mxu0 0.0
        %3439 = vmatprep.subr.mxu0 0.0
        %3440 = vmatpush1.msra.mxu0 0.0
        %3441 = vmatprep.subr.mxu0 0.0
        %3442 = vmatpush1.msra.mxu0 0.0
        %3443 = vmatprep.subr.mxu0 0.0
        %3444 = vmatpush1.msra.mxu0 0.0
        %3445 = vmatprep.subr.mxu0 0.0
        %3446 = vmatpush1.msra.mxu0 0.0
        %3447 = vmatprep.subr.mxu0 0.0
        %3448 = vmatpush1.msra.mxu0 0.0
        %3449 = vmatprep.subr.mxu0 0.0
        %3450 = vmatpush1.msra.mxu0 0.0
        %3451 = vmatprep.mubr.f32.mxu0 0.0
        %3452 = vmatmul.mubr.f32.gmra.mrb[0].mxu0 %v3383
        %v3453 = vpop.f32.mrb[0].mxu0
        %v3454 = vadd.f32 0.0, %v3453
        %v3455 = vpop.f32.mrb[0].mxu0
        %3456 = vmatprep.mubr.f32.mxu0 0.0
        %3457 = vmatmul.mubr.f32.gmra.mrb[0].mxu0 %v3384
        %v3458 = vpop.f32.mrb[0].mxu0
        %v3459 = vadd.f32 0.0, %v3458
        %v3460 = vpop.f32.mrb[0].mxu0
        %3461 = vdwg.mxu0
        %v3462 = vadd.f32 %v3356, %v3454
        %v3463 = vadd.f32 %v3357, %v3459
        %v3464 = vld [vmem:[%s578] sm:$0x1]
        %v3466 = vlaneseq
        %v3467 = vshrl.u32 %v3466, 7
        %v3468 = vsub.s32 0, %v3467
        %v3469 = vrot.slane %v3464, %v3468
        %v3471 = vmul.f32 %v3462, %v3469
        %v3472 = vmul.f32 %v3463, %v3469
        %v3473 = vld [vmem:[%s581] sm:$0x1]
        %v3475 = vlaneseq
        %v3476 = vshrl.u32 %v3475, 7
        %v3477 = vsub.s32 0, %v3476
        %v3478 = vrot.slane %v3473, %v3477
        %v3480 = vadd.f32 %v3471, %v3478
        %v3481 = vadd.f32 %v3472, %v3478
        %v3482 = vld [vmem:[%s590] sm:$0xff]
        %v3483 = vld [vmem:[%s590 + $0x8] sm:$0xff]
        %v3484 = vld [vmem:[%s594] sm:$0xff]
        %v3485 = vld [vmem:[%s594 + $0x8] sm:$0xff]
        %v3486 = vld [vmem:[%s594 + $0x10] sm:$0xff]
        %v3487 = vld [vmem:[%s594 + $0x18] sm:$0xff]
        %v3488 = vld [vmem:[%s594 + $0x20] sm:$0xff]
        %v3489 = vld [vmem:[%s594 + $0x28] sm:$0xff]
        %v3490 = vld [vmem:[%s594 + $0x30] sm:$0xff]
        %v3491 = vld [vmem:[%s594 + $0x38] sm:$0xff]
        %v3492 = vld [vmem:[%s594 + $0x40] sm:$0xff]
        %v3493 = vld [vmem:[%s594 + $0x48] sm:$0xff]
        %v3494 = vld [vmem:[%s594 + $0x50] sm:$0xff]
        %v3495 = vld [vmem:[%s594 + $0x58] sm:$0xff]
        %v3496 = vld [vmem:[%s594 + $0x60] sm:$0xff]
        %v3497 = vld [vmem:[%s594 + $0x68] sm:$0xff]
        %v3498 = vld [vmem:[%s594 + $0x70] sm:$0xff]
        %v3499 = vld [vmem:[%s594 + $0x78] sm:$0xff]
        %3500 = vmatprep.subr.mxu0 0.0
        %3501 = vmatpush1.msra.mxu0 %v3484
        %3502 = vmatprep.subr.mxu0 0.0
        %3503 = vmatpush1.msra.mxu0 %v3485
        %3504 = vmatprep.subr.mxu0 0.0
        %3505 = vmatpush1.msra.mxu0 %v3486
        %3506 = vmatprep.subr.mxu0 0.0
        %3507 = vmatpush1.msra.mxu0 %v3487
        %3508 = vmatprep.subr.mxu0 0.0
        %3509 = vmatpush1.msra.mxu0 %v3488
        %3510 = vmatprep.subr.mxu0 0.0
        %3511 = vmatpush1.msra.mxu0 %v3489
        %3512 = vmatprep.subr.mxu0 0.0
        %3513 = vmatpush1.msra.mxu0 %v3490
        %3514 = vmatprep.subr.mxu0 0.0
        %3515 = vmatpush1.msra.mxu0 %v3491
        %3516 = vmatprep.subr.mxu0 0.0
        %3517 = vmatpush1.msra.mxu0 %v3492
        %3518 = vmatprep.subr.mxu0 0.0
        %3519 = vmatpush1.msra.mxu0 %v3493
        %3520 = vmatprep.subr.mxu0 0.0
        %3521 = vmatpush1.msra.mxu0 %v3494
        %3522 = vmatprep.subr.mxu0 0.0
        %3523 = vmatpush1.msra.mxu0 %v3495
        %3524 = vmatprep.subr.mxu0 0.0
        %3525 = vmatpush1.msra.mxu0 %v3496
        %3526 = vmatprep.subr.mxu0 0.0
        %3527 = vmatpush1.msra.mxu0 %v3497
        %3528 = vmatprep.subr.mxu0 0.0
        %3529 = vmatpush1.msra.mxu0 %v3498
        %3530 = vmatprep.subr.mxu0 0.0
        %3531 = vmatpush1.msra.mxu0 %v3499
        %3532 = vmatprep.subr.mxu0 0.0
        %3533 = vmatpush1.msra.mxu0 0.0
        %3534 = vmatprep.subr.mxu0 0.0
        %3535 = vmatpush1.msra.mxu0 0.0
        %3536 = vmatprep.subr.mxu0 0.0
        %3537 = vmatpush1.msra.mxu0 0.0
        %3538 = vmatprep.subr.mxu0 0.0
        %3539 = vmatpush1.msra.mxu0 0.0
        %3540 = vmatprep.subr.mxu0 0.0
        %3541 = vmatpush1.msra.mxu0 0.0
        %3542 = vmatprep.subr.mxu0 0.0
        %3543 = vmatpush1.msra.mxu0 0.0
        %3544 = vmatprep.subr.mxu0 0.0
        %3545 = vmatpush1.msra.mxu0 0.0
        %3546 = vmatprep.subr.mxu0 0.0
        %3547 = vmatpush1.msra.mxu0 0.0
        %3548 = vmatprep.subr.mxu0 0.0
        %3549 = vmatpush1.msra.mxu0 0.0
        %3550 = vmatprep.subr.mxu0 0.0
        %3551 = vmatpush1.msra.mxu0 0.0
        %3552 = vmatprep.subr.mxu0 0.0
        %3553 = vmatpush1.msra.mxu0 0.0
        %3554 = vmatprep.subr.mxu0 0.0
        %3555 = vmatpush1.msra.mxu0 0.0
        %3556 = vmatprep.subr.mxu0 0.0
        %3557 = vmatpush1.msra.mxu0 0.0
        %3558 = vmatprep.subr.mxu0 0.0
        %3559 = vmatpush1.msra.mxu0 0.0
        %3560 = vmatprep.subr.mxu0 0.0
        %3561 = vmatpush1.msra.mxu0 0.0
        %3562 = vmatprep.subr.mxu0 0.0
        %3563 = vmatpush1.msra.mxu0 0.0
        %3564 = vmatprep.mubr.f32.mxu0 0.0
        %3565 = vmatmul.mubr.f32.gmra.mrb[0].mxu0 %v3482
        %v3566 = vpop.f32.mrb[0].mxu0
        %v3567 = vadd.f32 0.0, %v3566
        %v3568 = vpop.f32.mrb[0].mxu0
        %3569 = vmatprep.mubr.f32.mxu0 0.0
        %3570 = vmatmul.mubr.f32.gmra.mrb[0].mxu0 %v3483
        %v3571 = vpop.f32.mrb[0].mxu0
        %v3572 = vadd.f32 0.0, %v3571
        %v3573 = vpop.f32.mrb[0].mxu0
        %3574 = vdwg.mxu0
        %v3575 = vld [vmem:[%s597] sm:$0x1]
        %v3577 = vlaneseq
        %v3578 = vshrl.u32 %v3577, 7
        %v3579 = vsub.s32 0, %v3578
        %v3580 = vrot.slane %v3575, %v3579
        %v3582 = vmul.f32 %v3567, %v3580
        %v3583 = vmul.f32 %v3572, %v3580
        %v3584 = vadd.f32 %v3480, %v3582
        %v3585 = vadd.f32 %v3481, %v3583
        %v3586 = vld [vmem:[%s600] sm:$0x1]
        %v3588 = vlaneseq
        %v3589 = vshrl.u32 %v3588, 7
        %v3590 = vsub.s32 0, %v3589
        %v3591 = vrot.slane %v3586, %v3590
        %v3593 = vadd.f32 %v3584, %v3591
        %v3594 = vadd.f32 %v3585, %v3591
        %v3595 = vmax.f32 %v3593, 0.0
        %v3596 = vmax.f32 %v3594, 0.0
        %3597 = vst [vmem:[%s540] sm:$0xff] %v3595
        %3598 = vst [vmem:[%s540 + $0x8] sm:$0xff] %v3596
        %s3599 = sand.u32 %s327, 1
        %s3600 = scalar_lea.sflag [#allocation3], %s3599
        %s3601 = sand.u32 %s327, 1
        %s3602 = smul.addr %s3601, 16
        %s3603 = scalar_lea.vmem [#allocation2], %s3602
        // Predicated region
        $region61: #{postres_forward.3} parent=59 // pred_check
          %p3604 = pneg %p337
        $region62: #{postres_forward.3} parent=59 // pred_check_branch
          %3606 = sbr.rel (%p3604) target = $region64
        $region63: #{postres_forward.3} parent=59 // pred_region
          %s3608 = ssub.s32 256, 256
          %3609 = vsyncadd %s3600, %s3608
          %s3610 = smul.addr %s31, 2
          %s3611 = sadd.s32 %s30, %s3610
          %s3612 = smul.addr %s29, 8
          %s3613 = sadd.s32 %s3611, %s3612
          %s3614 = smul.addr %s3613, 128
          %s3615 = scalar_lea.hbm %s10, %s3614
          %s3616 = sshll.u32 %s3603, 4
          %s3617 = int_to_ptr.vmem [resolvable:$true] %s3616
          %3622 = dma.vmem_to_hbm [thread:$0]  %s3617, 256, %s3615, %s3600, 128, 128, 8
        $region64: #{postres_forward.3} parent=59 // pred_fallthru
          _
      $region60: #{postres_forward.3} parent=5 // pred_fallthru
        _
      %p3623 = scmp.le.s32.totalorder 2, %s19
      // Predicated region
      $region65: #{postres_forward.3} parent=5 // pred_check
        %p3624 = pneg %p3623
      $region66: #{postres_forward.3} parent=5 // pred_check_branch
        %3626 = sbr.rel (%p3624) target = $region68
      $region67: #{postres_forward.3} parent=5 // pred_region
        %s3627 = ssub.s32 %s19, 2
        // Predicated region
        $region69: #{postres_forward.3} parent=67 // pred_check
          %p3628 = pneg %p343
        $region70: #{postres_forward.3} parent=67 // pred_check_branch
          %3630 = sbr.rel (%p3628) target = $region72
        $region71: #{postres_forward.3} parent=67 // pred_region
          %s3631 = sand.u32 %s328, 1
          %s3632 = scalar_lea.sflag [#allocation3], %s3631
          %s3633 = sand.u32 %s328, 1
          %s3634 = smul.addr %s3633, 16
          %s3635 = scalar_lea.vmem [#allocation2], %s3634
          %3636 = dma.done %s3632, 256
        $region72: #{postres_forward.3} parent=67 // pred_fallthru
          _
      $region68: #{postres_forward.3} parent=5 // pred_fallthru
        _
    $region6: #{postres_forward.3} parent=1 // loop_footer
      %s23 = sadd.s32 1, %s19
    $region7: #{postres_forward.3} parent=1 // loop_footer_branch
      %18 = sbr.rel target = $region3
    $region8: #{postres_forward.3} parent=1 // loop_exit
      _
    %3637 = vsyncpa [#allocation3], 1
    %s3638 = scalar_lea.sflag [#allocation3], 1
    %3639 = vsyncpa %s3638, 1

</llo_original>
